<compile_context>
chip_gen: v6e
topology: v6e:2x2x1
jax: 0.10.0
libtpu: 0.0.40
codegen_flags: <defaults>
</compile_context>

<pallas_src>
import jax
import jax.numpy as jnp
from jax import lax
from jax.experimental import pallas as pl
from jax.experimental.pallas import tpu as pltpu


def lstm_kernel(x_ref, wih0_ref, whh0_ref, b0_ref,
                wih1_ref, whh1_ref, b1_ref, wfc_ref, bfc_ref,
                out_ref,
                h0_ref, c0_ref, h1_ref, c1_ref):
    # x_ref : [Bb, Tc, D]     wih0 : [D, 4H]   whh0 : [H, 4H]   b0 : [1, 4H]
    # wih1  : [H, 4H]         whh1 : [H, 4H]                    b1 : [1, 4H]
    # wfc   : [1, H]          bfc  : [1, 1]
    # h*/c* : [Bb, H] f32 VMEM scratch, persistent across the time-chunk axis.
    # NOTE: the g-gate columns (2H:3H) of wih0/whh0/b0/wih1/whh1/b1 were
    # pre-scaled by 2 in the wrapper (single-sigmoid gate trick).
    t = pl.program_id(1)
    Bb, Tc, D = x_ref.shape
    H = h0_ref.shape[1]
    cdt = wih0_ref.dtype  # MXU operand dtype (f32 or bf16); accumulation is f32.

    @pl.when(t == 0)
    def _init():
        h0_ref[...] = jnp.zeros_like(h0_ref)
        c0_ref[...] = jnp.zeros_like(c0_ref)
        h1_ref[...] = jnp.zeros_like(h1_ref)
        c1_ref[...] = jnp.zeros_like(c1_ref)

    # --- Hoisted layer-0 input projection: one tall matmul per chunk. -------
    # Transpose once per chunk so per-step slices are whole (Bb, 4H) tiles.
    xT = jnp.transpose(x_ref[...], (1, 0, 2))               # [Tc, Bb, D]
    x2 = xT.reshape(Tc * Bb, D).astype(cdt)
    g0_all = (jnp.dot(x2, wih0_ref[...], preferred_element_type=jnp.float32)
              + b0_ref[...]).reshape(Tc, Bb, 4 * H)         # [Tc, Bb, 4H] f32

    # Load weights/biases once; closed over by the unrolled loop.
    whh0 = whh0_ref[...]
    wih1 = wih1_ref[...]
    whh1 = whh1_ref[...]
    b1b = jnp.broadcast_to(b1_ref[...], (Bb, 4 * H))        # hoisted broadcast

    def lstm_gates(gates, c_prev):
        # Single full-tile EUP pass; tanh of the (pre-scaled) g gate recovered
        # as 2*sigmoid(2*pre_g) - 1 on the VPU.
        sig = jax.nn.sigmoid(gates)
        i = sig[:, 0 * H:1 * H]
        f = sig[:, 1 * H:2 * H]
        g = 2.0 * sig[:, 2 * H:3 * H] - 1.0
        o = sig[:, 3 * H:4 * H]
        c_new = f * c_prev + i * g
        h_new = o * jnp.tanh(c_new)
        return h_new, c_new

    h0 = h0_ref[...]
    c0 = c0_ref[...]
    h1 = h1_ref[...]
    c1 = c1_ref[...]

    # --- Recurrence over the chunk, fully unrolled (Tc is static). ----------
    for tt in range(Tc):
        # Layer-1 recurrent push first: depends only on the previous step's h1,
        # so it is independent of (and pipelines with) the layer-0 work below.
        g1_rec = jnp.dot(h1.astype(cdt), whh1,
                         preferred_element_type=jnp.float32)
        # Layer 0: only the recurrent matmul remains on the critical path.
        g0 = g0_all[tt] + jnp.dot(h0.astype(cdt), whh0,
                                  preferred_element_type=jnp.float32)
        h0, c0 = lstm_gates(g0, c0)
        # Layer 1: input projection of the fresh h0, added to the early push.
        g1 = g1_rec + jnp.dot(h0.astype(cdt), wih1,
                              preferred_element_type=jnp.float32) + b1b
        h1, c1 = lstm_gates(g1, c1)

    h0_ref[...] = h0
    c0_ref[...] = c0
    h1_ref[...] = h1
    c1_ref[...] = c1

    # --- Final Linear(H, 1) on the last timestep of the top layer. ----------
    @pl.when(t == pl.num_programs(1) - 1)
    def _finalize():
        # VPU multiply + lane reduction instead of an N=1 MXU matmul.
        out_ref[...] = (jnp.sum(h1 * wfc_ref[...], axis=-1, keepdims=True)
                        + bfc_ref[...]).astype(out_ref.dtype)


def lstm_model_forward(x, params, *, block_b=None, block_t=None,
                       compute_dtype=jnp.float32):
    """x: [B, T, D] float32 -> [B, 1] float32 (matches LSTMModel.forward)."""
    B, T, D = x.shape
    H = params["w_hh0"].shape[1]

    # --- Batch block: full-sublane multiples of 8 when possible; split into
    # >=2 blocks so the "parallel" axis can span both TensorCores on v7x.
    if block_b is None:
        if B % 8 == 0:
            Bb = min(B, 256)
            if B > 8 and Bb == B and (B // 2) % 8 == 0:
                Bb = B // 2
        else:
            Bb = B
    else:
        Bb = block_b

    # --- Time chunk: large enough to amortize per-grid-step overhead.
    if block_t is None:
        if T <= 32:
            Tc = T
        else:
            Tc = T
            for cand in (32, 16, 8):
                if T % cand == 0:
                    Tc = cand
                    break
    else:
        Tc = block_t

    assert B % Bb == 0 and T % Tc == 0
    # Mosaic (8, 128) tile constraints for the chosen blockings:
    assert Tc == T or Tc % 8 == 0        # x block second-minor dim
    assert Bb == B or Bb % 8 == 0        # out block second-minor dim

    # --- Weight prep: PyTorch layout -> row-major [in_features, 4H]. --------
    def fold_g(w):
        # Pre-scale the g-gate block (columns 2H:3H) by 2 so the kernel needs
        # only one sigmoid pass per cell: tanh(z) = 2*sigmoid(2z) - 1.
        return w.at[..., 2 * H:3 * H].multiply(2.0)

    wih0 = fold_g(params["w_ih0"].T)                                   # [D, 4H]
    whh0 = fold_g(params["w_hh0"].T)                                   # [H, 4H]
    b0 = fold_g((params["b_ih0"] + params["b_hh0"]).reshape(1, -1))    # [1, 4H]
    wih1 = fold_g(params["w_ih1"].T)                                   # [H, 4H]
    whh1 = fold_g(params["w_hh1"].T)                                   # [H, 4H]
    b1 = fold_g((params["b_ih1"] + params["b_hh1"]).reshape(1, -1))    # [1, 4H]
    wfc = params["w_fc"].reshape(1, H)                                 # [1, H]
    bfc = params["b_fc"].reshape(1, 1)                                 # [1, 1]

    # Optional bf16 MXU operands (v6e/v7x); biases / gates / cell state stay f32.
    wih0 = wih0.astype(compute_dtype)
    whh0 = whh0.astype(compute_dtype)
    wih1 = wih1.astype(compute_dtype)
    whh1 = whh1.astype(compute_dtype)
    # TODO(synk): for large H on v7x (64 MiB VMEM/TC), K/N-tile whh0/wih1/whh1
    # (or nest emit_pipeline) instead of keeping them whole-resident.

    const = lambda b, t: (0, 0)
    grid = (B // Bb, T // Tc)
    return pl.pallas_call(
        lstm_kernel,
        out_shape=jax.ShapeDtypeStruct((B, 1), jnp.float32),
        grid=grid,
        in_specs=[
            pl.BlockSpec((Bb, Tc, D), lambda b, t: (b, t, 0)),   # x chunk
            pl.BlockSpec((D, 4 * H), const),                     # wih0
            pl.BlockSpec((H, 4 * H), const),                     # whh0
            pl.BlockSpec((1, 4 * H), const),                     # b0
            pl.BlockSpec((H, 4 * H), const),                     # wih1
            pl.BlockSpec((H, 4 * H), const),                     # whh1
            pl.BlockSpec((1, 4 * H), const),                     # b1
            pl.BlockSpec((1, H), const),                         # wfc
            pl.BlockSpec((1, 1), const),                         # bfc
        ],
        out_specs=pl.BlockSpec((Bb, 1), lambda b, t: (b, 0)),
        scratch_shapes=[pltpu.VMEM((Bb, H), jnp.float32)] * 4,
        compiler_params=pltpu.CompilerParams(
            dimension_semantics=("parallel", "arbitrary"),
            vmem_limit_bytes=32 * 1024 * 1024),
    )(x, wih0, whh0, b0, wih1, whh1, b1, wfc, bfc)


def lstm_model_reference(x, params):
    """Pure-JAX reference with identical semantics (for verification)."""
    B, T, D = x.shape
    H = params["w_hh0"].shape[1]

    def layer(seq, wih, whh, bih, bhh):
        def step(carry, x_t):
            h, c = carry
            gates = x_t @ wih.T + bih + h @ whh.T + bhh
            i = jax.nn.sigmoid(gates[:, 0 * H:1 * H])
            f = jax.nn.sigmoid(gates[:, 1 * H:2 * H])
            g = jnp.tanh(gates[:, 2 * H:3 * H])
            o = jax.nn.sigmoid(gates[:, 3 * H:4 * H])
            c = f * c + i * g
            h = o * jnp.tanh(c)
            return (h, c), h
        h0 = jnp.zeros((B, H), jnp.float32)
        c0 = jnp.zeros((B, H), jnp.float32)
        (_, _), hs = lax.scan(step, (h0, c0), jnp.transpose(seq, (1, 0, 2)))
        return jnp.transpose(hs, (1, 0, 2))

    out0 = layer(x, params["w_ih0"], params["w_hh0"],
                 params["b_ih0"], params["b_hh0"])
    out1 = layer(out0, params["w_ih1"], params["w_hh1"],
                 params["b_ih1"], params["b_hh1"])
    return out1[:, -1, :] @ params["w_fc"].T + params["b_fc"]


def init_params(key, input_dim, hidden_dim):
    # PyTorch default init: U(-1/sqrt(H), 1/sqrt(H)) for all LSTM params,
    # U(-1/sqrt(fan_in), 1/sqrt(fan_in)) for Linear.
    k = 1.0 / jnp.sqrt(hidden_dim)
    kfc = 1.0 / jnp.sqrt(hidden_dim)
    keys = jax.random.split(key, 10)

    def u(kk, shape, lim):
        return jax.random.uniform(kk, shape, jnp.float32, -lim, lim)

    return {
        "w_ih0": u(keys[0], (4 * hidden_dim, input_dim), k),
        "w_hh0": u(keys[1], (4 * hidden_dim, hidden_dim), k),
        "b_ih0": u(keys[2], (4 * hidden_dim,), k),
        "b_hh0": u(keys[3], (4 * hidden_dim,), k),
        "w_ih1": u(keys[4], (4 * hidden_dim, hidden_dim), k),
        "w_hh1": u(keys[5], (4 * hidden_dim, hidden_dim), k),
        "b_ih1": u(keys[6], (4 * hidden_dim,), k),
        "b_hh1": u(keys[7], (4 * hidden_dim,), k),
        "w_fc": u(keys[8], (1, hidden_dim), kfc),
        "b_fc": u(keys[9], (1,), kfc),
    }


if __name__ == "__main__":
    # batch=8 (full sublane), seq=32, input_dim=16, hidden_dim=32.
    # block_t=16 is passed explicitly so the run exercises the cross-chunk
    # h/c carry (2 time chunks) in addition to the single-chunk default path.
    B, T, D, H = 8, 32, 16, 32
    key = jax.random.PRNGKey(0)
    kx, kp = jax.random.split(key)
    x = jax.random.normal(kx, (B, T, D), jnp.float32)
    params = init_params(kp, D, H)

    out = jax.block_until_ready(lstm_model_forward(x, params, block_t=16))

    ref = lstm_model_reference(x, params)
    assert out.shape == (B, 1)
    assert jnp.allclose(out, ref, atol=1e-4, rtol=1e-4), (out, ref)

    print("KERNEL_OK")
</pallas_src>

<mosaic_0001>
module attributes {stable_mosaic.version = 11 : i64} {
  func.func @lstm_kernel(%arg0: i32, %arg1: i32, %arg2: memref<8x16x16xf32, #tpu.memory_space<vmem>>, %arg3: memref<16x128xf32, #tpu.memory_space<vmem>>, %arg4: memref<32x128xf32, #tpu.memory_space<vmem>>, %arg5: memref<1x128xf32, #tpu.memory_space<vmem>>, %arg6: memref<32x128xf32, #tpu.memory_space<vmem>>, %arg7: memref<32x128xf32, #tpu.memory_space<vmem>>, %arg8: memref<1x128xf32, #tpu.memory_space<vmem>>, %arg9: memref<1x32xf32, #tpu.memory_space<vmem>>, %arg10: memref<1x1xf32, #tpu.memory_space<vmem>>, %arg11: memref<8x1xf32, #tpu.memory_space<vmem>>, %arg12: memref<8x32xf32, #tpu.memory_space<vmem>>, %arg13: memref<8x32xf32, #tpu.memory_space<vmem>>, %arg14: memref<8x32xf32, #tpu.memory_space<vmem>>, %arg15: memref<8x32xf32, #tpu.memory_space<vmem>>) attributes {dimension_semantics = [#tpu.dimension_semantics<parallel>, #tpu.dimension_semantics<arbitrary>], iteration_bounds = array<i64: 1, 2>, scalar_prefetch = 0 : i64, scratch_operands = 4 : i64, tpu.core_type = #tpu.core_type<tc>, window_params = [{transform_indices = @transform_0, window_bounds = array<i64: 8, 16, 16>}, {pipeline_mode = #tpu.pipeline_mode<synchronous>, transform_indices = @transform_1, window_bounds = array<i64: 16, 128>}, {pipeline_mode = #tpu.pipeline_mode<synchronous>, transform_indices = @transform_2, window_bounds = array<i64: 32, 128>}, {pipeline_mode = #tpu.pipeline_mode<synchronous>, transform_indices = @transform_3, window_bounds = array<i64: 1, 128>}, {pipeline_mode = #tpu.pipeline_mode<synchronous>, transform_indices = @transform_4, window_bounds = array<i64: 32, 128>}, {pipeline_mode = #tpu.pipeline_mode<synchronous>, transform_indices = @transform_5, window_bounds = array<i64: 32, 128>}, {pipeline_mode = #tpu.pipeline_mode<synchronous>, transform_indices = @transform_6, window_bounds = array<i64: 1, 128>}, {pipeline_mode = #tpu.pipeline_mode<synchronous>, transform_indices = @transform_7, window_bounds = array<i64: 1, 32>}, {pipeline_mode = #tpu.pipeline_mode<synchronous>, transform_indices = @transform_8, window_bounds = array<i64: 1, 1>}, {transform_indices = @transform_9, window_bounds = array<i64: 8, 1>}]} {
    %c0_i32 = arith.constant 0 : i32
    %0 = arith.cmpi eq, %arg1, %c0_i32 : i32
    %1 = arith.extui %0 : i1 to i32
    %c0_i32_0 = arith.constant 0 : i32
    %2 = arith.cmpi ne, %1, %c0_i32_0 : i32
    scf.if %2 {
      %cst_176 = arith.constant 0.000000e+00 : f32
      %733 = vector.broadcast %cst_176 : f32 to vector<8x32xf32>
      %c0_177 = arith.constant 0 : index
      %c0_178 = arith.constant 0 : index
      %734 = vector.load %arg12[%c0_177, %c0_178] : memref<8x32xf32, #tpu.memory_space<vmem>>, vector<8x32xf32>
      tpu.vector_store %arg12[%c0_177, %c0_178], %733 {strides = array<i32>} : memref<8x32xf32, #tpu.memory_space<vmem>>, vector<8x32xf32>,
      %cst_179 = arith.constant 0.000000e+00 : f32
      %735 = vector.broadcast %cst_179 : f32 to vector<8x32xf32>
      %c0_180 = arith.constant 0 : index
      %c0_181 = arith.constant 0 : index
      %736 = vector.load %arg13[%c0_180, %c0_181] : memref<8x32xf32, #tpu.memory_space<vmem>>, vector<8x32xf32>
      tpu.vector_store %arg13[%c0_180, %c0_181], %735 {strides = array<i32>} : memref<8x32xf32, #tpu.memory_space<vmem>>, vector<8x32xf32>,
      %cst_182 = arith.constant 0.000000e+00 : f32
      %737 = vector.broadcast %cst_182 : f32 to vector<8x32xf32>
      %c0_183 = arith.constant 0 : index
      %c0_184 = arith.constant 0 : index
      %738 = vector.load %arg14[%c0_183, %c0_184] : memref<8x32xf32, #tpu.memory_space<vmem>>, vector<8x32xf32>
      tpu.vector_store %arg14[%c0_183, %c0_184], %737 {strides = array<i32>} : memref<8x32xf32, #tpu.memory_space<vmem>>, vector<8x32xf32>,
      %cst_185 = arith.constant 0.000000e+00 : f32
      %739 = vector.broadcast %cst_185 : f32 to vector<8x32xf32>
      %c0_186 = arith.constant 0 : index
      %c0_187 = arith.constant 0 : index
      %740 = vector.load %arg15[%c0_186, %c0_187] : memref<8x32xf32, #tpu.memory_space<vmem>>, vector<8x32xf32>
      tpu.vector_store %arg15[%c0_186, %c0_187], %739 {strides = array<i32>} : memref<8x32xf32, #tpu.memory_space<vmem>>, vector<8x32xf32>,
    } else {
    }
    %c0 = arith.constant 0 : index
    %c0_1 = arith.constant 0 : index
    %c0_2 = arith.constant 0 : index
    %3 = vector.load %arg2[%c0, %c0_1, %c0_2] : memref<8x16x16xf32, #tpu.memory_space<vmem>>, vector<8x16x16xf32>
    %4 = tpu.transpose %3, [1, 0, 2] : vector<8x16x16xf32> -> vector<16x8x16xf32>
    %5 = vector.shape_cast %4 : vector<16x8x16xf32> to vector<128x16xf32>
    %c0_3 = arith.constant 0 : index
    %c0_4 = arith.constant 0 : index
    %6 = vector.load %arg3[%c0_3, %c0_4] : memref<16x128xf32, #tpu.memory_space<vmem>>, vector<16x128xf32>
    %cst = arith.constant dense<0.000000e+00> : vector<128x128xf32>
    %7 = tpu.matmul %5, %6, %cst {dimension_numbers = #tpu.dot_dimension_numbers<[1], [0], [0], [1], [0, 0, 1, 1], [], []>} : vector<128x16xf32>, vector<16x128xf32>, vector<128x128xf32> -> vector<128x128xf32>
    %c0_5 = arith.constant 0 : index
    %c0_6 = arith.constant 0 : index
    %8 = vector.load %arg5[%c0_5, %c0_6] : memref<1x128xf32, #tpu.memory_space<vmem>>, vector<1x128xf32>
    %9 = vector.broadcast %8 : vector<1x128xf32> to vector<128x128xf32>
    %10 = arith.addf %7, %9 : vector<128x128xf32>
    %11 = vector.shape_cast %10 : vector<128x128xf32> to vector<16x8x128xf32>
    %c0_7 = arith.constant 0 : index
    %c0_8 = arith.constant 0 : index
    %12 = vector.load %arg4[%c0_7, %c0_8] : memref<32x128xf32, #tpu.memory_space<vmem>>, vector<32x128xf32>
    %c0_9 = arith.constant 0 : index
    %c0_10 = arith.constant 0 : index
    %13 = vector.load %arg6[%c0_9, %c0_10] : memref<32x128xf32, #tpu.memory_space<vmem>>, vector<32x128xf32>
    %c0_11 = arith.constant 0 : index
    %c0_12 = arith.constant 0 : index
    %14 = vector.load %arg7[%c0_11, %c0_12] : memref<32x128xf32, #tpu.memory_space<vmem>>, vector<32x128xf32>
    %c0_13 = arith.constant 0 : index
    %c0_14 = arith.constant 0 : index
    %15 = vector.load %arg8[%c0_13, %c0_14] : memref<1x128xf32, #tpu.memory_space<vmem>>, vector<1x128xf32>
    %16 = vector.shape_cast %15 : vector<1x128xf32> to vector<1x128xf32>
    %17 = vector.broadcast %16 : vector<1x128xf32> to vector<8x128xf32>
    %c0_15 = arith.constant 0 : index
    %c0_16 = arith.constant 0 : index
    %18 = vector.load %arg12[%c0_15, %c0_16] : memref<8x32xf32, #tpu.memory_space<vmem>>, vector<8x32xf32>
    %c0_17 = arith.constant 0 : index
    %c0_18 = arith.constant 0 : index
    %19 = vector.load %arg13[%c0_17, %c0_18] : memref<8x32xf32, #tpu.memory_space<vmem>>, vector<8x32xf32>
    %c0_19 = arith.constant 0 : index
    %c0_20 = arith.constant 0 : index
    %20 = vector.load %arg14[%c0_19, %c0_20] : memref<8x32xf32, #tpu.memory_space<vmem>>, vector<8x32xf32>
    %c0_21 = arith.constant 0 : index
    %c0_22 = arith.constant 0 : index
    %21 = vector.load %arg15[%c0_21, %c0_22] : memref<8x32xf32, #tpu.memory_space<vmem>>, vector<8x32xf32>
    %cst_23 = arith.constant dense<0.000000e+00> : vector<8x128xf32>
    %22 = tpu.matmul %20, %14, %cst_23 {dimension_numbers = #tpu.dot_dimension_numbers<[1], [0], [0], [1], [0, 0, 1, 1], [], []>} : vector<8x32xf32>, vector<32x128xf32>, vector<8x128xf32> -> vector<8x128xf32>
    %23 = vector.extract_strided_slice %11 {offsets = [0, 0, 0], sizes = [1, 8, 128], strides = [1, 1, 1]} : vector<16x8x128xf32> to vector<1x8x128xf32>
    %24 = vector.shape_cast %23 : vector<1x8x128xf32> to vector<8x128xf32>
    %cst_24 = arith.constant dense<0.000000e+00> : vector<8x128xf32>
    %25 = tpu.matmul %18, %12, %cst_24 {dimension_numbers = #tpu.dot_dimension_numbers<[1], [0], [0], [1], [0, 0, 1, 1], [], []>} : vector<8x32xf32>, vector<32x128xf32>, vector<8x128xf32> -> vector<8x128xf32>
    %26 = arith.addf %24, %25 : vector<8x128xf32>
    %27 = arith.negf %26 : vector<8x128xf32>
    %28 = math.exp %27 : vector<8x128xf32>
    %cst_25 = arith.constant 1.000000e+00 : f32
    %29 = vector.broadcast %cst_25 : f32 to vector<8x128xf32>
    %30 = arith.addf %29, %28 : vector<8x128xf32>
    %31 = arith.divf %29, %30 : vector<8x128xf32>
    %32 = vector.extract_strided_slice %31 {offsets = [0, 0], sizes = [8, 32], strides = [1, 1]} : vector<8x128xf32> to vector<8x32xf32>
    %33 = vector.extract_strided_slice %31 {offsets = [0, 32], sizes = [8, 32], strides = [1, 1]} : vector<8x128xf32> to vector<8x32xf32>
    %34 = vector.extract_strided_slice %31 {offsets = [0, 64], sizes = [8, 32], strides = [1, 1]} : vector<8x128xf32> to vector<8x32xf32>
    %cst_26 = arith.constant 2.000000e+00 : f32
    %35 = vector.broadcast %cst_26 : f32 to vector<8x32xf32>
    %36 = arith.mulf %35, %34 : vector<8x32xf32>
    %cst_27 = arith.constant 1.000000e+00 : f32
    %37 = vector.broadcast %cst_27 : f32 to vector<8x32xf32>
    %38 = arith.subf %36, %37 : vector<8x32xf32>
    %39 = vector.extract_strided_slice %31 {offsets = [0, 96], sizes = [8, 32], strides = [1, 1]} : vector<8x128xf32> to vector<8x32xf32>
    %40 = arith.mulf %33, %19 : vector<8x32xf32>
    %41 = arith.mulf %32, %38 : vector<8x32xf32>
    %42 = arith.addf %40, %41 : vector<8x32xf32>
    %43 = math.tanh %42 : vector<8x32xf32>
    %44 = arith.mulf %39, %43 : vector<8x32xf32>
    %cst_28 = arith.constant dense<0.000000e+00> : vector<8x128xf32>
    %45 = tpu.matmul %44, %13, %cst_28 {dimension_numbers = #tpu.dot_dimension_numbers<[1], [0], [0], [1], [0, 0, 1, 1], [], []>} : vector<8x32xf32>, vector<32x128xf32>, vector<8x128xf32> -> vector<8x128xf32>
    %46 = arith.addf %22, %45 : vector<8x128xf32>
    %47 = arith.addf %46, %17 : vector<8x128xf32>
    %48 = arith.negf %47 : vector<8x128xf32>
    %49 = math.exp %48 : vector<8x128xf32>
    %cst_29 = arith.constant 1.000000e+00 : f32
    %50 = vector.broadcast %cst_29 : f32 to vector<8x128xf32>
    %51 = arith.addf %50, %49 : vector<8x128xf32>
    %52 = arith.divf %50, %51 : vector<8x128xf32>
    %53 = vector.extract_strided_slice %52 {offsets = [0, 0], sizes = [8, 32], strides = [1, 1]} : vector<8x128xf32> to vector<8x32xf32>
    %54 = vector.extract_strided_slice %52 {offsets = [0, 32], sizes = [8, 32], strides = [1, 1]} : vector<8x128xf32> to vector<8x32xf32>
    %55 = vector.extract_strided_slice %52 {offsets = [0, 64], sizes = [8, 32], strides = [1, 1]} : vector<8x128xf32> to vector<8x32xf32>
    %cst_30 = arith.constant 2.000000e+00 : f32
    %56 = vector.broadcast %cst_30 : f32 to vector<8x32xf32>
    %57 = arith.mulf %56, %55 : vector<8x32xf32>
    %cst_31 = arith.constant 1.000000e+00 : f32
    %58 = vector.broadcast %cst_31 : f32 to vector<8x32xf32>
    %59 = arith.subf %57, %58 : vector<8x32xf32>
    %60 = vector.extract_strided_slice %52 {offsets = [0, 96], sizes = [8, 32], strides = [1, 1]} : vector<8x128xf32> to vector<8x32xf32>
    %61 = arith.mulf %54, %21 : vector<8x32xf32>
    %62 = arith.mulf %53, %59 : vector<8x32xf32>
    %63 = arith.addf %61, %62 : vector<8x32xf32>
    %64 = math.tanh %63 : vector<8x32xf32>
    %65 = arith.mulf %60, %64 : vector<8x32xf32>
    %cst_32 = arith.constant dense<0.000000e+00> : vector<8x128xf32>
    %66 = tpu.matmul %65, %14, %cst_32 {dimension_numbers = #tpu.dot_dimension_numbers<[1], [0], [0], [1], [0, 0, 1, 1], [], []>} : vector<8x32xf32>, vector<32x128xf32>, vector<8x128xf32> -> vector<8x128xf32>
    %67 = vector.extract_strided_slice %11 {offsets = [1, 0, 0], sizes = [1, 8, 128], strides = [1, 1, 1]} : vector<16x8x128xf32> to vector<1x8x128xf32>
    %68 = vector.shape_cast %67 : vector<1x8x128xf32> to vector<8x128xf32>
    %cst_33 = arith.constant dense<0.000000e+00> : vector<8x128xf32>
    %69 = tpu.matmul %44, %12, %cst_33 {dimension_numbers = #tpu.dot_dimension_numbers<[1], [0], [0], [1], [0, 0, 1, 1], [], []>} : vector<8x32xf32>, vector<32x128xf32>, vector<8x128xf32> -> vector<8x128xf32>
    %70 = arith.addf %68, %69 : vector<8x128xf32>
    %71 = arith.negf %70 : vector<8x128xf32>
    %72 = math.exp %71 : vector<8x128xf32>
    %cst_34 = arith.constant 1.000000e+00 : f32
    %73 = vector.broadcast %cst_34 : f32 to vector<8x128xf32>
    %74 = arith.addf %73, %72 : vector<8x128xf32>
    %75 = arith.divf %73, %74 : vector<8x128xf32>
    %76 = vector.extract_strided_slice %75 {offsets = [0, 0], sizes = [8, 32], strides = [1, 1]} : vector<8x128xf32> to vector<8x32xf32>
    %77 = vector.extract_strided_slice %75 {offsets = [0, 32], sizes = [8, 32], strides = [1, 1]} : vector<8x128xf32> to vector<8x32xf32>
    %78 = vector.extract_strided_slice %75 {offsets = [0, 64], sizes = [8, 32], strides = [1, 1]} : vector<8x128xf32> to vector<8x32xf32>
    %cst_35 = arith.constant 2.000000e+00 : f32
    %79 = vector.broadcast %cst_35 : f32 to vector<8x32xf32>
    %80 = arith.mulf %79, %78 : vector<8x32xf32>
    %cst_36 = arith.constant 1.000000e+00 : f32
    %81 = vector.broadcast %cst_36 : f32 to vector<8x32xf32>
    %82 = arith.subf %80, %81 : vector<8x32xf32>
    %83 = vector.extract_strided_slice %75 {offsets = [0, 96], sizes = [8, 32], strides = [1, 1]} : vector<8x128xf32> to vector<8x32xf32>
    %84 = arith.mulf %77, %42 : vector<8x32xf32>
    %85 = arith.mulf %76, %82 : vector<8x32xf32>
    %86 = arith.addf %84, %85 : vector<8x32xf32>
    %87 = math.tanh %86 : vector<8x32xf32>
    %88 = arith.mulf %83, %87 : vector<8x32xf32>
    %cst_37 = arith.constant dense<0.000000e+00> : vector<8x128xf32>
    %89 = tpu.matmul %88, %13, %cst_37 {dimension_numbers = #tpu.dot_dimension_numbers<[1], [0], [0], [1], [0, 0, 1, 1], [], []>} : vector<8x32xf32>, vector<32x128xf32>, vector<8x128xf32> -> vector<8x128xf32>
    %90 = arith.addf %66, %89 : vector<8x128xf32>
    %91 = arith.addf %90, %17 : vector<8x128xf32>
    %92 = arith.negf %91 : vector<8x128xf32>
    %93 = math.exp %92 : vector<8x128xf32>
    %cst_38 = arith.constant 1.000000e+00 : f32
    %94 = vector.broadcast %cst_38 : f32 to vector<8x128xf32>
    %95 = arith.addf %94, %93 : vector<8x128xf32>
    %96 = arith.divf %94, %95 : vector<8x128xf32>
    %97 = vector.extract_strided_slice %96 {offsets = [0, 0], sizes = [8, 32], strides = [1, 1]} : vector<8x128xf32> to vector<8x32xf32>
    %98 = vector.extract_strided_slice %96 {offsets = [0, 32], sizes = [8, 32], strides = [1, 1]} : vector<8x128xf32> to vector<8x32xf32>
    %99 = vector.extract_strided_slice %96 {offsets = [0, 64], sizes = [8, 32], strides = [1, 1]} : vector<8x128xf32> to vector<8x32xf32>
    %cst_39 = arith.constant 2.000000e+00 : f32
    %100 = vector.broadcast %cst_39 : f32 to vector<8x32xf32>
    %101 = arith.mulf %100, %99 : vector<8x32xf32>
    %cst_40 = arith.constant 1.000000e+00 : f32
    %102 = vector.broadcast %cst_40 : f32 to vector<8x32xf32>
    %103 = arith.subf %101, %102 : vector<8x32xf32>
    %104 = vector.extract_strided_slice %96 {offsets = [0, 96], sizes = [8, 32], strides = [1, 1]} : vector<8x128xf32> to vector<8x32xf32>
    %105 = arith.mulf %98, %63 : vector<8x32xf32>
    %106 = arith.mulf %97, %103 : vector<8x32xf32>
    %107 = arith.addf %105, %106 : vector<8x32xf32>
    %108 = math.tanh %107 : vector<8x32xf32>
    %109 = arith.mulf %104, %108 : vector<8x32xf32>
    %cst_41 = arith.constant dense<0.000000e+00> : vector<8x128xf32>
    %110 = tpu.matmul %109, %14, %cst_41 {dimension_numbers = #tpu.dot_dimension_numbers<[1], [0], [0], [1], [0, 0, 1, 1], [], []>} : vector<8x32xf32>, vector<32x128xf32>, vector<8x128xf32> -> vector<8x128xf32>
    %111 = vector.extract_strided_slice %11 {offsets = [2, 0, 0], sizes = [1, 8, 128], strides = [1, 1, 1]} : vector<16x8x128xf32> to vector<1x8x128xf32>
    %112 = vector.shape_cast %111 : vector<1x8x128xf32> to vector<8x128xf32>
    %cst_42 = arith.constant dense<0.000000e+00> : vector<8x128xf32>
    %113 = tpu.matmul %88, %12, %cst_42 {dimension_numbers = #tpu.dot_dimension_numbers<[1], [0], [0], [1], [0, 0, 1, 1], [], []>} : vector<8x32xf32>, vector<32x128xf32>, vector<8x128xf32> -> vector<8x128xf32>
    %114 = arith.addf %112, %113 : vector<8x128xf32>
    %115 = arith.negf %114 : vector<8x128xf32>
    %116 = math.exp %115 : vector<8x128xf32>
    %cst_43 = arith.constant 1.000000e+00 : f32
    %117 = vector.broadcast %cst_43 : f32 to vector<8x128xf32>
    %118 = arith.addf %117, %116 : vector<8x128xf32>
    %119 = arith.divf %117, %118 : vector<8x128xf32>
    %120 = vector.extract_strided_slice %119 {offsets = [0, 0], sizes = [8, 32], strides = [1, 1]} : vector<8x128xf32> to vector<8x32xf32>
    %121 = vector.extract_strided_slice %119 {offsets = [0, 32], sizes = [8, 32], strides = [1, 1]} : vector<8x128xf32> to vector<8x32xf32>
    %122 = vector.extract_strided_slice %119 {offsets = [0, 64], sizes = [8, 32], strides = [1, 1]} : vector<8x128xf32> to vector<8x32xf32>
    %cst_44 = arith.constant 2.000000e+00 : f32
    %123 = vector.broadcast %cst_44 : f32 to vector<8x32xf32>
    %124 = arith.mulf %123, %122 : vector<8x32xf32>
    %cst_45 = arith.constant 1.000000e+00 : f32
    %125 = vector.broadcast %cst_45 : f32 to vector<8x32xf32>
    %126 = arith.subf %124, %125 : vector<8x32xf32>
    %127 = vector.extract_strided_slice %119 {offsets = [0, 96], sizes = [8, 32], strides = [1, 1]} : vector<8x128xf32> to vector<8x32xf32>
    %128 = arith.mulf %121, %86 : vector<8x32xf32>
    %129 = arith.mulf %120, %126 : vector<8x32xf32>
    %130 = arith.addf %128, %129 : vector<8x32xf32>
    %131 = math.tanh %130 : vector<8x32xf32>
    %132 = arith.mulf %127, %131 : vector<8x32xf32>
    %cst_46 = arith.constant dense<0.000000e+00> : vector<8x128xf32>
    %133 = tpu.matmul %132, %13, %cst_46 {dimension_numbers = #tpu.dot_dimension_numbers<[1], [0], [0], [1], [0, 0, 1, 1], [], []>} : vector<8x32xf32>, vector<32x128xf32>, vector<8x128xf32> -> vector<8x128xf32>
    %134 = arith.addf %110, %133 : vector<8x128xf32>
    %135 = arith.addf %134, %17 : vector<8x128xf32>
    %136 = arith.negf %135 : vector<8x128xf32>
    %137 = math.exp %136 : vector<8x128xf32>
    %cst_47 = arith.constant 1.000000e+00 : f32
    %138 = vector.broadcast %cst_47 : f32 to vector<8x128xf32>
    %139 = arith.addf %138, %137 : vector<8x128xf32>
    %140 = arith.divf %138, %139 : vector<8x128xf32>
    %141 = vector.extract_strided_slice %140 {offsets = [0, 0], sizes = [8, 32], strides = [1, 1]} : vector<8x128xf32> to vector<8x32xf32>
    %142 = vector.extract_strided_slice %140 {offsets = [0, 32], sizes = [8, 32], strides = [1, 1]} : vector<8x128xf32> to vector<8x32xf32>
    %143 = vector.extract_strided_slice %140 {offsets = [0, 64], sizes = [8, 32], strides = [1, 1]} : vector<8x128xf32> to vector<8x32xf32>
    %cst_48 = arith.constant 2.000000e+00 : f32
    %144 = vector.broadcast %cst_48 : f32 to vector<8x32xf32>
    %145 = arith.mulf %144, %143 : vector<8x32xf32>
    %cst_49 = arith.constant 1.000000e+00 : f32
    %146 = vector.broadcast %cst_49 : f32 to vector<8x32xf32>
    %147 = arith.subf %145, %146 : vector<8x32xf32>
    %148 = vector.extract_strided_slice %140 {offsets = [0, 96], sizes = [8, 32], strides = [1, 1]} : vector<8x128xf32> to vector<8x32xf32>
    %149 = arith.mulf %142, %107 : vector<8x32xf32>
    %150 = arith.mulf %141, %147 : vector<8x32xf32>
    %151 = arith.addf %149, %150 : vector<8x32xf32>
    %152 = math.tanh %151 : vector<8x32xf32>
    %153 = arith.mulf %148, %152 : vector<8x32xf32>
    %cst_50 = arith.constant dense<0.000000e+00> : vector<8x128xf32>
    %154 = tpu.matmul %153, %14, %cst_50 {dimension_numbers = #tpu.dot_dimension_numbers<[1], [0], [0], [1], [0, 0, 1, 1], [], []>} : vector<8x32xf32>, vector<32x128xf32>, vector<8x128xf32> -> vector<8x128xf32>
    %155 = vector.extract_strided_slice %11 {offsets = [3, 0, 0], sizes = [1, 8, 128], strides = [1, 1, 1]} : vector<16x8x128xf32> to vector<1x8x128xf32>
    %156 = vector.shape_cast %155 : vector<1x8x128xf32> to vector<8x128xf32>
    %cst_51 = arith.constant dense<0.000000e+00> : vector<8x128xf32>
    %157 = tpu.matmul %132, %12, %cst_51 {dimension_numbers = #tpu.dot_dimension_numbers<[1], [0], [0], [1], [0, 0, 1, 1], [], []>} : vector<8x32xf32>, vector<32x128xf32>, vector<8x128xf32> -> vector<8x128xf32>
    %158 = arith.addf %156, %157 : vector<8x128xf32>
    %159 = arith.negf %158 : vector<8x128xf32>
    %160 = math.exp %159 : vector<8x128xf32>
    %cst_52 = arith.constant 1.000000e+00 : f32
    %161 = vector.broadcast %cst_52 : f32 to vector<8x128xf32>
    %162 = arith.addf %161, %160 : vector<8x128xf32>
    %163 = arith.divf %161, %162 : vector<8x128xf32>
    %164 = vector.extract_strided_slice %163 {offsets = [0, 0], sizes = [8, 32], strides = [1, 1]} : vector<8x128xf32> to vector<8x32xf32>
    %165 = vector.extract_strided_slice %163 {offsets = [0, 32], sizes = [8, 32], strides = [1, 1]} : vector<8x128xf32> to vector<8x32xf32>
    %166 = vector.extract_strided_slice %163 {offsets = [0, 64], sizes = [8, 32], strides = [1, 1]} : vector<8x128xf32> to vector<8x32xf32>
    %cst_53 = arith.constant 2.000000e+00 : f32
    %167 = vector.broadcast %cst_53 : f32 to vector<8x32xf32>
    %168 = arith.mulf %167, %166 : vector<8x32xf32>
    %cst_54 = arith.constant 1.000000e+00 : f32
    %169 = vector.broadcast %cst_54 : f32 to vector<8x32xf32>
    %170 = arith.subf %168, %169 : vector<8x32xf32>
    %171 = vector.extract_strided_slice %163 {offsets = [0, 96], sizes = [8, 32], strides = [1, 1]} : vector<8x128xf32> to vector<8x32xf32>
    %172 = arith.mulf %165, %130 : vector<8x32xf32>
    %173 = arith.mulf %164, %170 : vector<8x32xf32>
    %174 = arith.addf %172, %173 : vector<8x32xf32>
    %175 = math.tanh %174 : vector<8x32xf32>
    %176 = arith.mulf %171, %175 : vector<8x32xf32>
    %cst_55 = arith.constant dense<0.000000e+00> : vector<8x128xf32>
    %177 = tpu.matmul %176, %13, %cst_55 {dimension_numbers = #tpu.dot_dimension_numbers<[1], [0], [0], [1], [0, 0, 1, 1], [], []>} : vector<8x32xf32>, vector<32x128xf32>, vector<8x128xf32> -> vector<8x128xf32>
    %178 = arith.addf %154, %177 : vector<8x128xf32>
    %179 = arith.addf %178, %17 : vector<8x128xf32>
    %180 = arith.negf %179 : vector<8x128xf32>
    %181 = math.exp %180 : vector<8x128xf32>
    %cst_56 = arith.constant 1.000000e+00 : f32
    %182 = vector.broadcast %cst_56 : f32 to vector<8x128xf32>
    %183 = arith.addf %182, %181 : vector<8x128xf32>
    %184 = arith.divf %182, %183 : vector<8x128xf32>
    %185 = vector.extract_strided_slice %184 {offsets = [0, 0], sizes = [8, 32], strides = [1, 1]} : vector<8x128xf32> to vector<8x32xf32>
    %186 = vector.extract_strided_slice %184 {offsets = [0, 32], sizes = [8, 32], strides = [1, 1]} : vector<8x128xf32> to vector<8x32xf32>
    %187 = vector.extract_strided_slice %184 {offsets = [0, 64], sizes = [8, 32], strides = [1, 1]} : vector<8x128xf32> to vector<8x32xf32>
    %cst_57 = arith.constant 2.000000e+00 : f32
    %188 = vector.broadcast %cst_57 : f32 to vector<8x32xf32>
    %189 = arith.mulf %188, %187 : vector<8x32xf32>
    %cst_58 = arith.constant 1.000000e+00 : f32
    %190 = vector.broadcast %cst_58 : f32 to vector<8x32xf32>
    %191 = arith.subf %189, %190 : vector<8x32xf32>
    %192 = vector.extract_strided_slice %184 {offsets = [0, 96], sizes = [8, 32], strides = [1, 1]} : vector<8x128xf32> to vector<8x32xf32>
    %193 = arith.mulf %186, %151 : vector<8x32xf32>
    %194 = arith.mulf %185, %191 : vector<8x32xf32>
    %195 = arith.addf %193, %194 : vector<8x32xf32>
    %196 = math.tanh %195 : vector<8x32xf32>
    %197 = arith.mulf %192, %196 : vector<8x32xf32>
    %cst_59 = arith.constant dense<0.000000e+00> : vector<8x128xf32>
    %198 = tpu.matmul %197, %14, %cst_59 {dimension_numbers = #tpu.dot_dimension_numbers<[1], [0], [0], [1], [0, 0, 1, 1], [], []>} : vector<8x32xf32>, vector<32x128xf32>, vector<8x128xf32> -> vector<8x128xf32>
    %199 = vector.extract_strided_slice %11 {offsets = [4, 0, 0], sizes = [1, 8, 128], strides = [1, 1, 1]} : vector<16x8x128xf32> to vector<1x8x128xf32>
    %200 = vector.shape_cast %199 : vector<1x8x128xf32> to vector<8x128xf32>
    %cst_60 = arith.constant dense<0.000000e+00> : vector<8x128xf32>
    %201 = tpu.matmul %176, %12, %cst_60 {dimension_numbers = #tpu.dot_dimension_numbers<[1], [0], [0], [1], [0, 0, 1, 1], [], []>} : vector<8x32xf32>, vector<32x128xf32>, vector<8x128xf32> -> vector<8x128xf32>
    %202 = arith.addf %200, %201 : vector<8x128xf32>
    %203 = arith.negf %202 : vector<8x128xf32>
    %204 = math.exp %203 : vector<8x128xf32>
    %cst_61 = arith.constant 1.000000e+00 : f32
    %205 = vector.broadcast %cst_61 : f32 to vector<8x128xf32>
    %206 = arith.addf %205, %204 : vector<8x128xf32>
    %207 = arith.divf %205, %206 : vector<8x128xf32>
    %208 = vector.extract_strided_slice %207 {offsets = [0, 0], sizes = [8, 32], strides = [1, 1]} : vector<8x128xf32> to vector<8x32xf32>
    %209 = vector.extract_strided_slice %207 {offsets = [0, 32], sizes = [8, 32], strides = [1, 1]} : vector<8x128xf32> to vector<8x32xf32>
    %210 = vector.extract_strided_slice %207 {offsets = [0, 64], sizes = [8, 32], strides = [1, 1]} : vector<8x128xf32> to vector<8x32xf32>
    %cst_62 = arith.constant 2.000000e+00 : f32
    %211 = vector.broadcast %cst_62 : f32 to vector<8x32xf32>
    %212 = arith.mulf %211, %210 : vector<8x32xf32>
    %cst_63 = arith.constant 1.000000e+00 : f32
    %213 = vector.broadcast %cst_63 : f32 to vector<8x32xf32>
    %214 = arith.subf %212, %213 : vector<8x32xf32>
    %215 = vector.extract_strided_slice %207 {offsets = [0, 96], sizes = [8, 32], strides = [1, 1]} : vector<8x128xf32> to vector<8x32xf32>
    %216 = arith.mulf %209, %174 : vector<8x32xf32>
    %217 = arith.mulf %208, %214 : vector<8x32xf32>
    %218 = arith.addf %216, %217 : vector<8x32xf32>
    %219 = math.tanh %218 : vector<8x32xf32>
    %220 = arith.mulf %215, %219 : vector<8x32xf32>
    %cst_64 = arith.constant dense<0.000000e+00> : vector<8x128xf32>
    %221 = tpu.matmul %220, %13, %cst_64 {dimension_numbers = #tpu.dot_dimension_numbers<[1], [0], [0], [1], [0, 0, 1, 1], [], []>} : vector<8x32xf32>, vector<32x128xf32>, vector<8x128xf32> -> vector<8x128xf32>
    %222 = arith.addf %198, %221 : vector<8x128xf32>
    %223 = arith.addf %222, %17 : vector<8x128xf32>
    %224 = arith.negf %223 : vector<8x128xf32>
    %225 = math.exp %224 : vector<8x128xf32>
    %cst_65 = arith.constant 1.000000e+00 : f32
    %226 = vector.broadcast %cst_65 : f32 to vector<8x128xf32>
    %227 = arith.addf %226, %225 : vector<8x128xf32>
    %228 = arith.divf %226, %227 : vector<8x128xf32>
    %229 = vector.extract_strided_slice %228 {offsets = [0, 0], sizes = [8, 32], strides = [1, 1]} : vector<8x128xf32> to vector<8x32xf32>
    %230 = vector.extract_strided_slice %228 {offsets = [0, 32], sizes = [8, 32], strides = [1, 1]} : vector<8x128xf32> to vector<8x32xf32>
    %231 = vector.extract_strided_slice %228 {offsets = [0, 64], sizes = [8, 32], strides = [1, 1]} : vector<8x128xf32> to vector<8x32xf32>
    %cst_66 = arith.constant 2.000000e+00 : f32
    %232 = vector.broadcast %cst_66 : f32 to vector<8x32xf32>
    %233 = arith.mulf %232, %231 : vector<8x32xf32>
    %cst_67 = arith.constant 1.000000e+00 : f32
    %234 = vector.broadcast %cst_67 : f32 to vector<8x32xf32>
    %235 = arith.subf %233, %234 : vector<8x32xf32>
    %236 = vector.extract_strided_slice %228 {offsets = [0, 96], sizes = [8, 32], strides = [1, 1]} : vector<8x128xf32> to vector<8x32xf32>
    %237 = arith.mulf %230, %195 : vector<8x32xf32>
    %238 = arith.mulf %229, %235 : vector<8x32xf32>
    %239 = arith.addf %237, %238 : vector<8x32xf32>
    %240 = math.tanh %239 : vector<8x32xf32>
    %241 = arith.mulf %236, %240 : vector<8x32xf32>
    %cst_68 = arith.constant dense<0.000000e+00> : vector<8x128xf32>
    %242 = tpu.matmul %241, %14, %cst_68 {dimension_numbers = #tpu.dot_dimension_numbers<[1], [0], [0], [1], [0, 0, 1, 1], [], []>} : vector<8x32xf32>, vector<32x128xf32>, vector<8x128xf32> -> vector<8x128xf32>
    %243 = vector.extract_strided_slice %11 {offsets = [5, 0, 0], sizes = [1, 8, 128], strides = [1, 1, 1]} : vector<16x8x128xf32> to vector<1x8x128xf32>
    %244 = vector.shape_cast %243 : vector<1x8x128xf32> to vector<8x128xf32>
    %cst_69 = arith.constant dense<0.000000e+00> : vector<8x128xf32>
    %245 = tpu.matmul %220, %12, %cst_69 {dimension_numbers = #tpu.dot_dimension_numbers<[1], [0], [0], [1], [0, 0, 1, 1], [], []>} : vector<8x32xf32>, vector<32x128xf32>, vector<8x128xf32> -> vector<8x128xf32>
    %246 = arith.addf %244, %245 : vector<8x128xf32>
    %247 = arith.negf %246 : vector<8x128xf32>
    %248 = math.exp %247 : vector<8x128xf32>
    %cst_70 = arith.constant 1.000000e+00 : f32
    %249 = vector.broadcast %cst_70 : f32 to vector<8x128xf32>
    %250 = arith.addf %249, %248 : vector<8x128xf32>
    %251 = arith.divf %249, %250 : vector<8x128xf32>
    %252 = vector.extract_strided_slice %251 {offsets = [0, 0], sizes = [8, 32], strides = [1, 1]} : vector<8x128xf32> to vector<8x32xf32>
    %253 = vector.extract_strided_slice %251 {offsets = [0, 32], sizes = [8, 32], strides = [1, 1]} : vector<8x128xf32> to vector<8x32xf32>
    %254 = vector.extract_strided_slice %251 {offsets = [0, 64], sizes = [8, 32], strides = [1, 1]} : vector<8x128xf32> to vector<8x32xf32>
    %cst_71 = arith.constant 2.000000e+00 : f32
    %255 = vector.broadcast %cst_71 : f32 to vector<8x32xf32>
    %256 = arith.mulf %255, %254 : vector<8x32xf32>
    %cst_72 = arith.constant 1.000000e+00 : f32
    %257 = vector.broadcast %cst_72 : f32 to vector<8x32xf32>
    %258 = arith.subf %256, %257 : vector<8x32xf32>
    %259 = vector.extract_strided_slice %251 {offsets = [0, 96], sizes = [8, 32], strides = [1, 1]} : vector<8x128xf32> to vector<8x32xf32>
    %260 = arith.mulf %253, %218 : vector<8x32xf32>
    %261 = arith.mulf %252, %258 : vector<8x32xf32>
    %262 = arith.addf %260, %261 : vector<8x32xf32>
    %263 = math.tanh %262 : vector<8x32xf32>
    %264 = arith.mulf %259, %263 : vector<8x32xf32>
    %cst_73 = arith.constant dense<0.000000e+00> : vector<8x128xf32>
    %265 = tpu.matmul %264, %13, %cst_73 {dimension_numbers = #tpu.dot_dimension_numbers<[1], [0], [0], [1], [0, 0, 1, 1], [], []>} : vector<8x32xf32>, vector<32x128xf32>, vector<8x128xf32> -> vector<8x128xf32>
    %266 = arith.addf %242, %265 : vector<8x128xf32>
    %267 = arith.addf %266, %17 : vector<8x128xf32>
    %268 = arith.negf %267 : vector<8x128xf32>
    %269 = math.exp %268 : vector<8x128xf32>
    %cst_74 = arith.constant 1.000000e+00 : f32
    %270 = vector.broadcast %cst_74 : f32 to vector<8x128xf32>
    %271 = arith.addf %270, %269 : vector<8x128xf32>
    %272 = arith.divf %270, %271 : vector<8x128xf32>
    %273 = vector.extract_strided_slice %272 {offsets = [0, 0], sizes = [8, 32], strides = [1, 1]} : vector<8x128xf32> to vector<8x32xf32>
    %274 = vector.extract_strided_slice %272 {offsets = [0, 32], sizes = [8, 32], strides = [1, 1]} : vector<8x128xf32> to vector<8x32xf32>
    %275 = vector.extract_strided_slice %272 {offsets = [0, 64], sizes = [8, 32], strides = [1, 1]} : vector<8x128xf32> to vector<8x32xf32>
    %cst_75 = arith.constant 2.000000e+00 : f32
    %276 = vector.broadcast %cst_75 : f32 to vector<8x32xf32>
    %277 = arith.mulf %276, %275 : vector<8x32xf32>
    %cst_76 = arith.constant 1.000000e+00 : f32
    %278 = vector.broadcast %cst_76 : f32 to vector<8x32xf32>
    %279 = arith.subf %277, %278 : vector<8x32xf32>
    %280 = vector.extract_strided_slice %272 {offsets = [0, 96], sizes = [8, 32], strides = [1, 1]} : vector<8x128xf32> to vector<8x32xf32>
    %281 = arith.mulf %274, %239 : vector<8x32xf32>
    %282 = arith.mulf %273, %279 : vector<8x32xf32>
    %283 = arith.addf %281, %282 : vector<8x32xf32>
    %284 = math.tanh %283 : vector<8x32xf32>
    %285 = arith.mulf %280, %284 : vector<8x32xf32>
    %cst_77 = arith.constant dense<0.000000e+00> : vector<8x128xf32>
    %286 = tpu.matmul %285, %14, %cst_77 {dimension_numbers = #tpu.dot_dimension_numbers<[1], [0], [0], [1], [0, 0, 1, 1], [], []>} : vector<8x32xf32>, vector<32x128xf32>, vector<8x128xf32> -> vector<8x128xf32>
    %287 = vector.extract_strided_slice %11 {offsets = [6, 0, 0], sizes = [1, 8, 128], strides = [1, 1, 1]} : vector<16x8x128xf32> to vector<1x8x128xf32>
    %288 = vector.shape_cast %287 : vector<1x8x128xf32> to vector<8x128xf32>
    %cst_78 = arith.constant dense<0.000000e+00> : vector<8x128xf32>
    %289 = tpu.matmul %264, %12, %cst_78 {dimension_numbers = #tpu.dot_dimension_numbers<[1], [0], [0], [1], [0, 0, 1, 1], [], []>} : vector<8x32xf32>, vector<32x128xf32>, vector<8x128xf32> -> vector<8x128xf32>
    %290 = arith.addf %288, %289 : vector<8x128xf32>
    %291 = arith.negf %290 : vector<8x128xf32>
    %292 = math.exp %291 : vector<8x128xf32>
    %cst_79 = arith.constant 1.000000e+00 : f32
    %293 = vector.broadcast %cst_79 : f32 to vector<8x128xf32>
    %294 = arith.addf %293, %292 : vector<8x128xf32>
    %295 = arith.divf %293, %294 : vector<8x128xf32>
    %296 = vector.extract_strided_slice %295 {offsets = [0, 0], sizes = [8, 32], strides = [1, 1]} : vector<8x128xf32> to vector<8x32xf32>
    %297 = vector.extract_strided_slice %295 {offsets = [0, 32], sizes = [8, 32], strides = [1, 1]} : vector<8x128xf32> to vector<8x32xf32>
    %298 = vector.extract_strided_slice %295 {offsets = [0, 64], sizes = [8, 32], strides = [1, 1]} : vector<8x128xf32> to vector<8x32xf32>
    %cst_80 = arith.constant 2.000000e+00 : f32
    %299 = vector.broadcast %cst_80 : f32 to vector<8x32xf32>
    %300 = arith.mulf %299, %298 : vector<8x32xf32>
    %cst_81 = arith.constant 1.000000e+00 : f32
    %301 = vector.broadcast %cst_81 : f32 to vector<8x32xf32>
    %302 = arith.subf %300, %301 : vector<8x32xf32>
    %303 = vector.extract_strided_slice %295 {offsets = [0, 96], sizes = [8, 32], strides = [1, 1]} : vector<8x128xf32> to vector<8x32xf32>
    %304 = arith.mulf %297, %262 : vector<8x32xf32>
    %305 = arith.mulf %296, %302 : vector<8x32xf32>
    %306 = arith.addf %304, %305 : vector<8x32xf32>
    %307 = math.tanh %306 : vector<8x32xf32>
    %308 = arith.mulf %303, %307 : vector<8x32xf32>
    %cst_82 = arith.constant dense<0.000000e+00> : vector<8x128xf32>
    %309 = tpu.matmul %308, %13, %cst_82 {dimension_numbers = #tpu.dot_dimension_numbers<[1], [0], [0], [1], [0, 0, 1, 1], [], []>} : vector<8x32xf32>, vector<32x128xf32>, vector<8x128xf32> -> vector<8x128xf32>
    %310 = arith.addf %286, %309 : vector<8x128xf32>
    %311 = arith.addf %310, %17 : vector<8x128xf32>
    %312 = arith.negf %311 : vector<8x128xf32>
    %313 = math.exp %312 : vector<8x128xf32>
    %cst_83 = arith.constant 1.000000e+00 : f32
    %314 = vector.broadcast %cst_83 : f32 to vector<8x128xf32>
    %315 = arith.addf %314, %313 : vector<8x128xf32>
    %316 = arith.divf %314, %315 : vector<8x128xf32>
    %317 = vector.extract_strided_slice %316 {offsets = [0, 0], sizes = [8, 32], strides = [1, 1]} : vector<8x128xf32> to vector<8x32xf32>
    %318 = vector.extract_strided_slice %316 {offsets = [0, 32], sizes = [8, 32], strides = [1, 1]} : vector<8x128xf32> to vector<8x32xf32>
    %319 = vector.extract_strided_slice %316 {offsets = [0, 64], sizes = [8, 32], strides = [1, 1]} : vector<8x128xf32> to vector<8x32xf32>
    %cst_84 = arith.constant 2.000000e+00 : f32
    %320 = vector.broadcast %cst_84 : f32 to vector<8x32xf32>
    %321 = arith.mulf %320, %319 : vector<8x32xf32>
    %cst_85 = arith.constant 1.000000e+00 : f32
    %322 = vector.broadcast %cst_85 : f32 to vector<8x32xf32>
    %323 = arith.subf %321, %322 : vector<8x32xf32>
    %324 = vector.extract_strided_slice %316 {offsets = [0, 96], sizes = [8, 32], strides = [1, 1]} : vector<8x128xf32> to vector<8x32xf32>
    %325 = arith.mulf %318, %283 : vector<8x32xf32>
    %326 = arith.mulf %317, %323 : vector<8x32xf32>
    %327 = arith.addf %325, %326 : vector<8x32xf32>
    %328 = math.tanh %327 : vector<8x32xf32>
    %329 = arith.mulf %324, %328 : vector<8x32xf32>
    %cst_86 = arith.constant dense<0.000000e+00> : vector<8x128xf32>
    %330 = tpu.matmul %329, %14, %cst_86 {dimension_numbers = #tpu.dot_dimension_numbers<[1], [0], [0], [1], [0, 0, 1, 1], [], []>} : vector<8x32xf32>, vector<32x128xf32>, vector<8x128xf32> -> vector<8x128xf32>
    %331 = vector.extract_strided_slice %11 {offsets = [7, 0, 0], sizes = [1, 8, 128], strides = [1, 1, 1]} : vector<16x8x128xf32> to vector<1x8x128xf32>
    %332 = vector.shape_cast %331 : vector<1x8x128xf32> to vector<8x128xf32>
    %cst_87 = arith.constant dense<0.000000e+00> : vector<8x128xf32>
    %333 = tpu.matmul %308, %12, %cst_87 {dimension_numbers = #tpu.dot_dimension_numbers<[1], [0], [0], [1], [0, 0, 1, 1], [], []>} : vector<8x32xf32>, vector<32x128xf32>, vector<8x128xf32> -> vector<8x128xf32>
    %334 = arith.addf %332, %333 : vector<8x128xf32>
    %335 = arith.negf %334 : vector<8x128xf32>
    %336 = math.exp %335 : vector<8x128xf32>
    %cst_88 = arith.constant 1.000000e+00 : f32
    %337 = vector.broadcast %cst_88 : f32 to vector<8x128xf32>
    %338 = arith.addf %337, %336 : vector<8x128xf32>
    %339 = arith.divf %337, %338 : vector<8x128xf32>
    %340 = vector.extract_strided_slice %339 {offsets = [0, 0], sizes = [8, 32], strides = [1, 1]} : vector<8x128xf32> to vector<8x32xf32>
    %341 = vector.extract_strided_slice %339 {offsets = [0, 32], sizes = [8, 32], strides = [1, 1]} : vector<8x128xf32> to vector<8x32xf32>
    %342 = vector.extract_strided_slice %339 {offsets = [0, 64], sizes = [8, 32], strides = [1, 1]} : vector<8x128xf32> to vector<8x32xf32>
    %cst_89 = arith.constant 2.000000e+00 : f32
    %343 = vector.broadcast %cst_89 : f32 to vector<8x32xf32>
    %344 = arith.mulf %343, %342 : vector<8x32xf32>
    %cst_90 = arith.constant 1.000000e+00 : f32
    %345 = vector.broadcast %cst_90 : f32 to vector<8x32xf32>
    %346 = arith.subf %344, %345 : vector<8x32xf32>
    %347 = vector.extract_strided_slice %339 {offsets = [0, 96], sizes = [8, 32], strides = [1, 1]} : vector<8x128xf32> to vector<8x32xf32>
    %348 = arith.mulf %341, %306 : vector<8x32xf32>
    %349 = arith.mulf %340, %346 : vector<8x32xf32>
    %350 = arith.addf %348, %349 : vector<8x32xf32>
    %351 = math.tanh %350 : vector<8x32xf32>
    %352 = arith.mulf %347, %351 : vector<8x32xf32>
    %cst_91 = arith.constant dense<0.000000e+00> : vector<8x128xf32>
    %353 = tpu.matmul %352, %13, %cst_91 {dimension_numbers = #tpu.dot_dimension_numbers<[1], [0], [0], [1], [0, 0, 1, 1], [], []>} : vector<8x32xf32>, vector<32x128xf32>, vector<8x128xf32> -> vector<8x128xf32>
    %354 = arith.addf %330, %353 : vector<8x128xf32>
    %355 = arith.addf %354, %17 : vector<8x128xf32>
    %356 = arith.negf %355 : vector<8x128xf32>
    %357 = math.exp %356 : vector<8x128xf32>
    %cst_92 = arith.constant 1.000000e+00 : f32
    %358 = vector.broadcast %cst_92 : f32 to vector<8x128xf32>
    %359 = arith.addf %358, %357 : vector<8x128xf32>
    %360 = arith.divf %358, %359 : vector<8x128xf32>
    %361 = vector.extract_strided_slice %360 {offsets = [0, 0], sizes = [8, 32], strides = [1, 1]} : vector<8x128xf32> to vector<8x32xf32>
    %362 = vector.extract_strided_slice %360 {offsets = [0, 32], sizes = [8, 32], strides = [1, 1]} : vector<8x128xf32> to vector<8x32xf32>
    %363 = vector.extract_strided_slice %360 {offsets = [0, 64], sizes = [8, 32], strides = [1, 1]} : vector<8x128xf32> to vector<8x32xf32>
    %cst_93 = arith.constant 2.000000e+00 : f32
    %364 = vector.broadcast %cst_93 : f32 to vector<8x32xf32>
    %365 = arith.mulf %364, %363 : vector<8x32xf32>
    %cst_94 = arith.constant 1.000000e+00 : f32
    %366 = vector.broadcast %cst_94 : f32 to vector<8x32xf32>
    %367 = arith.subf %365, %366 : vector<8x32xf32>
    %368 = vector.extract_strided_slice %360 {offsets = [0, 96], sizes = [8, 32], strides = [1, 1]} : vector<8x128xf32> to vector<8x32xf32>
    %369 = arith.mulf %362, %327 : vector<8x32xf32>
    %370 = arith.mulf %361, %367 : vector<8x32xf32>
    %371 = arith.addf %369, %370 : vector<8x32xf32>
    %372 = math.tanh %371 : vector<8x32xf32>
    %373 = arith.mulf %368, %372 : vector<8x32xf32>
    %cst_95 = arith.constant dense<0.000000e+00> : vector<8x128xf32>
    %374 = tpu.matmul %373, %14, %cst_95 {dimension_numbers = #tpu.dot_dimension_numbers<[1], [0], [0], [1], [0, 0, 1, 1], [], []>} : vector<8x32xf32>, vector<32x128xf32>, vector<8x128xf32> -> vector<8x128xf32>
    %375 = vector.extract_strided_slice %11 {offsets = [8, 0, 0], sizes = [1, 8, 128], strides = [1, 1, 1]} : vector<16x8x128xf32> to vector<1x8x128xf32>
    %376 = vector.shape_cast %375 : vector<1x8x128xf32> to vector<8x128xf32>
    %cst_96 = arith.constant dense<0.000000e+00> : vector<8x128xf32>
    %377 = tpu.matmul %352, %12, %cst_96 {dimension_numbers = #tpu.dot_dimension_numbers<[1], [0], [0], [1], [0, 0, 1, 1], [], []>} : vector<8x32xf32>, vector<32x128xf32>, vector<8x128xf32> -> vector<8x128xf32>
    %378 = arith.addf %376, %377 : vector<8x128xf32>
    %379 = arith.negf %378 : vector<8x128xf32>
    %380 = math.exp %379 : vector<8x128xf32>
    %cst_97 = arith.constant 1.000000e+00 : f32
    %381 = vector.broadcast %cst_97 : f32 to vector<8x128xf32>
    %382 = arith.addf %381, %380 : vector<8x128xf32>
    %383 = arith.divf %381, %382 : vector<8x128xf32>
    %384 = vector.extract_strided_slice %383 {offsets = [0, 0], sizes = [8, 32], strides = [1, 1]} : vector<8x128xf32> to vector<8x32xf32>
    %385 = vector.extract_strided_slice %383 {offsets = [0, 32], sizes = [8, 32], strides = [1, 1]} : vector<8x128xf32> to vector<8x32xf32>
    %386 = vector.extract_strided_slice %383 {offsets = [0, 64], sizes = [8, 32], strides = [1, 1]} : vector<8x128xf32> to vector<8x32xf32>
    %cst_98 = arith.constant 2.000000e+00 : f32
    %387 = vector.broadcast %cst_98 : f32 to vector<8x32xf32>
    %388 = arith.mulf %387, %386 : vector<8x32xf32>
    %cst_99 = arith.constant 1.000000e+00 : f32
    %389 = vector.broadcast %cst_99 : f32 to vector<8x32xf32>
    %390 = arith.subf %388, %389 : vector<8x32xf32>
    %391 = vector.extract_strided_slice %383 {offsets = [0, 96], sizes = [8, 32], strides = [1, 1]} : vector<8x128xf32> to vector<8x32xf32>
    %392 = arith.mulf %385, %350 : vector<8x32xf32>
    %393 = arith.mulf %384, %390 : vector<8x32xf32>
    %394 = arith.addf %392, %393 : vector<8x32xf32>
    %395 = math.tanh %394 : vector<8x32xf32>
    %396 = arith.mulf %391, %395 : vector<8x32xf32>
    %cst_100 = arith.constant dense<0.000000e+00> : vector<8x128xf32>
    %397 = tpu.matmul %396, %13, %cst_100 {dimension_numbers = #tpu.dot_dimension_numbers<[1], [0], [0], [1], [0, 0, 1, 1], [], []>} : vector<8x32xf32>, vector<32x128xf32>, vector<8x128xf32> -> vector<8x128xf32>
    %398 = arith.addf %374, %397 : vector<8x128xf32>
    %399 = arith.addf %398, %17 : vector<8x128xf32>
    %400 = arith.negf %399 : vector<8x128xf32>
    %401 = math.exp %400 : vector<8x128xf32>
    %cst_101 = arith.constant 1.000000e+00 : f32
    %402 = vector.broadcast %cst_101 : f32 to vector<8x128xf32>
    %403 = arith.addf %402, %401 : vector<8x128xf32>
    %404 = arith.divf %402, %403 : vector<8x128xf32>
    %405 = vector.extract_strided_slice %404 {offsets = [0, 0], sizes = [8, 32], strides = [1, 1]} : vector<8x128xf32> to vector<8x32xf32>
    %406 = vector.extract_strided_slice %404 {offsets = [0, 32], sizes = [8, 32], strides = [1, 1]} : vector<8x128xf32> to vector<8x32xf32>
    %407 = vector.extract_strided_slice %404 {offsets = [0, 64], sizes = [8, 32], strides = [1, 1]} : vector<8x128xf32> to vector<8x32xf32>
    %cst_102 = arith.constant 2.000000e+00 : f32
    %408 = vector.broadcast %cst_102 : f32 to vector<8x32xf32>
    %409 = arith.mulf %408, %407 : vector<8x32xf32>
    %cst_103 = arith.constant 1.000000e+00 : f32
    %410 = vector.broadcast %cst_103 : f32 to vector<8x32xf32>
    %411 = arith.subf %409, %410 : vector<8x32xf32>
    %412 = vector.extract_strided_slice %404 {offsets = [0, 96], sizes = [8, 32], strides = [1, 1]} : vector<8x128xf32> to vector<8x32xf32>
    %413 = arith.mulf %406, %371 : vector<8x32xf32>
    %414 = arith.mulf %405, %411 : vector<8x32xf32>
    %415 = arith.addf %413, %414 : vector<8x32xf32>
    %416 = math.tanh %415 : vector<8x32xf32>
    %417 = arith.mulf %412, %416 : vector<8x32xf32>
    %cst_104 = arith.constant dense<0.000000e+00> : vector<8x128xf32>
    %418 = tpu.matmul %417, %14, %cst_104 {dimension_numbers = #tpu.dot_dimension_numbers<[1], [0], [0], [1], [0, 0, 1, 1], [], []>} : vector<8x32xf32>, vector<32x128xf32>, vector<8x128xf32> -> vector<8x128xf32>
    %419 = vector.extract_strided_slice %11 {offsets = [9, 0, 0], sizes = [1, 8, 128], strides = [1, 1, 1]} : vector<16x8x128xf32> to vector<1x8x128xf32>
    %420 = vector.shape_cast %419 : vector<1x8x128xf32> to vector<8x128xf32>
    %cst_105 = arith.constant dense<0.000000e+00> : vector<8x128xf32>
    %421 = tpu.matmul %396, %12, %cst_105 {dimension_numbers = #tpu.dot_dimension_numbers<[1], [0], [0], [1], [0, 0, 1, 1], [], []>} : vector<8x32xf32>, vector<32x128xf32>, vector<8x128xf32> -> vector<8x128xf32>
    %422 = arith.addf %420, %421 : vector<8x128xf32>
    %423 = arith.negf %422 : vector<8x128xf32>
    %424 = math.exp %423 : vector<8x128xf32>
    %cst_106 = arith.constant 1.000000e+00 : f32
    %425 = vector.broadcast %cst_106 : f32 to vector<8x128xf32>
    %426 = arith.addf %425, %424 : vector<8x128xf32>
    %427 = arith.divf %425, %426 : vector<8x128xf32>
    %428 = vector.extract_strided_slice %427 {offsets = [0, 0], sizes = [8, 32], strides = [1, 1]} : vector<8x128xf32> to vector<8x32xf32>
    %429 = vector.extract_strided_slice %427 {offsets = [0, 32], sizes = [8, 32], strides = [1, 1]} : vector<8x128xf32> to vector<8x32xf32>
    %430 = vector.extract_strided_slice %427 {offsets = [0, 64], sizes = [8, 32], strides = [1, 1]} : vector<8x128xf32> to vector<8x32xf32>
    %cst_107 = arith.constant 2.000000e+00 : f32
    %431 = vector.broadcast %cst_107 : f32 to vector<8x32xf32>
    %432 = arith.mulf %431, %430 : vector<8x32xf32>
    %cst_108 = arith.constant 1.000000e+00 : f32
    %433 = vector.broadcast %cst_108 : f32 to vector<8x32xf32>
    %434 = arith.subf %432, %433 : vector<8x32xf32>
    %435 = vector.extract_strided_slice %427 {offsets = [0, 96], sizes = [8, 32], strides = [1, 1]} : vector<8x128xf32> to vector<8x32xf32>
    %436 = arith.mulf %429, %394 : vector<8x32xf32>
    %437 = arith.mulf %428, %434 : vector<8x32xf32>
    %438 = arith.addf %436, %437 : vector<8x32xf32>
    %439 = math.tanh %438 : vector<8x32xf32>
    %440 = arith.mulf %435, %439 : vector<8x32xf32>
    %cst_109 = arith.constant dense<0.000000e+00> : vector<8x128xf32>
    %441 = tpu.matmul %440, %13, %cst_109 {dimension_numbers = #tpu.dot_dimension_numbers<[1], [0], [0], [1], [0, 0, 1, 1], [], []>} : vector<8x32xf32>, vector<32x128xf32>, vector<8x128xf32> -> vector<8x128xf32>
    %442 = arith.addf %418, %441 : vector<8x128xf32>
    %443 = arith.addf %442, %17 : vector<8x128xf32>
    %444 = arith.negf %443 : vector<8x128xf32>
    %445 = math.exp %444 : vector<8x128xf32>
    %cst_110 = arith.constant 1.000000e+00 : f32
    %446 = vector.broadcast %cst_110 : f32 to vector<8x128xf32>
    %447 = arith.addf %446, %445 : vector<8x128xf32>
    %448 = arith.divf %446, %447 : vector<8x128xf32>
    %449 = vector.extract_strided_slice %448 {offsets = [0, 0], sizes = [8, 32], strides = [1, 1]} : vector<8x128xf32> to vector<8x32xf32>
    %450 = vector.extract_strided_slice %448 {offsets = [0, 32], sizes = [8, 32], strides = [1, 1]} : vector<8x128xf32> to vector<8x32xf32>
    %451 = vector.extract_strided_slice %448 {offsets = [0, 64], sizes = [8, 32], strides = [1, 1]} : vector<8x128xf32> to vector<8x32xf32>
    %cst_111 = arith.constant 2.000000e+00 : f32
    %452 = vector.broadcast %cst_111 : f32 to vector<8x32xf32>
    %453 = arith.mulf %452, %451 : vector<8x32xf32>
    %cst_112 = arith.constant 1.000000e+00 : f32
    %454 = vector.broadcast %cst_112 : f32 to vector<8x32xf32>
    %455 = arith.subf %453, %454 : vector<8x32xf32>
    %456 = vector.extract_strided_slice %448 {offsets = [0, 96], sizes = [8, 32], strides = [1, 1]} : vector<8x128xf32> to vector<8x32xf32>
    %457 = arith.mulf %450, %415 : vector<8x32xf32>
    %458 = arith.mulf %449, %455 : vector<8x32xf32>
    %459 = arith.addf %457, %458 : vector<8x32xf32>
    %460 = math.tanh %459 : vector<8x32xf32>
    %461 = arith.mulf %456, %460 : vector<8x32xf32>
    %cst_113 = arith.constant dense<0.000000e+00> : vector<8x128xf32>
    %462 = tpu.matmul %461, %14, %cst_113 {dimension_numbers = #tpu.dot_dimension_numbers<[1], [0], [0], [1], [0, 0, 1, 1], [], []>} : vector<8x32xf32>, vector<32x128xf32>, vector<8x128xf32> -> vector<8x128xf32>
    %463 = vector.extract_strided_slice %11 {offsets = [10, 0, 0], sizes = [1, 8, 128], strides = [1, 1, 1]} : vector<16x8x128xf32> to vector<1x8x128xf32>
    %464 = vector.shape_cast %463 : vector<1x8x128xf32> to vector<8x128xf32>
    %cst_114 = arith.constant dense<0.000000e+00> : vector<8x128xf32>
    %465 = tpu.matmul %440, %12, %cst_114 {dimension_numbers = #tpu.dot_dimension_numbers<[1], [0], [0], [1], [0, 0, 1, 1], [], []>} : vector<8x32xf32>, vector<32x128xf32>, vector<8x128xf32> -> vector<8x128xf32>
    %466 = arith.addf %464, %465 : vector<8x128xf32>
    %467 = arith.negf %466 : vector<8x128xf32>
    %468 = math.exp %467 : vector<8x128xf32>
    %cst_115 = arith.constant 1.000000e+00 : f32
    %469 = vector.broadcast %cst_115 : f32 to vector<8x128xf32>
    %470 = arith.addf %469, %468 : vector<8x128xf32>
    %471 = arith.divf %469, %470 : vector<8x128xf32>
    %472 = vector.extract_strided_slice %471 {offsets = [0, 0], sizes = [8, 32], strides = [1, 1]} : vector<8x128xf32> to vector<8x32xf32>
    %473 = vector.extract_strided_slice %471 {offsets = [0, 32], sizes = [8, 32], strides = [1, 1]} : vector<8x128xf32> to vector<8x32xf32>
    %474 = vector.extract_strided_slice %471 {offsets = [0, 64], sizes = [8, 32], strides = [1, 1]} : vector<8x128xf32> to vector<8x32xf32>
    %cst_116 = arith.constant 2.000000e+00 : f32
    %475 = vector.broadcast %cst_116 : f32 to vector<8x32xf32>
    %476 = arith.mulf %475, %474 : vector<8x32xf32>
    %cst_117 = arith.constant 1.000000e+00 : f32
    %477 = vector.broadcast %cst_117 : f32 to vector<8x32xf32>
    %478 = arith.subf %476, %477 : vector<8x32xf32>
    %479 = vector.extract_strided_slice %471 {offsets = [0, 96], sizes = [8, 32], strides = [1, 1]} : vector<8x128xf32> to vector<8x32xf32>
    %480 = arith.mulf %473, %438 : vector<8x32xf32>
    %481 = arith.mulf %472, %478 : vector<8x32xf32>
    %482 = arith.addf %480, %481 : vector<8x32xf32>
    %483 = math.tanh %482 : vector<8x32xf32>
    %484 = arith.mulf %479, %483 : vector<8x32xf32>
    %cst_118 = arith.constant dense<0.000000e+00> : vector<8x128xf32>
    %485 = tpu.matmul %484, %13, %cst_118 {dimension_numbers = #tpu.dot_dimension_numbers<[1], [0], [0], [1], [0, 0, 1, 1], [], []>} : vector<8x32xf32>, vector<32x128xf32>, vector<8x128xf32> -> vector<8x128xf32>
    %486 = arith.addf %462, %485 : vector<8x128xf32>
    %487 = arith.addf %486, %17 : vector<8x128xf32>
    %488 = arith.negf %487 : vector<8x128xf32>
    %489 = math.exp %488 : vector<8x128xf32>
    %cst_119 = arith.constant 1.000000e+00 : f32
    %490 = vector.broadcast %cst_119 : f32 to vector<8x128xf32>
    %491 = arith.addf %490, %489 : vector<8x128xf32>
    %492 = arith.divf %490, %491 : vector<8x128xf32>
    %493 = vector.extract_strided_slice %492 {offsets = [0, 0], sizes = [8, 32], strides = [1, 1]} : vector<8x128xf32> to vector<8x32xf32>
    %494 = vector.extract_strided_slice %492 {offsets = [0, 32], sizes = [8, 32], strides = [1, 1]} : vector<8x128xf32> to vector<8x32xf32>
    %495 = vector.extract_strided_slice %492 {offsets = [0, 64], sizes = [8, 32], strides = [1, 1]} : vector<8x128xf32> to vector<8x32xf32>
    %cst_120 = arith.constant 2.000000e+00 : f32
    %496 = vector.broadcast %cst_120 : f32 to vector<8x32xf32>
    %497 = arith.mulf %496, %495 : vector<8x32xf32>
    %cst_121 = arith.constant 1.000000e+00 : f32
    %498 = vector.broadcast %cst_121 : f32 to vector<8x32xf32>
    %499 = arith.subf %497, %498 : vector<8x32xf32>
    %500 = vector.extract_strided_slice %492 {offsets = [0, 96], sizes = [8, 32], strides = [1, 1]} : vector<8x128xf32> to vector<8x32xf32>
    %501 = arith.mulf %494, %459 : vector<8x32xf32>
    %502 = arith.mulf %493, %499 : vector<8x32xf32>
    %503 = arith.addf %501, %502 : vector<8x32xf32>
    %504 = math.tanh %503 : vector<8x32xf32>
    %505 = arith.mulf %500, %504 : vector<8x32xf32>
    %cst_122 = arith.constant dense<0.000000e+00> : vector<8x128xf32>
    %506 = tpu.matmul %505, %14, %cst_122 {dimension_numbers = #tpu.dot_dimension_numbers<[1], [0], [0], [1], [0, 0, 1, 1], [], []>} : vector<8x32xf32>, vector<32x128xf32>, vector<8x128xf32> -> vector<8x128xf32>
    %507 = vector.extract_strided_slice %11 {offsets = [11, 0, 0], sizes = [1, 8, 128], strides = [1, 1, 1]} : vector<16x8x128xf32> to vector<1x8x128xf32>
    %508 = vector.shape_cast %507 : vector<1x8x128xf32> to vector<8x128xf32>
    %cst_123 = arith.constant dense<0.000000e+00> : vector<8x128xf32>
    %509 = tpu.matmul %484, %12, %cst_123 {dimension_numbers = #tpu.dot_dimension_numbers<[1], [0], [0], [1], [0, 0, 1, 1], [], []>} : vector<8x32xf32>, vector<32x128xf32>, vector<8x128xf32> -> vector<8x128xf32>
    %510 = arith.addf %508, %509 : vector<8x128xf32>
    %511 = arith.negf %510 : vector<8x128xf32>
    %512 = math.exp %511 : vector<8x128xf32>
    %cst_124 = arith.constant 1.000000e+00 : f32
    %513 = vector.broadcast %cst_124 : f32 to vector<8x128xf32>
    %514 = arith.addf %513, %512 : vector<8x128xf32>
    %515 = arith.divf %513, %514 : vector<8x128xf32>
    %516 = vector.extract_strided_slice %515 {offsets = [0, 0], sizes = [8, 32], strides = [1, 1]} : vector<8x128xf32> to vector<8x32xf32>
    %517 = vector.extract_strided_slice %515 {offsets = [0, 32], sizes = [8, 32], strides = [1, 1]} : vector<8x128xf32> to vector<8x32xf32>
    %518 = vector.extract_strided_slice %515 {offsets = [0, 64], sizes = [8, 32], strides = [1, 1]} : vector<8x128xf32> to vector<8x32xf32>
    %cst_125 = arith.constant 2.000000e+00 : f32
    %519 = vector.broadcast %cst_125 : f32 to vector<8x32xf32>
    %520 = arith.mulf %519, %518 : vector<8x32xf32>
    %cst_126 = arith.constant 1.000000e+00 : f32
    %521 = vector.broadcast %cst_126 : f32 to vector<8x32xf32>
    %522 = arith.subf %520, %521 : vector<8x32xf32>
    %523 = vector.extract_strided_slice %515 {offsets = [0, 96], sizes = [8, 32], strides = [1, 1]} : vector<8x128xf32> to vector<8x32xf32>
    %524 = arith.mulf %517, %482 : vector<8x32xf32>
    %525 = arith.mulf %516, %522 : vector<8x32xf32>
    %526 = arith.addf %524, %525 : vector<8x32xf32>
    %527 = math.tanh %526 : vector<8x32xf32>
    %528 = arith.mulf %523, %527 : vector<8x32xf32>
    %cst_127 = arith.constant dense<0.000000e+00> : vector<8x128xf32>
    %529 = tpu.matmul %528, %13, %cst_127 {dimension_numbers = #tpu.dot_dimension_numbers<[1], [0], [0], [1], [0, 0, 1, 1], [], []>} : vector<8x32xf32>, vector<32x128xf32>, vector<8x128xf32> -> vector<8x128xf32>
    %530 = arith.addf %506, %529 : vector<8x128xf32>
    %531 = arith.addf %530, %17 : vector<8x128xf32>
    %532 = arith.negf %531 : vector<8x128xf32>
    %533 = math.exp %532 : vector<8x128xf32>
    %cst_128 = arith.constant 1.000000e+00 : f32
    %534 = vector.broadcast %cst_128 : f32 to vector<8x128xf32>
    %535 = arith.addf %534, %533 : vector<8x128xf32>
    %536 = arith.divf %534, %535 : vector<8x128xf32>
    %537 = vector.extract_strided_slice %536 {offsets = [0, 0], sizes = [8, 32], strides = [1, 1]} : vector<8x128xf32> to vector<8x32xf32>
    %538 = vector.extract_strided_slice %536 {offsets = [0, 32], sizes = [8, 32], strides = [1, 1]} : vector<8x128xf32> to vector<8x32xf32>
    %539 = vector.extract_strided_slice %536 {offsets = [0, 64], sizes = [8, 32], strides = [1, 1]} : vector<8x128xf32> to vector<8x32xf32>
    %cst_129 = arith.constant 2.000000e+00 : f32
    %540 = vector.broadcast %cst_129 : f32 to vector<8x32xf32>
    %541 = arith.mulf %540, %539 : vector<8x32xf32>
    %cst_130 = arith.constant 1.000000e+00 : f32
    %542 = vector.broadcast %cst_130 : f32 to vector<8x32xf32>
    %543 = arith.subf %541, %542 : vector<8x32xf32>
    %544 = vector.extract_strided_slice %536 {offsets = [0, 96], sizes = [8, 32], strides = [1, 1]} : vector<8x128xf32> to vector<8x32xf32>
    %545 = arith.mulf %538, %503 : vector<8x32xf32>
    %546 = arith.mulf %537, %543 : vector<8x32xf32>
    %547 = arith.addf %545, %546 : vector<8x32xf32>
    %548 = math.tanh %547 : vector<8x32xf32>
    %549 = arith.mulf %544, %548 : vector<8x32xf32>
    %cst_131 = arith.constant dense<0.000000e+00> : vector<8x128xf32>
    %550 = tpu.matmul %549, %14, %cst_131 {dimension_numbers = #tpu.dot_dimension_numbers<[1], [0], [0], [1], [0, 0, 1, 1], [], []>} : vector<8x32xf32>, vector<32x128xf32>, vector<8x128xf32> -> vector<8x128xf32>
    %551 = vector.extract_strided_slice %11 {offsets = [12, 0, 0], sizes = [1, 8, 128], strides = [1, 1, 1]} : vector<16x8x128xf32> to vector<1x8x128xf32>
    %552 = vector.shape_cast %551 : vector<1x8x128xf32> to vector<8x128xf32>
    %cst_132 = arith.constant dense<0.000000e+00> : vector<8x128xf32>
    %553 = tpu.matmul %528, %12, %cst_132 {dimension_numbers = #tpu.dot_dimension_numbers<[1], [0], [0], [1], [0, 0, 1, 1], [], []>} : vector<8x32xf32>, vector<32x128xf32>, vector<8x128xf32> -> vector<8x128xf32>
    %554 = arith.addf %552, %553 : vector<8x128xf32>
    %555 = arith.negf %554 : vector<8x128xf32>
    %556 = math.exp %555 : vector<8x128xf32>
    %cst_133 = arith.constant 1.000000e+00 : f32
    %557 = vector.broadcast %cst_133 : f32 to vector<8x128xf32>
    %558 = arith.addf %557, %556 : vector<8x128xf32>
    %559 = arith.divf %557, %558 : vector<8x128xf32>
    %560 = vector.extract_strided_slice %559 {offsets = [0, 0], sizes = [8, 32], strides = [1, 1]} : vector<8x128xf32> to vector<8x32xf32>
    %561 = vector.extract_strided_slice %559 {offsets = [0, 32], sizes = [8, 32], strides = [1, 1]} : vector<8x128xf32> to vector<8x32xf32>
    %562 = vector.extract_strided_slice %559 {offsets = [0, 64], sizes = [8, 32], strides = [1, 1]} : vector<8x128xf32> to vector<8x32xf32>
    %cst_134 = arith.constant 2.000000e+00 : f32
    %563 = vector.broadcast %cst_134 : f32 to vector<8x32xf32>
    %564 = arith.mulf %563, %562 : vector<8x32xf32>
    %cst_135 = arith.constant 1.000000e+00 : f32
    %565 = vector.broadcast %cst_135 : f32 to vector<8x32xf32>
    %566 = arith.subf %564, %565 : vector<8x32xf32>
    %567 = vector.extract_strided_slice %559 {offsets = [0, 96], sizes = [8, 32], strides = [1, 1]} : vector<8x128xf32> to vector<8x32xf32>
    %568 = arith.mulf %561, %526 : vector<8x32xf32>
    %569 = arith.mulf %560, %566 : vector<8x32xf32>
    %570 = arith.addf %568, %569 : vector<8x32xf32>
    %571 = math.tanh %570 : vector<8x32xf32>
    %572 = arith.mulf %567, %571 : vector<8x32xf32>
    %cst_136 = arith.constant dense<0.000000e+00> : vector<8x128xf32>
    %573 = tpu.matmul %572, %13, %cst_136 {dimension_numbers = #tpu.dot_dimension_numbers<[1], [0], [0], [1], [0, 0, 1, 1], [], []>} : vector<8x32xf32>, vector<32x128xf32>, vector<8x128xf32> -> vector<8x128xf32>
    %574 = arith.addf %550, %573 : vector<8x128xf32>
    %575 = arith.addf %574, %17 : vector<8x128xf32>
    %576 = arith.negf %575 : vector<8x128xf32>
    %577 = math.exp %576 : vector<8x128xf32>
    %cst_137 = arith.constant 1.000000e+00 : f32
    %578 = vector.broadcast %cst_137 : f32 to vector<8x128xf32>
    %579 = arith.addf %578, %577 : vector<8x128xf32>
    %580 = arith.divf %578, %579 : vector<8x128xf32>
    %581 = vector.extract_strided_slice %580 {offsets = [0, 0], sizes = [8, 32], strides = [1, 1]} : vector<8x128xf32> to vector<8x32xf32>
    %582 = vector.extract_strided_slice %580 {offsets = [0, 32], sizes = [8, 32], strides = [1, 1]} : vector<8x128xf32> to vector<8x32xf32>
    %583 = vector.extract_strided_slice %580 {offsets = [0, 64], sizes = [8, 32], strides = [1, 1]} : vector<8x128xf32> to vector<8x32xf32>
    %cst_138 = arith.constant 2.000000e+00 : f32
    %584 = vector.broadcast %cst_138 : f32 to vector<8x32xf32>
    %585 = arith.mulf %584, %583 : vector<8x32xf32>
    %cst_139 = arith.constant 1.000000e+00 : f32
    %586 = vector.broadcast %cst_139 : f32 to vector<8x32xf32>
    %587 = arith.subf %585, %586 : vector<8x32xf32>
    %588 = vector.extract_strided_slice %580 {offsets = [0, 96], sizes = [8, 32], strides = [1, 1]} : vector<8x128xf32> to vector<8x32xf32>
    %589 = arith.mulf %582, %547 : vector<8x32xf32>
    %590 = arith.mulf %581, %587 : vector<8x32xf32>
    %591 = arith.addf %589, %590 : vector<8x32xf32>
    %592 = math.tanh %591 : vector<8x32xf32>
    %593 = arith.mulf %588, %592 : vector<8x32xf32>
    %cst_140 = arith.constant dense<0.000000e+00> : vector<8x128xf32>
    %594 = tpu.matmul %593, %14, %cst_140 {dimension_numbers = #tpu.dot_dimension_numbers<[1], [0], [0], [1], [0, 0, 1, 1], [], []>} : vector<8x32xf32>, vector<32x128xf32>, vector<8x128xf32> -> vector<8x128xf32>
    %595 = vector.extract_strided_slice %11 {offsets = [13, 0, 0], sizes = [1, 8, 128], strides = [1, 1, 1]} : vector<16x8x128xf32> to vector<1x8x128xf32>
    %596 = vector.shape_cast %595 : vector<1x8x128xf32> to vector<8x128xf32>
    %cst_141 = arith.constant dense<0.000000e+00> : vector<8x128xf32>
    %597 = tpu.matmul %572, %12, %cst_141 {dimension_numbers = #tpu.dot_dimension_numbers<[1], [0], [0], [1], [0, 0, 1, 1], [], []>} : vector<8x32xf32>, vector<32x128xf32>, vector<8x128xf32> -> vector<8x128xf32>
    %598 = arith.addf %596, %597 : vector<8x128xf32>
    %599 = arith.negf %598 : vector<8x128xf32>
    %600 = math.exp %599 : vector<8x128xf32>
    %cst_142 = arith.constant 1.000000e+00 : f32
    %601 = vector.broadcast %cst_142 : f32 to vector<8x128xf32>
    %602 = arith.addf %601, %600 : vector<8x128xf32>
    %603 = arith.divf %601, %602 : vector<8x128xf32>
    %604 = vector.extract_strided_slice %603 {offsets = [0, 0], sizes = [8, 32], strides = [1, 1]} : vector<8x128xf32> to vector<8x32xf32>
    %605 = vector.extract_strided_slice %603 {offsets = [0, 32], sizes = [8, 32], strides = [1, 1]} : vector<8x128xf32> to vector<8x32xf32>
    %606 = vector.extract_strided_slice %603 {offsets = [0, 64], sizes = [8, 32], strides = [1, 1]} : vector<8x128xf32> to vector<8x32xf32>
    %cst_143 = arith.constant 2.000000e+00 : f32
    %607 = vector.broadcast %cst_143 : f32 to vector<8x32xf32>
    %608 = arith.mulf %607, %606 : vector<8x32xf32>
    %cst_144 = arith.constant 1.000000e+00 : f32
    %609 = vector.broadcast %cst_144 : f32 to vector<8x32xf32>
    %610 = arith.subf %608, %609 : vector<8x32xf32>
    %611 = vector.extract_strided_slice %603 {offsets = [0, 96], sizes = [8, 32], strides = [1, 1]} : vector<8x128xf32> to vector<8x32xf32>
    %612 = arith.mulf %605, %570 : vector<8x32xf32>
    %613 = arith.mulf %604, %610 : vector<8x32xf32>
    %614 = arith.addf %612, %613 : vector<8x32xf32>
    %615 = math.tanh %614 : vector<8x32xf32>
    %616 = arith.mulf %611, %615 : vector<8x32xf32>
    %cst_145 = arith.constant dense<0.000000e+00> : vector<8x128xf32>
    %617 = tpu.matmul %616, %13, %cst_145 {dimension_numbers = #tpu.dot_dimension_numbers<[1], [0], [0], [1], [0, 0, 1, 1], [], []>} : vector<8x32xf32>, vector<32x128xf32>, vector<8x128xf32> -> vector<8x128xf32>
    %618 = arith.addf %594, %617 : vector<8x128xf32>
    %619 = arith.addf %618, %17 : vector<8x128xf32>
    %620 = arith.negf %619 : vector<8x128xf32>
    %621 = math.exp %620 : vector<8x128xf32>
    %cst_146 = arith.constant 1.000000e+00 : f32
    %622 = vector.broadcast %cst_146 : f32 to vector<8x128xf32>
    %623 = arith.addf %622, %621 : vector<8x128xf32>
    %624 = arith.divf %622, %623 : vector<8x128xf32>
    %625 = vector.extract_strided_slice %624 {offsets = [0, 0], sizes = [8, 32], strides = [1, 1]} : vector<8x128xf32> to vector<8x32xf32>
    %626 = vector.extract_strided_slice %624 {offsets = [0, 32], sizes = [8, 32], strides = [1, 1]} : vector<8x128xf32> to vector<8x32xf32>
    %627 = vector.extract_strided_slice %624 {offsets = [0, 64], sizes = [8, 32], strides = [1, 1]} : vector<8x128xf32> to vector<8x32xf32>
    %cst_147 = arith.constant 2.000000e+00 : f32
    %628 = vector.broadcast %cst_147 : f32 to vector<8x32xf32>
    %629 = arith.mulf %628, %627 : vector<8x32xf32>
    %cst_148 = arith.constant 1.000000e+00 : f32
    %630 = vector.broadcast %cst_148 : f32 to vector<8x32xf32>
    %631 = arith.subf %629, %630 : vector<8x32xf32>
    %632 = vector.extract_strided_slice %624 {offsets = [0, 96], sizes = [8, 32], strides = [1, 1]} : vector<8x128xf32> to vector<8x32xf32>
    %633 = arith.mulf %626, %591 : vector<8x32xf32>
    %634 = arith.mulf %625, %631 : vector<8x32xf32>
    %635 = arith.addf %633, %634 : vector<8x32xf32>
    %636 = math.tanh %635 : vector<8x32xf32>
    %637 = arith.mulf %632, %636 : vector<8x32xf32>
    %cst_149 = arith.constant dense<0.000000e+00> : vector<8x128xf32>
    %638 = tpu.matmul %637, %14, %cst_149 {dimension_numbers = #tpu.dot_dimension_numbers<[1], [0], [0], [1], [0, 0, 1, 1], [], []>} : vector<8x32xf32>, vector<32x128xf32>, vector<8x128xf32> -> vector<8x128xf32>
    %639 = vector.extract_strided_slice %11 {offsets = [14, 0, 0], sizes = [1, 8, 128], strides = [1, 1, 1]} : vector<16x8x128xf32> to vector<1x8x128xf32>
    %640 = vector.shape_cast %639 : vector<1x8x128xf32> to vector<8x128xf32>
    %cst_150 = arith.constant dense<0.000000e+00> : vector<8x128xf32>
    %641 = tpu.matmul %616, %12, %cst_150 {dimension_numbers = #tpu.dot_dimension_numbers<[1], [0], [0], [1], [0, 0, 1, 1], [], []>} : vector<8x32xf32>, vector<32x128xf32>, vector<8x128xf32> -> vector<8x128xf32>
    %642 = arith.addf %640, %641 : vector<8x128xf32>
    %643 = arith.negf %642 : vector<8x128xf32>
    %644 = math.exp %643 : vector<8x128xf32>
    %cst_151 = arith.constant 1.000000e+00 : f32
    %645 = vector.broadcast %cst_151 : f32 to vector<8x128xf32>
    %646 = arith.addf %645, %644 : vector<8x128xf32>
    %647 = arith.divf %645, %646 : vector<8x128xf32>
    %648 = vector.extract_strided_slice %647 {offsets = [0, 0], sizes = [8, 32], strides = [1, 1]} : vector<8x128xf32> to vector<8x32xf32>
    %649 = vector.extract_strided_slice %647 {offsets = [0, 32], sizes = [8, 32], strides = [1, 1]} : vector<8x128xf32> to vector<8x32xf32>
    %650 = vector.extract_strided_slice %647 {offsets = [0, 64], sizes = [8, 32], strides = [1, 1]} : vector<8x128xf32> to vector<8x32xf32>
    %cst_152 = arith.constant 2.000000e+00 : f32
    %651 = vector.broadcast %cst_152 : f32 to vector<8x32xf32>
    %652 = arith.mulf %651, %650 : vector<8x32xf32>
    %cst_153 = arith.constant 1.000000e+00 : f32
    %653 = vector.broadcast %cst_153 : f32 to vector<8x32xf32>
    %654 = arith.subf %652, %653 : vector<8x32xf32>
    %655 = vector.extract_strided_slice %647 {offsets = [0, 96], sizes = [8, 32], strides = [1, 1]} : vector<8x128xf32> to vector<8x32xf32>
    %656 = arith.mulf %649, %614 : vector<8x32xf32>
    %657 = arith.mulf %648, %654 : vector<8x32xf32>
    %658 = arith.addf %656, %657 : vector<8x32xf32>
    %659 = math.tanh %658 : vector<8x32xf32>
    %660 = arith.mulf %655, %659 : vector<8x32xf32>
    %cst_154 = arith.constant dense<0.000000e+00> : vector<8x128xf32>
    %661 = tpu.matmul %660, %13, %cst_154 {dimension_numbers = #tpu.dot_dimension_numbers<[1], [0], [0], [1], [0, 0, 1, 1], [], []>} : vector<8x32xf32>, vector<32x128xf32>, vector<8x128xf32> -> vector<8x128xf32>
    %662 = arith.addf %638, %661 : vector<8x128xf32>
    %663 = arith.addf %662, %17 : vector<8x128xf32>
    %664 = arith.negf %663 : vector<8x128xf32>
    %665 = math.exp %664 : vector<8x128xf32>
    %cst_155 = arith.constant 1.000000e+00 : f32
    %666 = vector.broadcast %cst_155 : f32 to vector<8x128xf32>
    %667 = arith.addf %666, %665 : vector<8x128xf32>
    %668 = arith.divf %666, %667 : vector<8x128xf32>
    %669 = vector.extract_strided_slice %668 {offsets = [0, 0], sizes = [8, 32], strides = [1, 1]} : vector<8x128xf32> to vector<8x32xf32>
    %670 = vector.extract_strided_slice %668 {offsets = [0, 32], sizes = [8, 32], strides = [1, 1]} : vector<8x128xf32> to vector<8x32xf32>
    %671 = vector.extract_strided_slice %668 {offsets = [0, 64], sizes = [8, 32], strides = [1, 1]} : vector<8x128xf32> to vector<8x32xf32>
    %cst_156 = arith.constant 2.000000e+00 : f32
    %672 = vector.broadcast %cst_156 : f32 to vector<8x32xf32>
    %673 = arith.mulf %672, %671 : vector<8x32xf32>
    %cst_157 = arith.constant 1.000000e+00 : f32
    %674 = vector.broadcast %cst_157 : f32 to vector<8x32xf32>
    %675 = arith.subf %673, %674 : vector<8x32xf32>
    %676 = vector.extract_strided_slice %668 {offsets = [0, 96], sizes = [8, 32], strides = [1, 1]} : vector<8x128xf32> to vector<8x32xf32>
    %677 = arith.mulf %670, %635 : vector<8x32xf32>
    %678 = arith.mulf %669, %675 : vector<8x32xf32>
    %679 = arith.addf %677, %678 : vector<8x32xf32>
    %680 = math.tanh %679 : vector<8x32xf32>
    %681 = arith.mulf %676, %680 : vector<8x32xf32>
    %cst_158 = arith.constant dense<0.000000e+00> : vector<8x128xf32>
    %682 = tpu.matmul %681, %14, %cst_158 {dimension_numbers = #tpu.dot_dimension_numbers<[1], [0], [0], [1], [0, 0, 1, 1], [], []>} : vector<8x32xf32>, vector<32x128xf32>, vector<8x128xf32> -> vector<8x128xf32>
    %683 = vector.extract_strided_slice %11 {offsets = [15, 0, 0], sizes = [1, 8, 128], strides = [1, 1, 1]} : vector<16x8x128xf32> to vector<1x8x128xf32>
    %684 = vector.shape_cast %683 : vector<1x8x128xf32> to vector<8x128xf32>
    %cst_159 = arith.constant dense<0.000000e+00> : vector<8x128xf32>
    %685 = tpu.matmul %660, %12, %cst_159 {dimension_numbers = #tpu.dot_dimension_numbers<[1], [0], [0], [1], [0, 0, 1, 1], [], []>} : vector<8x32xf32>, vector<32x128xf32>, vector<8x128xf32> -> vector<8x128xf32>
    %686 = arith.addf %684, %685 : vector<8x128xf32>
    %687 = arith.negf %686 : vector<8x128xf32>
    %688 = math.exp %687 : vector<8x128xf32>
    %cst_160 = arith.constant 1.000000e+00 : f32
    %689 = vector.broadcast %cst_160 : f32 to vector<8x128xf32>
    %690 = arith.addf %689, %688 : vector<8x128xf32>
    %691 = arith.divf %689, %690 : vector<8x128xf32>
    %692 = vector.extract_strided_slice %691 {offsets = [0, 0], sizes = [8, 32], strides = [1, 1]} : vector<8x128xf32> to vector<8x32xf32>
    %693 = vector.extract_strided_slice %691 {offsets = [0, 32], sizes = [8, 32], strides = [1, 1]} : vector<8x128xf32> to vector<8x32xf32>
    %694 = vector.extract_strided_slice %691 {offsets = [0, 64], sizes = [8, 32], strides = [1, 1]} : vector<8x128xf32> to vector<8x32xf32>
    %cst_161 = arith.constant 2.000000e+00 : f32
    %695 = vector.broadcast %cst_161 : f32 to vector<8x32xf32>
    %696 = arith.mulf %695, %694 : vector<8x32xf32>
    %cst_162 = arith.constant 1.000000e+00 : f32
    %697 = vector.broadcast %cst_162 : f32 to vector<8x32xf32>
    %698 = arith.subf %696, %697 : vector<8x32xf32>
    %699 = vector.extract_strided_slice %691 {offsets = [0, 96], sizes = [8, 32], strides = [1, 1]} : vector<8x128xf32> to vector<8x32xf32>
    %700 = arith.mulf %693, %658 : vector<8x32xf32>
    %701 = arith.mulf %692, %698 : vector<8x32xf32>
    %702 = arith.addf %700, %701 : vector<8x32xf32>
    %703 = math.tanh %702 : vector<8x32xf32>
    %704 = arith.mulf %699, %703 : vector<8x32xf32>
    %cst_163 = arith.constant dense<0.000000e+00> : vector<8x128xf32>
    %705 = tpu.matmul %704, %13, %cst_163 {dimension_numbers = #tpu.dot_dimension_numbers<[1], [0], [0], [1], [0, 0, 1, 1], [], []>} : vector<8x32xf32>, vector<32x128xf32>, vector<8x128xf32> -> vector<8x128xf32>
    %706 = arith.addf %682, %705 : vector<8x128xf32>
    %707 = arith.addf %706, %17 : vector<8x128xf32>
    %708 = arith.negf %707 : vector<8x128xf32>
    %709 = math.exp %708 : vector<8x128xf32>
    %cst_164 = arith.constant 1.000000e+00 : f32
    %710 = vector.broadcast %cst_164 : f32 to vector<8x128xf32>
    %711 = arith.addf %710, %709 : vector<8x128xf32>
    %712 = arith.divf %710, %711 : vector<8x128xf32>
    %713 = vector.extract_strided_slice %712 {offsets = [0, 0], sizes = [8, 32], strides = [1, 1]} : vector<8x128xf32> to vector<8x32xf32>
    %714 = vector.extract_strided_slice %712 {offsets = [0, 32], sizes = [8, 32], strides = [1, 1]} : vector<8x128xf32> to vector<8x32xf32>
    %715 = vector.extract_strided_slice %712 {offsets = [0, 64], sizes = [8, 32], strides = [1, 1]} : vector<8x128xf32> to vector<8x32xf32>
    %cst_165 = arith.constant 2.000000e+00 : f32
    %716 = vector.broadcast %cst_165 : f32 to vector<8x32xf32>
    %717 = arith.mulf %716, %715 : vector<8x32xf32>
    %cst_166 = arith.constant 1.000000e+00 : f32
    %718 = vector.broadcast %cst_166 : f32 to vector<8x32xf32>
    %719 = arith.subf %717, %718 : vector<8x32xf32>
    %720 = vector.extract_strided_slice %712 {offsets = [0, 96], sizes = [8, 32], strides = [1, 1]} : vector<8x128xf32> to vector<8x32xf32>
    %721 = arith.mulf %714, %679 : vector<8x32xf32>
    %722 = arith.mulf %713, %719 : vector<8x32xf32>
    %723 = arith.addf %721, %722 : vector<8x32xf32>
    %724 = math.tanh %723 : vector<8x32xf32>
    %725 = arith.mulf %720, %724 : vector<8x32xf32>
    %c0_167 = arith.constant 0 : index
    %c0_168 = arith.constant 0 : index
    %726 = vector.load %arg12[%c0_167, %c0_168] : memref<8x32xf32, #tpu.memory_space<vmem>>, vector<8x32xf32>
    tpu.vector_store %arg12[%c0_167, %c0_168], %704 {strides = array<i32>} : memref<8x32xf32, #tpu.memory_space<vmem>>, vector<8x32xf32>,
    %c0_169 = arith.constant 0 : index
    %c0_170 = arith.constant 0 : index
    %727 = vector.load %arg13[%c0_169, %c0_170] : memref<8x32xf32, #tpu.memory_space<vmem>>, vector<8x32xf32>
    tpu.vector_store %arg13[%c0_169, %c0_170], %702 {strides = array<i32>} : memref<8x32xf32, #tpu.memory_space<vmem>>, vector<8x32xf32>,
    %c0_171 = arith.constant 0 : index
    %c0_172 = arith.constant 0 : index
    %728 = vector.load %arg14[%c0_171, %c0_172] : memref<8x32xf32, #tpu.memory_space<vmem>>, vector<8x32xf32>
    tpu.vector_store %arg14[%c0_171, %c0_172], %725 {strides = array<i32>} : memref<8x32xf32, #tpu.memory_space<vmem>>, vector<8x32xf32>,
    %c0_173 = arith.constant 0 : index
    %c0_174 = arith.constant 0 : index
    %729 = vector.load %arg15[%c0_173, %c0_174] : memref<8x32xf32, #tpu.memory_space<vmem>>, vector<8x32xf32>
    tpu.vector_store %arg15[%c0_173, %c0_174], %723 {strides = array<i32>} : memref<8x32xf32, #tpu.memory_space<vmem>>, vector<8x32xf32>,
    %c1_i32 = arith.constant 1 : i32
    %730 = arith.cmpi eq, %arg1, %c1_i32 : i32
    %731 = arith.extui %730 : i1 to i32
    %c0_i32_175 = arith.constant 0 : i32
    %732 = arith.cmpi ne, %731, %c0_i32_175 : i32
    scf.if %732 {
      %c0_176 = arith.constant 0 : index
      %c0_177 = arith.constant 0 : index
      %733 = vector.load %arg9[%c0_176, %c0_177] : memref<1x32xf32, #tpu.memory_space<vmem>>, vector<1x32xf32>
      %734 = vector.broadcast %733 : vector<1x32xf32> to vector<8x32xf32>
      %735 = arith.mulf %725, %734 : vector<8x32xf32>
      %cst_178 = arith.constant dense<0.000000e+00> : vector<8xf32>
      %736 = vector.multi_reduction <add>, %735, %cst_178 [1] : vector<8x32xf32> to vector<8xf32>
      %737 = vector.shape_cast %736 : vector<8xf32> to vector<8x1xf32>
      %c0_179 = arith.constant 0 : index
      %c0_180 = arith.constant 0 : index
      %738 = vector.load %arg10[%c0_179, %c0_180] : memref<1x1xf32, #tpu.memory_space<vmem>>, vector<1x1xf32>
      %739 = vector.broadcast %738 : vector<1x1xf32> to vector<8x1xf32>
      %740 = arith.addf %737, %739 : vector<8x1xf32>
      %c0_181 = arith.constant 0 : index
      %c0_182 = arith.constant 0 : index
      %741 = vector.load %arg11[%c0_181, %c0_182] : memref<8x1xf32, #tpu.memory_space<vmem>>, vector<8x1xf32>
      tpu.vector_store %arg11[%c0_181, %c0_182], %740 {strides = array<i32>} : memref<8x1xf32, #tpu.memory_space<vmem>>, vector<8x1xf32>,
    } else {
    }
    return
  }
  func.func @transform_0(%arg0: i32, %arg1: i32) -> (i32, i32, i32) {
    %c0_i32 = arith.constant 0 : i32
    %c0_i32_0 = arith.constant 0 : i32
    return %arg0, %arg1, %c0_i32 : i32, i32, i32
  }
  func.func @transform_1(%arg0: i32, %arg1: i32) -> (i32, i32) {
    %c0_i32 = arith.constant 0 : i32
    %c0_i32_0 = arith.constant 0 : i32
    %c0_i32_1 = arith.constant 0 : i32
    return %c0_i32, %c0_i32_0 : i32, i32
  }
  func.func @transform_2(%arg0: i32, %arg1: i32) -> (i32, i32) {
    %c0_i32 = arith.constant 0 : i32
    %c0_i32_0 = arith.constant 0 : i32
    %c0_i32_1 = arith.constant 0 : i32
    return %c0_i32, %c0_i32_0 : i32, i32
  }
  func.func @transform_3(%arg0: i32, %arg1: i32) -> (i32, i32) {
    %c0_i32 = arith.constant 0 : i32
    %c0_i32_0 = arith.constant 0 : i32
    %c0_i32_1 = arith.constant 0 : i32
    return %c0_i32, %c0_i32_0 : i32, i32
  }
  func.func @transform_4(%arg0: i32, %arg1: i32) -> (i32, i32) {
    %c0_i32 = arith.constant 0 : i32
    %c0_i32_0 = arith.constant 0 : i32
    %c0_i32_1 = arith.constant 0 : i32
    return %c0_i32, %c0_i32_0 : i32, i32
  }
  func.func @transform_5(%arg0: i32, %arg1: i32) -> (i32, i32) {
    %c0_i32 = arith.constant 0 : i32
    %c0_i32_0 = arith.constant 0 : i32
    %c0_i32_1 = arith.constant 0 : i32
    return %c0_i32, %c0_i32_0 : i32, i32
  }
  func.func @transform_6(%arg0: i32, %arg1: i32) -> (i32, i32) {
    %c0_i32 = arith.constant 0 : i32
    %c0_i32_0 = arith.constant 0 : i32
    %c0_i32_1 = arith.constant 0 : i32
    return %c0_i32, %c0_i32_0 : i32, i32
  }
  func.func @transform_7(%arg0: i32, %arg1: i32) -> (i32, i32) {
    %c0_i32 = arith.constant 0 : i32
    %c0_i32_0 = arith.constant 0 : i32
    %c0_i32_1 = arith.constant 0 : i32
    return %c0_i32, %c0_i32_0 : i32, i32
  }
  func.func @transform_8(%arg0: i32, %arg1: i32) -> (i32, i32) {
    %c0_i32 = arith.constant 0 : i32
    %c0_i32_0 = arith.constant 0 : i32
    %c0_i32_1 = arith.constant 0 : i32
    return %c0_i32, %c0_i32_0 : i32, i32
  }
  func.func @transform_9(%arg0: i32, %arg1: i32) -> (i32, i32) {
    %c0_i32 = arith.constant 0 : i32
    %c0_i32_0 = arith.constant 0 : i32
    return %arg0, %c0_i32 : i32, i32
  }
}

</mosaic_0001>

<llo_original>
// kernel: tpu_custom_call.1
$region0: #{tpu_custom_call.1}
  #allocation0 [shape = 'u32[]', space=smem, size = 0x4, offset = 0x4, fixed_abs, tag = 'smem constant byte address 0x4 - core index']
  #allocation1 [shape = 'u32[144,128]{1,0:T(1,128)}', space=vmem, size = 0x12000, scoped, tag = 'internal scratch']
  #allocation2 [shape = 'f32[8,32]{1,0:T(8,128)}', space=vmem, size = 0x1000, scoped, tag = 'scratch operand']
  #allocation3 [shape = 'f32[8,32]{1,0:T(8,128)}', space=vmem, size = 0x1000, scoped, tag = 'scratch operand']
  #allocation4 [shape = 'f32[8,32]{1,0:T(8,128)}', space=vmem, size = 0x1000, scoped, tag = 'scratch operand']
  #allocation5 [shape = 'f32[8,32]{1,0:T(8,128)}', space=vmem, size = 0x1000, scoped, tag = 'scratch operand']
  #allocation6 [shape = 'f32[1,1]{1,0:T(1,128)S(1)}', space=vmem, size = 0x200, scoped, tag = 'scoped memory for tpu_custom_call.1']
  %s0 = inlined_call_operand.vmem [shape: f32[8,32,16], index: 0, kind: input, shape index: {}]
  %s1 = inlined_call_operand.vmem [shape: f32[16,128], index: 1, kind: input, shape index: {}]
  %s2 = inlined_call_operand.vmem [shape: f32[32,128], index: 2, kind: input, shape index: {}]
  %s3 = inlined_call_operand.vmem [shape: f32[1,128], index: 3, kind: input, shape index: {}]
  %s4 = inlined_call_operand.vmem [shape: f32[32,128], index: 4, kind: input, shape index: {}]
  %s5 = inlined_call_operand.vmem [shape: f32[32,128], index: 5, kind: input, shape index: {}]
  %s6 = inlined_call_operand.vmem [shape: f32[1,128], index: 6, kind: input, shape index: {}]
  %s7 = inlined_call_operand.vmem [shape: f32[1,32], index: 7, kind: input, shape index: {}]
  %s8 = inlined_call_operand.<no memory space> [shape: f32[1,1], index: 8, kind: input, shape index: {}]
  %s9 = inlined_call_operand.vmem [shape: f32[8,1], index: 9, kind: output, shape index: {}]
  %s10 = sld [smem:[#allocation0]]
  $region115: #{tpu_custom_call.1} parent=0
    _
  %s12 = ssub.s32 1, %s10
  %s13 = scalar_select 0, %s12, %s10
  %v14 = vstv %s8
  %15 = vst [vmem:[#allocation6] sm:$0x1] %v14
  $region1: #{tpu_custom_call.1} parent=0
    #allocation7 [shape = 'u8[131072]{0}', space=vmem, size = 0x20000, scoped, tag = 'input window, operand 0']
    loop: start=0, step=1, limit=4
    $region2: #{tpu_custom_call.1} parent=1 // loop_pre_header
      _
    $region3: #{tpu_custom_call.1} parent=1 // loop_header
      %s17 = sphi 0, %s21
      %p18 = scmp.ge.s32.totalorder %s17, 4
      %s24 = sphi 0, %s36
      %s25 = sphi 0, %s32
      %s26 = sphi 0, %s24
      %s27 = sphi 0, %s25
      %s28 = sphi 0, %s26
      %s29 = sphi 0, %s27
      %s41 = sphi 0, %s43
      %s44 = sphi 0, %s41
      %s45 = sphi 0, %s44
      %s61 = sphi 0, %s45
      %s65 = sphi 0, %s65
      %s67 = sphi 0, %s65
      %s68 = sphi 0, %s67
      %s82 = sphi 0, %s68
      %s86 = sphi 0, %s86
      %s88 = sphi 0, %s86
      %s89 = sphi 0, %s88
      %s103 = sphi 0, %s89
      %s107 = sphi 0, %s107
      %s109 = sphi 0, %s107
      %s110 = sphi 0, %s109
      %s124 = sphi 0, %s110
      %s128 = sphi 0, %s128
      %s130 = sphi 0, %s128
      %s131 = sphi 0, %s130
      %s145 = sphi 0, %s131
      %s149 = sphi 0, %s149
      %s151 = sphi 0, %s149
      %s152 = sphi 0, %s151
      %s166 = sphi 0, %s152
      %s170 = sphi 0, %s170
      %s172 = sphi 0, %s170
      %s173 = sphi 0, %s172
      %s187 = sphi 0, %s173
      %s191 = sphi 0, %s191
      %s193 = sphi 0, %s191
      %s194 = sphi 0, %s193
      %s208 = sphi 0, %s194
      %s212 = sphi 0, %s212
      %s214 = sphi 0, %s212
      %s215 = sphi 0, %s214
      %s229 = sphi 0, %s215
      %s235 = sphi 0, %s237
      %s238 = sphi 0, %s235
      %s239 = sphi 0, %s238
      %s255 = sphi 0, %s239
    $region4: #{tpu_custom_call.1} parent=1 // loop_header_branch
      %20 = sbr.rel (%p18) target = $region8
    $region5: #{tpu_custom_call.1} parent=1 // loop_body
      %s22 = ssub.s32 %s17, 1
      %s23 = ssub.s32 %s17, 2
      %s30 = sadd.s32 1, %s25
      %p31 = scmp.ge.s32.totalorder %s30, 2
      %s32 = scalar_select %p31, 0, %s30
      %s33 = sadd.s32 1, %s24
      %s34 = scalar_select %p31, %s33, %s24
      %p35 = scmp.ge.s32.totalorder %s34, 1
      %s36 = scalar_select %p35, 0, %s34
      %s37 = ssub.s32 %s24, %s36
      %s38 = ssub.s32 %s25, %s32
      %s39 = sor.u32 %s37, %s38
      %p40 = scmp.eq.s32.totalorder %s39, 0
      %s42 = sadd.s32 %s41, 1
      %s43 = scalar_select %p40, %s41, %s42
      %p46 = pneg %p40
      %p47 = scmp.eq.s32.totalorder %s17, 1
      %p48 = por %p46, %p47
      %p49 = scmp.ne.s32.totalorder %s41, %s44
      %p50 = scmp.eq.s32.totalorder %s17, 0
      %p51 = por %p49, %p50
      %p52 = scmp.ne.s32.totalorder %s41, %s44
      %p53 = scmp.eq.s32.totalorder %s22, 1
      %p54 = por %p52, %p53
      %p55 = scmp.ne.s32.totalorder %s44, %s45
      %p56 = scmp.eq.s32.totalorder %s22, 0
      %p57 = por %p55, %p56
      %p58 = scmp.ne.s32.totalorder %s44, %s45
      %p59 = scmp.eq.s32.totalorder %s23, 1
      %p60 = por %p58, %p59
      %p62 = scmp.ne.s32.totalorder %s45, %s61
      %p63 = scmp.eq.s32.totalorder %s23, 0
      %p64 = por %p62, %p63
      %s66 = sadd.s32 %s65, 1
      %p69 = scmp.eq.s32.totalorder %s17, 1
      %p70 = scmp.ne.s32.totalorder %s65, %s67
      %p71 = scmp.eq.s32.totalorder %s17, 0
      %p72 = por %p70, %p71
      %p73 = scmp.ne.s32.totalorder %s65, %s67
      %p74 = scmp.eq.s32.totalorder %s22, 1
      %p75 = por %p73, %p74
      %p76 = scmp.ne.s32.totalorder %s67, %s68
      %p77 = scmp.eq.s32.totalorder %s22, 0
      %p78 = por %p76, %p77
      %p79 = scmp.ne.s32.totalorder %s67, %s68
      %p80 = scmp.eq.s32.totalorder %s23, 1
      %p81 = por %p79, %p80
      %p83 = scmp.ne.s32.totalorder %s68, %s82
      %p84 = scmp.eq.s32.totalorder %s23, 0
      %p85 = por %p83, %p84
      %s87 = sadd.s32 %s86, 1
      %p90 = scmp.eq.s32.totalorder %s17, 1
      %p91 = scmp.ne.s32.totalorder %s86, %s88
      %p92 = scmp.eq.s32.totalorder %s17, 0
      %p93 = por %p91, %p92
      %p94 = scmp.ne.s32.totalorder %s86, %s88
      %p95 = scmp.eq.s32.totalorder %s22, 1
      %p96 = por %p94, %p95
      %p97 = scmp.ne.s32.totalorder %s88, %s89
      %p98 = scmp.eq.s32.totalorder %s22, 0
      %p99 = por %p97, %p98
      %p100 = scmp.ne.s32.totalorder %s88, %s89
      %p101 = scmp.eq.s32.totalorder %s23, 1
      %p102 = por %p100, %p101
      %p104 = scmp.ne.s32.totalorder %s89, %s103
      %p105 = scmp.eq.s32.totalorder %s23, 0
      %p106 = por %p104, %p105
      %s108 = sadd.s32 %s107, 1
      %p111 = scmp.eq.s32.totalorder %s17, 1
      %p112 = scmp.ne.s32.totalorder %s107, %s109
      %p113 = scmp.eq.s32.totalorder %s17, 0
      %p114 = por %p112, %p113
      %p115 = scmp.ne.s32.totalorder %s107, %s109
      %p116 = scmp.eq.s32.totalorder %s22, 1
      %p117 = por %p115, %p116
      %p118 = scmp.ne.s32.totalorder %s109, %s110
      %p119 = scmp.eq.s32.totalorder %s22, 0
      %p120 = por %p118, %p119
      %p121 = scmp.ne.s32.totalorder %s109, %s110
      %p122 = scmp.eq.s32.totalorder %s23, 1
      %p123 = por %p121, %p122
      %p125 = scmp.ne.s32.totalorder %s110, %s124
      %p126 = scmp.eq.s32.totalorder %s23, 0
      %p127 = por %p125, %p126
      %s129 = sadd.s32 %s128, 1
      %p132 = scmp.eq.s32.totalorder %s17, 1
      %p133 = scmp.ne.s32.totalorder %s128, %s130
      %p134 = scmp.eq.s32.totalorder %s17, 0
      %p135 = por %p133, %p134
      %p136 = scmp.ne.s32.totalorder %s128, %s130
      %p137 = scmp.eq.s32.totalorder %s22, 1
      %p138 = por %p136, %p137
      %p139 = scmp.ne.s32.totalorder %s130, %s131
      %p140 = scmp.eq.s32.totalorder %s22, 0
      %p141 = por %p139, %p140
      %p142 = scmp.ne.s32.totalorder %s130, %s131
      %p143 = scmp.eq.s32.totalorder %s23, 1
      %p144 = por %p142, %p143
      %p146 = scmp.ne.s32.totalorder %s131, %s145
      %p147 = scmp.eq.s32.totalorder %s23, 0
      %p148 = por %p146, %p147
      %s150 = sadd.s32 %s149, 1
      %p153 = scmp.eq.s32.totalorder %s17, 1
      %p154 = scmp.ne.s32.totalorder %s149, %s151
      %p155 = scmp.eq.s32.totalorder %s17, 0
      %p156 = por %p154, %p155
      %p157 = scmp.ne.s32.totalorder %s149, %s151
      %p158 = scmp.eq.s32.totalorder %s22, 1
      %p159 = por %p157, %p158
      %p160 = scmp.ne.s32.totalorder %s151, %s152
      %p161 = scmp.eq.s32.totalorder %s22, 0
      %p162 = por %p160, %p161
      %p163 = scmp.ne.s32.totalorder %s151, %s152
      %p164 = scmp.eq.s32.totalorder %s23, 1
      %p165 = por %p163, %p164
      %p167 = scmp.ne.s32.totalorder %s152, %s166
      %p168 = scmp.eq.s32.totalorder %s23, 0
      %p169 = por %p167, %p168
      %s171 = sadd.s32 %s170, 1
      %p174 = scmp.eq.s32.totalorder %s17, 1
      %p175 = scmp.ne.s32.totalorder %s170, %s172
      %p176 = scmp.eq.s32.totalorder %s17, 0
      %p177 = por %p175, %p176
      %p178 = scmp.ne.s32.totalorder %s170, %s172
      %p179 = scmp.eq.s32.totalorder %s22, 1
      %p180 = por %p178, %p179
      %p181 = scmp.ne.s32.totalorder %s172, %s173
      %p182 = scmp.eq.s32.totalorder %s22, 0
      %p183 = por %p181, %p182
      %p184 = scmp.ne.s32.totalorder %s172, %s173
      %p185 = scmp.eq.s32.totalorder %s23, 1
      %p186 = por %p184, %p185
      %p188 = scmp.ne.s32.totalorder %s173, %s187
      %p189 = scmp.eq.s32.totalorder %s23, 0
      %p190 = por %p188, %p189
      %s192 = sadd.s32 %s191, 1
      %p195 = scmp.eq.s32.totalorder %s17, 1
      %p196 = scmp.ne.s32.totalorder %s191, %s193
      %p197 = scmp.eq.s32.totalorder %s17, 0
      %p198 = por %p196, %p197
      %p199 = scmp.ne.s32.totalorder %s191, %s193
      %p200 = scmp.eq.s32.totalorder %s22, 1
      %p201 = por %p199, %p200
      %p202 = scmp.ne.s32.totalorder %s193, %s194
      %p203 = scmp.eq.s32.totalorder %s22, 0
      %p204 = por %p202, %p203
      %p205 = scmp.ne.s32.totalorder %s193, %s194
      %p206 = scmp.eq.s32.totalorder %s23, 1
      %p207 = por %p205, %p206
      %p209 = scmp.ne.s32.totalorder %s194, %s208
      %p210 = scmp.eq.s32.totalorder %s23, 0
      %p211 = por %p209, %p210
      %s213 = sadd.s32 %s212, 1
      %p216 = scmp.eq.s32.totalorder %s17, 1
      %p217 = scmp.ne.s32.totalorder %s212, %s214
      %p218 = scmp.eq.s32.totalorder %s17, 0
      %p219 = por %p217, %p218
      %p220 = scmp.ne.s32.totalorder %s212, %s214
      %p221 = scmp.eq.s32.totalorder %s22, 1
      %p222 = por %p220, %p221
      %p223 = scmp.ne.s32.totalorder %s214, %s215
      %p224 = scmp.eq.s32.totalorder %s22, 0
      %p225 = por %p223, %p224
      %p226 = scmp.ne.s32.totalorder %s214, %s215
      %p227 = scmp.eq.s32.totalorder %s23, 1
      %p228 = por %p226, %p227
      %p230 = scmp.ne.s32.totalorder %s215, %s229
      %p231 = scmp.eq.s32.totalorder %s23, 0
      %p232 = por %p230, %p231
      %s233 = ssub.s32 %s24, %s36
      %p234 = scmp.eq.s32.totalorder %s233, 0
      %s236 = sadd.s32 %s235, 1
      %s237 = scalar_select %p234, %s235, %s236
      %p240 = pneg %p234
      %p241 = scmp.eq.s32.totalorder %s17, 1
      %p242 = por %p240, %p241
      %p243 = scmp.ne.s32.totalorder %s235, %s238
      %p244 = scmp.eq.s32.totalorder %s17, 0
      %p245 = por %p243, %p244
      %p246 = scmp.ne.s32.totalorder %s235, %s238
      %p247 = scmp.eq.s32.totalorder %s22, 1
      %p248 = por %p246, %p247
      %p249 = scmp.ne.s32.totalorder %s238, %s239
      %p250 = scmp.eq.s32.totalorder %s22, 0
      %p251 = por %p249, %p250
      %p252 = scmp.ne.s32.totalorder %s238, %s239
      %p253 = scmp.eq.s32.totalorder %s23, 1
      %p254 = por %p252, %p253
      %p256 = scmp.ne.s32.totalorder %s239, %s255
      %p257 = scmp.eq.s32.totalorder %s23, 0
      %p258 = por %p256, %p257
      %p259 = scmp.le.s32.totalorder 1, %s17
      %p260 = scmp.lt.s32.totalorder %s17, 3
      %p261 = pnand %p259, %p260
      %p262 = pneg %p261
      // Predicated region
      $region9: #{tpu_custom_call.1} parent=5 // pred_check
        _
      $region10: #{tpu_custom_call.1} parent=5 // pred_check_branch
        %264 = sbr.rel (%p261) target = $region12
      $region11: #{tpu_custom_call.1} parent=5 // pred_region
        %s265 = ssub.s32 %s17, 1
        // Predicated region
        $region13: #{tpu_custom_call.1} parent=11 // pred_check
          %p266 = pneg %p78
        $region14: #{tpu_custom_call.1} parent=11 // pred_check_branch
          %268 = sbr.rel (%p266) target = $region16
        $region15: #{tpu_custom_call.1} parent=11 // pred_region
          _
        $region16: #{tpu_custom_call.1} parent=11 // pred_fallthru
          _
        // Predicated region
        $region17: #{tpu_custom_call.1} parent=11 // pred_check
          %p269 = pneg %p99
        $region18: #{tpu_custom_call.1} parent=11 // pred_check_branch
          %271 = sbr.rel (%p269) target = $region20
        $region19: #{tpu_custom_call.1} parent=11 // pred_region
          _
        $region20: #{tpu_custom_call.1} parent=11 // pred_fallthru
          _
        // Predicated region
        $region21: #{tpu_custom_call.1} parent=11 // pred_check
          %p272 = pneg %p120
        $region22: #{tpu_custom_call.1} parent=11 // pred_check_branch
          %274 = sbr.rel (%p272) target = $region24
        $region23: #{tpu_custom_call.1} parent=11 // pred_region
          _
        $region24: #{tpu_custom_call.1} parent=11 // pred_fallthru
          _
        // Predicated region
        $region25: #{tpu_custom_call.1} parent=11 // pred_check
          %p275 = pneg %p141
        $region26: #{tpu_custom_call.1} parent=11 // pred_check_branch
          %277 = sbr.rel (%p275) target = $region28
        $region27: #{tpu_custom_call.1} parent=11 // pred_region
          _
        $region28: #{tpu_custom_call.1} parent=11 // pred_fallthru
          _
        // Predicated region
        $region29: #{tpu_custom_call.1} parent=11 // pred_check
          %p278 = pneg %p162
        $region30: #{tpu_custom_call.1} parent=11 // pred_check_branch
          %280 = sbr.rel (%p278) target = $region32
        $region31: #{tpu_custom_call.1} parent=11 // pred_region
          _
        $region32: #{tpu_custom_call.1} parent=11 // pred_fallthru
          _
        // Predicated region
        $region33: #{tpu_custom_call.1} parent=11 // pred_check
          %p281 = pneg %p183
        $region34: #{tpu_custom_call.1} parent=11 // pred_check_branch
          %283 = sbr.rel (%p281) target = $region36
        $region35: #{tpu_custom_call.1} parent=11 // pred_region
          _
        $region36: #{tpu_custom_call.1} parent=11 // pred_fallthru
          _
        // Predicated region
        $region37: #{tpu_custom_call.1} parent=11 // pred_check
          %p284 = pneg %p204
        $region38: #{tpu_custom_call.1} parent=11 // pred_check_branch
          %286 = sbr.rel (%p284) target = $region40
        $region39: #{tpu_custom_call.1} parent=11 // pred_region
          _
        $region40: #{tpu_custom_call.1} parent=11 // pred_fallthru
          _
        // Predicated region
        $region41: #{tpu_custom_call.1} parent=11 // pred_check
          %p287 = pneg %p225
        $region42: #{tpu_custom_call.1} parent=11 // pred_check_branch
          %289 = sbr.rel (%p287) target = $region44
        $region43: #{tpu_custom_call.1} parent=11 // pred_region
          _
        $region44: #{tpu_custom_call.1} parent=11 // pred_fallthru
          _
      $region12: #{tpu_custom_call.1} parent=5 // pred_fallthru
        _
      %p290 = scmp.lt.s32.totalorder %s17, 2
      // Predicated region
      $region45: #{tpu_custom_call.1} parent=5 // pred_check
        %p291 = pneg %p290
      $region46: #{tpu_custom_call.1} parent=5 // pred_check_branch
        %293 = sbr.rel (%p291) target = $region48
      $region47: #{tpu_custom_call.1} parent=5 // pred_region
        // Predicated region
        $region49: #{tpu_custom_call.1} parent=47 // pred_check
          %p294 = pneg %p51
        $region50: #{tpu_custom_call.1} parent=47 // pred_check_branch
          %296 = sbr.rel (%p294) target = $region52
        $region51: #{tpu_custom_call.1} parent=47 // pred_region
          %s297 = sand.u32 %s41, 1
          %s298 = sand.u32 %s41, 1
          %s299 = smul.addr %s298, 128
          %s300 = scalar_lea.vmem [#allocation7], %s299
          %s301 = smul.u32 8, %s24
          %s302 = smul.u32 2, %s25
          %s303 = smul.addr %s301, 4
          %s304 = sadd.s32 %s302, %s303
          %s305 = smul.addr %s304, 8
          %s306 = scalar_lea.vmem %s0, %s305
          // Predicated region
          $region53: #{tpu_custom_call.1} parent=51 // pred_check
            _
          $region54: #{tpu_custom_call.1} parent=51 // pred_check_branch
            %308 = sbr.rel (0) target = $region56
          $region55: #{tpu_custom_call.1} parent=51 // pred_region
            // Predicated region
            $region57: #{tpu_custom_call.1} parent=55 // pred_check
              _
            $region58: #{tpu_custom_call.1} parent=55 // pred_check_branch
              %310 = sbr.rel (0) target = $region60
            $region59: #{tpu_custom_call.1} parent=55 // pred_region
              // Predicated region
              $region72: #{tpu_custom_call.1} parent=59 // pred_check
                _
              $region73: #{tpu_custom_call.1} parent=59 // pred_check_branch
                %356 = sbr.rel (0) target = $region75
              $region74: #{tpu_custom_call.1} parent=59 // pred_region
                loop: start=0, step=1, limit=1
                $region76: #{tpu_custom_call.1} parent=74 // loop_pre_header
                  _
                $region77: #{tpu_custom_call.1} parent=74 // loop_header
                  %s358 = sphi 0, %s362
                  %p359 = scmp.ge.s32.totalorder %s358, 1
                  %s363 = sphi %s306, %s306
                  %s364 = sphi %s300, %s300
                $region78: #{tpu_custom_call.1} parent=74 // loop_header_branch
                  %361 = sbr.rel (%p359) target = $region82
                $region79: #{tpu_custom_call.1} parent=74 // loop_body
                  %v365 = vld [vmem:[%s363] sm:$0xff]
                  %366 = vst [vmem:[%s364] sm:$0xff] %v365
                  %v367 = vld [vmem:[%s363 + $0x8] sm:$0xff]
                  %368 = vst [vmem:[%s364 + $0x8] sm:$0xff] %v367
                  %v369 = vld [vmem:[%s363 + $0x20] sm:$0xff]
                  %370 = vst [vmem:[%s364 + $0x10] sm:$0xff] %v369
                  %v371 = vld [vmem:[%s363 + $0x28] sm:$0xff]
                  %372 = vst [vmem:[%s364 + $0x18] sm:$0xff] %v371
                  %v373 = vld [vmem:[%s363 + $0x40] sm:$0xff]
                  %374 = vst [vmem:[%s364 + $0x20] sm:$0xff] %v373
                  %v375 = vld [vmem:[%s363 + $0x48] sm:$0xff]
                  %376 = vst [vmem:[%s364 + $0x28] sm:$0xff] %v375
                  %v377 = vld [vmem:[%s363 + $0x60] sm:$0xff]
                  %378 = vst [vmem:[%s364 + $0x30] sm:$0xff] %v377
                  %v379 = vld [vmem:[%s363 + $0x68] sm:$0xff]
                  %380 = vst [vmem:[%s364 + $0x38] sm:$0xff] %v379
                  %v381 = vld [vmem:[%s363 + $0x80] sm:$0xff]
                  %382 = vst [vmem:[%s364 + $0x40] sm:$0xff] %v381
                  %v383 = vld [vmem:[%s363 + $0x88] sm:$0xff]
                  %384 = vst [vmem:[%s364 + $0x48] sm:$0xff] %v383
                  %v385 = vld [vmem:[%s363 + $0xa0] sm:$0xff]
                  %386 = vst [vmem:[%s364 + $0x50] sm:$0xff] %v385
                  %v387 = vld [vmem:[%s363 + $0xa8] sm:$0xff]
                  %388 = vst [vmem:[%s364 + $0x58] sm:$0xff] %v387
                  %v389 = vld [vmem:[%s363 + $0xc0] sm:$0xff]
                  %390 = vst [vmem:[%s364 + $0x60] sm:$0xff] %v389
                  %v391 = vld [vmem:[%s363 + $0xc8] sm:$0xff]
                  %392 = vst [vmem:[%s364 + $0x68] sm:$0xff] %v391
                  %v393 = vld [vmem:[%s363 + $0xe0] sm:$0xff]
                  %394 = vst [vmem:[%s364 + $0x70] sm:$0xff] %v393
                  %v395 = vld [vmem:[%s363 + $0xe8] sm:$0xff]
                  %396 = vst [vmem:[%s364 + $0x78] sm:$0xff] %v395
                $region80: #{tpu_custom_call.1} parent=74 // loop_footer
                  %s362 = sadd.s32 1, %s358
                $region81: #{tpu_custom_call.1} parent=74 // loop_footer_branch
                  %357 = sbr.rel target = $region77
                $region82: #{tpu_custom_call.1} parent=74 // loop_exit
                  _
              $region75: #{tpu_custom_call.1} parent=59 // pred_fallthru
                _
              // Predicated region
              $region83: #{tpu_custom_call.1} parent=59 // pred_check
                _
              $region84: #{tpu_custom_call.1} parent=59 // pred_check_branch
                %398 = sbr.rel target = $region86
              $region85: #{tpu_custom_call.1} parent=59 // pred_region
                _
              $region86: #{tpu_custom_call.1} parent=59 // pred_fallthru
                _
            $region60: #{tpu_custom_call.1} parent=55 // pred_fallthru
              _
            // Predicated region
            $region61: #{tpu_custom_call.1} parent=55 // pred_check
              _
            $region62: #{tpu_custom_call.1} parent=55 // pred_check_branch
              %312 = sbr.rel target = $region64
            $region63: #{tpu_custom_call.1} parent=55 // pred_region
              %s314 = ssub.s32 256, 1
              loop: start=0, step=1, limit=1
              $region65: #{tpu_custom_call.1} parent=63 // loop_pre_header
                _
              $region66: #{tpu_custom_call.1} parent=63 // loop_header
                %s316 = sphi 0, %s320
                %p317 = scmp.ge.s32.totalorder %s316, 1
                %s321 = sphi %s306, %s306
                %s322 = sphi %s300, %s300
              $region67: #{tpu_custom_call.1} parent=63 // loop_header_branch
                %319 = sbr.rel (%p317) target = $region71
              $region68: #{tpu_custom_call.1} parent=63 // loop_body
                %v323 = vld [vmem:[%s321] sm:%s314]
                %324 = vst [vmem:[%s322] sm:%s314] %v323
                %v325 = vld [vmem:[%s321 + $0x8] sm:%s314]
                %326 = vst [vmem:[%s322 + $0x8] sm:%s314] %v325
                %v327 = vld [vmem:[%s321 + $0x20] sm:%s314]
                %328 = vst [vmem:[%s322 + $0x10] sm:%s314] %v327
                %v329 = vld [vmem:[%s321 + $0x28] sm:%s314]
                %330 = vst [vmem:[%s322 + $0x18] sm:%s314] %v329
                %v331 = vld [vmem:[%s321 + $0x40] sm:%s314]
                %332 = vst [vmem:[%s322 + $0x20] sm:%s314] %v331
                %v333 = vld [vmem:[%s321 + $0x48] sm:%s314]
                %334 = vst [vmem:[%s322 + $0x28] sm:%s314] %v333
                %v335 = vld [vmem:[%s321 + $0x60] sm:%s314]
                %336 = vst [vmem:[%s322 + $0x30] sm:%s314] %v335
                %v337 = vld [vmem:[%s321 + $0x68] sm:%s314]
                %338 = vst [vmem:[%s322 + $0x38] sm:%s314] %v337
                %v339 = vld [vmem:[%s321 + $0x80] sm:%s314]
                %340 = vst [vmem:[%s322 + $0x40] sm:%s314] %v339
                %v341 = vld [vmem:[%s321 + $0x88] sm:%s314]
                %342 = vst [vmem:[%s322 + $0x48] sm:%s314] %v341
                %v343 = vld [vmem:[%s321 + $0xa0] sm:%s314]
                %344 = vst [vmem:[%s322 + $0x50] sm:%s314] %v343
                %v345 = vld [vmem:[%s321 + $0xa8] sm:%s314]
                %346 = vst [vmem:[%s322 + $0x58] sm:%s314] %v345
                %v347 = vld [vmem:[%s321 + $0xc0] sm:%s314]
                %348 = vst [vmem:[%s322 + $0x60] sm:%s314] %v347
                %v349 = vld [vmem:[%s321 + $0xc8] sm:%s314]
                %350 = vst [vmem:[%s322 + $0x68] sm:%s314] %v349
                %v351 = vld [vmem:[%s321 + $0xe0] sm:%s314]
                %352 = vst [vmem:[%s322 + $0x70] sm:%s314] %v351
                %v353 = vld [vmem:[%s321 + $0xe8] sm:%s314]
                %354 = vst [vmem:[%s322 + $0x78] sm:%s314] %v353
              $region69: #{tpu_custom_call.1} parent=63 // loop_footer
                %s320 = sadd.s32 1, %s316
              $region70: #{tpu_custom_call.1} parent=63 // loop_footer_branch
                %315 = sbr.rel target = $region66
              $region71: #{tpu_custom_call.1} parent=63 // loop_exit
                _
            $region64: #{tpu_custom_call.1} parent=55 // pred_fallthru
              _
          $region56: #{tpu_custom_call.1} parent=51 // pred_fallthru
            _
          %399 = vnop
        $region52: #{tpu_custom_call.1} parent=47 // pred_fallthru
          _
      $region48: #{tpu_custom_call.1} parent=5 // pred_fallthru
        _
      %p400 = scmp.le.s32.totalorder 1, %s17
      %p401 = scmp.lt.s32.totalorder %s17, 3
      %p402 = pnand %p400, %p401
      %p403 = pneg %p402
      // Predicated region
      $region87: #{tpu_custom_call.1} parent=5 // pred_check
        _
      $region88: #{tpu_custom_call.1} parent=5 // pred_check_branch
        %405 = sbr.rel (%p402) target = $region90
      $region89: #{tpu_custom_call.1} parent=5 // pred_region
        %s406 = ssub.s32 %s17, 1
        %s407 = sand.u32 %s44, 1
        %s408 = sand.u32 %s44, 1
        %s409 = smul.addr %s408, 128
        %s410 = scalar_lea.vmem [#allocation7], %s409
        // Predicated region
        $region91: #{tpu_custom_call.1} parent=89 // pred_check
          %p411 = pneg %p57
        $region92: #{tpu_custom_call.1} parent=89 // pred_check_branch
          %413 = sbr.rel (%p411) target = $region94
        $region93: #{tpu_custom_call.1} parent=89 // pred_region
          _
        $region94: #{tpu_custom_call.1} parent=89 // pred_fallthru
          _
        %s414 = sand.u32 %s44, 1
        %s415 = sand.u32 %s44, 1
        %s416 = smul.addr %s415, 128
        %s417 = scalar_lea.vmem [#allocation7], %s416
        %p418 = pneg %p57
        %p419 = pneg %p54
        %p420 = pneg %p78
        %p421 = pneg %p75
        %p422 = pneg %p99
        %p423 = pneg %p96
        %p424 = pneg %p120
        %p425 = pneg %p117
        %p426 = pneg %p141
        %p427 = pneg %p138
        %p428 = pneg %p162
        %p429 = pneg %p159
        %p430 = pneg %p183
        %p431 = pneg %p180
        %p432 = pneg %p204
        %p433 = pneg %p201
        %p434 = pneg %p225
        %p435 = pneg %p222
        %p436 = pneg %p251
        %p437 = pneg %p248
        %p438 = scmp.lt.s32.totalorder %s26, 0
        %s439 = scalar_select %p438, %s26, 0
        %s440 = smul.addr %s439, 8
        %s441 = scalar_lea.vmem %s9, %s440
        %s442 = smul.u32 8, %s26
        %s443 = smul.u32 2, %s27
        %p444 = scmp.lt.s32.totalorder %s26, 0
        %s445 = scalar_select %p444, %s26, 0
        %s446 = smul.addr %s445, 8
        %s447 = scalar_lea.vmem %s9, %s446
        %p448 = scmp.eq.s32.totalorder %s27, 0
        // Predicated region
        $region95: #{tpu_custom_call.1} parent=89 // pred_check
          %p449 = pneg %p448
        $region96: #{tpu_custom_call.1} parent=89 // pred_check_branch
          %451 = sbr.rel (%p449) target = $region98
        $region97: #{tpu_custom_call.1} parent=89 // pred_region
          %vm452 = vcmask 261120
          %453 = vst.msk [vmem:[#allocation2] sm:$0xff] %vm452, 0.0
          %454 = vst.msk [vmem:[#allocation3] sm:$0xff] %vm452, 0.0
          %455 = vst.msk [vmem:[#allocation4] sm:$0xff] %vm452, 0.0
          %456 = vst.msk [vmem:[#allocation5] sm:$0xff] %vm452, 0.0
        $region98: #{tpu_custom_call.1} parent=89 // pred_fallthru
          _
        %v457 = vld [vmem:[%s410] sm:$0xff]
        %v458 = vld [vmem:[%s410 + $0x8] sm:$0xff]
        %v459 = vld [vmem:[%s410 + $0x10] sm:$0xff]
        %v460 = vld [vmem:[%s410 + $0x18] sm:$0xff]
        %v461 = vld [vmem:[%s410 + $0x20] sm:$0xff]
        %v462 = vld [vmem:[%s410 + $0x28] sm:$0xff]
        %v463 = vld [vmem:[%s410 + $0x30] sm:$0xff]
        %v464 = vld [vmem:[%s410 + $0x38] sm:$0xff]
        %v465 = vld [vmem:[%s410 + $0x40] sm:$0xff]
        %v466 = vld [vmem:[%s410 + $0x48] sm:$0xff]
        %v467 = vld [vmem:[%s410 + $0x50] sm:$0xff]
        %v468 = vld [vmem:[%s410 + $0x58] sm:$0xff]
        %v469 = vld [vmem:[%s410 + $0x60] sm:$0xff]
        %v470 = vld [vmem:[%s410 + $0x68] sm:$0xff]
        %v471 = vld [vmem:[%s410 + $0x70] sm:$0xff]
        %v472 = vld [vmem:[%s410 + $0x78] sm:$0xff]
        %v473 = vcombine.low %v457, %v461
        %v474 = vcombine.high %v457, %v461
        %v476 = vunpack.c.l.s4 1983009808
        %v477 = vunpack.c.0.s8 %v476
        %v478 = vlaneseq
        %v479 = vshrl.u32 %v478, 7
        %v480 = vsub.s32 %v477, %v479
        %v481 = vrot.slane %v473, %v480
        %v483 = vunpack.c.l.s4 1983009808
        %v484 = vunpack.c.0.s8 %v483
        %v485 = vlaneseq
        %v486 = vshrl.u32 %v485, 7
        %v487 = vsub.s32 %v484, %v486
        %v488 = vrot.slane %v474, %v487
        %v489 = vcombine.low %v459, %v463
        %v490 = vcombine.high %v459, %v463
        %v492 = vunpack.c.l.s4 1983009808
        %v493 = vunpack.c.0.s8 %v492
        %v494 = vlaneseq
        %v495 = vshrl.u32 %v494, 7
        %v496 = vsub.s32 %v493, %v495
        %v497 = vrot.slane %v489, %v496
        %v499 = vunpack.c.l.s4 1983009808
        %v500 = vunpack.c.0.s8 %v499
        %v501 = vlaneseq
        %v502 = vshrl.u32 %v501, 7
        %v503 = vsub.s32 %v500, %v502
        %v504 = vrot.slane %v490, %v503
        %v505 = vcombine.low %v465, %v469
        %v506 = vcombine.high %v465, %v469
        %v508 = vunpack.c.l.s4 1983009808
        %v509 = vunpack.c.0.s8 %v508
        %v510 = vlaneseq
        %v511 = vshrl.u32 %v510, 7
        %v512 = vsub.s32 %v509, %v511
        %v513 = vrot.slane %v505, %v512
        %v515 = vunpack.c.l.s4 1983009808
        %v516 = vunpack.c.0.s8 %v515
        %v517 = vlaneseq
        %v518 = vshrl.u32 %v517, 7
        %v519 = vsub.s32 %v516, %v518
        %v520 = vrot.slane %v506, %v519
        %v521 = vcombine.low %v467, %v471
        %v522 = vcombine.high %v467, %v471
        %v524 = vunpack.c.l.s4 1983009808
        %v525 = vunpack.c.0.s8 %v524
        %v526 = vlaneseq
        %v527 = vshrl.u32 %v526, 7
        %v528 = vsub.s32 %v525, %v527
        %v529 = vrot.slane %v521, %v528
        %v531 = vunpack.c.l.s4 1983009808
        %v532 = vunpack.c.0.s8 %v531
        %v533 = vlaneseq
        %v534 = vshrl.u32 %v533, 7
        %v535 = vsub.s32 %v532, %v534
        %v536 = vrot.slane %v522, %v535
        %v537 = vcombine.low %v481, %v497
        %v538 = vcombine.high %v481, %v497
        %v540 = vunpack.c.l.s4 1934713408
        %v541 = vunpack.c.0.s8 %v540
        %v542 = vlaneseq
        %v543 = vshrl.u32 %v542, 7
        %v544 = vsub.s32 %v541, %v543
        %v545 = vrot.slane %v537, %v544
        %v547 = vunpack.c.l.s4 1934713408
        %v548 = vunpack.c.0.s8 %v547
        %v549 = vlaneseq
        %v550 = vshrl.u32 %v549, 7
        %v551 = vsub.s32 %v548, %v550
        %v552 = vrot.slane %v538, %v551
        %v553 = vcombine.low %v488, %v504
        %v554 = vcombine.high %v488, %v504
        %v556 = vunpack.c.l.s4 1934713408
        %v557 = vunpack.c.0.s8 %v556
        %v558 = vlaneseq
        %v559 = vshrl.u32 %v558, 7
        %v560 = vsub.s32 %v557, %v559
        %v561 = vrot.slane %v553, %v560
        %v563 = vunpack.c.l.s4 1934713408
        %v564 = vunpack.c.0.s8 %v563
        %v565 = vlaneseq
        %v566 = vshrl.u32 %v565, 7
        %v567 = vsub.s32 %v564, %v566
        %v568 = vrot.slane %v554, %v567
        %v569 = vcombine.low %v513, %v529
        %v570 = vcombine.high %v513, %v529
        %v572 = vunpack.c.l.s4 1934713408
        %v573 = vunpack.c.0.s8 %v572
        %v574 = vlaneseq
        %v575 = vshrl.u32 %v574, 7
        %v576 = vsub.s32 %v573, %v575
        %v577 = vrot.slane %v569, %v576
        %v579 = vunpack.c.l.s4 1934713408
        %v580 = vunpack.c.0.s8 %v579
        %v581 = vlaneseq
        %v582 = vshrl.u32 %v581, 7
        %v583 = vsub.s32 %v580, %v582
        %v584 = vrot.slane %v570, %v583
        %v585 = vcombine.low %v520, %v536
        %v586 = vcombine.high %v520, %v536
        %v588 = vunpack.c.l.s4 1934713408
        %v589 = vunpack.c.0.s8 %v588
        %v590 = vlaneseq
        %v591 = vshrl.u32 %v590, 7
        %v592 = vsub.s32 %v589, %v591
        %v593 = vrot.slane %v585, %v592
        %v595 = vunpack.c.l.s4 1934713408
        %v596 = vunpack.c.0.s8 %v595
        %v597 = vlaneseq
        %v598 = vshrl.u32 %v597, 7
        %v599 = vsub.s32 %v596, %v598
        %v600 = vrot.slane %v586, %v599
        %v601 = vcombine.low %v545, %v577
        %v602 = vcombine.high %v545, %v577
        %v603 = vcombine.low %v552, %v584
        %v604 = vcombine.high %v552, %v584
        %v605 = vcombine.low %v561, %v593
        %v606 = vcombine.high %v561, %v593
        %v607 = vcombine.low %v568, %v600
        %v608 = vcombine.high %v568, %v600
        %v609 = vcombine.low %v458, %v462
        %v610 = vcombine.high %v458, %v462
        %v612 = vunpack.c.l.s4 1983009808
        %v613 = vunpack.c.0.s8 %v612
        %v614 = vlaneseq
        %v615 = vshrl.u32 %v614, 7
        %v616 = vsub.s32 %v613, %v615
        %v617 = vrot.slane %v609, %v616
        %v619 = vunpack.c.l.s4 1983009808
        %v620 = vunpack.c.0.s8 %v619
        %v621 = vlaneseq
        %v622 = vshrl.u32 %v621, 7
        %v623 = vsub.s32 %v620, %v622
        %v624 = vrot.slane %v610, %v623
        %v625 = vcombine.low %v460, %v464
        %v626 = vcombine.high %v460, %v464
        %v628 = vunpack.c.l.s4 1983009808
        %v629 = vunpack.c.0.s8 %v628
        %v630 = vlaneseq
        %v631 = vshrl.u32 %v630, 7
        %v632 = vsub.s32 %v629, %v631
        %v633 = vrot.slane %v625, %v632
        %v635 = vunpack.c.l.s4 1983009808
        %v636 = vunpack.c.0.s8 %v635
        %v637 = vlaneseq
        %v638 = vshrl.u32 %v637, 7
        %v639 = vsub.s32 %v636, %v638
        %v640 = vrot.slane %v626, %v639
        %v641 = vcombine.low %v466, %v470
        %v642 = vcombine.high %v466, %v470
        %v644 = vunpack.c.l.s4 1983009808
        %v645 = vunpack.c.0.s8 %v644
        %v646 = vlaneseq
        %v647 = vshrl.u32 %v646, 7
        %v648 = vsub.s32 %v645, %v647
        %v649 = vrot.slane %v641, %v648
        %v651 = vunpack.c.l.s4 1983009808
        %v652 = vunpack.c.0.s8 %v651
        %v653 = vlaneseq
        %v654 = vshrl.u32 %v653, 7
        %v655 = vsub.s32 %v652, %v654
        %v656 = vrot.slane %v642, %v655
        %v657 = vcombine.low %v468, %v472
        %v658 = vcombine.high %v468, %v472
        %v660 = vunpack.c.l.s4 1983009808
        %v661 = vunpack.c.0.s8 %v660
        %v662 = vlaneseq
        %v663 = vshrl.u32 %v662, 7
        %v664 = vsub.s32 %v661, %v663
        %v665 = vrot.slane %v657, %v664
        %v667 = vunpack.c.l.s4 1983009808
        %v668 = vunpack.c.0.s8 %v667
        %v669 = vlaneseq
        %v670 = vshrl.u32 %v669, 7
        %v671 = vsub.s32 %v668, %v670
        %v672 = vrot.slane %v658, %v671
        %v673 = vcombine.low %v617, %v633
        %v674 = vcombine.high %v617, %v633
        %v676 = vunpack.c.l.s4 1934713408
        %v677 = vunpack.c.0.s8 %v676
        %v678 = vlaneseq
        %v679 = vshrl.u32 %v678, 7
        %v680 = vsub.s32 %v677, %v679
        %v681 = vrot.slane %v673, %v680
        %v683 = vunpack.c.l.s4 1934713408
        %v684 = vunpack.c.0.s8 %v683
        %v685 = vlaneseq
        %v686 = vshrl.u32 %v685, 7
        %v687 = vsub.s32 %v684, %v686
        %v688 = vrot.slane %v674, %v687
        %v689 = vcombine.low %v624, %v640
        %v690 = vcombine.high %v624, %v640
        %v692 = vunpack.c.l.s4 1934713408
        %v693 = vunpack.c.0.s8 %v692
        %v694 = vlaneseq
        %v695 = vshrl.u32 %v694, 7
        %v696 = vsub.s32 %v693, %v695
        %v697 = vrot.slane %v689, %v696
        %v699 = vunpack.c.l.s4 1934713408
        %v700 = vunpack.c.0.s8 %v699
        %v701 = vlaneseq
        %v702 = vshrl.u32 %v701, 7
        %v703 = vsub.s32 %v700, %v702
        %v704 = vrot.slane %v690, %v703
        %v705 = vcombine.low %v649, %v665
        %v706 = vcombine.high %v649, %v665
        %v708 = vunpack.c.l.s4 1934713408
        %v709 = vunpack.c.0.s8 %v708
        %v710 = vlaneseq
        %v711 = vshrl.u32 %v710, 7
        %v712 = vsub.s32 %v709, %v711
        %v713 = vrot.slane %v705, %v712
        %v715 = vunpack.c.l.s4 1934713408
        %v716 = vunpack.c.0.s8 %v715
        %v717 = vlaneseq
        %v718 = vshrl.u32 %v717, 7
        %v719 = vsub.s32 %v716, %v718
        %v720 = vrot.slane %v706, %v719
        %v721 = vcombine.low %v656, %v672
        %v722 = vcombine.high %v656, %v672
        %v724 = vunpack.c.l.s4 1934713408
        %v725 = vunpack.c.0.s8 %v724
        %v726 = vlaneseq
        %v727 = vshrl.u32 %v726, 7
        %v728 = vsub.s32 %v725, %v727
        %v729 = vrot.slane %v721, %v728
        %v731 = vunpack.c.l.s4 1934713408
        %v732 = vunpack.c.0.s8 %v731
        %v733 = vlaneseq
        %v734 = vshrl.u32 %v733, 7
        %v735 = vsub.s32 %v732, %v734
        %v736 = vrot.slane %v722, %v735
        %v737 = vcombine.low %v681, %v713
        %v738 = vcombine.high %v681, %v713
        %v739 = vcombine.low %v688, %v720
        %v740 = vcombine.high %v688, %v720
        %v741 = vcombine.low %v697, %v729
        %v742 = vcombine.high %v697, %v729
        %v743 = vcombine.low %v704, %v736
        %v744 = vcombine.high %v704, %v736
        %v745 = vld [vmem:[%s1] sm:$0xff]
        %v746 = vld [vmem:[%s1 + $0x8] sm:$0xff]
        %v747 = vld [vmem:[%s3] sm:$0x1]
        %v749 = vlaneseq
        %v750 = vshrl.u32 %v749, 7
        %v751 = vsub.s32 0, %v750
        %v752 = vrot.slane %v747, %v751
        %vm754 = vcmask 130048
        %v756 = vsel %vm754, %v601, 0
        %v759 = vsel %vm754, %v602, 0
        %v762 = vsel %vm754, %v603, 0
        %v765 = vsel %vm754, %v604, 0
        %v768 = vsel %vm754, %v605, 0
        %v771 = vsel %vm754, %v606, 0
        %v774 = vsel %vm754, %v607, 0
        %v777 = vsel %vm754, %v608, 0
        %v780 = vsel %vm754, %v737, 0
        %v783 = vsel %vm754, %v738, 0
        %v786 = vsel %vm754, %v739, 0
        %v789 = vsel %vm754, %v740, 0
        %v792 = vsel %vm754, %v741, 0
        %v795 = vsel %vm754, %v742, 0
        %v798 = vsel %vm754, %v743, 0
        %v801 = vsel %vm754, %v744, 0
        %803 = vmatprep.subr.mxu0 0.0
        %804 = vmatpush1.msra.mxu0 0.0
        %805 = vmatprep.subr.mxu0 0.0
        %806 = vmatpush1.msra.mxu0 0.0
        %807 = vmatprep.subr.mxu0 0.0
        %808 = vmatpush1.msra.mxu0 0.0
        %809 = vmatprep.subr.mxu0 0.0
        %810 = vmatpush1.msra.mxu0 0.0
        %811 = vmatprep.subr.mxu0 0.0
        %812 = vmatpush1.msra.mxu0 0.0
        %813 = vmatprep.subr.mxu0 0.0
        %814 = vmatpush1.msra.mxu0 0.0
        %815 = vmatprep.subr.mxu0 0.0
        %816 = vmatpush1.msra.mxu0 0.0
        %817 = vmatprep.subr.mxu0 0.0
        %818 = vmatpush1.msra.mxu0 0.0
        %819 = vmatprep.subr.mxu0 0.0
        %820 = vmatpush1.msra.mxu0 0.0
        %821 = vmatprep.subr.mxu0 0.0
        %822 = vmatpush1.msra.mxu0 0.0
        %823 = vmatprep.subr.mxu0 0.0
        %824 = vmatpush1.msra.mxu0 0.0
        %825 = vmatprep.subr.mxu0 0.0
        %826 = vmatpush1.msra.mxu0 0.0
        %827 = vmatprep.subr.mxu0 0.0
        %828 = vmatpush1.msra.mxu0 0.0
        %829 = vmatprep.subr.mxu0 0.0
        %830 = vmatpush1.msra.mxu0 0.0
        %831 = vmatprep.subr.mxu0 0.0
        %832 = vmatpush1.msra.mxu0 %v746
        %833 = vmatprep.subr.mxu0 0.0
        %834 = vmatpush1.msra.mxu0 %v745
        %835 = vmatprep.subr.mxu0 0.0
        %836 = vmatpush2.msra.mxu0 0.0
        %837 = vmatprep.subr.mxu0 0.0
        %838 = vmatpush2.msra.mxu0 0.0
        %839 = vmatprep.subr.mxu0 0.0
        %840 = vmatpush2.msra.mxu0 0.0
        %841 = vmatprep.subr.mxu0 0.0
        %842 = vmatpush2.msra.mxu0 0.0
        %843 = vmatprep.subr.mxu0 0.0
        %844 = vmatpush2.msra.mxu0 0.0
        %845 = vmatprep.subr.mxu0 0.0
        %846 = vmatpush2.msra.mxu0 0.0
        %847 = vmatprep.subr.mxu0 0.0
        %848 = vmatpush2.msra.mxu0 0.0
        %849 = vmatprep.subr.mxu0 0.0
        %850 = vmatpush2.msra.mxu0 0.0
        %851 = vmatprep.subr.mxu0 0.0
        %852 = vmatpush2.msra.mxu0 0.0
        %853 = vmatprep.subr.mxu0 0.0
        %854 = vmatpush2.msra.mxu0 0.0
        %855 = vmatprep.subr.mxu0 0.0
        %856 = vmatpush2.msra.mxu0 0.0
        %857 = vmatprep.subr.mxu0 0.0
        %858 = vmatpush2.msra.mxu0 0.0
        %859 = vmatprep.subr.mxu0 0.0
        %860 = vmatpush2.msra.mxu0 0.0
        %861 = vmatprep.subr.mxu0 0.0
        %862 = vmatpush2.msra.mxu0 0.0
        %863 = vmatprep.subr.mxu0 0.0
        %864 = vmatpush2.msra.mxu0 0.0
        %865 = vmatprep.subr.mxu0 0.0
        %866 = vmatpush2.msra.mxu0 0.0
        %867 = vmatprep.mubr.f32.mxu0 0.0
        %868 = vmatmul.mubr.f32.gmra.mxu0 %v756
        %v869 = vpop.f32.mrf.mxu0
        %v870 = vadd.f32 %v752, %v869
        %v871 = vpop.f32.mrf.mxu0
        %872 = vmatprep.mubr.f32.mxu0 0.0
        %873 = vmatmul.mubr.f32.gmra.mxu0 %v759
        %v874 = vpop.f32.mrf.mxu0
        %v875 = vadd.f32 %v752, %v874
        %v876 = vpop.f32.mrf.mxu0
        %877 = vmatprep.mubr.f32.mxu0 0.0
        %878 = vmatmul.mubr.f32.gmra.mxu0 %v762
        %v879 = vpop.f32.mrf.mxu0
        %v880 = vadd.f32 %v752, %v879
        %v881 = vpop.f32.mrf.mxu0
        %882 = vmatprep.mubr.f32.mxu0 0.0
        %883 = vmatmul.mubr.f32.gmra.mxu0 %v765
        %v884 = vpop.f32.mrf.mxu0
        %v885 = vadd.f32 %v752, %v884
        %v886 = vpop.f32.mrf.mxu0
        %887 = vmatprep.mubr.f32.mxu0 0.0
        %888 = vmatmul.mubr.f32.gmra.mxu0 %v768
        %v889 = vpop.f32.mrf.mxu0
        %v890 = vadd.f32 %v752, %v889
        %v891 = vpop.f32.mrf.mxu0
        %892 = vmatprep.mubr.f32.mxu0 0.0
        %893 = vmatmul.mubr.f32.gmra.mxu0 %v771
        %v894 = vpop.f32.mrf.mxu0
        %v895 = vadd.f32 %v752, %v894
        %v896 = vpop.f32.mrf.mxu0
        %897 = vmatprep.mubr.f32.mxu0 0.0
        %898 = vmatmul.mubr.f32.gmra.mxu0 %v774
        %v899 = vpop.f32.mrf.mxu0
        %v900 = vadd.f32 %v752, %v899
        %v901 = vpop.f32.mrf.mxu0
        %902 = vmatprep.mubr.f32.mxu0 0.0
        %903 = vmatmul.mubr.f32.gmra.mxu0 %v777
        %v904 = vpop.f32.mrf.mxu0
        %v905 = vadd.f32 %v752, %v904
        %v906 = vpop.f32.mrf.mxu0
        %907 = vmatprep.mubr.f32.mxu0 0.0
        %908 = vmatmul.mubr.f32.gmra.mxu0 %v780
        %v909 = vpop.f32.mrf.mxu0
        %v910 = vadd.f32 %v752, %v909
        %v911 = vpop.f32.mrf.mxu0
        %912 = vmatprep.mubr.f32.mxu0 0.0
        %913 = vmatmul.mubr.f32.gmra.mxu0 %v783
        %v914 = vpop.f32.mrf.mxu0
        %v915 = vadd.f32 %v752, %v914
        %v916 = vpop.f32.mrf.mxu0
        %917 = vmatprep.mubr.f32.mxu0 0.0
        %918 = vmatmul.mubr.f32.gmra.mxu0 %v786
        %v919 = vpop.f32.mrf.mxu0
        %v920 = vadd.f32 %v752, %v919
        %v921 = vpop.f32.mrf.mxu0
        %922 = vmatprep.mubr.f32.mxu0 0.0
        %923 = vmatmul.mubr.f32.gmra.mxu0 %v789
        %v924 = vpop.f32.mrf.mxu0
        %v925 = vadd.f32 %v752, %v924
        %v926 = vpop.f32.mrf.mxu0
        %927 = vmatprep.mubr.f32.mxu0 0.0
        %928 = vmatmul.mubr.f32.gmra.mxu0 %v792
        %v929 = vpop.f32.mrf.mxu0
        %v930 = vadd.f32 %v752, %v929
        %v931 = vpop.f32.mrf.mxu0
        %932 = vmatprep.mubr.f32.mxu0 0.0
        %933 = vmatmul.mubr.f32.gmra.mxu0 %v795
        %v934 = vpop.f32.mrf.mxu0
        %v935 = vadd.f32 %v752, %v934
        %v936 = vpop.f32.mrf.mxu0
        %937 = vmatprep.mubr.f32.mxu0 0.0
        %938 = vmatmul.mubr.f32.gmra.mxu0 %v798
        %v939 = vpop.f32.mrf.mxu0
        %v940 = vadd.f32 %v752, %v939
        %v941 = vpop.f32.mrf.mxu0
        %942 = vmatprep.mubr.f32.mxu0 0.0
        %943 = vmatmul.mubr.f32.gmra.mxu0 %v801
        %v944 = vpop.f32.mrf.mxu0
        %v945 = vadd.f32 %v752, %v944
        %v946 = vpop.f32.mrf.mxu0
        %947 = vdwg.mxu0
        %v948 = vld [vmem:[%s2] sm:$0xff]
        %v949 = vld [vmem:[%s2 + $0x8] sm:$0xff]
        %v950 = vld [vmem:[%s2 + $0x10] sm:$0xff]
        %v951 = vld [vmem:[%s2 + $0x18] sm:$0xff]
        %v952 = vld [vmem:[%s4] sm:$0xff]
        %v953 = vld [vmem:[%s4 + $0x8] sm:$0xff]
        %v954 = vld [vmem:[%s4 + $0x10] sm:$0xff]
        %v955 = vld [vmem:[%s4 + $0x18] sm:$0xff]
        %v956 = vld [vmem:[%s5] sm:$0xff]
        %v957 = vld [vmem:[%s5 + $0x8] sm:$0xff]
        %v958 = vld [vmem:[%s5 + $0x10] sm:$0xff]
        %v959 = vld [vmem:[%s5 + $0x18] sm:$0xff]
        %v960 = vld [vmem:[%s6] sm:$0x1]
        %v962 = vlaneseq
        %v963 = vshrl.u32 %v962, 7
        %v964 = vsub.s32 0, %v963
        %v965 = vrot.slane %v960, %v964
        %v967 = vld [vmem:[#allocation2] sm:$0xff]
        %v968 = vld [vmem:[#allocation3] sm:$0xff]
        %v969 = vld [vmem:[#allocation4] sm:$0xff]
        %v970 = vld [vmem:[#allocation5] sm:$0xff]
        %vm971 = vcmask 261120
        %v973 = vsel %vm971, %v967, 0
        %975 = vmatprep.subr.mxu0 0.0
        %976 = vmatpush1.msra.mxu0 0.0
        %977 = vmatprep.subr.mxu0 0.0
        %978 = vmatpush1.msra.mxu0 0.0
        %979 = vmatprep.subr.mxu0 0.0
        %980 = vmatpush1.msra.mxu0 0.0
        %981 = vmatprep.subr.mxu0 0.0
        %982 = vmatpush1.msra.mxu0 0.0
        %983 = vmatprep.subr.mxu0 0.0
        %984 = vmatpush1.msra.mxu0 0.0
        %985 = vmatprep.subr.mxu0 0.0
        %986 = vmatpush1.msra.mxu0 0.0
        %987 = vmatprep.subr.mxu0 0.0
        %988 = vmatpush1.msra.mxu0 0.0
        %989 = vmatprep.subr.mxu0 0.0
        %990 = vmatpush1.msra.mxu0 0.0
        %991 = vmatprep.subr.mxu0 0.0
        %992 = vmatpush1.msra.mxu0 0.0
        %993 = vmatprep.subr.mxu0 0.0
        %994 = vmatpush1.msra.mxu0 0.0
        %995 = vmatprep.subr.mxu0 0.0
        %996 = vmatpush1.msra.mxu0 0.0
        %997 = vmatprep.subr.mxu0 0.0
        %998 = vmatpush1.msra.mxu0 0.0
        %999 = vmatprep.subr.mxu0 0.0
        %1000 = vmatpush1.msra.mxu0 %v951
        %1001 = vmatprep.subr.mxu0 0.0
        %1002 = vmatpush1.msra.mxu0 %v950
        %1003 = vmatprep.subr.mxu0 0.0
        %1004 = vmatpush1.msra.mxu0 %v949
        %1005 = vmatprep.subr.mxu0 0.0
        %1006 = vmatpush1.msra.mxu0 %v948
        %1007 = vmatprep.subr.mxu0 0.0
        %1008 = vmatpush2.msra.mxu0 0.0
        %1009 = vmatprep.subr.mxu0 0.0
        %1010 = vmatpush2.msra.mxu0 0.0
        %1011 = vmatprep.subr.mxu0 0.0
        %1012 = vmatpush2.msra.mxu0 0.0
        %1013 = vmatprep.subr.mxu0 0.0
        %1014 = vmatpush2.msra.mxu0 0.0
        %1015 = vmatprep.subr.mxu0 0.0
        %1016 = vmatpush2.msra.mxu0 0.0
        %1017 = vmatprep.subr.mxu0 0.0
        %1018 = vmatpush2.msra.mxu0 0.0
        %1019 = vmatprep.subr.mxu0 0.0
        %1020 = vmatpush2.msra.mxu0 0.0
        %1021 = vmatprep.subr.mxu0 0.0
        %1022 = vmatpush2.msra.mxu0 0.0
        %1023 = vmatprep.subr.mxu0 0.0
        %1024 = vmatpush2.msra.mxu0 0.0
        %1025 = vmatprep.subr.mxu0 0.0
        %1026 = vmatpush2.msra.mxu0 0.0
        %1027 = vmatprep.subr.mxu0 0.0
        %1028 = vmatpush2.msra.mxu0 0.0
        %1029 = vmatprep.subr.mxu0 0.0
        %1030 = vmatpush2.msra.mxu0 0.0
        %1031 = vmatprep.subr.mxu0 0.0
        %1032 = vmatpush2.msra.mxu0 0.0
        %1033 = vmatprep.subr.mxu0 0.0
        %1034 = vmatpush2.msra.mxu0 0.0
        %1035 = vmatprep.subr.mxu0 0.0
        %1036 = vmatpush2.msra.mxu0 0.0
        %1037 = vmatprep.subr.mxu0 0.0
        %1038 = vmatpush2.msra.mxu0 0.0
        %1039 = vmatprep.mubr.f32.mxu0 0.0
        %1040 = vmatmul.mubr.f32.gmra.mxu0 %v973
        %v1041 = vpop.f32.mrf.mxu0
        %v1042 = vadd.f32 0.0, %v1041
        %v1043 = vpop.f32.mrf.mxu0
        %1044 = vdwg.mxu0
        %v1045 = vadd.f32 %v870, %v1042
        %v1046 = vxor.u32 %v1045, 2147483648
        %v1047 = vmul.f32 %v1046, 1.442695
        %v1048 = vpow.pop %v1047
        %v1049 = vadd.f32 %v1048, 1.0
        %v1050 = vrcp.pop %v1049
        %v1051 = vmul.f32 1.0, %v1050
        %v1052 = vmul.f32 %v1051, 2.0
        %v1053 = vsub.f32 %v1052, 1.0
        %1055 = vrot.lane.b32.xlu0 %v968, 32
        %v1056 = vpop.permute.xlu0 %1055
        %v1058 = vmul.f32 %v1051, %v1056
        %1060 = vrot.lane.b32.xlu0 %v1053, 64
        %v1061 = vpop.permute.xlu0 %1060
        %v1063 = vmul.f32 %v1051, %v1061
        %1065 = vrot.lane.b32.xlu0 %v1063, 32
        %v1066 = vpop.permute.xlu0 %1065
        %v1068 = vadd.f32 %v1058, %v1066
        %v1069 = vtanh.pop %v1068
        %1071 = vrot.lane.b32.xlu0 %v1069, 64
        %v1072 = vpop.permute.xlu0 %1071
        %v1074 = vmul.f32 %v1051, %v1072
        %1076 = vrot.lane.b32.xlu0 %v1074, 32
        %v1077 = vpop.permute.xlu0 %1076
        %v1078 = vsel %vm971, %v1077, 0
        %1080 = vmatprep.subr.mxu0 0.0
        %1081 = vmatpush1.msra.mxu0 0.0
        %1082 = vmatprep.subr.mxu0 0.0
        %1083 = vmatpush1.msra.mxu0 0.0
        %1084 = vmatprep.subr.mxu0 0.0
        %1085 = vmatpush1.msra.mxu0 0.0
        %1086 = vmatprep.subr.mxu0 0.0
        %1087 = vmatpush1.msra.mxu0 0.0
        %1088 = vmatprep.subr.mxu0 0.0
        %1089 = vmatpush1.msra.mxu0 0.0
        %1090 = vmatprep.subr.mxu0 0.0
        %1091 = vmatpush1.msra.mxu0 0.0
        %1092 = vmatprep.subr.mxu0 0.0
        %1093 = vmatpush1.msra.mxu0 0.0
        %1094 = vmatprep.subr.mxu0 0.0
        %1095 = vmatpush1.msra.mxu0 0.0
        %1096 = vmatprep.subr.mxu0 0.0
        %1097 = vmatpush1.msra.mxu0 0.0
        %1098 = vmatprep.subr.mxu0 0.0
        %1099 = vmatpush1.msra.mxu0 0.0
        %1100 = vmatprep.subr.mxu0 0.0
        %1101 = vmatpush1.msra.mxu0 0.0
        %1102 = vmatprep.subr.mxu0 0.0
        %1103 = vmatpush1.msra.mxu0 0.0
        %1104 = vmatprep.subr.mxu0 0.0
        %1105 = vmatpush1.msra.mxu0 %v955
        %1106 = vmatprep.subr.mxu0 0.0
        %1107 = vmatpush1.msra.mxu0 %v954
        %1108 = vmatprep.subr.mxu0 0.0
        %1109 = vmatpush1.msra.mxu0 %v953
        %1110 = vmatprep.subr.mxu0 0.0
        %1111 = vmatpush1.msra.mxu0 %v952
        %1112 = vmatprep.subr.mxu0 0.0
        %1113 = vmatpush2.msra.mxu0 0.0
        %1114 = vmatprep.subr.mxu0 0.0
        %1115 = vmatpush2.msra.mxu0 0.0
        %1116 = vmatprep.subr.mxu0 0.0
        %1117 = vmatpush2.msra.mxu0 0.0
        %1118 = vmatprep.subr.mxu0 0.0
        %1119 = vmatpush2.msra.mxu0 0.0
        %1120 = vmatprep.subr.mxu0 0.0
        %1121 = vmatpush2.msra.mxu0 0.0
        %1122 = vmatprep.subr.mxu0 0.0
        %1123 = vmatpush2.msra.mxu0 0.0
        %1124 = vmatprep.subr.mxu0 0.0
        %1125 = vmatpush2.msra.mxu0 0.0
        %1126 = vmatprep.subr.mxu0 0.0
        %1127 = vmatpush2.msra.mxu0 0.0
        %1128 = vmatprep.subr.mxu0 0.0
        %1129 = vmatpush2.msra.mxu0 0.0
        %1130 = vmatprep.subr.mxu0 0.0
        %1131 = vmatpush2.msra.mxu0 0.0
        %1132 = vmatprep.subr.mxu0 0.0
        %1133 = vmatpush2.msra.mxu0 0.0
        %1134 = vmatprep.subr.mxu0 0.0
        %1135 = vmatpush2.msra.mxu0 0.0
        %1136 = vmatprep.subr.mxu0 0.0
        %1137 = vmatpush2.msra.mxu0 0.0
        %1138 = vmatprep.subr.mxu0 0.0
        %1139 = vmatpush2.msra.mxu0 0.0
        %1140 = vmatprep.subr.mxu0 0.0
        %1141 = vmatpush2.msra.mxu0 0.0
        %1142 = vmatprep.subr.mxu0 0.0
        %1143 = vmatpush2.msra.mxu0 0.0
        %1144 = vmatprep.mubr.f32.mxu0 0.0
        %1145 = vmatmul.mubr.f32.gmra.mxu0 %v1078
        %v1146 = vpop.f32.mrf.mxu0
        %v1147 = vadd.f32 0.0, %v1146
        %v1148 = vpop.f32.mrf.mxu0
        %1149 = vdwg.mxu0
        %v1151 = vsel %vm971, %v969, 0
        %1153 = vmatprep.subr.mxu0 0.0
        %1154 = vmatpush1.msra.mxu0 0.0
        %1155 = vmatprep.subr.mxu0 0.0
        %1156 = vmatpush1.msra.mxu0 0.0
        %1157 = vmatprep.subr.mxu0 0.0
        %1158 = vmatpush1.msra.mxu0 0.0
        %1159 = vmatprep.subr.mxu0 0.0
        %1160 = vmatpush1.msra.mxu0 0.0
        %1161 = vmatprep.subr.mxu0 0.0
        %1162 = vmatpush1.msra.mxu0 0.0
        %1163 = vmatprep.subr.mxu0 0.0
        %1164 = vmatpush1.msra.mxu0 0.0
        %1165 = vmatprep.subr.mxu0 0.0
        %1166 = vmatpush1.msra.mxu0 0.0
        %1167 = vmatprep.subr.mxu0 0.0
        %1168 = vmatpush1.msra.mxu0 0.0
        %1169 = vmatprep.subr.mxu0 0.0
        %1170 = vmatpush1.msra.mxu0 0.0
        %1171 = vmatprep.subr.mxu0 0.0
        %1172 = vmatpush1.msra.mxu0 0.0
        %1173 = vmatprep.subr.mxu0 0.0
        %1174 = vmatpush1.msra.mxu0 0.0
        %1175 = vmatprep.subr.mxu0 0.0
        %1176 = vmatpush1.msra.mxu0 0.0
        %1177 = vmatprep.subr.mxu0 0.0
        %1178 = vmatpush1.msra.mxu0 %v959
        %1179 = vmatprep.subr.mxu0 0.0
        %1180 = vmatpush1.msra.mxu0 %v958
        %1181 = vmatprep.subr.mxu0 0.0
        %1182 = vmatpush1.msra.mxu0 %v957
        %1183 = vmatprep.subr.mxu0 0.0
        %1184 = vmatpush1.msra.mxu0 %v956
        %1185 = vmatprep.subr.mxu0 0.0
        %1186 = vmatpush2.msra.mxu0 0.0
        %1187 = vmatprep.subr.mxu0 0.0
        %1188 = vmatpush2.msra.mxu0 0.0
        %1189 = vmatprep.subr.mxu0 0.0
        %1190 = vmatpush2.msra.mxu0 0.0
        %1191 = vmatprep.subr.mxu0 0.0
        %1192 = vmatpush2.msra.mxu0 0.0
        %1193 = vmatprep.subr.mxu0 0.0
        %1194 = vmatpush2.msra.mxu0 0.0
        %1195 = vmatprep.subr.mxu0 0.0
        %1196 = vmatpush2.msra.mxu0 0.0
        %1197 = vmatprep.subr.mxu0 0.0
        %1198 = vmatpush2.msra.mxu0 0.0
        %1199 = vmatprep.subr.mxu0 0.0
        %1200 = vmatpush2.msra.mxu0 0.0
        %1201 = vmatprep.subr.mxu0 0.0
        %1202 = vmatpush2.msra.mxu0 0.0
        %1203 = vmatprep.subr.mxu0 0.0
        %1204 = vmatpush2.msra.mxu0 0.0
        %1205 = vmatprep.subr.mxu0 0.0
        %1206 = vmatpush2.msra.mxu0 0.0
        %1207 = vmatprep.subr.mxu0 0.0
        %1208 = vmatpush2.msra.mxu0 0.0
        %1209 = vmatprep.subr.mxu0 0.0
        %1210 = vmatpush2.msra.mxu0 0.0
        %1211 = vmatprep.subr.mxu0 0.0
        %1212 = vmatpush2.msra.mxu0 0.0
        %1213 = vmatprep.subr.mxu0 0.0
        %1214 = vmatpush2.msra.mxu0 0.0
        %1215 = vmatprep.subr.mxu0 0.0
        %1216 = vmatpush2.msra.mxu0 0.0
        %1217 = vmatprep.mubr.f32.mxu0 0.0
        %1218 = vmatmul.mubr.f32.gmra.mxu0 %v1151
        %v1219 = vpop.f32.mrf.mxu0
        %v1220 = vadd.f32 %v1147, %v1219
        %v1221 = vpop.f32.mrf.mxu0
        %1222 = vdwg.mxu0
        %v1223 = vadd.f32 %v1220, %v965
        %v1224 = vxor.u32 %v1223, 2147483648
        %v1225 = vmul.f32 %v1224, 1.442695
        %v1226 = vpow.pop %v1225
        %v1227 = vadd.f32 %v1226, 1.0
        %v1228 = vrcp.pop %v1227
        %v1229 = vmul.f32 1.0, %v1228
        %v1230 = vmul.f32 %v1229, 2.0
        %v1231 = vsub.f32 %v1230, 1.0
        %1233 = vrot.lane.b32.xlu0 %v970, 32
        %v1234 = vpop.permute.xlu0 %1233
        %v1236 = vmul.f32 %v1229, %v1234
        %1238 = vrot.lane.b32.xlu0 %v1231, 64
        %v1239 = vpop.permute.xlu0 %1238
        %v1241 = vmul.f32 %v1229, %v1239
        %1243 = vrot.lane.b32.xlu0 %v1241, 32
        %v1244 = vpop.permute.xlu0 %1243
        %v1246 = vadd.f32 %v1236, %v1244
        %v1247 = vtanh.pop %v1246
        %1249 = vrot.lane.b32.xlu0 %v1247, 64
        %v1250 = vpop.permute.xlu0 %1249
        %v1252 = vmul.f32 %v1229, %v1250
        %1253 = vmatprep.subr.mxu0 0.0
        %1254 = vmatpush1.msra.mxu0 0.0
        %1255 = vmatprep.subr.mxu0 0.0
        %1256 = vmatpush1.msra.mxu0 0.0
        %1257 = vmatprep.subr.mxu0 0.0
        %1258 = vmatpush1.msra.mxu0 0.0
        %1259 = vmatprep.subr.mxu0 0.0
        %1260 = vmatpush1.msra.mxu0 0.0
        %1261 = vmatprep.subr.mxu0 0.0
        %1262 = vmatpush1.msra.mxu0 0.0
        %1263 = vmatprep.subr.mxu0 0.0
        %1264 = vmatpush1.msra.mxu0 0.0
        %1265 = vmatprep.subr.mxu0 0.0
        %1266 = vmatpush1.msra.mxu0 0.0
        %1267 = vmatprep.subr.mxu0 0.0
        %1268 = vmatpush1.msra.mxu0 0.0
        %1269 = vmatprep.subr.mxu0 0.0
        %1270 = vmatpush1.msra.mxu0 0.0
        %1271 = vmatprep.subr.mxu0 0.0
        %1272 = vmatpush1.msra.mxu0 0.0
        %1273 = vmatprep.subr.mxu0 0.0
        %1274 = vmatpush1.msra.mxu0 0.0
        %1275 = vmatprep.subr.mxu0 0.0
        %1276 = vmatpush1.msra.mxu0 0.0
        %1277 = vmatprep.subr.mxu0 0.0
        %1278 = vmatpush1.msra.mxu0 %v951
        %1279 = vmatprep.subr.mxu0 0.0
        %1280 = vmatpush1.msra.mxu0 %v950
        %1281 = vmatprep.subr.mxu0 0.0
        %1282 = vmatpush1.msra.mxu0 %v949
        %1283 = vmatprep.subr.mxu0 0.0
        %1284 = vmatpush1.msra.mxu0 %v948
        %1285 = vmatprep.subr.mxu0 0.0
        %1286 = vmatpush2.msra.mxu0 0.0
        %1287 = vmatprep.subr.mxu0 0.0
        %1288 = vmatpush2.msra.mxu0 0.0
        %1289 = vmatprep.subr.mxu0 0.0
        %1290 = vmatpush2.msra.mxu0 0.0
        %1291 = vmatprep.subr.mxu0 0.0
        %1292 = vmatpush2.msra.mxu0 0.0
        %1293 = vmatprep.subr.mxu0 0.0
        %1294 = vmatpush2.msra.mxu0 0.0
        %1295 = vmatprep.subr.mxu0 0.0
        %1296 = vmatpush2.msra.mxu0 0.0
        %1297 = vmatprep.subr.mxu0 0.0
        %1298 = vmatpush2.msra.mxu0 0.0
        %1299 = vmatprep.subr.mxu0 0.0
        %1300 = vmatpush2.msra.mxu0 0.0
        %1301 = vmatprep.subr.mxu0 0.0
        %1302 = vmatpush2.msra.mxu0 0.0
        %1303 = vmatprep.subr.mxu0 0.0
        %1304 = vmatpush2.msra.mxu0 0.0
        %1305 = vmatprep.subr.mxu0 0.0
        %1306 = vmatpush2.msra.mxu0 0.0
        %1307 = vmatprep.subr.mxu0 0.0
        %1308 = vmatpush2.msra.mxu0 0.0
        %1309 = vmatprep.subr.mxu0 0.0
        %1310 = vmatpush2.msra.mxu0 0.0
        %1311 = vmatprep.subr.mxu0 0.0
        %1312 = vmatpush2.msra.mxu0 0.0
        %1313 = vmatprep.subr.mxu0 0.0
        %1314 = vmatpush2.msra.mxu0 0.0
        %1315 = vmatprep.subr.mxu0 0.0
        %1316 = vmatpush2.msra.mxu0 0.0
        %1317 = vmatprep.mubr.f32.mxu0 0.0
        %1318 = vmatmul.mubr.f32.gmra.mxu0 %v1078
        %v1319 = vpop.f32.mrf.mxu0
        %v1320 = vadd.f32 0.0, %v1319
        %v1321 = vpop.f32.mrf.mxu0
        %1322 = vdwg.mxu0
        %v1323 = vadd.f32 %v875, %v1320
        %v1324 = vxor.u32 %v1323, 2147483648
        %v1325 = vmul.f32 %v1324, 1.442695
        %v1326 = vpow.pop %v1325
        %v1327 = vadd.f32 %v1326, 1.0
        %v1328 = vrcp.pop %v1327
        %v1329 = vmul.f32 1.0, %v1328
        %v1330 = vmul.f32 %v1329, 2.0
        %v1331 = vsub.f32 %v1330, 1.0
        %v1332 = vmul.f32 %v1329, %v1068
        %1334 = vrot.lane.b32.xlu0 %v1331, 64
        %v1335 = vpop.permute.xlu0 %1334
        %v1337 = vmul.f32 %v1329, %v1335
        %1339 = vrot.lane.b32.xlu0 %v1337, 32
        %v1340 = vpop.permute.xlu0 %1339
        %v1342 = vadd.f32 %v1332, %v1340
        %v1343 = vtanh.pop %v1342
        %1345 = vrot.lane.b32.xlu0 %v1343, 64
        %v1346 = vpop.permute.xlu0 %1345
        %v1348 = vmul.f32 %v1329, %v1346
        %1350 = vrot.lane.b32.xlu0 %v1348, 32
        %v1351 = vpop.permute.xlu0 %1350
        %v1352 = vsel %vm971, %v1351, 0
        %1354 = vmatprep.subr.mxu0 0.0
        %1355 = vmatpush1.msra.mxu0 0.0
        %1356 = vmatprep.subr.mxu0 0.0
        %1357 = vmatpush1.msra.mxu0 0.0
        %1358 = vmatprep.subr.mxu0 0.0
        %1359 = vmatpush1.msra.mxu0 0.0
        %1360 = vmatprep.subr.mxu0 0.0
        %1361 = vmatpush1.msra.mxu0 0.0
        %1362 = vmatprep.subr.mxu0 0.0
        %1363 = vmatpush1.msra.mxu0 0.0
        %1364 = vmatprep.subr.mxu0 0.0
        %1365 = vmatpush1.msra.mxu0 0.0
        %1366 = vmatprep.subr.mxu0 0.0
        %1367 = vmatpush1.msra.mxu0 0.0
        %1368 = vmatprep.subr.mxu0 0.0
        %1369 = vmatpush1.msra.mxu0 0.0
        %1370 = vmatprep.subr.mxu0 0.0
        %1371 = vmatpush1.msra.mxu0 0.0
        %1372 = vmatprep.subr.mxu0 0.0
        %1373 = vmatpush1.msra.mxu0 0.0
        %1374 = vmatprep.subr.mxu0 0.0
        %1375 = vmatpush1.msra.mxu0 0.0
        %1376 = vmatprep.subr.mxu0 0.0
        %1377 = vmatpush1.msra.mxu0 0.0
        %1378 = vmatprep.subr.mxu0 0.0
        %1379 = vmatpush1.msra.mxu0 %v955
        %1380 = vmatprep.subr.mxu0 0.0
        %1381 = vmatpush1.msra.mxu0 %v954
        %1382 = vmatprep.subr.mxu0 0.0
        %1383 = vmatpush1.msra.mxu0 %v953
        %1384 = vmatprep.subr.mxu0 0.0
        %1385 = vmatpush1.msra.mxu0 %v952
        %1386 = vmatprep.subr.mxu0 0.0
        %1387 = vmatpush2.msra.mxu0 0.0
        %1388 = vmatprep.subr.mxu0 0.0
        %1389 = vmatpush2.msra.mxu0 0.0
        %1390 = vmatprep.subr.mxu0 0.0
        %1391 = vmatpush2.msra.mxu0 0.0
        %1392 = vmatprep.subr.mxu0 0.0
        %1393 = vmatpush2.msra.mxu0 0.0
        %1394 = vmatprep.subr.mxu0 0.0
        %1395 = vmatpush2.msra.mxu0 0.0
        %1396 = vmatprep.subr.mxu0 0.0
        %1397 = vmatpush2.msra.mxu0 0.0
        %1398 = vmatprep.subr.mxu0 0.0
        %1399 = vmatpush2.msra.mxu0 0.0
        %1400 = vmatprep.subr.mxu0 0.0
        %1401 = vmatpush2.msra.mxu0 0.0
        %1402 = vmatprep.subr.mxu0 0.0
        %1403 = vmatpush2.msra.mxu0 0.0
        %1404 = vmatprep.subr.mxu0 0.0
        %1405 = vmatpush2.msra.mxu0 0.0
        %1406 = vmatprep.subr.mxu0 0.0
        %1407 = vmatpush2.msra.mxu0 0.0
        %1408 = vmatprep.subr.mxu0 0.0
        %1409 = vmatpush2.msra.mxu0 0.0
        %1410 = vmatprep.subr.mxu0 0.0
        %1411 = vmatpush2.msra.mxu0 0.0
        %1412 = vmatprep.subr.mxu0 0.0
        %1413 = vmatpush2.msra.mxu0 0.0
        %1414 = vmatprep.subr.mxu0 0.0
        %1415 = vmatpush2.msra.mxu0 0.0
        %1416 = vmatprep.subr.mxu0 0.0
        %1417 = vmatpush2.msra.mxu0 0.0
        %1418 = vmatprep.mubr.f32.mxu0 0.0
        %1419 = vmatmul.mubr.f32.gmra.mxu0 %v1352
        %v1420 = vpop.f32.mrf.mxu0
        %v1421 = vadd.f32 0.0, %v1420
        %v1422 = vpop.f32.mrf.mxu0
        %1423 = vdwg.mxu0
        %1425 = vrot.lane.b32.xlu0 %v1252, 32
        %v1426 = vpop.permute.xlu0 %1425
        %v1427 = vsel %vm971, %v1426, 0
        %1429 = vmatprep.subr.mxu0 0.0
        %1430 = vmatpush1.msra.mxu0 0.0
        %1431 = vmatprep.subr.mxu0 0.0
        %1432 = vmatpush1.msra.mxu0 0.0
        %1433 = vmatprep.subr.mxu0 0.0
        %1434 = vmatpush1.msra.mxu0 0.0
        %1435 = vmatprep.subr.mxu0 0.0
        %1436 = vmatpush1.msra.mxu0 0.0
        %1437 = vmatprep.subr.mxu0 0.0
        %1438 = vmatpush1.msra.mxu0 0.0
        %1439 = vmatprep.subr.mxu0 0.0
        %1440 = vmatpush1.msra.mxu0 0.0
        %1441 = vmatprep.subr.mxu0 0.0
        %1442 = vmatpush1.msra.mxu0 0.0
        %1443 = vmatprep.subr.mxu0 0.0
        %1444 = vmatpush1.msra.mxu0 0.0
        %1445 = vmatprep.subr.mxu0 0.0
        %1446 = vmatpush1.msra.mxu0 0.0
        %1447 = vmatprep.subr.mxu0 0.0
        %1448 = vmatpush1.msra.mxu0 0.0
        %1449 = vmatprep.subr.mxu0 0.0
        %1450 = vmatpush1.msra.mxu0 0.0
        %1451 = vmatprep.subr.mxu0 0.0
        %1452 = vmatpush1.msra.mxu0 0.0
        %1453 = vmatprep.subr.mxu0 0.0
        %1454 = vmatpush1.msra.mxu0 %v959
        %1455 = vmatprep.subr.mxu0 0.0
        %1456 = vmatpush1.msra.mxu0 %v958
        %1457 = vmatprep.subr.mxu0 0.0
        %1458 = vmatpush1.msra.mxu0 %v957
        %1459 = vmatprep.subr.mxu0 0.0
        %1460 = vmatpush1.msra.mxu0 %v956
        %1461 = vmatprep.subr.mxu0 0.0
        %1462 = vmatpush2.msra.mxu0 0.0
        %1463 = vmatprep.subr.mxu0 0.0
        %1464 = vmatpush2.msra.mxu0 0.0
        %1465 = vmatprep.subr.mxu0 0.0
        %1466 = vmatpush2.msra.mxu0 0.0
        %1467 = vmatprep.subr.mxu0 0.0
        %1468 = vmatpush2.msra.mxu0 0.0
        %1469 = vmatprep.subr.mxu0 0.0
        %1470 = vmatpush2.msra.mxu0 0.0
        %1471 = vmatprep.subr.mxu0 0.0
        %1472 = vmatpush2.msra.mxu0 0.0
        %1473 = vmatprep.subr.mxu0 0.0
        %1474 = vmatpush2.msra.mxu0 0.0
        %1475 = vmatprep.subr.mxu0 0.0
        %1476 = vmatpush2.msra.mxu0 0.0
        %1477 = vmatprep.subr.mxu0 0.0
        %1478 = vmatpush2.msra.mxu0 0.0
        %1479 = vmatprep.subr.mxu0 0.0
        %1480 = vmatpush2.msra.mxu0 0.0
        %1481 = vmatprep.subr.mxu0 0.0
        %1482 = vmatpush2.msra.mxu0 0.0
        %1483 = vmatprep.subr.mxu0 0.0
        %1484 = vmatpush2.msra.mxu0 0.0
        %1485 = vmatprep.subr.mxu0 0.0
        %1486 = vmatpush2.msra.mxu0 0.0
        %1487 = vmatprep.subr.mxu0 0.0
        %1488 = vmatpush2.msra.mxu0 0.0
        %1489 = vmatprep.subr.mxu0 0.0
        %1490 = vmatpush2.msra.mxu0 0.0
        %1491 = vmatprep.subr.mxu0 0.0
        %1492 = vmatpush2.msra.mxu0 0.0
        %1493 = vmatprep.mubr.f32.mxu0 0.0
        %1494 = vmatmul.mubr.f32.gmra.mxu0 %v1427
        %v1495 = vpop.f32.mrf.mxu0
        %v1496 = vadd.f32 %v1421, %v1495
        %v1497 = vpop.f32.mrf.mxu0
        %1498 = vdwg.mxu0
        %v1499 = vadd.f32 %v1496, %v965
        %v1500 = vxor.u32 %v1499, 2147483648
        %v1501 = vmul.f32 %v1500, 1.442695
        %v1502 = vpow.pop %v1501
        %v1503 = vadd.f32 %v1502, 1.0
        %v1504 = vrcp.pop %v1503
        %v1505 = vmul.f32 1.0, %v1504
        %v1506 = vmul.f32 %v1505, 2.0
        %v1507 = vsub.f32 %v1506, 1.0
        %v1508 = vmul.f32 %v1505, %v1246
        %1510 = vrot.lane.b32.xlu0 %v1507, 64
        %v1511 = vpop.permute.xlu0 %1510
        %v1513 = vmul.f32 %v1505, %v1511
        %1515 = vrot.lane.b32.xlu0 %v1513, 32
        %v1516 = vpop.permute.xlu0 %1515
        %v1518 = vadd.f32 %v1508, %v1516
        %v1519 = vtanh.pop %v1518
        %1521 = vrot.lane.b32.xlu0 %v1519, 64
        %v1522 = vpop.permute.xlu0 %1521
        %v1524 = vmul.f32 %v1505, %v1522
        %1525 = vmatprep.subr.mxu0 0.0
        %1526 = vmatpush1.msra.mxu0 0.0
        %1527 = vmatprep.subr.mxu0 0.0
        %1528 = vmatpush1.msra.mxu0 0.0
        %1529 = vmatprep.subr.mxu0 0.0
        %1530 = vmatpush1.msra.mxu0 0.0
        %1531 = vmatprep.subr.mxu0 0.0
        %1532 = vmatpush1.msra.mxu0 0.0
        %1533 = vmatprep.subr.mxu0 0.0
        %1534 = vmatpush1.msra.mxu0 0.0
        %1535 = vmatprep.subr.mxu0 0.0
        %1536 = vmatpush1.msra.mxu0 0.0
        %1537 = vmatprep.subr.mxu0 0.0
        %1538 = vmatpush1.msra.mxu0 0.0
        %1539 = vmatprep.subr.mxu0 0.0
        %1540 = vmatpush1.msra.mxu0 0.0
        %1541 = vmatprep.subr.mxu0 0.0
        %1542 = vmatpush1.msra.mxu0 0.0
        %1543 = vmatprep.subr.mxu0 0.0
        %1544 = vmatpush1.msra.mxu0 0.0
        %1545 = vmatprep.subr.mxu0 0.0
        %1546 = vmatpush1.msra.mxu0 0.0
        %1547 = vmatprep.subr.mxu0 0.0
        %1548 = vmatpush1.msra.mxu0 0.0
        %1549 = vmatprep.subr.mxu0 0.0
        %1550 = vmatpush1.msra.mxu0 %v951
        %1551 = vmatprep.subr.mxu0 0.0
        %1552 = vmatpush1.msra.mxu0 %v950
        %1553 = vmatprep.subr.mxu0 0.0
        %1554 = vmatpush1.msra.mxu0 %v949
        %1555 = vmatprep.subr.mxu0 0.0
        %1556 = vmatpush1.msra.mxu0 %v948
        %1557 = vmatprep.subr.mxu0 0.0
        %1558 = vmatpush2.msra.mxu0 0.0
        %1559 = vmatprep.subr.mxu0 0.0
        %1560 = vmatpush2.msra.mxu0 0.0
        %1561 = vmatprep.subr.mxu0 0.0
        %1562 = vmatpush2.msra.mxu0 0.0
        %1563 = vmatprep.subr.mxu0 0.0
        %1564 = vmatpush2.msra.mxu0 0.0
        %1565 = vmatprep.subr.mxu0 0.0
        %1566 = vmatpush2.msra.mxu0 0.0
        %1567 = vmatprep.subr.mxu0 0.0
        %1568 = vmatpush2.msra.mxu0 0.0
        %1569 = vmatprep.subr.mxu0 0.0
        %1570 = vmatpush2.msra.mxu0 0.0
        %1571 = vmatprep.subr.mxu0 0.0
        %1572 = vmatpush2.msra.mxu0 0.0
        %1573 = vmatprep.subr.mxu0 0.0
        %1574 = vmatpush2.msra.mxu0 0.0
        %1575 = vmatprep.subr.mxu0 0.0
        %1576 = vmatpush2.msra.mxu0 0.0
        %1577 = vmatprep.subr.mxu0 0.0
        %1578 = vmatpush2.msra.mxu0 0.0
        %1579 = vmatprep.subr.mxu0 0.0
        %1580 = vmatpush2.msra.mxu0 0.0
        %1581 = vmatprep.subr.mxu0 0.0
        %1582 = vmatpush2.msra.mxu0 0.0
        %1583 = vmatprep.subr.mxu0 0.0
        %1584 = vmatpush2.msra.mxu0 0.0
        %1585 = vmatprep.subr.mxu0 0.0
        %1586 = vmatpush2.msra.mxu0 0.0
        %1587 = vmatprep.subr.mxu0 0.0
        %1588 = vmatpush2.msra.mxu0 0.0
        %1589 = vmatprep.mubr.f32.mxu0 0.0
        %1590 = vmatmul.mubr.f32.gmra.mxu0 %v1352
        %v1591 = vpop.f32.mrf.mxu0
        %v1592 = vadd.f32 0.0, %v1591
        %v1593 = vpop.f32.mrf.mxu0
        %1594 = vdwg.mxu0
        %v1595 = vadd.f32 %v880, %v1592
        %v1596 = vxor.u32 %v1595, 2147483648
        %v1597 = vmul.f32 %v1596, 1.442695
        %v1598 = vpow.pop %v1597
        %v1599 = vadd.f32 %v1598, 1.0
        %v1600 = vrcp.pop %v1599
        %v1601 = vmul.f32 1.0, %v1600
        %v1602 = vmul.f32 %v1601, 2.0
        %v1603 = vsub.f32 %v1602, 1.0
        %v1604 = vmul.f32 %v1601, %v1342
        %1606 = vrot.lane.b32.xlu0 %v1603, 64
        %v1607 = vpop.permute.xlu0 %1606
        %v1609 = vmul.f32 %v1601, %v1607
        %1611 = vrot.lane.b32.xlu0 %v1609, 32
        %v1612 = vpop.permute.xlu0 %1611
        %v1614 = vadd.f32 %v1604, %v1612
        %v1615 = vtanh.pop %v1614
        %1617 = vrot.lane.b32.xlu0 %v1615, 64
        %v1618 = vpop.permute.xlu0 %1617
        %v1620 = vmul.f32 %v1601, %v1618
        %1622 = vrot.lane.b32.xlu0 %v1620, 32
        %v1623 = vpop.permute.xlu0 %1622
        %v1624 = vsel %vm971, %v1623, 0
        %1626 = vmatprep.subr.mxu0 0.0
        %1627 = vmatpush1.msra.mxu0 0.0
        %1628 = vmatprep.subr.mxu0 0.0
        %1629 = vmatpush1.msra.mxu0 0.0
        %1630 = vmatprep.subr.mxu0 0.0
        %1631 = vmatpush1.msra.mxu0 0.0
        %1632 = vmatprep.subr.mxu0 0.0
        %1633 = vmatpush1.msra.mxu0 0.0
        %1634 = vmatprep.subr.mxu0 0.0
        %1635 = vmatpush1.msra.mxu0 0.0
        %1636 = vmatprep.subr.mxu0 0.0
        %1637 = vmatpush1.msra.mxu0 0.0
        %1638 = vmatprep.subr.mxu0 0.0
        %1639 = vmatpush1.msra.mxu0 0.0
        %1640 = vmatprep.subr.mxu0 0.0
        %1641 = vmatpush1.msra.mxu0 0.0
        %1642 = vmatprep.subr.mxu0 0.0
        %1643 = vmatpush1.msra.mxu0 0.0
        %1644 = vmatprep.subr.mxu0 0.0
        %1645 = vmatpush1.msra.mxu0 0.0
        %1646 = vmatprep.subr.mxu0 0.0
        %1647 = vmatpush1.msra.mxu0 0.0
        %1648 = vmatprep.subr.mxu0 0.0
        %1649 = vmatpush1.msra.mxu0 0.0
        %1650 = vmatprep.subr.mxu0 0.0
        %1651 = vmatpush1.msra.mxu0 %v955
        %1652 = vmatprep.subr.mxu0 0.0
        %1653 = vmatpush1.msra.mxu0 %v954
        %1654 = vmatprep.subr.mxu0 0.0
        %1655 = vmatpush1.msra.mxu0 %v953
        %1656 = vmatprep.subr.mxu0 0.0
        %1657 = vmatpush1.msra.mxu0 %v952
        %1658 = vmatprep.subr.mxu0 0.0
        %1659 = vmatpush2.msra.mxu0 0.0
        %1660 = vmatprep.subr.mxu0 0.0
        %1661 = vmatpush2.msra.mxu0 0.0
        %1662 = vmatprep.subr.mxu0 0.0
        %1663 = vmatpush2.msra.mxu0 0.0
        %1664 = vmatprep.subr.mxu0 0.0
        %1665 = vmatpush2.msra.mxu0 0.0
        %1666 = vmatprep.subr.mxu0 0.0
        %1667 = vmatpush2.msra.mxu0 0.0
        %1668 = vmatprep.subr.mxu0 0.0
        %1669 = vmatpush2.msra.mxu0 0.0
        %1670 = vmatprep.subr.mxu0 0.0
        %1671 = vmatpush2.msra.mxu0 0.0
        %1672 = vmatprep.subr.mxu0 0.0
        %1673 = vmatpush2.msra.mxu0 0.0
        %1674 = vmatprep.subr.mxu0 0.0
        %1675 = vmatpush2.msra.mxu0 0.0
        %1676 = vmatprep.subr.mxu0 0.0
        %1677 = vmatpush2.msra.mxu0 0.0
        %1678 = vmatprep.subr.mxu0 0.0
        %1679 = vmatpush2.msra.mxu0 0.0
        %1680 = vmatprep.subr.mxu0 0.0
        %1681 = vmatpush2.msra.mxu0 0.0
        %1682 = vmatprep.subr.mxu0 0.0
        %1683 = vmatpush2.msra.mxu0 0.0
        %1684 = vmatprep.subr.mxu0 0.0
        %1685 = vmatpush2.msra.mxu0 0.0
        %1686 = vmatprep.subr.mxu0 0.0
        %1687 = vmatpush2.msra.mxu0 0.0
        %1688 = vmatprep.subr.mxu0 0.0
        %1689 = vmatpush2.msra.mxu0 0.0
        %1690 = vmatprep.mubr.f32.mxu0 0.0
        %1691 = vmatmul.mubr.f32.gmra.mxu0 %v1624
        %v1692 = vpop.f32.mrf.mxu0
        %v1693 = vadd.f32 0.0, %v1692
        %v1694 = vpop.f32.mrf.mxu0
        %1695 = vdwg.mxu0
        %1697 = vrot.lane.b32.xlu0 %v1524, 32
        %v1698 = vpop.permute.xlu0 %1697
        %v1699 = vsel %vm971, %v1698, 0
        %1701 = vmatprep.subr.mxu0 0.0
        %1702 = vmatpush1.msra.mxu0 0.0
        %1703 = vmatprep.subr.mxu0 0.0
        %1704 = vmatpush1.msra.mxu0 0.0
        %1705 = vmatprep.subr.mxu0 0.0
        %1706 = vmatpush1.msra.mxu0 0.0
        %1707 = vmatprep.subr.mxu0 0.0
        %1708 = vmatpush1.msra.mxu0 0.0
        %1709 = vmatprep.subr.mxu0 0.0
        %1710 = vmatpush1.msra.mxu0 0.0
        %1711 = vmatprep.subr.mxu0 0.0
        %1712 = vmatpush1.msra.mxu0 0.0
        %1713 = vmatprep.subr.mxu0 0.0
        %1714 = vmatpush1.msra.mxu0 0.0
        %1715 = vmatprep.subr.mxu0 0.0
        %1716 = vmatpush1.msra.mxu0 0.0
        %1717 = vmatprep.subr.mxu0 0.0
        %1718 = vmatpush1.msra.mxu0 0.0
        %1719 = vmatprep.subr.mxu0 0.0
        %1720 = vmatpush1.msra.mxu0 0.0
        %1721 = vmatprep.subr.mxu0 0.0
        %1722 = vmatpush1.msra.mxu0 0.0
        %1723 = vmatprep.subr.mxu0 0.0
        %1724 = vmatpush1.msra.mxu0 0.0
        %1725 = vmatprep.subr.mxu0 0.0
        %1726 = vmatpush1.msra.mxu0 %v959
        %1727 = vmatprep.subr.mxu0 0.0
        %1728 = vmatpush1.msra.mxu0 %v958
        %1729 = vmatprep.subr.mxu0 0.0
        %1730 = vmatpush1.msra.mxu0 %v957
        %1731 = vmatprep.subr.mxu0 0.0
        %1732 = vmatpush1.msra.mxu0 %v956
        %1733 = vmatprep.subr.mxu0 0.0
        %1734 = vmatpush2.msra.mxu0 0.0
        %1735 = vmatprep.subr.mxu0 0.0
        %1736 = vmatpush2.msra.mxu0 0.0
        %1737 = vmatprep.subr.mxu0 0.0
        %1738 = vmatpush2.msra.mxu0 0.0
        %1739 = vmatprep.subr.mxu0 0.0
        %1740 = vmatpush2.msra.mxu0 0.0
        %1741 = vmatprep.subr.mxu0 0.0
        %1742 = vmatpush2.msra.mxu0 0.0
        %1743 = vmatprep.subr.mxu0 0.0
        %1744 = vmatpush2.msra.mxu0 0.0
        %1745 = vmatprep.subr.mxu0 0.0
        %1746 = vmatpush2.msra.mxu0 0.0
        %1747 = vmatprep.subr.mxu0 0.0
        %1748 = vmatpush2.msra.mxu0 0.0
        %1749 = vmatprep.subr.mxu0 0.0
        %1750 = vmatpush2.msra.mxu0 0.0
        %1751 = vmatprep.subr.mxu0 0.0
        %1752 = vmatpush2.msra.mxu0 0.0
        %1753 = vmatprep.subr.mxu0 0.0
        %1754 = vmatpush2.msra.mxu0 0.0
        %1755 = vmatprep.subr.mxu0 0.0
        %1756 = vmatpush2.msra.mxu0 0.0
        %1757 = vmatprep.subr.mxu0 0.0
        %1758 = vmatpush2.msra.mxu0 0.0
        %1759 = vmatprep.subr.mxu0 0.0
        %1760 = vmatpush2.msra.mxu0 0.0
        %1761 = vmatprep.subr.mxu0 0.0
        %1762 = vmatpush2.msra.mxu0 0.0
        %1763 = vmatprep.subr.mxu0 0.0
        %1764 = vmatpush2.msra.mxu0 0.0
        %1765 = vmatprep.mubr.f32.mxu0 0.0
        %1766 = vmatmul.mubr.f32.gmra.mxu0 %v1699
        %v1767 = vpop.f32.mrf.mxu0
        %v1768 = vadd.f32 %v1693, %v1767
        %v1769 = vpop.f32.mrf.mxu0
        %1770 = vdwg.mxu0
        %v1771 = vadd.f32 %v1768, %v965
        %v1772 = vxor.u32 %v1771, 2147483648
        %v1773 = vmul.f32 %v1772, 1.442695
        %v1774 = vpow.pop %v1773
        %v1775 = vadd.f32 %v1774, 1.0
        %v1776 = vrcp.pop %v1775
        %v1777 = vmul.f32 1.0, %v1776
        %v1778 = vmul.f32 %v1777, 2.0
        %v1779 = vsub.f32 %v1778, 1.0
        %v1780 = vmul.f32 %v1777, %v1518
        %1782 = vrot.lane.b32.xlu0 %v1779, 64
        %v1783 = vpop.permute.xlu0 %1782
        %v1785 = vmul.f32 %v1777, %v1783
        %1787 = vrot.lane.b32.xlu0 %v1785, 32
        %v1788 = vpop.permute.xlu0 %1787
        %v1790 = vadd.f32 %v1780, %v1788
        %v1791 = vtanh.pop %v1790
        %1793 = vrot.lane.b32.xlu0 %v1791, 64
        %v1794 = vpop.permute.xlu0 %1793
        %v1796 = vmul.f32 %v1777, %v1794
        %1797 = vmatprep.subr.mxu0 0.0
        %1798 = vmatpush1.msra.mxu0 0.0
        %1799 = vmatprep.subr.mxu0 0.0
        %1800 = vmatpush1.msra.mxu0 0.0
        %1801 = vmatprep.subr.mxu0 0.0
        %1802 = vmatpush1.msra.mxu0 0.0
        %1803 = vmatprep.subr.mxu0 0.0
        %1804 = vmatpush1.msra.mxu0 0.0
        %1805 = vmatprep.subr.mxu0 0.0
        %1806 = vmatpush1.msra.mxu0 0.0
        %1807 = vmatprep.subr.mxu0 0.0
        %1808 = vmatpush1.msra.mxu0 0.0
        %1809 = vmatprep.subr.mxu0 0.0
        %1810 = vmatpush1.msra.mxu0 0.0
        %1811 = vmatprep.subr.mxu0 0.0
        %1812 = vmatpush1.msra.mxu0 0.0
        %1813 = vmatprep.subr.mxu0 0.0
        %1814 = vmatpush1.msra.mxu0 0.0
        %1815 = vmatprep.subr.mxu0 0.0
        %1816 = vmatpush1.msra.mxu0 0.0
        %1817 = vmatprep.subr.mxu0 0.0
        %1818 = vmatpush1.msra.mxu0 0.0
        %1819 = vmatprep.subr.mxu0 0.0
        %1820 = vmatpush1.msra.mxu0 0.0
        %1821 = vmatprep.subr.mxu0 0.0
        %1822 = vmatpush1.msra.mxu0 %v951
        %1823 = vmatprep.subr.mxu0 0.0
        %1824 = vmatpush1.msra.mxu0 %v950
        %1825 = vmatprep.subr.mxu0 0.0
        %1826 = vmatpush1.msra.mxu0 %v949
        %1827 = vmatprep.subr.mxu0 0.0
        %1828 = vmatpush1.msra.mxu0 %v948
        %1829 = vmatprep.subr.mxu0 0.0
        %1830 = vmatpush2.msra.mxu0 0.0
        %1831 = vmatprep.subr.mxu0 0.0
        %1832 = vmatpush2.msra.mxu0 0.0
        %1833 = vmatprep.subr.mxu0 0.0
        %1834 = vmatpush2.msra.mxu0 0.0
        %1835 = vmatprep.subr.mxu0 0.0
        %1836 = vmatpush2.msra.mxu0 0.0
        %1837 = vmatprep.subr.mxu0 0.0
        %1838 = vmatpush2.msra.mxu0 0.0
        %1839 = vmatprep.subr.mxu0 0.0
        %1840 = vmatpush2.msra.mxu0 0.0
        %1841 = vmatprep.subr.mxu0 0.0
        %1842 = vmatpush2.msra.mxu0 0.0
        %1843 = vmatprep.subr.mxu0 0.0
        %1844 = vmatpush2.msra.mxu0 0.0
        %1845 = vmatprep.subr.mxu0 0.0
        %1846 = vmatpush2.msra.mxu0 0.0
        %1847 = vmatprep.subr.mxu0 0.0
        %1848 = vmatpush2.msra.mxu0 0.0
        %1849 = vmatprep.subr.mxu0 0.0
        %1850 = vmatpush2.msra.mxu0 0.0
        %1851 = vmatprep.subr.mxu0 0.0
        %1852 = vmatpush2.msra.mxu0 0.0
        %1853 = vmatprep.subr.mxu0 0.0
        %1854 = vmatpush2.msra.mxu0 0.0
        %1855 = vmatprep.subr.mxu0 0.0
        %1856 = vmatpush2.msra.mxu0 0.0
        %1857 = vmatprep.subr.mxu0 0.0
        %1858 = vmatpush2.msra.mxu0 0.0
        %1859 = vmatprep.subr.mxu0 0.0
        %1860 = vmatpush2.msra.mxu0 0.0
        %1861 = vmatprep.mubr.f32.mxu0 0.0
        %1862 = vmatmul.mubr.f32.gmra.mxu0 %v1624
        %v1863 = vpop.f32.mrf.mxu0
        %v1864 = vadd.f32 0.0, %v1863
        %v1865 = vpop.f32.mrf.mxu0
        %1866 = vdwg.mxu0
        %v1867 = vadd.f32 %v885, %v1864
        %v1868 = vxor.u32 %v1867, 2147483648
        %v1869 = vmul.f32 %v1868, 1.442695
        %v1870 = vpow.pop %v1869
        %v1871 = vadd.f32 %v1870, 1.0
        %v1872 = vrcp.pop %v1871
        %v1873 = vmul.f32 1.0, %v1872
        %v1874 = vmul.f32 %v1873, 2.0
        %v1875 = vsub.f32 %v1874, 1.0
        %v1876 = vmul.f32 %v1873, %v1614
        %1878 = vrot.lane.b32.xlu0 %v1875, 64
        %v1879 = vpop.permute.xlu0 %1878
        %v1881 = vmul.f32 %v1873, %v1879
        %1883 = vrot.lane.b32.xlu0 %v1881, 32
        %v1884 = vpop.permute.xlu0 %1883
        %v1886 = vadd.f32 %v1876, %v1884
        %v1887 = vtanh.pop %v1886
        %1889 = vrot.lane.b32.xlu0 %v1887, 64
        %v1890 = vpop.permute.xlu0 %1889
        %v1892 = vmul.f32 %v1873, %v1890
        %1894 = vrot.lane.b32.xlu0 %v1892, 32
        %v1895 = vpop.permute.xlu0 %1894
        %v1896 = vsel %vm971, %v1895, 0
        %1898 = vmatprep.subr.mxu0 0.0
        %1899 = vmatpush1.msra.mxu0 0.0
        %1900 = vmatprep.subr.mxu0 0.0
        %1901 = vmatpush1.msra.mxu0 0.0
        %1902 = vmatprep.subr.mxu0 0.0
        %1903 = vmatpush1.msra.mxu0 0.0
        %1904 = vmatprep.subr.mxu0 0.0
        %1905 = vmatpush1.msra.mxu0 0.0
        %1906 = vmatprep.subr.mxu0 0.0
        %1907 = vmatpush1.msra.mxu0 0.0
        %1908 = vmatprep.subr.mxu0 0.0
        %1909 = vmatpush1.msra.mxu0 0.0
        %1910 = vmatprep.subr.mxu0 0.0
        %1911 = vmatpush1.msra.mxu0 0.0
        %1912 = vmatprep.subr.mxu0 0.0
        %1913 = vmatpush1.msra.mxu0 0.0
        %1914 = vmatprep.subr.mxu0 0.0
        %1915 = vmatpush1.msra.mxu0 0.0
        %1916 = vmatprep.subr.mxu0 0.0
        %1917 = vmatpush1.msra.mxu0 0.0
        %1918 = vmatprep.subr.mxu0 0.0
        %1919 = vmatpush1.msra.mxu0 0.0
        %1920 = vmatprep.subr.mxu0 0.0
        %1921 = vmatpush1.msra.mxu0 0.0
        %1922 = vmatprep.subr.mxu0 0.0
        %1923 = vmatpush1.msra.mxu0 %v955
        %1924 = vmatprep.subr.mxu0 0.0
        %1925 = vmatpush1.msra.mxu0 %v954
        %1926 = vmatprep.subr.mxu0 0.0
        %1927 = vmatpush1.msra.mxu0 %v953
        %1928 = vmatprep.subr.mxu0 0.0
        %1929 = vmatpush1.msra.mxu0 %v952
        %1930 = vmatprep.subr.mxu0 0.0
        %1931 = vmatpush2.msra.mxu0 0.0
        %1932 = vmatprep.subr.mxu0 0.0
        %1933 = vmatpush2.msra.mxu0 0.0
        %1934 = vmatprep.subr.mxu0 0.0
        %1935 = vmatpush2.msra.mxu0 0.0
        %1936 = vmatprep.subr.mxu0 0.0
        %1937 = vmatpush2.msra.mxu0 0.0
        %1938 = vmatprep.subr.mxu0 0.0
        %1939 = vmatpush2.msra.mxu0 0.0
        %1940 = vmatprep.subr.mxu0 0.0
        %1941 = vmatpush2.msra.mxu0 0.0
        %1942 = vmatprep.subr.mxu0 0.0
        %1943 = vmatpush2.msra.mxu0 0.0
        %1944 = vmatprep.subr.mxu0 0.0
        %1945 = vmatpush2.msra.mxu0 0.0
        %1946 = vmatprep.subr.mxu0 0.0
        %1947 = vmatpush2.msra.mxu0 0.0
        %1948 = vmatprep.subr.mxu0 0.0
        %1949 = vmatpush2.msra.mxu0 0.0
        %1950 = vmatprep.subr.mxu0 0.0
        %1951 = vmatpush2.msra.mxu0 0.0
        %1952 = vmatprep.subr.mxu0 0.0
        %1953 = vmatpush2.msra.mxu0 0.0
        %1954 = vmatprep.subr.mxu0 0.0
        %1955 = vmatpush2.msra.mxu0 0.0
        %1956 = vmatprep.subr.mxu0 0.0
        %1957 = vmatpush2.msra.mxu0 0.0
        %1958 = vmatprep.subr.mxu0 0.0
        %1959 = vmatpush2.msra.mxu0 0.0
        %1960 = vmatprep.subr.mxu0 0.0
        %1961 = vmatpush2.msra.mxu0 0.0
        %1962 = vmatprep.mubr.f32.mxu0 0.0
        %1963 = vmatmul.mubr.f32.gmra.mxu0 %v1896
        %v1964 = vpop.f32.mrf.mxu0
        %v1965 = vadd.f32 0.0, %v1964
        %v1966 = vpop.f32.mrf.mxu0
        %1967 = vdwg.mxu0
        %1969 = vrot.lane.b32.xlu0 %v1796, 32
        %v1970 = vpop.permute.xlu0 %1969
        %v1971 = vsel %vm971, %v1970, 0
        %1973 = vmatprep.subr.mxu0 0.0
        %1974 = vmatpush1.msra.mxu0 0.0
        %1975 = vmatprep.subr.mxu0 0.0
        %1976 = vmatpush1.msra.mxu0 0.0
        %1977 = vmatprep.subr.mxu0 0.0
        %1978 = vmatpush1.msra.mxu0 0.0
        %1979 = vmatprep.subr.mxu0 0.0
        %1980 = vmatpush1.msra.mxu0 0.0
        %1981 = vmatprep.subr.mxu0 0.0
        %1982 = vmatpush1.msra.mxu0 0.0
        %1983 = vmatprep.subr.mxu0 0.0
        %1984 = vmatpush1.msra.mxu0 0.0
        %1985 = vmatprep.subr.mxu0 0.0
        %1986 = vmatpush1.msra.mxu0 0.0
        %1987 = vmatprep.subr.mxu0 0.0
        %1988 = vmatpush1.msra.mxu0 0.0
        %1989 = vmatprep.subr.mxu0 0.0
        %1990 = vmatpush1.msra.mxu0 0.0
        %1991 = vmatprep.subr.mxu0 0.0
        %1992 = vmatpush1.msra.mxu0 0.0
        %1993 = vmatprep.subr.mxu0 0.0
        %1994 = vmatpush1.msra.mxu0 0.0
        %1995 = vmatprep.subr.mxu0 0.0
        %1996 = vmatpush1.msra.mxu0 0.0
        %1997 = vmatprep.subr.mxu0 0.0
        %1998 = vmatpush1.msra.mxu0 %v959
        %1999 = vmatprep.subr.mxu0 0.0
        %2000 = vmatpush1.msra.mxu0 %v958
        %2001 = vmatprep.subr.mxu0 0.0
        %2002 = vmatpush1.msra.mxu0 %v957
        %2003 = vmatprep.subr.mxu0 0.0
        %2004 = vmatpush1.msra.mxu0 %v956
        %2005 = vmatprep.subr.mxu0 0.0
        %2006 = vmatpush2.msra.mxu0 0.0
        %2007 = vmatprep.subr.mxu0 0.0
        %2008 = vmatpush2.msra.mxu0 0.0
        %2009 = vmatprep.subr.mxu0 0.0
        %2010 = vmatpush2.msra.mxu0 0.0
        %2011 = vmatprep.subr.mxu0 0.0
        %2012 = vmatpush2.msra.mxu0 0.0
        %2013 = vmatprep.subr.mxu0 0.0
        %2014 = vmatpush2.msra.mxu0 0.0
        %2015 = vmatprep.subr.mxu0 0.0
        %2016 = vmatpush2.msra.mxu0 0.0
        %2017 = vmatprep.subr.mxu0 0.0
        %2018 = vmatpush2.msra.mxu0 0.0
        %2019 = vmatprep.subr.mxu0 0.0
        %2020 = vmatpush2.msra.mxu0 0.0
        %2021 = vmatprep.subr.mxu0 0.0
        %2022 = vmatpush2.msra.mxu0 0.0
        %2023 = vmatprep.subr.mxu0 0.0
        %2024 = vmatpush2.msra.mxu0 0.0
        %2025 = vmatprep.subr.mxu0 0.0
        %2026 = vmatpush2.msra.mxu0 0.0
        %2027 = vmatprep.subr.mxu0 0.0
        %2028 = vmatpush2.msra.mxu0 0.0
        %2029 = vmatprep.subr.mxu0 0.0
        %2030 = vmatpush2.msra.mxu0 0.0
        %2031 = vmatprep.subr.mxu0 0.0
        %2032 = vmatpush2.msra.mxu0 0.0
        %2033 = vmatprep.subr.mxu0 0.0
        %2034 = vmatpush2.msra.mxu0 0.0
        %2035 = vmatprep.subr.mxu0 0.0
        %2036 = vmatpush2.msra.mxu0 0.0
        %2037 = vmatprep.mubr.f32.mxu0 0.0
        %2038 = vmatmul.mubr.f32.gmra.mxu0 %v1971
        %v2039 = vpop.f32.mrf.mxu0
        %v2040 = vadd.f32 %v1965, %v2039
        %v2041 = vpop.f32.mrf.mxu0
        %2042 = vdwg.mxu0
        %v2043 = vadd.f32 %v2040, %v965
        %v2044 = vxor.u32 %v2043, 2147483648
        %v2045 = vmul.f32 %v2044, 1.442695
        %v2046 = vpow.pop %v2045
        %v2047 = vadd.f32 %v2046, 1.0
        %v2048 = vrcp.pop %v2047
        %v2049 = vmul.f32 1.0, %v2048
        %v2050 = vmul.f32 %v2049, 2.0
        %v2051 = vsub.f32 %v2050, 1.0
        %v2052 = vmul.f32 %v2049, %v1790
        %2054 = vrot.lane.b32.xlu0 %v2051, 64
        %v2055 = vpop.permute.xlu0 %2054
        %v2057 = vmul.f32 %v2049, %v2055
        %2059 = vrot.lane.b32.xlu0 %v2057, 32
        %v2060 = vpop.permute.xlu0 %2059
        %v2062 = vadd.f32 %v2052, %v2060
        %v2063 = vtanh.pop %v2062
        %2065 = vrot.lane.b32.xlu0 %v2063, 64
        %v2066 = vpop.permute.xlu0 %2065
        %v2068 = vmul.f32 %v2049, %v2066
        %2069 = vmatprep.subr.mxu0 0.0
        %2070 = vmatpush1.msra.mxu0 0.0
        %2071 = vmatprep.subr.mxu0 0.0
        %2072 = vmatpush1.msra.mxu0 0.0
        %2073 = vmatprep.subr.mxu0 0.0
        %2074 = vmatpush1.msra.mxu0 0.0
        %2075 = vmatprep.subr.mxu0 0.0
        %2076 = vmatpush1.msra.mxu0 0.0
        %2077 = vmatprep.subr.mxu0 0.0
        %2078 = vmatpush1.msra.mxu0 0.0
        %2079 = vmatprep.subr.mxu0 0.0
        %2080 = vmatpush1.msra.mxu0 0.0
        %2081 = vmatprep.subr.mxu0 0.0
        %2082 = vmatpush1.msra.mxu0 0.0
        %2083 = vmatprep.subr.mxu0 0.0
        %2084 = vmatpush1.msra.mxu0 0.0
        %2085 = vmatprep.subr.mxu0 0.0
        %2086 = vmatpush1.msra.mxu0 0.0
        %2087 = vmatprep.subr.mxu0 0.0
        %2088 = vmatpush1.msra.mxu0 0.0
        %2089 = vmatprep.subr.mxu0 0.0
        %2090 = vmatpush1.msra.mxu0 0.0
        %2091 = vmatprep.subr.mxu0 0.0
        %2092 = vmatpush1.msra.mxu0 0.0
        %2093 = vmatprep.subr.mxu0 0.0
        %2094 = vmatpush1.msra.mxu0 %v951
        %2095 = vmatprep.subr.mxu0 0.0
        %2096 = vmatpush1.msra.mxu0 %v950
        %2097 = vmatprep.subr.mxu0 0.0
        %2098 = vmatpush1.msra.mxu0 %v949
        %2099 = vmatprep.subr.mxu0 0.0
        %2100 = vmatpush1.msra.mxu0 %v948
        %2101 = vmatprep.subr.mxu0 0.0
        %2102 = vmatpush2.msra.mxu0 0.0
        %2103 = vmatprep.subr.mxu0 0.0
        %2104 = vmatpush2.msra.mxu0 0.0
        %2105 = vmatprep.subr.mxu0 0.0
        %2106 = vmatpush2.msra.mxu0 0.0
        %2107 = vmatprep.subr.mxu0 0.0
        %2108 = vmatpush2.msra.mxu0 0.0
        %2109 = vmatprep.subr.mxu0 0.0
        %2110 = vmatpush2.msra.mxu0 0.0
        %2111 = vmatprep.subr.mxu0 0.0
        %2112 = vmatpush2.msra.mxu0 0.0
        %2113 = vmatprep.subr.mxu0 0.0
        %2114 = vmatpush2.msra.mxu0 0.0
        %2115 = vmatprep.subr.mxu0 0.0
        %2116 = vmatpush2.msra.mxu0 0.0
        %2117 = vmatprep.subr.mxu0 0.0
        %2118 = vmatpush2.msra.mxu0 0.0
        %2119 = vmatprep.subr.mxu0 0.0
        %2120 = vmatpush2.msra.mxu0 0.0
        %2121 = vmatprep.subr.mxu0 0.0
        %2122 = vmatpush2.msra.mxu0 0.0
        %2123 = vmatprep.subr.mxu0 0.0
        %2124 = vmatpush2.msra.mxu0 0.0
        %2125 = vmatprep.subr.mxu0 0.0
        %2126 = vmatpush2.msra.mxu0 0.0
        %2127 = vmatprep.subr.mxu0 0.0
        %2128 = vmatpush2.msra.mxu0 0.0
        %2129 = vmatprep.subr.mxu0 0.0
        %2130 = vmatpush2.msra.mxu0 0.0
        %2131 = vmatprep.subr.mxu0 0.0
        %2132 = vmatpush2.msra.mxu0 0.0
        %2133 = vmatprep.mubr.f32.mxu0 0.0
        %2134 = vmatmul.mubr.f32.gmra.mxu0 %v1896
        %v2135 = vpop.f32.mrf.mxu0
        %v2136 = vadd.f32 0.0, %v2135
        %v2137 = vpop.f32.mrf.mxu0
        %2138 = vdwg.mxu0
        %v2139 = vadd.f32 %v890, %v2136
        %v2140 = vxor.u32 %v2139, 2147483648
        %v2141 = vmul.f32 %v2140, 1.442695
        %v2142 = vpow.pop %v2141
        %v2143 = vadd.f32 %v2142, 1.0
        %v2144 = vrcp.pop %v2143
        %v2145 = vmul.f32 1.0, %v2144
        %v2146 = vmul.f32 %v2145, 2.0
        %v2147 = vsub.f32 %v2146, 1.0
        %v2148 = vmul.f32 %v2145, %v1886
        %2150 = vrot.lane.b32.xlu0 %v2147, 64
        %v2151 = vpop.permute.xlu0 %2150
        %v2153 = vmul.f32 %v2145, %v2151
        %2155 = vrot.lane.b32.xlu0 %v2153, 32
        %v2156 = vpop.permute.xlu0 %2155
        %v2158 = vadd.f32 %v2148, %v2156
        %v2159 = vtanh.pop %v2158
        %2161 = vrot.lane.b32.xlu0 %v2159, 64
        %v2162 = vpop.permute.xlu0 %2161
        %v2164 = vmul.f32 %v2145, %v2162
        %2166 = vrot.lane.b32.xlu0 %v2164, 32
        %v2167 = vpop.permute.xlu0 %2166
        %v2168 = vsel %vm971, %v2167, 0
        %2170 = vmatprep.subr.mxu0 0.0
        %2171 = vmatpush1.msra.mxu0 0.0
        %2172 = vmatprep.subr.mxu0 0.0
        %2173 = vmatpush1.msra.mxu0 0.0
        %2174 = vmatprep.subr.mxu0 0.0
        %2175 = vmatpush1.msra.mxu0 0.0
        %2176 = vmatprep.subr.mxu0 0.0
        %2177 = vmatpush1.msra.mxu0 0.0
        %2178 = vmatprep.subr.mxu0 0.0
        %2179 = vmatpush1.msra.mxu0 0.0
        %2180 = vmatprep.subr.mxu0 0.0
        %2181 = vmatpush1.msra.mxu0 0.0
        %2182 = vmatprep.subr.mxu0 0.0
        %2183 = vmatpush1.msra.mxu0 0.0
        %2184 = vmatprep.subr.mxu0 0.0
        %2185 = vmatpush1.msra.mxu0 0.0
        %2186 = vmatprep.subr.mxu0 0.0
        %2187 = vmatpush1.msra.mxu0 0.0
        %2188 = vmatprep.subr.mxu0 0.0
        %2189 = vmatpush1.msra.mxu0 0.0
        %2190 = vmatprep.subr.mxu0 0.0
        %2191 = vmatpush1.msra.mxu0 0.0
        %2192 = vmatprep.subr.mxu0 0.0
        %2193 = vmatpush1.msra.mxu0 0.0
        %2194 = vmatprep.subr.mxu0 0.0
        %2195 = vmatpush1.msra.mxu0 %v955
        %2196 = vmatprep.subr.mxu0 0.0
        %2197 = vmatpush1.msra.mxu0 %v954
        %2198 = vmatprep.subr.mxu0 0.0
        %2199 = vmatpush1.msra.mxu0 %v953
        %2200 = vmatprep.subr.mxu0 0.0
        %2201 = vmatpush1.msra.mxu0 %v952
        %2202 = vmatprep.subr.mxu0 0.0
        %2203 = vmatpush2.msra.mxu0 0.0
        %2204 = vmatprep.subr.mxu0 0.0
        %2205 = vmatpush2.msra.mxu0 0.0
        %2206 = vmatprep.subr.mxu0 0.0
        %2207 = vmatpush2.msra.mxu0 0.0
        %2208 = vmatprep.subr.mxu0 0.0
        %2209 = vmatpush2.msra.mxu0 0.0
        %2210 = vmatprep.subr.mxu0 0.0
        %2211 = vmatpush2.msra.mxu0 0.0
        %2212 = vmatprep.subr.mxu0 0.0
        %2213 = vmatpush2.msra.mxu0 0.0
        %2214 = vmatprep.subr.mxu0 0.0
        %2215 = vmatpush2.msra.mxu0 0.0
        %2216 = vmatprep.subr.mxu0 0.0
        %2217 = vmatpush2.msra.mxu0 0.0
        %2218 = vmatprep.subr.mxu0 0.0
        %2219 = vmatpush2.msra.mxu0 0.0
        %2220 = vmatprep.subr.mxu0 0.0
        %2221 = vmatpush2.msra.mxu0 0.0
        %2222 = vmatprep.subr.mxu0 0.0
        %2223 = vmatpush2.msra.mxu0 0.0
        %2224 = vmatprep.subr.mxu0 0.0
        %2225 = vmatpush2.msra.mxu0 0.0
        %2226 = vmatprep.subr.mxu0 0.0
        %2227 = vmatpush2.msra.mxu0 0.0
        %2228 = vmatprep.subr.mxu0 0.0
        %2229 = vmatpush2.msra.mxu0 0.0
        %2230 = vmatprep.subr.mxu0 0.0
        %2231 = vmatpush2.msra.mxu0 0.0
        %2232 = vmatprep.subr.mxu0 0.0
        %2233 = vmatpush2.msra.mxu0 0.0
        %2234 = vmatprep.mubr.f32.mxu0 0.0
        %2235 = vmatmul.mubr.f32.gmra.mxu0 %v2168
        %v2236 = vpop.f32.mrf.mxu0
        %v2237 = vadd.f32 0.0, %v2236
        %v2238 = vpop.f32.mrf.mxu0
        %2239 = vdwg.mxu0
        %2241 = vrot.lane.b32.xlu0 %v2068, 32
        %v2242 = vpop.permute.xlu0 %2241
        %v2243 = vsel %vm971, %v2242, 0
        %2245 = vmatprep.subr.mxu0 0.0
        %2246 = vmatpush1.msra.mxu0 0.0
        %2247 = vmatprep.subr.mxu0 0.0
        %2248 = vmatpush1.msra.mxu0 0.0
        %2249 = vmatprep.subr.mxu0 0.0
        %2250 = vmatpush1.msra.mxu0 0.0
        %2251 = vmatprep.subr.mxu0 0.0
        %2252 = vmatpush1.msra.mxu0 0.0
        %2253 = vmatprep.subr.mxu0 0.0
        %2254 = vmatpush1.msra.mxu0 0.0
        %2255 = vmatprep.subr.mxu0 0.0
        %2256 = vmatpush1.msra.mxu0 0.0
        %2257 = vmatprep.subr.mxu0 0.0
        %2258 = vmatpush1.msra.mxu0 0.0
        %2259 = vmatprep.subr.mxu0 0.0
        %2260 = vmatpush1.msra.mxu0 0.0
        %2261 = vmatprep.subr.mxu0 0.0
        %2262 = vmatpush1.msra.mxu0 0.0
        %2263 = vmatprep.subr.mxu0 0.0
        %2264 = vmatpush1.msra.mxu0 0.0
        %2265 = vmatprep.subr.mxu0 0.0
        %2266 = vmatpush1.msra.mxu0 0.0
        %2267 = vmatprep.subr.mxu0 0.0
        %2268 = vmatpush1.msra.mxu0 0.0
        %2269 = vmatprep.subr.mxu0 0.0
        %2270 = vmatpush1.msra.mxu0 %v959
        %2271 = vmatprep.subr.mxu0 0.0
        %2272 = vmatpush1.msra.mxu0 %v958
        %2273 = vmatprep.subr.mxu0 0.0
        %2274 = vmatpush1.msra.mxu0 %v957
        %2275 = vmatprep.subr.mxu0 0.0
        %2276 = vmatpush1.msra.mxu0 %v956
        %2277 = vmatprep.subr.mxu0 0.0
        %2278 = vmatpush2.msra.mxu0 0.0
        %2279 = vmatprep.subr.mxu0 0.0
        %2280 = vmatpush2.msra.mxu0 0.0
        %2281 = vmatprep.subr.mxu0 0.0
        %2282 = vmatpush2.msra.mxu0 0.0
        %2283 = vmatprep.subr.mxu0 0.0
        %2284 = vmatpush2.msra.mxu0 0.0
        %2285 = vmatprep.subr.mxu0 0.0
        %2286 = vmatpush2.msra.mxu0 0.0
        %2287 = vmatprep.subr.mxu0 0.0
        %2288 = vmatpush2.msra.mxu0 0.0
        %2289 = vmatprep.subr.mxu0 0.0
        %2290 = vmatpush2.msra.mxu0 0.0
        %2291 = vmatprep.subr.mxu0 0.0
        %2292 = vmatpush2.msra.mxu0 0.0
        %2293 = vmatprep.subr.mxu0 0.0
        %2294 = vmatpush2.msra.mxu0 0.0
        %2295 = vmatprep.subr.mxu0 0.0
        %2296 = vmatpush2.msra.mxu0 0.0
        %2297 = vmatprep.subr.mxu0 0.0
        %2298 = vmatpush2.msra.mxu0 0.0
        %2299 = vmatprep.subr.mxu0 0.0
        %2300 = vmatpush2.msra.mxu0 0.0
        %2301 = vmatprep.subr.mxu0 0.0
        %2302 = vmatpush2.msra.mxu0 0.0
        %2303 = vmatprep.subr.mxu0 0.0
        %2304 = vmatpush2.msra.mxu0 0.0
        %2305 = vmatprep.subr.mxu0 0.0
        %2306 = vmatpush2.msra.mxu0 0.0
        %2307 = vmatprep.subr.mxu0 0.0
        %2308 = vmatpush2.msra.mxu0 0.0
        %2309 = vmatprep.mubr.f32.mxu0 0.0
        %2310 = vmatmul.mubr.f32.gmra.mxu0 %v2243
        %v2311 = vpop.f32.mrf.mxu0
        %v2312 = vadd.f32 %v2237, %v2311
        %v2313 = vpop.f32.mrf.mxu0
        %2314 = vdwg.mxu0
        %v2315 = vadd.f32 %v2312, %v965
        %v2316 = vxor.u32 %v2315, 2147483648
        %v2317 = vmul.f32 %v2316, 1.442695
        %v2318 = vpow.pop %v2317
        %v2319 = vadd.f32 %v2318, 1.0
        %v2320 = vrcp.pop %v2319
        %v2321 = vmul.f32 1.0, %v2320
        %v2322 = vmul.f32 %v2321, 2.0
        %v2323 = vsub.f32 %v2322, 1.0
        %v2324 = vmul.f32 %v2321, %v2062
        %2326 = vrot.lane.b32.xlu0 %v2323, 64
        %v2327 = vpop.permute.xlu0 %2326
        %v2329 = vmul.f32 %v2321, %v2327
        %2331 = vrot.lane.b32.xlu0 %v2329, 32
        %v2332 = vpop.permute.xlu0 %2331
        %v2334 = vadd.f32 %v2324, %v2332
        %v2335 = vtanh.pop %v2334
        %2337 = vrot.lane.b32.xlu0 %v2335, 64
        %v2338 = vpop.permute.xlu0 %2337
        %v2340 = vmul.f32 %v2321, %v2338
        %2341 = vmatprep.subr.mxu0 0.0
        %2342 = vmatpush1.msra.mxu0 0.0
        %2343 = vmatprep.subr.mxu0 0.0
        %2344 = vmatpush1.msra.mxu0 0.0
        %2345 = vmatprep.subr.mxu0 0.0
        %2346 = vmatpush1.msra.mxu0 0.0
        %2347 = vmatprep.subr.mxu0 0.0
        %2348 = vmatpush1.msra.mxu0 0.0
        %2349 = vmatprep.subr.mxu0 0.0
        %2350 = vmatpush1.msra.mxu0 0.0
        %2351 = vmatprep.subr.mxu0 0.0
        %2352 = vmatpush1.msra.mxu0 0.0
        %2353 = vmatprep.subr.mxu0 0.0
        %2354 = vmatpush1.msra.mxu0 0.0
        %2355 = vmatprep.subr.mxu0 0.0
        %2356 = vmatpush1.msra.mxu0 0.0
        %2357 = vmatprep.subr.mxu0 0.0
        %2358 = vmatpush1.msra.mxu0 0.0
        %2359 = vmatprep.subr.mxu0 0.0
        %2360 = vmatpush1.msra.mxu0 0.0
        %2361 = vmatprep.subr.mxu0 0.0
        %2362 = vmatpush1.msra.mxu0 0.0
        %2363 = vmatprep.subr.mxu0 0.0
        %2364 = vmatpush1.msra.mxu0 0.0
        %2365 = vmatprep.subr.mxu0 0.0
        %2366 = vmatpush1.msra.mxu0 %v951
        %2367 = vmatprep.subr.mxu0 0.0
        %2368 = vmatpush1.msra.mxu0 %v950
        %2369 = vmatprep.subr.mxu0 0.0
        %2370 = vmatpush1.msra.mxu0 %v949
        %2371 = vmatprep.subr.mxu0 0.0
        %2372 = vmatpush1.msra.mxu0 %v948
        %2373 = vmatprep.subr.mxu0 0.0
        %2374 = vmatpush2.msra.mxu0 0.0
        %2375 = vmatprep.subr.mxu0 0.0
        %2376 = vmatpush2.msra.mxu0 0.0
        %2377 = vmatprep.subr.mxu0 0.0
        %2378 = vmatpush2.msra.mxu0 0.0
        %2379 = vmatprep.subr.mxu0 0.0
        %2380 = vmatpush2.msra.mxu0 0.0
        %2381 = vmatprep.subr.mxu0 0.0
        %2382 = vmatpush2.msra.mxu0 0.0
        %2383 = vmatprep.subr.mxu0 0.0
        %2384 = vmatpush2.msra.mxu0 0.0
        %2385 = vmatprep.subr.mxu0 0.0
        %2386 = vmatpush2.msra.mxu0 0.0
        %2387 = vmatprep.subr.mxu0 0.0
        %2388 = vmatpush2.msra.mxu0 0.0
        %2389 = vmatprep.subr.mxu0 0.0
        %2390 = vmatpush2.msra.mxu0 0.0
        %2391 = vmatprep.subr.mxu0 0.0
        %2392 = vmatpush2.msra.mxu0 0.0
        %2393 = vmatprep.subr.mxu0 0.0
        %2394 = vmatpush2.msra.mxu0 0.0
        %2395 = vmatprep.subr.mxu0 0.0
        %2396 = vmatpush2.msra.mxu0 0.0
        %2397 = vmatprep.subr.mxu0 0.0
        %2398 = vmatpush2.msra.mxu0 0.0
        %2399 = vmatprep.subr.mxu0 0.0
        %2400 = vmatpush2.msra.mxu0 0.0
        %2401 = vmatprep.subr.mxu0 0.0
        %2402 = vmatpush2.msra.mxu0 0.0
        %2403 = vmatprep.subr.mxu0 0.0
        %2404 = vmatpush2.msra.mxu0 0.0
        %2405 = vmatprep.mubr.f32.mxu0 0.0
        %2406 = vmatmul.mubr.f32.gmra.mxu0 %v2168
        %v2407 = vpop.f32.mrf.mxu0
        %v2408 = vadd.f32 0.0, %v2407
        %v2409 = vpop.f32.mrf.mxu0
        %2410 = vdwg.mxu0
        %v2411 = vadd.f32 %v895, %v2408
        %v2412 = vxor.u32 %v2411, 2147483648
        %v2413 = vmul.f32 %v2412, 1.442695
        %v2414 = vpow.pop %v2413
        %v2415 = vadd.f32 %v2414, 1.0
        %v2416 = vrcp.pop %v2415
        %v2417 = vmul.f32 1.0, %v2416
        %v2418 = vmul.f32 %v2417, 2.0
        %v2419 = vsub.f32 %v2418, 1.0
        %v2420 = vmul.f32 %v2417, %v2158
        %2422 = vrot.lane.b32.xlu0 %v2419, 64
        %v2423 = vpop.permute.xlu0 %2422
        %v2425 = vmul.f32 %v2417, %v2423
        %2427 = vrot.lane.b32.xlu0 %v2425, 32
        %v2428 = vpop.permute.xlu0 %2427
        %v2430 = vadd.f32 %v2420, %v2428
        %v2431 = vtanh.pop %v2430
        %2433 = vrot.lane.b32.xlu0 %v2431, 64
        %v2434 = vpop.permute.xlu0 %2433
        %v2436 = vmul.f32 %v2417, %v2434
        %2438 = vrot.lane.b32.xlu0 %v2436, 32
        %v2439 = vpop.permute.xlu0 %2438
        %v2440 = vsel %vm971, %v2439, 0
        %2442 = vmatprep.subr.mxu0 0.0
        %2443 = vmatpush1.msra.mxu0 0.0
        %2444 = vmatprep.subr.mxu0 0.0
        %2445 = vmatpush1.msra.mxu0 0.0
        %2446 = vmatprep.subr.mxu0 0.0
        %2447 = vmatpush1.msra.mxu0 0.0
        %2448 = vmatprep.subr.mxu0 0.0
        %2449 = vmatpush1.msra.mxu0 0.0
        %2450 = vmatprep.subr.mxu0 0.0
        %2451 = vmatpush1.msra.mxu0 0.0
        %2452 = vmatprep.subr.mxu0 0.0
        %2453 = vmatpush1.msra.mxu0 0.0
        %2454 = vmatprep.subr.mxu0 0.0
        %2455 = vmatpush1.msra.mxu0 0.0
        %2456 = vmatprep.subr.mxu0 0.0
        %2457 = vmatpush1.msra.mxu0 0.0
        %2458 = vmatprep.subr.mxu0 0.0
        %2459 = vmatpush1.msra.mxu0 0.0
        %2460 = vmatprep.subr.mxu0 0.0
        %2461 = vmatpush1.msra.mxu0 0.0
        %2462 = vmatprep.subr.mxu0 0.0
        %2463 = vmatpush1.msra.mxu0 0.0
        %2464 = vmatprep.subr.mxu0 0.0
        %2465 = vmatpush1.msra.mxu0 0.0
        %2466 = vmatprep.subr.mxu0 0.0
        %2467 = vmatpush1.msra.mxu0 %v955
        %2468 = vmatprep.subr.mxu0 0.0
        %2469 = vmatpush1.msra.mxu0 %v954
        %2470 = vmatprep.subr.mxu0 0.0
        %2471 = vmatpush1.msra.mxu0 %v953
        %2472 = vmatprep.subr.mxu0 0.0
        %2473 = vmatpush1.msra.mxu0 %v952
        %2474 = vmatprep.subr.mxu0 0.0
        %2475 = vmatpush2.msra.mxu0 0.0
        %2476 = vmatprep.subr.mxu0 0.0
        %2477 = vmatpush2.msra.mxu0 0.0
        %2478 = vmatprep.subr.mxu0 0.0
        %2479 = vmatpush2.msra.mxu0 0.0
        %2480 = vmatprep.subr.mxu0 0.0
        %2481 = vmatpush2.msra.mxu0 0.0
        %2482 = vmatprep.subr.mxu0 0.0
        %2483 = vmatpush2.msra.mxu0 0.0
        %2484 = vmatprep.subr.mxu0 0.0
        %2485 = vmatpush2.msra.mxu0 0.0
        %2486 = vmatprep.subr.mxu0 0.0
        %2487 = vmatpush2.msra.mxu0 0.0
        %2488 = vmatprep.subr.mxu0 0.0
        %2489 = vmatpush2.msra.mxu0 0.0
        %2490 = vmatprep.subr.mxu0 0.0
        %2491 = vmatpush2.msra.mxu0 0.0
        %2492 = vmatprep.subr.mxu0 0.0
        %2493 = vmatpush2.msra.mxu0 0.0
        %2494 = vmatprep.subr.mxu0 0.0
        %2495 = vmatpush2.msra.mxu0 0.0
        %2496 = vmatprep.subr.mxu0 0.0
        %2497 = vmatpush2.msra.mxu0 0.0
        %2498 = vmatprep.subr.mxu0 0.0
        %2499 = vmatpush2.msra.mxu0 0.0
        %2500 = vmatprep.subr.mxu0 0.0
        %2501 = vmatpush2.msra.mxu0 0.0
        %2502 = vmatprep.subr.mxu0 0.0
        %2503 = vmatpush2.msra.mxu0 0.0
        %2504 = vmatprep.subr.mxu0 0.0
        %2505 = vmatpush2.msra.mxu0 0.0
        %2506 = vmatprep.mubr.f32.mxu0 0.0
        %2507 = vmatmul.mubr.f32.gmra.mxu0 %v2440
        %v2508 = vpop.f32.mrf.mxu0
        %v2509 = vadd.f32 0.0, %v2508
        %v2510 = vpop.f32.mrf.mxu0
        %2511 = vdwg.mxu0
        %2513 = vrot.lane.b32.xlu0 %v2340, 32
        %v2514 = vpop.permute.xlu0 %2513
        %v2515 = vsel %vm971, %v2514, 0
        %2517 = vmatprep.subr.mxu0 0.0
        %2518 = vmatpush1.msra.mxu0 0.0
        %2519 = vmatprep.subr.mxu0 0.0
        %2520 = vmatpush1.msra.mxu0 0.0
        %2521 = vmatprep.subr.mxu0 0.0
        %2522 = vmatpush1.msra.mxu0 0.0
        %2523 = vmatprep.subr.mxu0 0.0
        %2524 = vmatpush1.msra.mxu0 0.0
        %2525 = vmatprep.subr.mxu0 0.0
        %2526 = vmatpush1.msra.mxu0 0.0
        %2527 = vmatprep.subr.mxu0 0.0
        %2528 = vmatpush1.msra.mxu0 0.0
        %2529 = vmatprep.subr.mxu0 0.0
        %2530 = vmatpush1.msra.mxu0 0.0
        %2531 = vmatprep.subr.mxu0 0.0
        %2532 = vmatpush1.msra.mxu0 0.0
        %2533 = vmatprep.subr.mxu0 0.0
        %2534 = vmatpush1.msra.mxu0 0.0
        %2535 = vmatprep.subr.mxu0 0.0
        %2536 = vmatpush1.msra.mxu0 0.0
        %2537 = vmatprep.subr.mxu0 0.0
        %2538 = vmatpush1.msra.mxu0 0.0
        %2539 = vmatprep.subr.mxu0 0.0
        %2540 = vmatpush1.msra.mxu0 0.0
        %2541 = vmatprep.subr.mxu0 0.0
        %2542 = vmatpush1.msra.mxu0 %v959
        %2543 = vmatprep.subr.mxu0 0.0
        %2544 = vmatpush1.msra.mxu0 %v958
        %2545 = vmatprep.subr.mxu0 0.0
        %2546 = vmatpush1.msra.mxu0 %v957
        %2547 = vmatprep.subr.mxu0 0.0
        %2548 = vmatpush1.msra.mxu0 %v956
        %2549 = vmatprep.subr.mxu0 0.0
        %2550 = vmatpush2.msra.mxu0 0.0
        %2551 = vmatprep.subr.mxu0 0.0
        %2552 = vmatpush2.msra.mxu0 0.0
        %2553 = vmatprep.subr.mxu0 0.0
        %2554 = vmatpush2.msra.mxu0 0.0
        %2555 = vmatprep.subr.mxu0 0.0
        %2556 = vmatpush2.msra.mxu0 0.0
        %2557 = vmatprep.subr.mxu0 0.0
        %2558 = vmatpush2.msra.mxu0 0.0
        %2559 = vmatprep.subr.mxu0 0.0
        %2560 = vmatpush2.msra.mxu0 0.0
        %2561 = vmatprep.subr.mxu0 0.0
        %2562 = vmatpush2.msra.mxu0 0.0
        %2563 = vmatprep.subr.mxu0 0.0
        %2564 = vmatpush2.msra.mxu0 0.0
        %2565 = vmatprep.subr.mxu0 0.0
        %2566 = vmatpush2.msra.mxu0 0.0
        %2567 = vmatprep.subr.mxu0 0.0
        %2568 = vmatpush2.msra.mxu0 0.0
        %2569 = vmatprep.subr.mxu0 0.0
        %2570 = vmatpush2.msra.mxu0 0.0
        %2571 = vmatprep.subr.mxu0 0.0
        %2572 = vmatpush2.msra.mxu0 0.0
        %2573 = vmatprep.subr.mxu0 0.0
        %2574 = vmatpush2.msra.mxu0 0.0
        %2575 = vmatprep.subr.mxu0 0.0
        %2576 = vmatpush2.msra.mxu0 0.0
        %2577 = vmatprep.subr.mxu0 0.0
        %2578 = vmatpush2.msra.mxu0 0.0
        %2579 = vmatprep.subr.mxu0 0.0
        %2580 = vmatpush2.msra.mxu0 0.0
        %2581 = vmatprep.mubr.f32.mxu0 0.0
        %2582 = vmatmul.mubr.f32.gmra.mxu0 %v2515
        %v2583 = vpop.f32.mrf.mxu0
        %v2584 = vadd.f32 %v2509, %v2583
        %v2585 = vpop.f32.mrf.mxu0
        %2586 = vdwg.mxu0
        %v2587 = vadd.f32 %v2584, %v965
        %v2588 = vxor.u32 %v2587, 2147483648
        %v2589 = vmul.f32 %v2588, 1.442695
        %v2590 = vpow.pop %v2589
        %v2591 = vadd.f32 %v2590, 1.0
        %v2592 = vrcp.pop %v2591
        %v2593 = vmul.f32 1.0, %v2592
        %v2594 = vmul.f32 %v2593, 2.0
        %v2595 = vsub.f32 %v2594, 1.0
        %v2596 = vmul.f32 %v2593, %v2334
        %2598 = vrot.lane.b32.xlu0 %v2595, 64
        %v2599 = vpop.permute.xlu0 %2598
        %v2601 = vmul.f32 %v2593, %v2599
        %2603 = vrot.lane.b32.xlu0 %v2601, 32
        %v2604 = vpop.permute.xlu0 %2603
        %v2606 = vadd.f32 %v2596, %v2604
        %v2607 = vtanh.pop %v2606
        %2609 = vrot.lane.b32.xlu0 %v2607, 64
        %v2610 = vpop.permute.xlu0 %2609
        %v2612 = vmul.f32 %v2593, %v2610
        %2613 = vmatprep.subr.mxu0 0.0
        %2614 = vmatpush1.msra.mxu0 0.0
        %2615 = vmatprep.subr.mxu0 0.0
        %2616 = vmatpush1.msra.mxu0 0.0
        %2617 = vmatprep.subr.mxu0 0.0
        %2618 = vmatpush1.msra.mxu0 0.0
        %2619 = vmatprep.subr.mxu0 0.0
        %2620 = vmatpush1.msra.mxu0 0.0
        %2621 = vmatprep.subr.mxu0 0.0
        %2622 = vmatpush1.msra.mxu0 0.0
        %2623 = vmatprep.subr.mxu0 0.0
        %2624 = vmatpush1.msra.mxu0 0.0
        %2625 = vmatprep.subr.mxu0 0.0
        %2626 = vmatpush1.msra.mxu0 0.0
        %2627 = vmatprep.subr.mxu0 0.0
        %2628 = vmatpush1.msra.mxu0 0.0
        %2629 = vmatprep.subr.mxu0 0.0
        %2630 = vmatpush1.msra.mxu0 0.0
        %2631 = vmatprep.subr.mxu0 0.0
        %2632 = vmatpush1.msra.mxu0 0.0
        %2633 = vmatprep.subr.mxu0 0.0
        %2634 = vmatpush1.msra.mxu0 0.0
        %2635 = vmatprep.subr.mxu0 0.0
        %2636 = vmatpush1.msra.mxu0 0.0
        %2637 = vmatprep.subr.mxu0 0.0
        %2638 = vmatpush1.msra.mxu0 %v951
        %2639 = vmatprep.subr.mxu0 0.0
        %2640 = vmatpush1.msra.mxu0 %v950
        %2641 = vmatprep.subr.mxu0 0.0
        %2642 = vmatpush1.msra.mxu0 %v949
        %2643 = vmatprep.subr.mxu0 0.0
        %2644 = vmatpush1.msra.mxu0 %v948
        %2645 = vmatprep.subr.mxu0 0.0
        %2646 = vmatpush2.msra.mxu0 0.0
        %2647 = vmatprep.subr.mxu0 0.0
        %2648 = vmatpush2.msra.mxu0 0.0
        %2649 = vmatprep.subr.mxu0 0.0
        %2650 = vmatpush2.msra.mxu0 0.0
        %2651 = vmatprep.subr.mxu0 0.0
        %2652 = vmatpush2.msra.mxu0 0.0
        %2653 = vmatprep.subr.mxu0 0.0
        %2654 = vmatpush2.msra.mxu0 0.0
        %2655 = vmatprep.subr.mxu0 0.0
        %2656 = vmatpush2.msra.mxu0 0.0
        %2657 = vmatprep.subr.mxu0 0.0
        %2658 = vmatpush2.msra.mxu0 0.0
        %2659 = vmatprep.subr.mxu0 0.0
        %2660 = vmatpush2.msra.mxu0 0.0
        %2661 = vmatprep.subr.mxu0 0.0
        %2662 = vmatpush2.msra.mxu0 0.0
        %2663 = vmatprep.subr.mxu0 0.0
        %2664 = vmatpush2.msra.mxu0 0.0
        %2665 = vmatprep.subr.mxu0 0.0
        %2666 = vmatpush2.msra.mxu0 0.0
        %2667 = vmatprep.subr.mxu0 0.0
        %2668 = vmatpush2.msra.mxu0 0.0
        %2669 = vmatprep.subr.mxu0 0.0
        %2670 = vmatpush2.msra.mxu0 0.0
        %2671 = vmatprep.subr.mxu0 0.0
        %2672 = vmatpush2.msra.mxu0 0.0
        %2673 = vmatprep.subr.mxu0 0.0
        %2674 = vmatpush2.msra.mxu0 0.0
        %2675 = vmatprep.subr.mxu0 0.0
        %2676 = vmatpush2.msra.mxu0 0.0
        %2677 = vmatprep.mubr.f32.mxu0 0.0
        %2678 = vmatmul.mubr.f32.gmra.mxu0 %v2440
        %v2679 = vpop.f32.mrf.mxu0
        %v2680 = vadd.f32 0.0, %v2679
        %v2681 = vpop.f32.mrf.mxu0
        %2682 = vdwg.mxu0
        %v2683 = vadd.f32 %v900, %v2680
        %v2684 = vxor.u32 %v2683, 2147483648
        %v2685 = vmul.f32 %v2684, 1.442695
        %v2686 = vpow.pop %v2685
        %v2687 = vadd.f32 %v2686, 1.0
        %v2688 = vrcp.pop %v2687
        %v2689 = vmul.f32 1.0, %v2688
        %v2690 = vmul.f32 %v2689, 2.0
        %v2691 = vsub.f32 %v2690, 1.0
        %v2692 = vmul.f32 %v2689, %v2430
        %2694 = vrot.lane.b32.xlu0 %v2691, 64
        %v2695 = vpop.permute.xlu0 %2694
        %v2697 = vmul.f32 %v2689, %v2695
        %2699 = vrot.lane.b32.xlu0 %v2697, 32
        %v2700 = vpop.permute.xlu0 %2699
        %v2702 = vadd.f32 %v2692, %v2700
        %v2703 = vtanh.pop %v2702
        %2705 = vrot.lane.b32.xlu0 %v2703, 64
        %v2706 = vpop.permute.xlu0 %2705
        %v2708 = vmul.f32 %v2689, %v2706
        %2710 = vrot.lane.b32.xlu0 %v2708, 32
        %v2711 = vpop.permute.xlu0 %2710
        %v2712 = vsel %vm971, %v2711, 0
        %2714 = vmatprep.subr.mxu0 0.0
        %2715 = vmatpush1.msra.mxu0 0.0
        %2716 = vmatprep.subr.mxu0 0.0
        %2717 = vmatpush1.msra.mxu0 0.0
        %2718 = vmatprep.subr.mxu0 0.0
        %2719 = vmatpush1.msra.mxu0 0.0
        %2720 = vmatprep.subr.mxu0 0.0
        %2721 = vmatpush1.msra.mxu0 0.0
        %2722 = vmatprep.subr.mxu0 0.0
        %2723 = vmatpush1.msra.mxu0 0.0
        %2724 = vmatprep.subr.mxu0 0.0
        %2725 = vmatpush1.msra.mxu0 0.0
        %2726 = vmatprep.subr.mxu0 0.0
        %2727 = vmatpush1.msra.mxu0 0.0
        %2728 = vmatprep.subr.mxu0 0.0
        %2729 = vmatpush1.msra.mxu0 0.0
        %2730 = vmatprep.subr.mxu0 0.0
        %2731 = vmatpush1.msra.mxu0 0.0
        %2732 = vmatprep.subr.mxu0 0.0
        %2733 = vmatpush1.msra.mxu0 0.0
        %2734 = vmatprep.subr.mxu0 0.0
        %2735 = vmatpush1.msra.mxu0 0.0
        %2736 = vmatprep.subr.mxu0 0.0
        %2737 = vmatpush1.msra.mxu0 0.0
        %2738 = vmatprep.subr.mxu0 0.0
        %2739 = vmatpush1.msra.mxu0 %v955
        %2740 = vmatprep.subr.mxu0 0.0
        %2741 = vmatpush1.msra.mxu0 %v954
        %2742 = vmatprep.subr.mxu0 0.0
        %2743 = vmatpush1.msra.mxu0 %v953
        %2744 = vmatprep.subr.mxu0 0.0
        %2745 = vmatpush1.msra.mxu0 %v952
        %2746 = vmatprep.subr.mxu0 0.0
        %2747 = vmatpush2.msra.mxu0 0.0
        %2748 = vmatprep.subr.mxu0 0.0
        %2749 = vmatpush2.msra.mxu0 0.0
        %2750 = vmatprep.subr.mxu0 0.0
        %2751 = vmatpush2.msra.mxu0 0.0
        %2752 = vmatprep.subr.mxu0 0.0
        %2753 = vmatpush2.msra.mxu0 0.0
        %2754 = vmatprep.subr.mxu0 0.0
        %2755 = vmatpush2.msra.mxu0 0.0
        %2756 = vmatprep.subr.mxu0 0.0
        %2757 = vmatpush2.msra.mxu0 0.0
        %2758 = vmatprep.subr.mxu0 0.0
        %2759 = vmatpush2.msra.mxu0 0.0
        %2760 = vmatprep.subr.mxu0 0.0
        %2761 = vmatpush2.msra.mxu0 0.0
        %2762 = vmatprep.subr.mxu0 0.0
        %2763 = vmatpush2.msra.mxu0 0.0
        %2764 = vmatprep.subr.mxu0 0.0
        %2765 = vmatpush2.msra.mxu0 0.0
        %2766 = vmatprep.subr.mxu0 0.0
        %2767 = vmatpush2.msra.mxu0 0.0
        %2768 = vmatprep.subr.mxu0 0.0
        %2769 = vmatpush2.msra.mxu0 0.0
        %2770 = vmatprep.subr.mxu0 0.0
        %2771 = vmatpush2.msra.mxu0 0.0
        %2772 = vmatprep.subr.mxu0 0.0
        %2773 = vmatpush2.msra.mxu0 0.0
        %2774 = vmatprep.subr.mxu0 0.0
        %2775 = vmatpush2.msra.mxu0 0.0
        %2776 = vmatprep.subr.mxu0 0.0
        %2777 = vmatpush2.msra.mxu0 0.0
        %2778 = vmatprep.mubr.f32.mxu0 0.0
        %2779 = vmatmul.mubr.f32.gmra.mxu0 %v2712
        %v2780 = vpop.f32.mrf.mxu0
        %v2781 = vadd.f32 0.0, %v2780
        %v2782 = vpop.f32.mrf.mxu0
        %2783 = vdwg.mxu0
        %2785 = vrot.lane.b32.xlu0 %v2612, 32
        %v2786 = vpop.permute.xlu0 %2785
        %v2787 = vsel %vm971, %v2786, 0
        %2789 = vmatprep.subr.mxu0 0.0
        %2790 = vmatpush1.msra.mxu0 0.0
        %2791 = vmatprep.subr.mxu0 0.0
        %2792 = vmatpush1.msra.mxu0 0.0
        %2793 = vmatprep.subr.mxu0 0.0
        %2794 = vmatpush1.msra.mxu0 0.0
        %2795 = vmatprep.subr.mxu0 0.0
        %2796 = vmatpush1.msra.mxu0 0.0
        %2797 = vmatprep.subr.mxu0 0.0
        %2798 = vmatpush1.msra.mxu0 0.0
        %2799 = vmatprep.subr.mxu0 0.0
        %2800 = vmatpush1.msra.mxu0 0.0
        %2801 = vmatprep.subr.mxu0 0.0
        %2802 = vmatpush1.msra.mxu0 0.0
        %2803 = vmatprep.subr.mxu0 0.0
        %2804 = vmatpush1.msra.mxu0 0.0
        %2805 = vmatprep.subr.mxu0 0.0
        %2806 = vmatpush1.msra.mxu0 0.0
        %2807 = vmatprep.subr.mxu0 0.0
        %2808 = vmatpush1.msra.mxu0 0.0
        %2809 = vmatprep.subr.mxu0 0.0
        %2810 = vmatpush1.msra.mxu0 0.0
        %2811 = vmatprep.subr.mxu0 0.0
        %2812 = vmatpush1.msra.mxu0 0.0
        %2813 = vmatprep.subr.mxu0 0.0
        %2814 = vmatpush1.msra.mxu0 %v959
        %2815 = vmatprep.subr.mxu0 0.0
        %2816 = vmatpush1.msra.mxu0 %v958
        %2817 = vmatprep.subr.mxu0 0.0
        %2818 = vmatpush1.msra.mxu0 %v957
        %2819 = vmatprep.subr.mxu0 0.0
        %2820 = vmatpush1.msra.mxu0 %v956
        %2821 = vmatprep.subr.mxu0 0.0
        %2822 = vmatpush2.msra.mxu0 0.0
        %2823 = vmatprep.subr.mxu0 0.0
        %2824 = vmatpush2.msra.mxu0 0.0
        %2825 = vmatprep.subr.mxu0 0.0
        %2826 = vmatpush2.msra.mxu0 0.0
        %2827 = vmatprep.subr.mxu0 0.0
        %2828 = vmatpush2.msra.mxu0 0.0
        %2829 = vmatprep.subr.mxu0 0.0
        %2830 = vmatpush2.msra.mxu0 0.0
        %2831 = vmatprep.subr.mxu0 0.0
        %2832 = vmatpush2.msra.mxu0 0.0
        %2833 = vmatprep.subr.mxu0 0.0
        %2834 = vmatpush2.msra.mxu0 0.0
        %2835 = vmatprep.subr.mxu0 0.0
        %2836 = vmatpush2.msra.mxu0 0.0
        %2837 = vmatprep.subr.mxu0 0.0
        %2838 = vmatpush2.msra.mxu0 0.0
        %2839 = vmatprep.subr.mxu0 0.0
        %2840 = vmatpush2.msra.mxu0 0.0
        %2841 = vmatprep.subr.mxu0 0.0
        %2842 = vmatpush2.msra.mxu0 0.0
        %2843 = vmatprep.subr.mxu0 0.0
        %2844 = vmatpush2.msra.mxu0 0.0
        %2845 = vmatprep.subr.mxu0 0.0
        %2846 = vmatpush2.msra.mxu0 0.0
        %2847 = vmatprep.subr.mxu0 0.0
        %2848 = vmatpush2.msra.mxu0 0.0
        %2849 = vmatprep.subr.mxu0 0.0
        %2850 = vmatpush2.msra.mxu0 0.0
        %2851 = vmatprep.subr.mxu0 0.0
        %2852 = vmatpush2.msra.mxu0 0.0
        %2853 = vmatprep.mubr.f32.mxu0 0.0
        %2854 = vmatmul.mubr.f32.gmra.mxu0 %v2787
        %v2855 = vpop.f32.mrf.mxu0
        %v2856 = vadd.f32 %v2781, %v2855
        %v2857 = vpop.f32.mrf.mxu0
        %2858 = vdwg.mxu0
        %v2859 = vadd.f32 %v2856, %v965
        %v2860 = vxor.u32 %v2859, 2147483648
        %v2861 = vmul.f32 %v2860, 1.442695
        %v2862 = vpow.pop %v2861
        %v2863 = vadd.f32 %v2862, 1.0
        %v2864 = vrcp.pop %v2863
        %v2865 = vmul.f32 1.0, %v2864
        %v2866 = vmul.f32 %v2865, 2.0
        %v2867 = vsub.f32 %v2866, 1.0
        %v2868 = vmul.f32 %v2865, %v2606
        %2870 = vrot.lane.b32.xlu0 %v2867, 64
        %v2871 = vpop.permute.xlu0 %2870
        %v2873 = vmul.f32 %v2865, %v2871
        %2875 = vrot.lane.b32.xlu0 %v2873, 32
        %v2876 = vpop.permute.xlu0 %2875
        %v2878 = vadd.f32 %v2868, %v2876
        %v2879 = vtanh.pop %v2878
        %2881 = vrot.lane.b32.xlu0 %v2879, 64
        %v2882 = vpop.permute.xlu0 %2881
        %v2884 = vmul.f32 %v2865, %v2882
        %2885 = vmatprep.subr.mxu0 0.0
        %2886 = vmatpush1.msra.mxu0 0.0
        %2887 = vmatprep.subr.mxu0 0.0
        %2888 = vmatpush1.msra.mxu0 0.0
        %2889 = vmatprep.subr.mxu0 0.0
        %2890 = vmatpush1.msra.mxu0 0.0
        %2891 = vmatprep.subr.mxu0 0.0
        %2892 = vmatpush1.msra.mxu0 0.0
        %2893 = vmatprep.subr.mxu0 0.0
        %2894 = vmatpush1.msra.mxu0 0.0
        %2895 = vmatprep.subr.mxu0 0.0
        %2896 = vmatpush1.msra.mxu0 0.0
        %2897 = vmatprep.subr.mxu0 0.0
        %2898 = vmatpush1.msra.mxu0 0.0
        %2899 = vmatprep.subr.mxu0 0.0
        %2900 = vmatpush1.msra.mxu0 0.0
        %2901 = vmatprep.subr.mxu0 0.0
        %2902 = vmatpush1.msra.mxu0 0.0
        %2903 = vmatprep.subr.mxu0 0.0
        %2904 = vmatpush1.msra.mxu0 0.0
        %2905 = vmatprep.subr.mxu0 0.0
        %2906 = vmatpush1.msra.mxu0 0.0
        %2907 = vmatprep.subr.mxu0 0.0
        %2908 = vmatpush1.msra.mxu0 0.0
        %2909 = vmatprep.subr.mxu0 0.0
        %2910 = vmatpush1.msra.mxu0 %v951
        %2911 = vmatprep.subr.mxu0 0.0
        %2912 = vmatpush1.msra.mxu0 %v950
        %2913 = vmatprep.subr.mxu0 0.0
        %2914 = vmatpush1.msra.mxu0 %v949
        %2915 = vmatprep.subr.mxu0 0.0
        %2916 = vmatpush1.msra.mxu0 %v948
        %2917 = vmatprep.subr.mxu0 0.0
        %2918 = vmatpush2.msra.mxu0 0.0
        %2919 = vmatprep.subr.mxu0 0.0
        %2920 = vmatpush2.msra.mxu0 0.0
        %2921 = vmatprep.subr.mxu0 0.0
        %2922 = vmatpush2.msra.mxu0 0.0
        %2923 = vmatprep.subr.mxu0 0.0
        %2924 = vmatpush2.msra.mxu0 0.0
        %2925 = vmatprep.subr.mxu0 0.0
        %2926 = vmatpush2.msra.mxu0 0.0
        %2927 = vmatprep.subr.mxu0 0.0
        %2928 = vmatpush2.msra.mxu0 0.0
        %2929 = vmatprep.subr.mxu0 0.0
        %2930 = vmatpush2.msra.mxu0 0.0
        %2931 = vmatprep.subr.mxu0 0.0
        %2932 = vmatpush2.msra.mxu0 0.0
        %2933 = vmatprep.subr.mxu0 0.0
        %2934 = vmatpush2.msra.mxu0 0.0
        %2935 = vmatprep.subr.mxu0 0.0
        %2936 = vmatpush2.msra.mxu0 0.0
        %2937 = vmatprep.subr.mxu0 0.0
        %2938 = vmatpush2.msra.mxu0 0.0
        %2939 = vmatprep.subr.mxu0 0.0
        %2940 = vmatpush2.msra.mxu0 0.0
        %2941 = vmatprep.subr.mxu0 0.0
        %2942 = vmatpush2.msra.mxu0 0.0
        %2943 = vmatprep.subr.mxu0 0.0
        %2944 = vmatpush2.msra.mxu0 0.0
        %2945 = vmatprep.subr.mxu0 0.0
        %2946 = vmatpush2.msra.mxu0 0.0
        %2947 = vmatprep.subr.mxu0 0.0
        %2948 = vmatpush2.msra.mxu0 0.0
        %2949 = vmatprep.mubr.f32.mxu0 0.0
        %2950 = vmatmul.mubr.f32.gmra.mxu0 %v2712
        %v2951 = vpop.f32.mrf.mxu0
        %v2952 = vadd.f32 0.0, %v2951
        %v2953 = vpop.f32.mrf.mxu0
        %2954 = vdwg.mxu0
        %v2955 = vadd.f32 %v905, %v2952
        %v2956 = vxor.u32 %v2955, 2147483648
        %v2957 = vmul.f32 %v2956, 1.442695
        %v2958 = vpow.pop %v2957
        %v2959 = vadd.f32 %v2958, 1.0
        %v2960 = vrcp.pop %v2959
        %v2961 = vmul.f32 1.0, %v2960
        %v2962 = vmul.f32 %v2961, 2.0
        %v2963 = vsub.f32 %v2962, 1.0
        %v2964 = vmul.f32 %v2961, %v2702
        %2966 = vrot.lane.b32.xlu0 %v2963, 64
        %v2967 = vpop.permute.xlu0 %2966
        %v2969 = vmul.f32 %v2961, %v2967
        %2971 = vrot.lane.b32.xlu0 %v2969, 32
        %v2972 = vpop.permute.xlu0 %2971
        %v2974 = vadd.f32 %v2964, %v2972
        %v2975 = vtanh.pop %v2974
        %2977 = vrot.lane.b32.xlu0 %v2975, 64
        %v2978 = vpop.permute.xlu0 %2977
        %v2980 = vmul.f32 %v2961, %v2978
        %2982 = vrot.lane.b32.xlu0 %v2980, 32
        %v2983 = vpop.permute.xlu0 %2982
        %v2984 = vsel %vm971, %v2983, 0
        %2986 = vmatprep.subr.mxu0 0.0
        %2987 = vmatpush1.msra.mxu0 0.0
        %2988 = vmatprep.subr.mxu0 0.0
        %2989 = vmatpush1.msra.mxu0 0.0
        %2990 = vmatprep.subr.mxu0 0.0
        %2991 = vmatpush1.msra.mxu0 0.0
        %2992 = vmatprep.subr.mxu0 0.0
        %2993 = vmatpush1.msra.mxu0 0.0
        %2994 = vmatprep.subr.mxu0 0.0
        %2995 = vmatpush1.msra.mxu0 0.0
        %2996 = vmatprep.subr.mxu0 0.0
        %2997 = vmatpush1.msra.mxu0 0.0
        %2998 = vmatprep.subr.mxu0 0.0
        %2999 = vmatpush1.msra.mxu0 0.0
        %3000 = vmatprep.subr.mxu0 0.0
        %3001 = vmatpush1.msra.mxu0 0.0
        %3002 = vmatprep.subr.mxu0 0.0
        %3003 = vmatpush1.msra.mxu0 0.0
        %3004 = vmatprep.subr.mxu0 0.0
        %3005 = vmatpush1.msra.mxu0 0.0
        %3006 = vmatprep.subr.mxu0 0.0
        %3007 = vmatpush1.msra.mxu0 0.0
        %3008 = vmatprep.subr.mxu0 0.0
        %3009 = vmatpush1.msra.mxu0 0.0
        %3010 = vmatprep.subr.mxu0 0.0
        %3011 = vmatpush1.msra.mxu0 %v955
        %3012 = vmatprep.subr.mxu0 0.0
        %3013 = vmatpush1.msra.mxu0 %v954
        %3014 = vmatprep.subr.mxu0 0.0
        %3015 = vmatpush1.msra.mxu0 %v953
        %3016 = vmatprep.subr.mxu0 0.0
        %3017 = vmatpush1.msra.mxu0 %v952
        %3018 = vmatprep.subr.mxu0 0.0
        %3019 = vmatpush2.msra.mxu0 0.0
        %3020 = vmatprep.subr.mxu0 0.0
        %3021 = vmatpush2.msra.mxu0 0.0
        %3022 = vmatprep.subr.mxu0 0.0
        %3023 = vmatpush2.msra.mxu0 0.0
        %3024 = vmatprep.subr.mxu0 0.0
        %3025 = vmatpush2.msra.mxu0 0.0
        %3026 = vmatprep.subr.mxu0 0.0
        %3027 = vmatpush2.msra.mxu0 0.0
        %3028 = vmatprep.subr.mxu0 0.0
        %3029 = vmatpush2.msra.mxu0 0.0
        %3030 = vmatprep.subr.mxu0 0.0
        %3031 = vmatpush2.msra.mxu0 0.0
        %3032 = vmatprep.subr.mxu0 0.0
        %3033 = vmatpush2.msra.mxu0 0.0
        %3034 = vmatprep.subr.mxu0 0.0
        %3035 = vmatpush2.msra.mxu0 0.0
        %3036 = vmatprep.subr.mxu0 0.0
        %3037 = vmatpush2.msra.mxu0 0.0
        %3038 = vmatprep.subr.mxu0 0.0
        %3039 = vmatpush2.msra.mxu0 0.0
        %3040 = vmatprep.subr.mxu0 0.0
        %3041 = vmatpush2.msra.mxu0 0.0
        %3042 = vmatprep.subr.mxu0 0.0
        %3043 = vmatpush2.msra.mxu0 0.0
        %3044 = vmatprep.subr.mxu0 0.0
        %3045 = vmatpush2.msra.mxu0 0.0
        %3046 = vmatprep.subr.mxu0 0.0
        %3047 = vmatpush2.msra.mxu0 0.0
        %3048 = vmatprep.subr.mxu0 0.0
        %3049 = vmatpush2.msra.mxu0 0.0
        %3050 = vmatprep.mubr.f32.mxu0 0.0
        %3051 = vmatmul.mubr.f32.gmra.mxu0 %v2984
        %v3052 = vpop.f32.mrf.mxu0
        %v3053 = vadd.f32 0.0, %v3052
        %v3054 = vpop.f32.mrf.mxu0
        %3055 = vdwg.mxu0
        %3057 = vrot.lane.b32.xlu0 %v2884, 32
        %v3058 = vpop.permute.xlu0 %3057
        %v3059 = vsel %vm971, %v3058, 0
        %3061 = vmatprep.subr.mxu0 0.0
        %3062 = vmatpush1.msra.mxu0 0.0
        %3063 = vmatprep.subr.mxu0 0.0
        %3064 = vmatpush1.msra.mxu0 0.0
        %3065 = vmatprep.subr.mxu0 0.0
        %3066 = vmatpush1.msra.mxu0 0.0
        %3067 = vmatprep.subr.mxu0 0.0
        %3068 = vmatpush1.msra.mxu0 0.0
        %3069 = vmatprep.subr.mxu0 0.0
        %3070 = vmatpush1.msra.mxu0 0.0
        %3071 = vmatprep.subr.mxu0 0.0
        %3072 = vmatpush1.msra.mxu0 0.0
        %3073 = vmatprep.subr.mxu0 0.0
        %3074 = vmatpush1.msra.mxu0 0.0
        %3075 = vmatprep.subr.mxu0 0.0
        %3076 = vmatpush1.msra.mxu0 0.0
        %3077 = vmatprep.subr.mxu0 0.0
        %3078 = vmatpush1.msra.mxu0 0.0
        %3079 = vmatprep.subr.mxu0 0.0
        %3080 = vmatpush1.msra.mxu0 0.0
        %3081 = vmatprep.subr.mxu0 0.0
        %3082 = vmatpush1.msra.mxu0 0.0
        %3083 = vmatprep.subr.mxu0 0.0
        %3084 = vmatpush1.msra.mxu0 0.0
        %3085 = vmatprep.subr.mxu0 0.0
        %3086 = vmatpush1.msra.mxu0 %v959
        %3087 = vmatprep.subr.mxu0 0.0
        %3088 = vmatpush1.msra.mxu0 %v958
        %3089 = vmatprep.subr.mxu0 0.0
        %3090 = vmatpush1.msra.mxu0 %v957
        %3091 = vmatprep.subr.mxu0 0.0
        %3092 = vmatpush1.msra.mxu0 %v956
        %3093 = vmatprep.subr.mxu0 0.0
        %3094 = vmatpush2.msra.mxu0 0.0
        %3095 = vmatprep.subr.mxu0 0.0
        %3096 = vmatpush2.msra.mxu0 0.0
        %3097 = vmatprep.subr.mxu0 0.0
        %3098 = vmatpush2.msra.mxu0 0.0
        %3099 = vmatprep.subr.mxu0 0.0
        %3100 = vmatpush2.msra.mxu0 0.0
        %3101 = vmatprep.subr.mxu0 0.0
        %3102 = vmatpush2.msra.mxu0 0.0
        %3103 = vmatprep.subr.mxu0 0.0
        %3104 = vmatpush2.msra.mxu0 0.0
        %3105 = vmatprep.subr.mxu0 0.0
        %3106 = vmatpush2.msra.mxu0 0.0
        %3107 = vmatprep.subr.mxu0 0.0
        %3108 = vmatpush2.msra.mxu0 0.0
        %3109 = vmatprep.subr.mxu0 0.0
        %3110 = vmatpush2.msra.mxu0 0.0
        %3111 = vmatprep.subr.mxu0 0.0
        %3112 = vmatpush2.msra.mxu0 0.0
        %3113 = vmatprep.subr.mxu0 0.0
        %3114 = vmatpush2.msra.mxu0 0.0
        %3115 = vmatprep.subr.mxu0 0.0
        %3116 = vmatpush2.msra.mxu0 0.0
        %3117 = vmatprep.subr.mxu0 0.0
        %3118 = vmatpush2.msra.mxu0 0.0
        %3119 = vmatprep.subr.mxu0 0.0
        %3120 = vmatpush2.msra.mxu0 0.0
        %3121 = vmatprep.subr.mxu0 0.0
        %3122 = vmatpush2.msra.mxu0 0.0
        %3123 = vmatprep.subr.mxu0 0.0
        %3124 = vmatpush2.msra.mxu0 0.0
        %3125 = vmatprep.mubr.f32.mxu0 0.0
        %3126 = vmatmul.mubr.f32.gmra.mxu0 %v3059
        %v3127 = vpop.f32.mrf.mxu0
        %v3128 = vadd.f32 %v3053, %v3127
        %v3129 = vpop.f32.mrf.mxu0
        %3130 = vdwg.mxu0
        %v3131 = vadd.f32 %v3128, %v965
        %v3132 = vxor.u32 %v3131, 2147483648
        %v3133 = vmul.f32 %v3132, 1.442695
        %v3134 = vpow.pop %v3133
        %v3135 = vadd.f32 %v3134, 1.0
        %v3136 = vrcp.pop %v3135
        %v3137 = vmul.f32 1.0, %v3136
        %v3138 = vmul.f32 %v3137, 2.0
        %v3139 = vsub.f32 %v3138, 1.0
        %v3140 = vmul.f32 %v3137, %v2878
        %3142 = vrot.lane.b32.xlu0 %v3139, 64
        %v3143 = vpop.permute.xlu0 %3142
        %v3145 = vmul.f32 %v3137, %v3143
        %3147 = vrot.lane.b32.xlu0 %v3145, 32
        %v3148 = vpop.permute.xlu0 %3147
        %v3150 = vadd.f32 %v3140, %v3148
        %v3151 = vtanh.pop %v3150
        %3153 = vrot.lane.b32.xlu0 %v3151, 64
        %v3154 = vpop.permute.xlu0 %3153
        %v3156 = vmul.f32 %v3137, %v3154
        %3157 = vmatprep.subr.mxu0 0.0
        %3158 = vmatpush1.msra.mxu0 0.0
        %3159 = vmatprep.subr.mxu0 0.0
        %3160 = vmatpush1.msra.mxu0 0.0
        %3161 = vmatprep.subr.mxu0 0.0
        %3162 = vmatpush1.msra.mxu0 0.0
        %3163 = vmatprep.subr.mxu0 0.0
        %3164 = vmatpush1.msra.mxu0 0.0
        %3165 = vmatprep.subr.mxu0 0.0
        %3166 = vmatpush1.msra.mxu0 0.0
        %3167 = vmatprep.subr.mxu0 0.0
        %3168 = vmatpush1.msra.mxu0 0.0
        %3169 = vmatprep.subr.mxu0 0.0
        %3170 = vmatpush1.msra.mxu0 0.0
        %3171 = vmatprep.subr.mxu0 0.0
        %3172 = vmatpush1.msra.mxu0 0.0
        %3173 = vmatprep.subr.mxu0 0.0
        %3174 = vmatpush1.msra.mxu0 0.0
        %3175 = vmatprep.subr.mxu0 0.0
        %3176 = vmatpush1.msra.mxu0 0.0
        %3177 = vmatprep.subr.mxu0 0.0
        %3178 = vmatpush1.msra.mxu0 0.0
        %3179 = vmatprep.subr.mxu0 0.0
        %3180 = vmatpush1.msra.mxu0 0.0
        %3181 = vmatprep.subr.mxu0 0.0
        %3182 = vmatpush1.msra.mxu0 %v951
        %3183 = vmatprep.subr.mxu0 0.0
        %3184 = vmatpush1.msra.mxu0 %v950
        %3185 = vmatprep.subr.mxu0 0.0
        %3186 = vmatpush1.msra.mxu0 %v949
        %3187 = vmatprep.subr.mxu0 0.0
        %3188 = vmatpush1.msra.mxu0 %v948
        %3189 = vmatprep.subr.mxu0 0.0
        %3190 = vmatpush2.msra.mxu0 0.0
        %3191 = vmatprep.subr.mxu0 0.0
        %3192 = vmatpush2.msra.mxu0 0.0
        %3193 = vmatprep.subr.mxu0 0.0
        %3194 = vmatpush2.msra.mxu0 0.0
        %3195 = vmatprep.subr.mxu0 0.0
        %3196 = vmatpush2.msra.mxu0 0.0
        %3197 = vmatprep.subr.mxu0 0.0
        %3198 = vmatpush2.msra.mxu0 0.0
        %3199 = vmatprep.subr.mxu0 0.0
        %3200 = vmatpush2.msra.mxu0 0.0
        %3201 = vmatprep.subr.mxu0 0.0
        %3202 = vmatpush2.msra.mxu0 0.0
        %3203 = vmatprep.subr.mxu0 0.0
        %3204 = vmatpush2.msra.mxu0 0.0
        %3205 = vmatprep.subr.mxu0 0.0
        %3206 = vmatpush2.msra.mxu0 0.0
        %3207 = vmatprep.subr.mxu0 0.0
        %3208 = vmatpush2.msra.mxu0 0.0
        %3209 = vmatprep.subr.mxu0 0.0
        %3210 = vmatpush2.msra.mxu0 0.0
        %3211 = vmatprep.subr.mxu0 0.0
        %3212 = vmatpush2.msra.mxu0 0.0
        %3213 = vmatprep.subr.mxu0 0.0
        %3214 = vmatpush2.msra.mxu0 0.0
        %3215 = vmatprep.subr.mxu0 0.0
        %3216 = vmatpush2.msra.mxu0 0.0
        %3217 = vmatprep.subr.mxu0 0.0
        %3218 = vmatpush2.msra.mxu0 0.0
        %3219 = vmatprep.subr.mxu0 0.0
        %3220 = vmatpush2.msra.mxu0 0.0
        %3221 = vmatprep.mubr.f32.mxu0 0.0
        %3222 = vmatmul.mubr.f32.gmra.mxu0 %v2984
        %v3223 = vpop.f32.mrf.mxu0
        %v3224 = vadd.f32 0.0, %v3223
        %v3225 = vpop.f32.mrf.mxu0
        %3226 = vdwg.mxu0
        %v3227 = vadd.f32 %v910, %v3224
        %v3228 = vxor.u32 %v3227, 2147483648
        %v3229 = vmul.f32 %v3228, 1.442695
        %v3230 = vpow.pop %v3229
        %v3231 = vadd.f32 %v3230, 1.0
        %v3232 = vrcp.pop %v3231
        %v3233 = vmul.f32 1.0, %v3232
        %v3234 = vmul.f32 %v3233, 2.0
        %v3235 = vsub.f32 %v3234, 1.0
        %v3236 = vmul.f32 %v3233, %v2974
        %3238 = vrot.lane.b32.xlu0 %v3235, 64
        %v3239 = vpop.permute.xlu0 %3238
        %v3241 = vmul.f32 %v3233, %v3239
        %3243 = vrot.lane.b32.xlu0 %v3241, 32
        %v3244 = vpop.permute.xlu0 %3243
        %v3246 = vadd.f32 %v3236, %v3244
        %v3247 = vtanh.pop %v3246
        %3249 = vrot.lane.b32.xlu0 %v3247, 64
        %v3250 = vpop.permute.xlu0 %3249
        %v3252 = vmul.f32 %v3233, %v3250
        %3254 = vrot.lane.b32.xlu0 %v3252, 32
        %v3255 = vpop.permute.xlu0 %3254
        %v3256 = vsel %vm971, %v3255, 0
        %3258 = vmatprep.subr.mxu0 0.0
        %3259 = vmatpush1.msra.mxu0 0.0
        %3260 = vmatprep.subr.mxu0 0.0
        %3261 = vmatpush1.msra.mxu0 0.0
        %3262 = vmatprep.subr.mxu0 0.0
        %3263 = vmatpush1.msra.mxu0 0.0
        %3264 = vmatprep.subr.mxu0 0.0
        %3265 = vmatpush1.msra.mxu0 0.0
        %3266 = vmatprep.subr.mxu0 0.0
        %3267 = vmatpush1.msra.mxu0 0.0
        %3268 = vmatprep.subr.mxu0 0.0
        %3269 = vmatpush1.msra.mxu0 0.0
        %3270 = vmatprep.subr.mxu0 0.0
        %3271 = vmatpush1.msra.mxu0 0.0
        %3272 = vmatprep.subr.mxu0 0.0
        %3273 = vmatpush1.msra.mxu0 0.0
        %3274 = vmatprep.subr.mxu0 0.0
        %3275 = vmatpush1.msra.mxu0 0.0
        %3276 = vmatprep.subr.mxu0 0.0
        %3277 = vmatpush1.msra.mxu0 0.0
        %3278 = vmatprep.subr.mxu0 0.0
        %3279 = vmatpush1.msra.mxu0 0.0
        %3280 = vmatprep.subr.mxu0 0.0
        %3281 = vmatpush1.msra.mxu0 0.0
        %3282 = vmatprep.subr.mxu0 0.0
        %3283 = vmatpush1.msra.mxu0 %v955
        %3284 = vmatprep.subr.mxu0 0.0
        %3285 = vmatpush1.msra.mxu0 %v954
        %3286 = vmatprep.subr.mxu0 0.0
        %3287 = vmatpush1.msra.mxu0 %v953
        %3288 = vmatprep.subr.mxu0 0.0
        %3289 = vmatpush1.msra.mxu0 %v952
        %3290 = vmatprep.subr.mxu0 0.0
        %3291 = vmatpush2.msra.mxu0 0.0
        %3292 = vmatprep.subr.mxu0 0.0
        %3293 = vmatpush2.msra.mxu0 0.0
        %3294 = vmatprep.subr.mxu0 0.0
        %3295 = vmatpush2.msra.mxu0 0.0
        %3296 = vmatprep.subr.mxu0 0.0
        %3297 = vmatpush2.msra.mxu0 0.0
        %3298 = vmatprep.subr.mxu0 0.0
        %3299 = vmatpush2.msra.mxu0 0.0
        %3300 = vmatprep.subr.mxu0 0.0
        %3301 = vmatpush2.msra.mxu0 0.0
        %3302 = vmatprep.subr.mxu0 0.0
        %3303 = vmatpush2.msra.mxu0 0.0
        %3304 = vmatprep.subr.mxu0 0.0
        %3305 = vmatpush2.msra.mxu0 0.0
        %3306 = vmatprep.subr.mxu0 0.0
        %3307 = vmatpush2.msra.mxu0 0.0
        %3308 = vmatprep.subr.mxu0 0.0
        %3309 = vmatpush2.msra.mxu0 0.0
        %3310 = vmatprep.subr.mxu0 0.0
        %3311 = vmatpush2.msra.mxu0 0.0
        %3312 = vmatprep.subr.mxu0 0.0
        %3313 = vmatpush2.msra.mxu0 0.0
        %3314 = vmatprep.subr.mxu0 0.0
        %3315 = vmatpush2.msra.mxu0 0.0
        %3316 = vmatprep.subr.mxu0 0.0
        %3317 = vmatpush2.msra.mxu0 0.0
        %3318 = vmatprep.subr.mxu0 0.0
        %3319 = vmatpush2.msra.mxu0 0.0
        %3320 = vmatprep.subr.mxu0 0.0
        %3321 = vmatpush2.msra.mxu0 0.0
        %3322 = vmatprep.mubr.f32.mxu0 0.0
        %3323 = vmatmul.mubr.f32.gmra.mxu0 %v3256
        %v3324 = vpop.f32.mrf.mxu0
        %v3325 = vadd.f32 0.0, %v3324
        %v3326 = vpop.f32.mrf.mxu0
        %3327 = vdwg.mxu0
        %3329 = vrot.lane.b32.xlu0 %v3156, 32
        %v3330 = vpop.permute.xlu0 %3329
        %v3331 = vsel %vm971, %v3330, 0
        %3333 = vmatprep.subr.mxu0 0.0
        %3334 = vmatpush1.msra.mxu0 0.0
        %3335 = vmatprep.subr.mxu0 0.0
        %3336 = vmatpush1.msra.mxu0 0.0
        %3337 = vmatprep.subr.mxu0 0.0
        %3338 = vmatpush1.msra.mxu0 0.0
        %3339 = vmatprep.subr.mxu0 0.0
        %3340 = vmatpush1.msra.mxu0 0.0
        %3341 = vmatprep.subr.mxu0 0.0
        %3342 = vmatpush1.msra.mxu0 0.0
        %3343 = vmatprep.subr.mxu0 0.0
        %3344 = vmatpush1.msra.mxu0 0.0
        %3345 = vmatprep.subr.mxu0 0.0
        %3346 = vmatpush1.msra.mxu0 0.0
        %3347 = vmatprep.subr.mxu0 0.0
        %3348 = vmatpush1.msra.mxu0 0.0
        %3349 = vmatprep.subr.mxu0 0.0
        %3350 = vmatpush1.msra.mxu0 0.0
        %3351 = vmatprep.subr.mxu0 0.0
        %3352 = vmatpush1.msra.mxu0 0.0
        %3353 = vmatprep.subr.mxu0 0.0
        %3354 = vmatpush1.msra.mxu0 0.0
        %3355 = vmatprep.subr.mxu0 0.0
        %3356 = vmatpush1.msra.mxu0 0.0
        %3357 = vmatprep.subr.mxu0 0.0
        %3358 = vmatpush1.msra.mxu0 %v959
        %3359 = vmatprep.subr.mxu0 0.0
        %3360 = vmatpush1.msra.mxu0 %v958
        %3361 = vmatprep.subr.mxu0 0.0
        %3362 = vmatpush1.msra.mxu0 %v957
        %3363 = vmatprep.subr.mxu0 0.0
        %3364 = vmatpush1.msra.mxu0 %v956
        %3365 = vmatprep.subr.mxu0 0.0
        %3366 = vmatpush2.msra.mxu0 0.0
        %3367 = vmatprep.subr.mxu0 0.0
        %3368 = vmatpush2.msra.mxu0 0.0
        %3369 = vmatprep.subr.mxu0 0.0
        %3370 = vmatpush2.msra.mxu0 0.0
        %3371 = vmatprep.subr.mxu0 0.0
        %3372 = vmatpush2.msra.mxu0 0.0
        %3373 = vmatprep.subr.mxu0 0.0
        %3374 = vmatpush2.msra.mxu0 0.0
        %3375 = vmatprep.subr.mxu0 0.0
        %3376 = vmatpush2.msra.mxu0 0.0
        %3377 = vmatprep.subr.mxu0 0.0
        %3378 = vmatpush2.msra.mxu0 0.0
        %3379 = vmatprep.subr.mxu0 0.0
        %3380 = vmatpush2.msra.mxu0 0.0
        %3381 = vmatprep.subr.mxu0 0.0
        %3382 = vmatpush2.msra.mxu0 0.0
        %3383 = vmatprep.subr.mxu0 0.0
        %3384 = vmatpush2.msra.mxu0 0.0
        %3385 = vmatprep.subr.mxu0 0.0
        %3386 = vmatpush2.msra.mxu0 0.0
        %3387 = vmatprep.subr.mxu0 0.0
        %3388 = vmatpush2.msra.mxu0 0.0
        %3389 = vmatprep.subr.mxu0 0.0
        %3390 = vmatpush2.msra.mxu0 0.0
        %3391 = vmatprep.subr.mxu0 0.0
        %3392 = vmatpush2.msra.mxu0 0.0
        %3393 = vmatprep.subr.mxu0 0.0
        %3394 = vmatpush2.msra.mxu0 0.0
        %3395 = vmatprep.subr.mxu0 0.0
        %3396 = vmatpush2.msra.mxu0 0.0
        %3397 = vmatprep.mubr.f32.mxu0 0.0
        %3398 = vmatmul.mubr.f32.gmra.mxu0 %v3331
        %v3399 = vpop.f32.mrf.mxu0
        %v3400 = vadd.f32 %v3325, %v3399
        %v3401 = vpop.f32.mrf.mxu0
        %3402 = vdwg.mxu0
        %v3403 = vadd.f32 %v3400, %v965
        %v3404 = vxor.u32 %v3403, 2147483648
        %v3405 = vmul.f32 %v3404, 1.442695
        %v3406 = vpow.pop %v3405
        %v3407 = vadd.f32 %v3406, 1.0
        %v3408 = vrcp.pop %v3407
        %v3409 = vmul.f32 1.0, %v3408
        %v3410 = vmul.f32 %v3409, 2.0
        %v3411 = vsub.f32 %v3410, 1.0
        %v3412 = vmul.f32 %v3409, %v3150
        %3414 = vrot.lane.b32.xlu0 %v3411, 64
        %v3415 = vpop.permute.xlu0 %3414
        %v3417 = vmul.f32 %v3409, %v3415
        %3419 = vrot.lane.b32.xlu0 %v3417, 32
        %v3420 = vpop.permute.xlu0 %3419
        %v3422 = vadd.f32 %v3412, %v3420
        %v3423 = vtanh.pop %v3422
        %3425 = vrot.lane.b32.xlu0 %v3423, 64
        %v3426 = vpop.permute.xlu0 %3425
        %v3428 = vmul.f32 %v3409, %v3426
        %3429 = vmatprep.subr.mxu0 0.0
        %3430 = vmatpush1.msra.mxu0 0.0
        %3431 = vmatprep.subr.mxu0 0.0
        %3432 = vmatpush1.msra.mxu0 0.0
        %3433 = vmatprep.subr.mxu0 0.0
        %3434 = vmatpush1.msra.mxu0 0.0
        %3435 = vmatprep.subr.mxu0 0.0
        %3436 = vmatpush1.msra.mxu0 0.0
        %3437 = vmatprep.subr.mxu0 0.0
        %3438 = vmatpush1.msra.mxu0 0.0
        %3439 = vmatprep.subr.mxu0 0.0
        %3440 = vmatpush1.msra.mxu0 0.0
        %3441 = vmatprep.subr.mxu0 0.0
        %3442 = vmatpush1.msra.mxu0 0.0
        %3443 = vmatprep.subr.mxu0 0.0
        %3444 = vmatpush1.msra.mxu0 0.0
        %3445 = vmatprep.subr.mxu0 0.0
        %3446 = vmatpush1.msra.mxu0 0.0
        %3447 = vmatprep.subr.mxu0 0.0
        %3448 = vmatpush1.msra.mxu0 0.0
        %3449 = vmatprep.subr.mxu0 0.0
        %3450 = vmatpush1.msra.mxu0 0.0
        %3451 = vmatprep.subr.mxu0 0.0
        %3452 = vmatpush1.msra.mxu0 0.0
        %3453 = vmatprep.subr.mxu0 0.0
        %3454 = vmatpush1.msra.mxu0 %v951
        %3455 = vmatprep.subr.mxu0 0.0
        %3456 = vmatpush1.msra.mxu0 %v950
        %3457 = vmatprep.subr.mxu0 0.0
        %3458 = vmatpush1.msra.mxu0 %v949
        %3459 = vmatprep.subr.mxu0 0.0
        %3460 = vmatpush1.msra.mxu0 %v948
        %3461 = vmatprep.subr.mxu0 0.0
        %3462 = vmatpush2.msra.mxu0 0.0
        %3463 = vmatprep.subr.mxu0 0.0
        %3464 = vmatpush2.msra.mxu0 0.0
        %3465 = vmatprep.subr.mxu0 0.0
        %3466 = vmatpush2.msra.mxu0 0.0
        %3467 = vmatprep.subr.mxu0 0.0
        %3468 = vmatpush2.msra.mxu0 0.0
        %3469 = vmatprep.subr.mxu0 0.0
        %3470 = vmatpush2.msra.mxu0 0.0
        %3471 = vmatprep.subr.mxu0 0.0
        %3472 = vmatpush2.msra.mxu0 0.0
        %3473 = vmatprep.subr.mxu0 0.0
        %3474 = vmatpush2.msra.mxu0 0.0
        %3475 = vmatprep.subr.mxu0 0.0
        %3476 = vmatpush2.msra.mxu0 0.0
        %3477 = vmatprep.subr.mxu0 0.0
        %3478 = vmatpush2.msra.mxu0 0.0
        %3479 = vmatprep.subr.mxu0 0.0
        %3480 = vmatpush2.msra.mxu0 0.0
        %3481 = vmatprep.subr.mxu0 0.0
        %3482 = vmatpush2.msra.mxu0 0.0
        %3483 = vmatprep.subr.mxu0 0.0
        %3484 = vmatpush2.msra.mxu0 0.0
        %3485 = vmatprep.subr.mxu0 0.0
        %3486 = vmatpush2.msra.mxu0 0.0
        %3487 = vmatprep.subr.mxu0 0.0
        %3488 = vmatpush2.msra.mxu0 0.0
        %3489 = vmatprep.subr.mxu0 0.0
        %3490 = vmatpush2.msra.mxu0 0.0
        %3491 = vmatprep.subr.mxu0 0.0
        %3492 = vmatpush2.msra.mxu0 0.0
        %3493 = vmatprep.mubr.f32.mxu0 0.0
        %3494 = vmatmul.mubr.f32.gmra.mxu0 %v3256
        %v3495 = vpop.f32.mrf.mxu0
        %v3496 = vadd.f32 0.0, %v3495
        %v3497 = vpop.f32.mrf.mxu0
        %3498 = vdwg.mxu0
        %v3499 = vadd.f32 %v915, %v3496
        %v3500 = vxor.u32 %v3499, 2147483648
        %v3501 = vmul.f32 %v3500, 1.442695
        %v3502 = vpow.pop %v3501
        %v3503 = vadd.f32 %v3502, 1.0
        %v3504 = vrcp.pop %v3503
        %v3505 = vmul.f32 1.0, %v3504
        %v3506 = vmul.f32 %v3505, 2.0
        %v3507 = vsub.f32 %v3506, 1.0
        %v3508 = vmul.f32 %v3505, %v3246
        %3510 = vrot.lane.b32.xlu0 %v3507, 64
        %v3511 = vpop.permute.xlu0 %3510
        %v3513 = vmul.f32 %v3505, %v3511
        %3515 = vrot.lane.b32.xlu0 %v3513, 32
        %v3516 = vpop.permute.xlu0 %3515
        %v3518 = vadd.f32 %v3508, %v3516
        %v3519 = vtanh.pop %v3518
        %3521 = vrot.lane.b32.xlu0 %v3519, 64
        %v3522 = vpop.permute.xlu0 %3521
        %v3524 = vmul.f32 %v3505, %v3522
        %3526 = vrot.lane.b32.xlu0 %v3524, 32
        %v3527 = vpop.permute.xlu0 %3526
        %v3528 = vsel %vm971, %v3527, 0
        %3530 = vmatprep.subr.mxu0 0.0
        %3531 = vmatpush1.msra.mxu0 0.0
        %3532 = vmatprep.subr.mxu0 0.0
        %3533 = vmatpush1.msra.mxu0 0.0
        %3534 = vmatprep.subr.mxu0 0.0
        %3535 = vmatpush1.msra.mxu0 0.0
        %3536 = vmatprep.subr.mxu0 0.0
        %3537 = vmatpush1.msra.mxu0 0.0
        %3538 = vmatprep.subr.mxu0 0.0
        %3539 = vmatpush1.msra.mxu0 0.0
        %3540 = vmatprep.subr.mxu0 0.0
        %3541 = vmatpush1.msra.mxu0 0.0
        %3542 = vmatprep.subr.mxu0 0.0
        %3543 = vmatpush1.msra.mxu0 0.0
        %3544 = vmatprep.subr.mxu0 0.0
        %3545 = vmatpush1.msra.mxu0 0.0
        %3546 = vmatprep.subr.mxu0 0.0
        %3547 = vmatpush1.msra.mxu0 0.0
        %3548 = vmatprep.subr.mxu0 0.0
        %3549 = vmatpush1.msra.mxu0 0.0
        %3550 = vmatprep.subr.mxu0 0.0
        %3551 = vmatpush1.msra.mxu0 0.0
        %3552 = vmatprep.subr.mxu0 0.0
        %3553 = vmatpush1.msra.mxu0 0.0
        %3554 = vmatprep.subr.mxu0 0.0
        %3555 = vmatpush1.msra.mxu0 %v955
        %3556 = vmatprep.subr.mxu0 0.0
        %3557 = vmatpush1.msra.mxu0 %v954
        %3558 = vmatprep.subr.mxu0 0.0
        %3559 = vmatpush1.msra.mxu0 %v953
        %3560 = vmatprep.subr.mxu0 0.0
        %3561 = vmatpush1.msra.mxu0 %v952
        %3562 = vmatprep.subr.mxu0 0.0
        %3563 = vmatpush2.msra.mxu0 0.0
        %3564 = vmatprep.subr.mxu0 0.0
        %3565 = vmatpush2.msra.mxu0 0.0
        %3566 = vmatprep.subr.mxu0 0.0
        %3567 = vmatpush2.msra.mxu0 0.0
        %3568 = vmatprep.subr.mxu0 0.0
        %3569 = vmatpush2.msra.mxu0 0.0
        %3570 = vmatprep.subr.mxu0 0.0
        %3571 = vmatpush2.msra.mxu0 0.0
        %3572 = vmatprep.subr.mxu0 0.0
        %3573 = vmatpush2.msra.mxu0 0.0
        %3574 = vmatprep.subr.mxu0 0.0
        %3575 = vmatpush2.msra.mxu0 0.0
        %3576 = vmatprep.subr.mxu0 0.0
        %3577 = vmatpush2.msra.mxu0 0.0
        %3578 = vmatprep.subr.mxu0 0.0
        %3579 = vmatpush2.msra.mxu0 0.0
        %3580 = vmatprep.subr.mxu0 0.0
        %3581 = vmatpush2.msra.mxu0 0.0
        %3582 = vmatprep.subr.mxu0 0.0
        %3583 = vmatpush2.msra.mxu0 0.0
        %3584 = vmatprep.subr.mxu0 0.0
        %3585 = vmatpush2.msra.mxu0 0.0
        %3586 = vmatprep.subr.mxu0 0.0
        %3587 = vmatpush2.msra.mxu0 0.0
        %3588 = vmatprep.subr.mxu0 0.0
        %3589 = vmatpush2.msra.mxu0 0.0
        %3590 = vmatprep.subr.mxu0 0.0
        %3591 = vmatpush2.msra.mxu0 0.0
        %3592 = vmatprep.subr.mxu0 0.0
        %3593 = vmatpush2.msra.mxu0 0.0
        %3594 = vmatprep.mubr.f32.mxu0 0.0
        %3595 = vmatmul.mubr.f32.gmra.mxu0 %v3528
        %v3596 = vpop.f32.mrf.mxu0
        %v3597 = vadd.f32 0.0, %v3596
        %v3598 = vpop.f32.mrf.mxu0
        %3599 = vdwg.mxu0
        %3601 = vrot.lane.b32.xlu0 %v3428, 32
        %v3602 = vpop.permute.xlu0 %3601
        %v3603 = vsel %vm971, %v3602, 0
        %3605 = vmatprep.subr.mxu0 0.0
        %3606 = vmatpush1.msra.mxu0 0.0
        %3607 = vmatprep.subr.mxu0 0.0
        %3608 = vmatpush1.msra.mxu0 0.0
        %3609 = vmatprep.subr.mxu0 0.0
        %3610 = vmatpush1.msra.mxu0 0.0
        %3611 = vmatprep.subr.mxu0 0.0
        %3612 = vmatpush1.msra.mxu0 0.0
        %3613 = vmatprep.subr.mxu0 0.0
        %3614 = vmatpush1.msra.mxu0 0.0
        %3615 = vmatprep.subr.mxu0 0.0
        %3616 = vmatpush1.msra.mxu0 0.0
        %3617 = vmatprep.subr.mxu0 0.0
        %3618 = vmatpush1.msra.mxu0 0.0
        %3619 = vmatprep.subr.mxu0 0.0
        %3620 = vmatpush1.msra.mxu0 0.0
        %3621 = vmatprep.subr.mxu0 0.0
        %3622 = vmatpush1.msra.mxu0 0.0
        %3623 = vmatprep.subr.mxu0 0.0
        %3624 = vmatpush1.msra.mxu0 0.0
        %3625 = vmatprep.subr.mxu0 0.0
        %3626 = vmatpush1.msra.mxu0 0.0
        %3627 = vmatprep.subr.mxu0 0.0
        %3628 = vmatpush1.msra.mxu0 0.0
        %3629 = vmatprep.subr.mxu0 0.0
        %3630 = vmatpush1.msra.mxu0 %v959
        %3631 = vmatprep.subr.mxu0 0.0
        %3632 = vmatpush1.msra.mxu0 %v958
        %3633 = vmatprep.subr.mxu0 0.0
        %3634 = vmatpush1.msra.mxu0 %v957
        %3635 = vmatprep.subr.mxu0 0.0
        %3636 = vmatpush1.msra.mxu0 %v956
        %3637 = vmatprep.subr.mxu0 0.0
        %3638 = vmatpush2.msra.mxu0 0.0
        %3639 = vmatprep.subr.mxu0 0.0
        %3640 = vmatpush2.msra.mxu0 0.0
        %3641 = vmatprep.subr.mxu0 0.0
        %3642 = vmatpush2.msra.mxu0 0.0
        %3643 = vmatprep.subr.mxu0 0.0
        %3644 = vmatpush2.msra.mxu0 0.0
        %3645 = vmatprep.subr.mxu0 0.0
        %3646 = vmatpush2.msra.mxu0 0.0
        %3647 = vmatprep.subr.mxu0 0.0
        %3648 = vmatpush2.msra.mxu0 0.0
        %3649 = vmatprep.subr.mxu0 0.0
        %3650 = vmatpush2.msra.mxu0 0.0
        %3651 = vmatprep.subr.mxu0 0.0
        %3652 = vmatpush2.msra.mxu0 0.0
        %3653 = vmatprep.subr.mxu0 0.0
        %3654 = vmatpush2.msra.mxu0 0.0
        %3655 = vmatprep.subr.mxu0 0.0
        %3656 = vmatpush2.msra.mxu0 0.0
        %3657 = vmatprep.subr.mxu0 0.0
        %3658 = vmatpush2.msra.mxu0 0.0
        %3659 = vmatprep.subr.mxu0 0.0
        %3660 = vmatpush2.msra.mxu0 0.0
        %3661 = vmatprep.subr.mxu0 0.0
        %3662 = vmatpush2.msra.mxu0 0.0
        %3663 = vmatprep.subr.mxu0 0.0
        %3664 = vmatpush2.msra.mxu0 0.0
        %3665 = vmatprep.subr.mxu0 0.0
        %3666 = vmatpush2.msra.mxu0 0.0
        %3667 = vmatprep.subr.mxu0 0.0
        %3668 = vmatpush2.msra.mxu0 0.0
        %3669 = vmatprep.mubr.f32.mxu0 0.0
        %3670 = vmatmul.mubr.f32.gmra.mxu0 %v3603
        %v3671 = vpop.f32.mrf.mxu0
        %v3672 = vadd.f32 %v3597, %v3671
        %v3673 = vpop.f32.mrf.mxu0
        %3674 = vdwg.mxu0
        %v3675 = vadd.f32 %v3672, %v965
        %v3676 = vxor.u32 %v3675, 2147483648
        %v3677 = vmul.f32 %v3676, 1.442695
        %v3678 = vpow.pop %v3677
        %v3679 = vadd.f32 %v3678, 1.0
        %v3680 = vrcp.pop %v3679
        %v3681 = vmul.f32 1.0, %v3680
        %v3682 = vmul.f32 %v3681, 2.0
        %v3683 = vsub.f32 %v3682, 1.0
        %v3684 = vmul.f32 %v3681, %v3422
        %3686 = vrot.lane.b32.xlu0 %v3683, 64
        %v3687 = vpop.permute.xlu0 %3686
        %v3689 = vmul.f32 %v3681, %v3687
        %3691 = vrot.lane.b32.xlu0 %v3689, 32
        %v3692 = vpop.permute.xlu0 %3691
        %v3694 = vadd.f32 %v3684, %v3692
        %v3695 = vtanh.pop %v3694
        %3697 = vrot.lane.b32.xlu0 %v3695, 64
        %v3698 = vpop.permute.xlu0 %3697
        %v3700 = vmul.f32 %v3681, %v3698
        %3701 = vmatprep.subr.mxu0 0.0
        %3702 = vmatpush1.msra.mxu0 0.0
        %3703 = vmatprep.subr.mxu0 0.0
        %3704 = vmatpush1.msra.mxu0 0.0
        %3705 = vmatprep.subr.mxu0 0.0
        %3706 = vmatpush1.msra.mxu0 0.0
        %3707 = vmatprep.subr.mxu0 0.0
        %3708 = vmatpush1.msra.mxu0 0.0
        %3709 = vmatprep.subr.mxu0 0.0
        %3710 = vmatpush1.msra.mxu0 0.0
        %3711 = vmatprep.subr.mxu0 0.0
        %3712 = vmatpush1.msra.mxu0 0.0
        %3713 = vmatprep.subr.mxu0 0.0
        %3714 = vmatpush1.msra.mxu0 0.0
        %3715 = vmatprep.subr.mxu0 0.0
        %3716 = vmatpush1.msra.mxu0 0.0
        %3717 = vmatprep.subr.mxu0 0.0
        %3718 = vmatpush1.msra.mxu0 0.0
        %3719 = vmatprep.subr.mxu0 0.0
        %3720 = vmatpush1.msra.mxu0 0.0
        %3721 = vmatprep.subr.mxu0 0.0
        %3722 = vmatpush1.msra.mxu0 0.0
        %3723 = vmatprep.subr.mxu0 0.0
        %3724 = vmatpush1.msra.mxu0 0.0
        %3725 = vmatprep.subr.mxu0 0.0
        %3726 = vmatpush1.msra.mxu0 %v951
        %3727 = vmatprep.subr.mxu0 0.0
        %3728 = vmatpush1.msra.mxu0 %v950
        %3729 = vmatprep.subr.mxu0 0.0
        %3730 = vmatpush1.msra.mxu0 %v949
        %3731 = vmatprep.subr.mxu0 0.0
        %3732 = vmatpush1.msra.mxu0 %v948
        %3733 = vmatprep.subr.mxu0 0.0
        %3734 = vmatpush2.msra.mxu0 0.0
        %3735 = vmatprep.subr.mxu0 0.0
        %3736 = vmatpush2.msra.mxu0 0.0
        %3737 = vmatprep.subr.mxu0 0.0
        %3738 = vmatpush2.msra.mxu0 0.0
        %3739 = vmatprep.subr.mxu0 0.0
        %3740 = vmatpush2.msra.mxu0 0.0
        %3741 = vmatprep.subr.mxu0 0.0
        %3742 = vmatpush2.msra.mxu0 0.0
        %3743 = vmatprep.subr.mxu0 0.0
        %3744 = vmatpush2.msra.mxu0 0.0
        %3745 = vmatprep.subr.mxu0 0.0
        %3746 = vmatpush2.msra.mxu0 0.0
        %3747 = vmatprep.subr.mxu0 0.0
        %3748 = vmatpush2.msra.mxu0 0.0
        %3749 = vmatprep.subr.mxu0 0.0
        %3750 = vmatpush2.msra.mxu0 0.0
        %3751 = vmatprep.subr.mxu0 0.0
        %3752 = vmatpush2.msra.mxu0 0.0
        %3753 = vmatprep.subr.mxu0 0.0
        %3754 = vmatpush2.msra.mxu0 0.0
        %3755 = vmatprep.subr.mxu0 0.0
        %3756 = vmatpush2.msra.mxu0 0.0
        %3757 = vmatprep.subr.mxu0 0.0
        %3758 = vmatpush2.msra.mxu0 0.0
        %3759 = vmatprep.subr.mxu0 0.0
        %3760 = vmatpush2.msra.mxu0 0.0
        %3761 = vmatprep.subr.mxu0 0.0
        %3762 = vmatpush2.msra.mxu0 0.0
        %3763 = vmatprep.subr.mxu0 0.0
        %3764 = vmatpush2.msra.mxu0 0.0
        %3765 = vmatprep.mubr.f32.mxu0 0.0
        %3766 = vmatmul.mubr.f32.gmra.mxu0 %v3528
        %v3767 = vpop.f32.mrf.mxu0
        %v3768 = vadd.f32 0.0, %v3767
        %v3769 = vpop.f32.mrf.mxu0
        %3770 = vdwg.mxu0
        %v3771 = vadd.f32 %v920, %v3768
        %v3772 = vxor.u32 %v3771, 2147483648
        %v3773 = vmul.f32 %v3772, 1.442695
        %v3774 = vpow.pop %v3773
        %v3775 = vadd.f32 %v3774, 1.0
        %v3776 = vrcp.pop %v3775
        %v3777 = vmul.f32 1.0, %v3776
        %v3778 = vmul.f32 %v3777, 2.0
        %v3779 = vsub.f32 %v3778, 1.0
        %v3780 = vmul.f32 %v3777, %v3518
        %3782 = vrot.lane.b32.xlu0 %v3779, 64
        %v3783 = vpop.permute.xlu0 %3782
        %v3785 = vmul.f32 %v3777, %v3783
        %3787 = vrot.lane.b32.xlu0 %v3785, 32
        %v3788 = vpop.permute.xlu0 %3787
        %v3790 = vadd.f32 %v3780, %v3788
        %v3791 = vtanh.pop %v3790
        %3793 = vrot.lane.b32.xlu0 %v3791, 64
        %v3794 = vpop.permute.xlu0 %3793
        %v3796 = vmul.f32 %v3777, %v3794
        %3798 = vrot.lane.b32.xlu0 %v3796, 32
        %v3799 = vpop.permute.xlu0 %3798
        %v3800 = vsel %vm971, %v3799, 0
        %3802 = vmatprep.subr.mxu0 0.0
        %3803 = vmatpush1.msra.mxu0 0.0
        %3804 = vmatprep.subr.mxu0 0.0
        %3805 = vmatpush1.msra.mxu0 0.0
        %3806 = vmatprep.subr.mxu0 0.0
        %3807 = vmatpush1.msra.mxu0 0.0
        %3808 = vmatprep.subr.mxu0 0.0
        %3809 = vmatpush1.msra.mxu0 0.0
        %3810 = vmatprep.subr.mxu0 0.0
        %3811 = vmatpush1.msra.mxu0 0.0
        %3812 = vmatprep.subr.mxu0 0.0
        %3813 = vmatpush1.msra.mxu0 0.0
        %3814 = vmatprep.subr.mxu0 0.0
        %3815 = vmatpush1.msra.mxu0 0.0
        %3816 = vmatprep.subr.mxu0 0.0
        %3817 = vmatpush1.msra.mxu0 0.0
        %3818 = vmatprep.subr.mxu0 0.0
        %3819 = vmatpush1.msra.mxu0 0.0
        %3820 = vmatprep.subr.mxu0 0.0
        %3821 = vmatpush1.msra.mxu0 0.0
        %3822 = vmatprep.subr.mxu0 0.0
        %3823 = vmatpush1.msra.mxu0 0.0
        %3824 = vmatprep.subr.mxu0 0.0
        %3825 = vmatpush1.msra.mxu0 0.0
        %3826 = vmatprep.subr.mxu0 0.0
        %3827 = vmatpush1.msra.mxu0 %v955
        %3828 = vmatprep.subr.mxu0 0.0
        %3829 = vmatpush1.msra.mxu0 %v954
        %3830 = vmatprep.subr.mxu0 0.0
        %3831 = vmatpush1.msra.mxu0 %v953
        %3832 = vmatprep.subr.mxu0 0.0
        %3833 = vmatpush1.msra.mxu0 %v952
        %3834 = vmatprep.subr.mxu0 0.0
        %3835 = vmatpush2.msra.mxu0 0.0
        %3836 = vmatprep.subr.mxu0 0.0
        %3837 = vmatpush2.msra.mxu0 0.0
        %3838 = vmatprep.subr.mxu0 0.0
        %3839 = vmatpush2.msra.mxu0 0.0
        %3840 = vmatprep.subr.mxu0 0.0
        %3841 = vmatpush2.msra.mxu0 0.0
        %3842 = vmatprep.subr.mxu0 0.0
        %3843 = vmatpush2.msra.mxu0 0.0
        %3844 = vmatprep.subr.mxu0 0.0
        %3845 = vmatpush2.msra.mxu0 0.0
        %3846 = vmatprep.subr.mxu0 0.0
        %3847 = vmatpush2.msra.mxu0 0.0
        %3848 = vmatprep.subr.mxu0 0.0
        %3849 = vmatpush2.msra.mxu0 0.0
        %3850 = vmatprep.subr.mxu0 0.0
        %3851 = vmatpush2.msra.mxu0 0.0
        %3852 = vmatprep.subr.mxu0 0.0
        %3853 = vmatpush2.msra.mxu0 0.0
        %3854 = vmatprep.subr.mxu0 0.0
        %3855 = vmatpush2.msra.mxu0 0.0
        %3856 = vmatprep.subr.mxu0 0.0
        %3857 = vmatpush2.msra.mxu0 0.0
        %3858 = vmatprep.subr.mxu0 0.0
        %3859 = vmatpush2.msra.mxu0 0.0
        %3860 = vmatprep.subr.mxu0 0.0
        %3861 = vmatpush2.msra.mxu0 0.0
        %3862 = vmatprep.subr.mxu0 0.0
        %3863 = vmatpush2.msra.mxu0 0.0
        %3864 = vmatprep.subr.mxu0 0.0
        %3865 = vmatpush2.msra.mxu0 0.0
        %3866 = vmatprep.mubr.f32.mxu0 0.0
        %3867 = vmatmul.mubr.f32.gmra.mxu0 %v3800
        %v3868 = vpop.f32.mrf.mxu0
        %v3869 = vadd.f32 0.0, %v3868
        %v3870 = vpop.f32.mrf.mxu0
        %3871 = vdwg.mxu0
        %3873 = vrot.lane.b32.xlu0 %v3700, 32
        %v3874 = vpop.permute.xlu0 %3873
        %v3875 = vsel %vm971, %v3874, 0
        %3877 = vmatprep.subr.mxu0 0.0
        %3878 = vmatpush1.msra.mxu0 0.0
        %3879 = vmatprep.subr.mxu0 0.0
        %3880 = vmatpush1.msra.mxu0 0.0
        %3881 = vmatprep.subr.mxu0 0.0
        %3882 = vmatpush1.msra.mxu0 0.0
        %3883 = vmatprep.subr.mxu0 0.0
        %3884 = vmatpush1.msra.mxu0 0.0
        %3885 = vmatprep.subr.mxu0 0.0
        %3886 = vmatpush1.msra.mxu0 0.0
        %3887 = vmatprep.subr.mxu0 0.0
        %3888 = vmatpush1.msra.mxu0 0.0
        %3889 = vmatprep.subr.mxu0 0.0
        %3890 = vmatpush1.msra.mxu0 0.0
        %3891 = vmatprep.subr.mxu0 0.0
        %3892 = vmatpush1.msra.mxu0 0.0
        %3893 = vmatprep.subr.mxu0 0.0
        %3894 = vmatpush1.msra.mxu0 0.0
        %3895 = vmatprep.subr.mxu0 0.0
        %3896 = vmatpush1.msra.mxu0 0.0
        %3897 = vmatprep.subr.mxu0 0.0
        %3898 = vmatpush1.msra.mxu0 0.0
        %3899 = vmatprep.subr.mxu0 0.0
        %3900 = vmatpush1.msra.mxu0 0.0
        %3901 = vmatprep.subr.mxu0 0.0
        %3902 = vmatpush1.msra.mxu0 %v959
        %3903 = vmatprep.subr.mxu0 0.0
        %3904 = vmatpush1.msra.mxu0 %v958
        %3905 = vmatprep.subr.mxu0 0.0
        %3906 = vmatpush1.msra.mxu0 %v957
        %3907 = vmatprep.subr.mxu0 0.0
        %3908 = vmatpush1.msra.mxu0 %v956
        %3909 = vmatprep.subr.mxu0 0.0
        %3910 = vmatpush2.msra.mxu0 0.0
        %3911 = vmatprep.subr.mxu0 0.0
        %3912 = vmatpush2.msra.mxu0 0.0
        %3913 = vmatprep.subr.mxu0 0.0
        %3914 = vmatpush2.msra.mxu0 0.0
        %3915 = vmatprep.subr.mxu0 0.0
        %3916 = vmatpush2.msra.mxu0 0.0
        %3917 = vmatprep.subr.mxu0 0.0
        %3918 = vmatpush2.msra.mxu0 0.0
        %3919 = vmatprep.subr.mxu0 0.0
        %3920 = vmatpush2.msra.mxu0 0.0
        %3921 = vmatprep.subr.mxu0 0.0
        %3922 = vmatpush2.msra.mxu0 0.0
        %3923 = vmatprep.subr.mxu0 0.0
        %3924 = vmatpush2.msra.mxu0 0.0
        %3925 = vmatprep.subr.mxu0 0.0
        %3926 = vmatpush2.msra.mxu0 0.0
        %3927 = vmatprep.subr.mxu0 0.0
        %3928 = vmatpush2.msra.mxu0 0.0
        %3929 = vmatprep.subr.mxu0 0.0
        %3930 = vmatpush2.msra.mxu0 0.0
        %3931 = vmatprep.subr.mxu0 0.0
        %3932 = vmatpush2.msra.mxu0 0.0
        %3933 = vmatprep.subr.mxu0 0.0
        %3934 = vmatpush2.msra.mxu0 0.0
        %3935 = vmatprep.subr.mxu0 0.0
        %3936 = vmatpush2.msra.mxu0 0.0
        %3937 = vmatprep.subr.mxu0 0.0
        %3938 = vmatpush2.msra.mxu0 0.0
        %3939 = vmatprep.subr.mxu0 0.0
        %3940 = vmatpush2.msra.mxu0 0.0
        %3941 = vmatprep.mubr.f32.mxu0 0.0
        %3942 = vmatmul.mubr.f32.gmra.mxu0 %v3875
        %v3943 = vpop.f32.mrf.mxu0
        %v3944 = vadd.f32 %v3869, %v3943
        %v3945 = vpop.f32.mrf.mxu0
        %3946 = vdwg.mxu0
        %v3947 = vadd.f32 %v3944, %v965
        %v3948 = vxor.u32 %v3947, 2147483648
        %v3949 = vmul.f32 %v3948, 1.442695
        %v3950 = vpow.pop %v3949
        %v3951 = vadd.f32 %v3950, 1.0
        %v3952 = vrcp.pop %v3951
        %v3953 = vmul.f32 1.0, %v3952
        %v3954 = vmul.f32 %v3953, 2.0
        %v3955 = vsub.f32 %v3954, 1.0
        %v3956 = vmul.f32 %v3953, %v3694
        %3958 = vrot.lane.b32.xlu0 %v3955, 64
        %v3959 = vpop.permute.xlu0 %3958
        %v3961 = vmul.f32 %v3953, %v3959
        %3963 = vrot.lane.b32.xlu0 %v3961, 32
        %v3964 = vpop.permute.xlu0 %3963
        %v3966 = vadd.f32 %v3956, %v3964
        %v3967 = vtanh.pop %v3966
        %3969 = vrot.lane.b32.xlu0 %v3967, 64
        %v3970 = vpop.permute.xlu0 %3969
        %v3972 = vmul.f32 %v3953, %v3970
        %3973 = vmatprep.subr.mxu0 0.0
        %3974 = vmatpush1.msra.mxu0 0.0
        %3975 = vmatprep.subr.mxu0 0.0
        %3976 = vmatpush1.msra.mxu0 0.0
        %3977 = vmatprep.subr.mxu0 0.0
        %3978 = vmatpush1.msra.mxu0 0.0
        %3979 = vmatprep.subr.mxu0 0.0
        %3980 = vmatpush1.msra.mxu0 0.0
        %3981 = vmatprep.subr.mxu0 0.0
        %3982 = vmatpush1.msra.mxu0 0.0
        %3983 = vmatprep.subr.mxu0 0.0
        %3984 = vmatpush1.msra.mxu0 0.0
        %3985 = vmatprep.subr.mxu0 0.0
        %3986 = vmatpush1.msra.mxu0 0.0
        %3987 = vmatprep.subr.mxu0 0.0
        %3988 = vmatpush1.msra.mxu0 0.0
        %3989 = vmatprep.subr.mxu0 0.0
        %3990 = vmatpush1.msra.mxu0 0.0
        %3991 = vmatprep.subr.mxu0 0.0
        %3992 = vmatpush1.msra.mxu0 0.0
        %3993 = vmatprep.subr.mxu0 0.0
        %3994 = vmatpush1.msra.mxu0 0.0
        %3995 = vmatprep.subr.mxu0 0.0
        %3996 = vmatpush1.msra.mxu0 0.0
        %3997 = vmatprep.subr.mxu0 0.0
        %3998 = vmatpush1.msra.mxu0 %v951
        %3999 = vmatprep.subr.mxu0 0.0
        %4000 = vmatpush1.msra.mxu0 %v950
        %4001 = vmatprep.subr.mxu0 0.0
        %4002 = vmatpush1.msra.mxu0 %v949
        %4003 = vmatprep.subr.mxu0 0.0
        %4004 = vmatpush1.msra.mxu0 %v948
        %4005 = vmatprep.subr.mxu0 0.0
        %4006 = vmatpush2.msra.mxu0 0.0
        %4007 = vmatprep.subr.mxu0 0.0
        %4008 = vmatpush2.msra.mxu0 0.0
        %4009 = vmatprep.subr.mxu0 0.0
        %4010 = vmatpush2.msra.mxu0 0.0
        %4011 = vmatprep.subr.mxu0 0.0
        %4012 = vmatpush2.msra.mxu0 0.0
        %4013 = vmatprep.subr.mxu0 0.0
        %4014 = vmatpush2.msra.mxu0 0.0
        %4015 = vmatprep.subr.mxu0 0.0
        %4016 = vmatpush2.msra.mxu0 0.0
        %4017 = vmatprep.subr.mxu0 0.0
        %4018 = vmatpush2.msra.mxu0 0.0
        %4019 = vmatprep.subr.mxu0 0.0
        %4020 = vmatpush2.msra.mxu0 0.0
        %4021 = vmatprep.subr.mxu0 0.0
        %4022 = vmatpush2.msra.mxu0 0.0
        %4023 = vmatprep.subr.mxu0 0.0
        %4024 = vmatpush2.msra.mxu0 0.0
        %4025 = vmatprep.subr.mxu0 0.0
        %4026 = vmatpush2.msra.mxu0 0.0
        %4027 = vmatprep.subr.mxu0 0.0
        %4028 = vmatpush2.msra.mxu0 0.0
        %4029 = vmatprep.subr.mxu0 0.0
        %4030 = vmatpush2.msra.mxu0 0.0
        %4031 = vmatprep.subr.mxu0 0.0
        %4032 = vmatpush2.msra.mxu0 0.0
        %4033 = vmatprep.subr.mxu0 0.0
        %4034 = vmatpush2.msra.mxu0 0.0
        %4035 = vmatprep.subr.mxu0 0.0
        %4036 = vmatpush2.msra.mxu0 0.0
        %4037 = vmatprep.mubr.f32.mxu0 0.0
        %4038 = vmatmul.mubr.f32.gmra.mxu0 %v3800
        %v4039 = vpop.f32.mrf.mxu0
        %v4040 = vadd.f32 0.0, %v4039
        %v4041 = vpop.f32.mrf.mxu0
        %4042 = vdwg.mxu0
        %v4043 = vadd.f32 %v925, %v4040
        %v4044 = vxor.u32 %v4043, 2147483648
        %v4045 = vmul.f32 %v4044, 1.442695
        %v4046 = vpow.pop %v4045
        %v4047 = vadd.f32 %v4046, 1.0
        %v4048 = vrcp.pop %v4047
        %v4049 = vmul.f32 1.0, %v4048
        %v4050 = vmul.f32 %v4049, 2.0
        %v4051 = vsub.f32 %v4050, 1.0
        %v4052 = vmul.f32 %v4049, %v3790
        %4054 = vrot.lane.b32.xlu0 %v4051, 64
        %v4055 = vpop.permute.xlu0 %4054
        %v4057 = vmul.f32 %v4049, %v4055
        %4059 = vrot.lane.b32.xlu0 %v4057, 32
        %v4060 = vpop.permute.xlu0 %4059
        %v4062 = vadd.f32 %v4052, %v4060
        %v4063 = vtanh.pop %v4062
        %4065 = vrot.lane.b32.xlu0 %v4063, 64
        %v4066 = vpop.permute.xlu0 %4065
        %v4068 = vmul.f32 %v4049, %v4066
        %4070 = vrot.lane.b32.xlu0 %v4068, 32
        %v4071 = vpop.permute.xlu0 %4070
        %v4072 = vsel %vm971, %v4071, 0
        %4074 = vmatprep.subr.mxu0 0.0
        %4075 = vmatpush1.msra.mxu0 0.0
        %4076 = vmatprep.subr.mxu0 0.0
        %4077 = vmatpush1.msra.mxu0 0.0
        %4078 = vmatprep.subr.mxu0 0.0
        %4079 = vmatpush1.msra.mxu0 0.0
        %4080 = vmatprep.subr.mxu0 0.0
        %4081 = vmatpush1.msra.mxu0 0.0
        %4082 = vmatprep.subr.mxu0 0.0
        %4083 = vmatpush1.msra.mxu0 0.0
        %4084 = vmatprep.subr.mxu0 0.0
        %4085 = vmatpush1.msra.mxu0 0.0
        %4086 = vmatprep.subr.mxu0 0.0
        %4087 = vmatpush1.msra.mxu0 0.0
        %4088 = vmatprep.subr.mxu0 0.0
        %4089 = vmatpush1.msra.mxu0 0.0
        %4090 = vmatprep.subr.mxu0 0.0
        %4091 = vmatpush1.msra.mxu0 0.0
        %4092 = vmatprep.subr.mxu0 0.0
        %4093 = vmatpush1.msra.mxu0 0.0
        %4094 = vmatprep.subr.mxu0 0.0
        %4095 = vmatpush1.msra.mxu0 0.0
        %4096 = vmatprep.subr.mxu0 0.0
        %4097 = vmatpush1.msra.mxu0 0.0
        %4098 = vmatprep.subr.mxu0 0.0
        %4099 = vmatpush1.msra.mxu0 %v955
        %4100 = vmatprep.subr.mxu0 0.0
        %4101 = vmatpush1.msra.mxu0 %v954
        %4102 = vmatprep.subr.mxu0 0.0
        %4103 = vmatpush1.msra.mxu0 %v953
        %4104 = vmatprep.subr.mxu0 0.0
        %4105 = vmatpush1.msra.mxu0 %v952
        %4106 = vmatprep.subr.mxu0 0.0
        %4107 = vmatpush2.msra.mxu0 0.0
        %4108 = vmatprep.subr.mxu0 0.0
        %4109 = vmatpush2.msra.mxu0 0.0
        %4110 = vmatprep.subr.mxu0 0.0
        %4111 = vmatpush2.msra.mxu0 0.0
        %4112 = vmatprep.subr.mxu0 0.0
        %4113 = vmatpush2.msra.mxu0 0.0
        %4114 = vmatprep.subr.mxu0 0.0
        %4115 = vmatpush2.msra.mxu0 0.0
        %4116 = vmatprep.subr.mxu0 0.0
        %4117 = vmatpush2.msra.mxu0 0.0
        %4118 = vmatprep.subr.mxu0 0.0
        %4119 = vmatpush2.msra.mxu0 0.0
        %4120 = vmatprep.subr.mxu0 0.0
        %4121 = vmatpush2.msra.mxu0 0.0
        %4122 = vmatprep.subr.mxu0 0.0
        %4123 = vmatpush2.msra.mxu0 0.0
        %4124 = vmatprep.subr.mxu0 0.0
        %4125 = vmatpush2.msra.mxu0 0.0
        %4126 = vmatprep.subr.mxu0 0.0
        %4127 = vmatpush2.msra.mxu0 0.0
        %4128 = vmatprep.subr.mxu0 0.0
        %4129 = vmatpush2.msra.mxu0 0.0
        %4130 = vmatprep.subr.mxu0 0.0
        %4131 = vmatpush2.msra.mxu0 0.0
        %4132 = vmatprep.subr.mxu0 0.0
        %4133 = vmatpush2.msra.mxu0 0.0
        %4134 = vmatprep.subr.mxu0 0.0
        %4135 = vmatpush2.msra.mxu0 0.0
        %4136 = vmatprep.subr.mxu0 0.0
        %4137 = vmatpush2.msra.mxu0 0.0
        %4138 = vmatprep.mubr.f32.mxu0 0.0
        %4139 = vmatmul.mubr.f32.gmra.mxu0 %v4072
        %v4140 = vpop.f32.mrf.mxu0
        %v4141 = vadd.f32 0.0, %v4140
        %v4142 = vpop.f32.mrf.mxu0
        %4143 = vdwg.mxu0
        %4145 = vrot.lane.b32.xlu0 %v3972, 32
        %v4146 = vpop.permute.xlu0 %4145
        %v4147 = vsel %vm971, %v4146, 0
        %4149 = vmatprep.subr.mxu0 0.0
        %4150 = vmatpush1.msra.mxu0 0.0
        %4151 = vmatprep.subr.mxu0 0.0
        %4152 = vmatpush1.msra.mxu0 0.0
        %4153 = vmatprep.subr.mxu0 0.0
        %4154 = vmatpush1.msra.mxu0 0.0
        %4155 = vmatprep.subr.mxu0 0.0
        %4156 = vmatpush1.msra.mxu0 0.0
        %4157 = vmatprep.subr.mxu0 0.0
        %4158 = vmatpush1.msra.mxu0 0.0
        %4159 = vmatprep.subr.mxu0 0.0
        %4160 = vmatpush1.msra.mxu0 0.0
        %4161 = vmatprep.subr.mxu0 0.0
        %4162 = vmatpush1.msra.mxu0 0.0
        %4163 = vmatprep.subr.mxu0 0.0
        %4164 = vmatpush1.msra.mxu0 0.0
        %4165 = vmatprep.subr.mxu0 0.0
        %4166 = vmatpush1.msra.mxu0 0.0
        %4167 = vmatprep.subr.mxu0 0.0
        %4168 = vmatpush1.msra.mxu0 0.0
        %4169 = vmatprep.subr.mxu0 0.0
        %4170 = vmatpush1.msra.mxu0 0.0
        %4171 = vmatprep.subr.mxu0 0.0
        %4172 = vmatpush1.msra.mxu0 0.0
        %4173 = vmatprep.subr.mxu0 0.0
        %4174 = vmatpush1.msra.mxu0 %v959
        %4175 = vmatprep.subr.mxu0 0.0
        %4176 = vmatpush1.msra.mxu0 %v958
        %4177 = vmatprep.subr.mxu0 0.0
        %4178 = vmatpush1.msra.mxu0 %v957
        %4179 = vmatprep.subr.mxu0 0.0
        %4180 = vmatpush1.msra.mxu0 %v956
        %4181 = vmatprep.subr.mxu0 0.0
        %4182 = vmatpush2.msra.mxu0 0.0
        %4183 = vmatprep.subr.mxu0 0.0
        %4184 = vmatpush2.msra.mxu0 0.0
        %4185 = vmatprep.subr.mxu0 0.0
        %4186 = vmatpush2.msra.mxu0 0.0
        %4187 = vmatprep.subr.mxu0 0.0
        %4188 = vmatpush2.msra.mxu0 0.0
        %4189 = vmatprep.subr.mxu0 0.0
        %4190 = vmatpush2.msra.mxu0 0.0
        %4191 = vmatprep.subr.mxu0 0.0
        %4192 = vmatpush2.msra.mxu0 0.0
        %4193 = vmatprep.subr.mxu0 0.0
        %4194 = vmatpush2.msra.mxu0 0.0
        %4195 = vmatprep.subr.mxu0 0.0
        %4196 = vmatpush2.msra.mxu0 0.0
        %4197 = vmatprep.subr.mxu0 0.0
        %4198 = vmatpush2.msra.mxu0 0.0
        %4199 = vmatprep.subr.mxu0 0.0
        %4200 = vmatpush2.msra.mxu0 0.0
        %4201 = vmatprep.subr.mxu0 0.0
        %4202 = vmatpush2.msra.mxu0 0.0
        %4203 = vmatprep.subr.mxu0 0.0
        %4204 = vmatpush2.msra.mxu0 0.0
        %4205 = vmatprep.subr.mxu0 0.0
        %4206 = vmatpush2.msra.mxu0 0.0
        %4207 = vmatprep.subr.mxu0 0.0
        %4208 = vmatpush2.msra.mxu0 0.0
        %4209 = vmatprep.subr.mxu0 0.0
        %4210 = vmatpush2.msra.mxu0 0.0
        %4211 = vmatprep.subr.mxu0 0.0
        %4212 = vmatpush2.msra.mxu0 0.0
        %4213 = vmatprep.mubr.f32.mxu0 0.0
        %4214 = vmatmul.mubr.f32.gmra.mxu0 %v4147
        %v4215 = vpop.f32.mrf.mxu0
        %v4216 = vadd.f32 %v4141, %v4215
        %v4217 = vpop.f32.mrf.mxu0
        %4218 = vdwg.mxu0
        %v4219 = vadd.f32 %v4216, %v965
        %v4220 = vxor.u32 %v4219, 2147483648
        %v4221 = vmul.f32 %v4220, 1.442695
        %v4222 = vpow.pop %v4221
        %v4223 = vadd.f32 %v4222, 1.0
        %v4224 = vrcp.pop %v4223
        %v4225 = vmul.f32 1.0, %v4224
        %v4226 = vmul.f32 %v4225, 2.0
        %v4227 = vsub.f32 %v4226, 1.0
        %v4228 = vmul.f32 %v4225, %v3966
        %4230 = vrot.lane.b32.xlu0 %v4227, 64
        %v4231 = vpop.permute.xlu0 %4230
        %v4233 = vmul.f32 %v4225, %v4231
        %4235 = vrot.lane.b32.xlu0 %v4233, 32
        %v4236 = vpop.permute.xlu0 %4235
        %v4238 = vadd.f32 %v4228, %v4236
        %v4239 = vtanh.pop %v4238
        %4241 = vrot.lane.b32.xlu0 %v4239, 64
        %v4242 = vpop.permute.xlu0 %4241
        %v4244 = vmul.f32 %v4225, %v4242
        %4245 = vmatprep.subr.mxu0 0.0
        %4246 = vmatpush1.msra.mxu0 0.0
        %4247 = vmatprep.subr.mxu0 0.0
        %4248 = vmatpush1.msra.mxu0 0.0
        %4249 = vmatprep.subr.mxu0 0.0
        %4250 = vmatpush1.msra.mxu0 0.0
        %4251 = vmatprep.subr.mxu0 0.0
        %4252 = vmatpush1.msra.mxu0 0.0
        %4253 = vmatprep.subr.mxu0 0.0
        %4254 = vmatpush1.msra.mxu0 0.0
        %4255 = vmatprep.subr.mxu0 0.0
        %4256 = vmatpush1.msra.mxu0 0.0
        %4257 = vmatprep.subr.mxu0 0.0
        %4258 = vmatpush1.msra.mxu0 0.0
        %4259 = vmatprep.subr.mxu0 0.0
        %4260 = vmatpush1.msra.mxu0 0.0
        %4261 = vmatprep.subr.mxu0 0.0
        %4262 = vmatpush1.msra.mxu0 0.0
        %4263 = vmatprep.subr.mxu0 0.0
        %4264 = vmatpush1.msra.mxu0 0.0
        %4265 = vmatprep.subr.mxu0 0.0
        %4266 = vmatpush1.msra.mxu0 0.0
        %4267 = vmatprep.subr.mxu0 0.0
        %4268 = vmatpush1.msra.mxu0 0.0
        %4269 = vmatprep.subr.mxu0 0.0
        %4270 = vmatpush1.msra.mxu0 %v951
        %4271 = vmatprep.subr.mxu0 0.0
        %4272 = vmatpush1.msra.mxu0 %v950
        %4273 = vmatprep.subr.mxu0 0.0
        %4274 = vmatpush1.msra.mxu0 %v949
        %4275 = vmatprep.subr.mxu0 0.0
        %4276 = vmatpush1.msra.mxu0 %v948
        %4277 = vmatprep.subr.mxu0 0.0
        %4278 = vmatpush2.msra.mxu0 0.0
        %4279 = vmatprep.subr.mxu0 0.0
        %4280 = vmatpush2.msra.mxu0 0.0
        %4281 = vmatprep.subr.mxu0 0.0
        %4282 = vmatpush2.msra.mxu0 0.0
        %4283 = vmatprep.subr.mxu0 0.0
        %4284 = vmatpush2.msra.mxu0 0.0
        %4285 = vmatprep.subr.mxu0 0.0
        %4286 = vmatpush2.msra.mxu0 0.0
        %4287 = vmatprep.subr.mxu0 0.0
        %4288 = vmatpush2.msra.mxu0 0.0
        %4289 = vmatprep.subr.mxu0 0.0
        %4290 = vmatpush2.msra.mxu0 0.0
        %4291 = vmatprep.subr.mxu0 0.0
        %4292 = vmatpush2.msra.mxu0 0.0
        %4293 = vmatprep.subr.mxu0 0.0
        %4294 = vmatpush2.msra.mxu0 0.0
        %4295 = vmatprep.subr.mxu0 0.0
        %4296 = vmatpush2.msra.mxu0 0.0
        %4297 = vmatprep.subr.mxu0 0.0
        %4298 = vmatpush2.msra.mxu0 0.0
        %4299 = vmatprep.subr.mxu0 0.0
        %4300 = vmatpush2.msra.mxu0 0.0
        %4301 = vmatprep.subr.mxu0 0.0
        %4302 = vmatpush2.msra.mxu0 0.0
        %4303 = vmatprep.subr.mxu0 0.0
        %4304 = vmatpush2.msra.mxu0 0.0
        %4305 = vmatprep.subr.mxu0 0.0
        %4306 = vmatpush2.msra.mxu0 0.0
        %4307 = vmatprep.subr.mxu0 0.0
        %4308 = vmatpush2.msra.mxu0 0.0
        %4309 = vmatprep.mubr.f32.mxu0 0.0
        %4310 = vmatmul.mubr.f32.gmra.mxu0 %v4072
        %v4311 = vpop.f32.mrf.mxu0
        %v4312 = vadd.f32 0.0, %v4311
        %v4313 = vpop.f32.mrf.mxu0
        %4314 = vdwg.mxu0
        %v4315 = vadd.f32 %v930, %v4312
        %v4316 = vxor.u32 %v4315, 2147483648
        %v4317 = vmul.f32 %v4316, 1.442695
        %v4318 = vpow.pop %v4317
        %v4319 = vadd.f32 %v4318, 1.0
        %v4320 = vrcp.pop %v4319
        %v4321 = vmul.f32 1.0, %v4320
        %v4322 = vmul.f32 %v4321, 2.0
        %v4323 = vsub.f32 %v4322, 1.0
        %v4324 = vmul.f32 %v4321, %v4062
        %4326 = vrot.lane.b32.xlu0 %v4323, 64
        %v4327 = vpop.permute.xlu0 %4326
        %v4329 = vmul.f32 %v4321, %v4327
        %4331 = vrot.lane.b32.xlu0 %v4329, 32
        %v4332 = vpop.permute.xlu0 %4331
        %v4334 = vadd.f32 %v4324, %v4332
        %v4335 = vtanh.pop %v4334
        %4337 = vrot.lane.b32.xlu0 %v4335, 64
        %v4338 = vpop.permute.xlu0 %4337
        %v4340 = vmul.f32 %v4321, %v4338
        %4342 = vrot.lane.b32.xlu0 %v4340, 32
        %v4343 = vpop.permute.xlu0 %4342
        %v4344 = vsel %vm971, %v4343, 0
        %4346 = vmatprep.subr.mxu0 0.0
        %4347 = vmatpush1.msra.mxu0 0.0
        %4348 = vmatprep.subr.mxu0 0.0
        %4349 = vmatpush1.msra.mxu0 0.0
        %4350 = vmatprep.subr.mxu0 0.0
        %4351 = vmatpush1.msra.mxu0 0.0
        %4352 = vmatprep.subr.mxu0 0.0
        %4353 = vmatpush1.msra.mxu0 0.0
        %4354 = vmatprep.subr.mxu0 0.0
        %4355 = vmatpush1.msra.mxu0 0.0
        %4356 = vmatprep.subr.mxu0 0.0
        %4357 = vmatpush1.msra.mxu0 0.0
        %4358 = vmatprep.subr.mxu0 0.0
        %4359 = vmatpush1.msra.mxu0 0.0
        %4360 = vmatprep.subr.mxu0 0.0
        %4361 = vmatpush1.msra.mxu0 0.0
        %4362 = vmatprep.subr.mxu0 0.0
        %4363 = vmatpush1.msra.mxu0 0.0
        %4364 = vmatprep.subr.mxu0 0.0
        %4365 = vmatpush1.msra.mxu0 0.0
        %4366 = vmatprep.subr.mxu0 0.0
        %4367 = vmatpush1.msra.mxu0 0.0
        %4368 = vmatprep.subr.mxu0 0.0
        %4369 = vmatpush1.msra.mxu0 0.0
        %4370 = vmatprep.subr.mxu0 0.0
        %4371 = vmatpush1.msra.mxu0 %v955
        %4372 = vmatprep.subr.mxu0 0.0
        %4373 = vmatpush1.msra.mxu0 %v954
        %4374 = vmatprep.subr.mxu0 0.0
        %4375 = vmatpush1.msra.mxu0 %v953
        %4376 = vmatprep.subr.mxu0 0.0
        %4377 = vmatpush1.msra.mxu0 %v952
        %4378 = vmatprep.subr.mxu0 0.0
        %4379 = vmatpush2.msra.mxu0 0.0
        %4380 = vmatprep.subr.mxu0 0.0
        %4381 = vmatpush2.msra.mxu0 0.0
        %4382 = vmatprep.subr.mxu0 0.0
        %4383 = vmatpush2.msra.mxu0 0.0
        %4384 = vmatprep.subr.mxu0 0.0
        %4385 = vmatpush2.msra.mxu0 0.0
        %4386 = vmatprep.subr.mxu0 0.0
        %4387 = vmatpush2.msra.mxu0 0.0
        %4388 = vmatprep.subr.mxu0 0.0
        %4389 = vmatpush2.msra.mxu0 0.0
        %4390 = vmatprep.subr.mxu0 0.0
        %4391 = vmatpush2.msra.mxu0 0.0
        %4392 = vmatprep.subr.mxu0 0.0
        %4393 = vmatpush2.msra.mxu0 0.0
        %4394 = vmatprep.subr.mxu0 0.0
        %4395 = vmatpush2.msra.mxu0 0.0
        %4396 = vmatprep.subr.mxu0 0.0
        %4397 = vmatpush2.msra.mxu0 0.0
        %4398 = vmatprep.subr.mxu0 0.0
        %4399 = vmatpush2.msra.mxu0 0.0
        %4400 = vmatprep.subr.mxu0 0.0
        %4401 = vmatpush2.msra.mxu0 0.0
        %4402 = vmatprep.subr.mxu0 0.0
        %4403 = vmatpush2.msra.mxu0 0.0
        %4404 = vmatprep.subr.mxu0 0.0
        %4405 = vmatpush2.msra.mxu0 0.0
        %4406 = vmatprep.subr.mxu0 0.0
        %4407 = vmatpush2.msra.mxu0 0.0
        %4408 = vmatprep.subr.mxu0 0.0
        %4409 = vmatpush2.msra.mxu0 0.0
        %4410 = vmatprep.mubr.f32.mxu0 0.0
        %4411 = vmatmul.mubr.f32.gmra.mxu0 %v4344
        %v4412 = vpop.f32.mrf.mxu0
        %v4413 = vadd.f32 0.0, %v4412
        %v4414 = vpop.f32.mrf.mxu0
        %4415 = vdwg.mxu0
        %4417 = vrot.lane.b32.xlu0 %v4244, 32
        %v4418 = vpop.permute.xlu0 %4417
        %v4419 = vsel %vm971, %v4418, 0
        %4421 = vmatprep.subr.mxu0 0.0
        %4422 = vmatpush1.msra.mxu0 0.0
        %4423 = vmatprep.subr.mxu0 0.0
        %4424 = vmatpush1.msra.mxu0 0.0
        %4425 = vmatprep.subr.mxu0 0.0
        %4426 = vmatpush1.msra.mxu0 0.0
        %4427 = vmatprep.subr.mxu0 0.0
        %4428 = vmatpush1.msra.mxu0 0.0
        %4429 = vmatprep.subr.mxu0 0.0
        %4430 = vmatpush1.msra.mxu0 0.0
        %4431 = vmatprep.subr.mxu0 0.0
        %4432 = vmatpush1.msra.mxu0 0.0
        %4433 = vmatprep.subr.mxu0 0.0
        %4434 = vmatpush1.msra.mxu0 0.0
        %4435 = vmatprep.subr.mxu0 0.0
        %4436 = vmatpush1.msra.mxu0 0.0
        %4437 = vmatprep.subr.mxu0 0.0
        %4438 = vmatpush1.msra.mxu0 0.0
        %4439 = vmatprep.subr.mxu0 0.0
        %4440 = vmatpush1.msra.mxu0 0.0
        %4441 = vmatprep.subr.mxu0 0.0
        %4442 = vmatpush1.msra.mxu0 0.0
        %4443 = vmatprep.subr.mxu0 0.0
        %4444 = vmatpush1.msra.mxu0 0.0
        %4445 = vmatprep.subr.mxu0 0.0
        %4446 = vmatpush1.msra.mxu0 %v959
        %4447 = vmatprep.subr.mxu0 0.0
        %4448 = vmatpush1.msra.mxu0 %v958
        %4449 = vmatprep.subr.mxu0 0.0
        %4450 = vmatpush1.msra.mxu0 %v957
        %4451 = vmatprep.subr.mxu0 0.0
        %4452 = vmatpush1.msra.mxu0 %v956
        %4453 = vmatprep.subr.mxu0 0.0
        %4454 = vmatpush2.msra.mxu0 0.0
        %4455 = vmatprep.subr.mxu0 0.0
        %4456 = vmatpush2.msra.mxu0 0.0
        %4457 = vmatprep.subr.mxu0 0.0
        %4458 = vmatpush2.msra.mxu0 0.0
        %4459 = vmatprep.subr.mxu0 0.0
        %4460 = vmatpush2.msra.mxu0 0.0
        %4461 = vmatprep.subr.mxu0 0.0
        %4462 = vmatpush2.msra.mxu0 0.0
        %4463 = vmatprep.subr.mxu0 0.0
        %4464 = vmatpush2.msra.mxu0 0.0
        %4465 = vmatprep.subr.mxu0 0.0
        %4466 = vmatpush2.msra.mxu0 0.0
        %4467 = vmatprep.subr.mxu0 0.0
        %4468 = vmatpush2.msra.mxu0 0.0
        %4469 = vmatprep.subr.mxu0 0.0
        %4470 = vmatpush2.msra.mxu0 0.0
        %4471 = vmatprep.subr.mxu0 0.0
        %4472 = vmatpush2.msra.mxu0 0.0
        %4473 = vmatprep.subr.mxu0 0.0
        %4474 = vmatpush2.msra.mxu0 0.0
        %4475 = vmatprep.subr.mxu0 0.0
        %4476 = vmatpush2.msra.mxu0 0.0
        %4477 = vmatprep.subr.mxu0 0.0
        %4478 = vmatpush2.msra.mxu0 0.0
        %4479 = vmatprep.subr.mxu0 0.0
        %4480 = vmatpush2.msra.mxu0 0.0
        %4481 = vmatprep.subr.mxu0 0.0
        %4482 = vmatpush2.msra.mxu0 0.0
        %4483 = vmatprep.subr.mxu0 0.0
        %4484 = vmatpush2.msra.mxu0 0.0
        %4485 = vmatprep.mubr.f32.mxu0 0.0
        %4486 = vmatmul.mubr.f32.gmra.mxu0 %v4419
        %v4487 = vpop.f32.mrf.mxu0
        %v4488 = vadd.f32 %v4413, %v4487
        %v4489 = vpop.f32.mrf.mxu0
        %4490 = vdwg.mxu0
        %v4491 = vadd.f32 %v4488, %v965
        %v4492 = vxor.u32 %v4491, 2147483648
        %v4493 = vmul.f32 %v4492, 1.442695
        %v4494 = vpow.pop %v4493
        %v4495 = vadd.f32 %v4494, 1.0
        %v4496 = vrcp.pop %v4495
        %v4497 = vmul.f32 1.0, %v4496
        %v4498 = vmul.f32 %v4497, 2.0
        %v4499 = vsub.f32 %v4498, 1.0
        %v4500 = vmul.f32 %v4497, %v4238
        %4502 = vrot.lane.b32.xlu0 %v4499, 64
        %v4503 = vpop.permute.xlu0 %4502
        %v4505 = vmul.f32 %v4497, %v4503
        %4507 = vrot.lane.b32.xlu0 %v4505, 32
        %v4508 = vpop.permute.xlu0 %4507
        %v4510 = vadd.f32 %v4500, %v4508
        %v4511 = vtanh.pop %v4510
        %4513 = vrot.lane.b32.xlu0 %v4511, 64
        %v4514 = vpop.permute.xlu0 %4513
        %v4516 = vmul.f32 %v4497, %v4514
        %4517 = vmatprep.subr.mxu0 0.0
        %4518 = vmatpush1.msra.mxu0 0.0
        %4519 = vmatprep.subr.mxu0 0.0
        %4520 = vmatpush1.msra.mxu0 0.0
        %4521 = vmatprep.subr.mxu0 0.0
        %4522 = vmatpush1.msra.mxu0 0.0
        %4523 = vmatprep.subr.mxu0 0.0
        %4524 = vmatpush1.msra.mxu0 0.0
        %4525 = vmatprep.subr.mxu0 0.0
        %4526 = vmatpush1.msra.mxu0 0.0
        %4527 = vmatprep.subr.mxu0 0.0
        %4528 = vmatpush1.msra.mxu0 0.0
        %4529 = vmatprep.subr.mxu0 0.0
        %4530 = vmatpush1.msra.mxu0 0.0
        %4531 = vmatprep.subr.mxu0 0.0
        %4532 = vmatpush1.msra.mxu0 0.0
        %4533 = vmatprep.subr.mxu0 0.0
        %4534 = vmatpush1.msra.mxu0 0.0
        %4535 = vmatprep.subr.mxu0 0.0
        %4536 = vmatpush1.msra.mxu0 0.0
        %4537 = vmatprep.subr.mxu0 0.0
        %4538 = vmatpush1.msra.mxu0 0.0
        %4539 = vmatprep.subr.mxu0 0.0
        %4540 = vmatpush1.msra.mxu0 0.0
        %4541 = vmatprep.subr.mxu0 0.0
        %4542 = vmatpush1.msra.mxu0 %v951
        %4543 = vmatprep.subr.mxu0 0.0
        %4544 = vmatpush1.msra.mxu0 %v950
        %4545 = vmatprep.subr.mxu0 0.0
        %4546 = vmatpush1.msra.mxu0 %v949
        %4547 = vmatprep.subr.mxu0 0.0
        %4548 = vmatpush1.msra.mxu0 %v948
        %4549 = vmatprep.subr.mxu0 0.0
        %4550 = vmatpush2.msra.mxu0 0.0
        %4551 = vmatprep.subr.mxu0 0.0
        %4552 = vmatpush2.msra.mxu0 0.0
        %4553 = vmatprep.subr.mxu0 0.0
        %4554 = vmatpush2.msra.mxu0 0.0
        %4555 = vmatprep.subr.mxu0 0.0
        %4556 = vmatpush2.msra.mxu0 0.0
        %4557 = vmatprep.subr.mxu0 0.0
        %4558 = vmatpush2.msra.mxu0 0.0
        %4559 = vmatprep.subr.mxu0 0.0
        %4560 = vmatpush2.msra.mxu0 0.0
        %4561 = vmatprep.subr.mxu0 0.0
        %4562 = vmatpush2.msra.mxu0 0.0
        %4563 = vmatprep.subr.mxu0 0.0
        %4564 = vmatpush2.msra.mxu0 0.0
        %4565 = vmatprep.subr.mxu0 0.0
        %4566 = vmatpush2.msra.mxu0 0.0
        %4567 = vmatprep.subr.mxu0 0.0
        %4568 = vmatpush2.msra.mxu0 0.0
        %4569 = vmatprep.subr.mxu0 0.0
        %4570 = vmatpush2.msra.mxu0 0.0
        %4571 = vmatprep.subr.mxu0 0.0
        %4572 = vmatpush2.msra.mxu0 0.0
        %4573 = vmatprep.subr.mxu0 0.0
        %4574 = vmatpush2.msra.mxu0 0.0
        %4575 = vmatprep.subr.mxu0 0.0
        %4576 = vmatpush2.msra.mxu0 0.0
        %4577 = vmatprep.subr.mxu0 0.0
        %4578 = vmatpush2.msra.mxu0 0.0
        %4579 = vmatprep.subr.mxu0 0.0
        %4580 = vmatpush2.msra.mxu0 0.0
        %4581 = vmatprep.mubr.f32.mxu0 0.0
        %4582 = vmatmul.mubr.f32.gmra.mxu0 %v4344
        %v4583 = vpop.f32.mrf.mxu0
        %v4584 = vadd.f32 0.0, %v4583
        %v4585 = vpop.f32.mrf.mxu0
        %4586 = vdwg.mxu0
        %v4587 = vadd.f32 %v935, %v4584
        %v4588 = vxor.u32 %v4587, 2147483648
        %v4589 = vmul.f32 %v4588, 1.442695
        %v4590 = vpow.pop %v4589
        %v4591 = vadd.f32 %v4590, 1.0
        %v4592 = vrcp.pop %v4591
        %v4593 = vmul.f32 1.0, %v4592
        %v4594 = vmul.f32 %v4593, 2.0
        %v4595 = vsub.f32 %v4594, 1.0
        %v4596 = vmul.f32 %v4593, %v4334
        %4598 = vrot.lane.b32.xlu0 %v4595, 64
        %v4599 = vpop.permute.xlu0 %4598
        %v4601 = vmul.f32 %v4593, %v4599
        %4603 = vrot.lane.b32.xlu0 %v4601, 32
        %v4604 = vpop.permute.xlu0 %4603
        %v4606 = vadd.f32 %v4596, %v4604
        %v4607 = vtanh.pop %v4606
        %4609 = vrot.lane.b32.xlu0 %v4607, 64
        %v4610 = vpop.permute.xlu0 %4609
        %v4612 = vmul.f32 %v4593, %v4610
        %4614 = vrot.lane.b32.xlu0 %v4612, 32
        %v4615 = vpop.permute.xlu0 %4614
        %v4616 = vsel %vm971, %v4615, 0
        %4618 = vmatprep.subr.mxu0 0.0
        %4619 = vmatpush1.msra.mxu0 0.0
        %4620 = vmatprep.subr.mxu0 0.0
        %4621 = vmatpush1.msra.mxu0 0.0
        %4622 = vmatprep.subr.mxu0 0.0
        %4623 = vmatpush1.msra.mxu0 0.0
        %4624 = vmatprep.subr.mxu0 0.0
        %4625 = vmatpush1.msra.mxu0 0.0
        %4626 = vmatprep.subr.mxu0 0.0
        %4627 = vmatpush1.msra.mxu0 0.0
        %4628 = vmatprep.subr.mxu0 0.0
        %4629 = vmatpush1.msra.mxu0 0.0
        %4630 = vmatprep.subr.mxu0 0.0
        %4631 = vmatpush1.msra.mxu0 0.0
        %4632 = vmatprep.subr.mxu0 0.0
        %4633 = vmatpush1.msra.mxu0 0.0
        %4634 = vmatprep.subr.mxu0 0.0
        %4635 = vmatpush1.msra.mxu0 0.0
        %4636 = vmatprep.subr.mxu0 0.0
        %4637 = vmatpush1.msra.mxu0 0.0
        %4638 = vmatprep.subr.mxu0 0.0
        %4639 = vmatpush1.msra.mxu0 0.0
        %4640 = vmatprep.subr.mxu0 0.0
        %4641 = vmatpush1.msra.mxu0 0.0
        %4642 = vmatprep.subr.mxu0 0.0
        %4643 = vmatpush1.msra.mxu0 %v955
        %4644 = vmatprep.subr.mxu0 0.0
        %4645 = vmatpush1.msra.mxu0 %v954
        %4646 = vmatprep.subr.mxu0 0.0
        %4647 = vmatpush1.msra.mxu0 %v953
        %4648 = vmatprep.subr.mxu0 0.0
        %4649 = vmatpush1.msra.mxu0 %v952
        %4650 = vmatprep.subr.mxu0 0.0
        %4651 = vmatpush2.msra.mxu0 0.0
        %4652 = vmatprep.subr.mxu0 0.0
        %4653 = vmatpush2.msra.mxu0 0.0
        %4654 = vmatprep.subr.mxu0 0.0
        %4655 = vmatpush2.msra.mxu0 0.0
        %4656 = vmatprep.subr.mxu0 0.0
        %4657 = vmatpush2.msra.mxu0 0.0
        %4658 = vmatprep.subr.mxu0 0.0
        %4659 = vmatpush2.msra.mxu0 0.0
        %4660 = vmatprep.subr.mxu0 0.0
        %4661 = vmatpush2.msra.mxu0 0.0
        %4662 = vmatprep.subr.mxu0 0.0
        %4663 = vmatpush2.msra.mxu0 0.0
        %4664 = vmatprep.subr.mxu0 0.0
        %4665 = vmatpush2.msra.mxu0 0.0
        %4666 = vmatprep.subr.mxu0 0.0
        %4667 = vmatpush2.msra.mxu0 0.0
        %4668 = vmatprep.subr.mxu0 0.0
        %4669 = vmatpush2.msra.mxu0 0.0
        %4670 = vmatprep.subr.mxu0 0.0
        %4671 = vmatpush2.msra.mxu0 0.0
        %4672 = vmatprep.subr.mxu0 0.0
        %4673 = vmatpush2.msra.mxu0 0.0
        %4674 = vmatprep.subr.mxu0 0.0
        %4675 = vmatpush2.msra.mxu0 0.0
        %4676 = vmatprep.subr.mxu0 0.0
        %4677 = vmatpush2.msra.mxu0 0.0
        %4678 = vmatprep.subr.mxu0 0.0
        %4679 = vmatpush2.msra.mxu0 0.0
        %4680 = vmatprep.subr.mxu0 0.0
        %4681 = vmatpush2.msra.mxu0 0.0
        %4682 = vmatprep.mubr.f32.mxu0 0.0
        %4683 = vmatmul.mubr.f32.gmra.mxu0 %v4616
        %v4684 = vpop.f32.mrf.mxu0
        %v4685 = vadd.f32 0.0, %v4684
        %v4686 = vpop.f32.mrf.mxu0
        %4687 = vdwg.mxu0
        %4689 = vrot.lane.b32.xlu0 %v4516, 32
        %v4690 = vpop.permute.xlu0 %4689
        %v4691 = vsel %vm971, %v4690, 0
        %4693 = vmatprep.subr.mxu0 0.0
        %4694 = vmatpush1.msra.mxu0 0.0
        %4695 = vmatprep.subr.mxu0 0.0
        %4696 = vmatpush1.msra.mxu0 0.0
        %4697 = vmatprep.subr.mxu0 0.0
        %4698 = vmatpush1.msra.mxu0 0.0
        %4699 = vmatprep.subr.mxu0 0.0
        %4700 = vmatpush1.msra.mxu0 0.0
        %4701 = vmatprep.subr.mxu0 0.0
        %4702 = vmatpush1.msra.mxu0 0.0
        %4703 = vmatprep.subr.mxu0 0.0
        %4704 = vmatpush1.msra.mxu0 0.0
        %4705 = vmatprep.subr.mxu0 0.0
        %4706 = vmatpush1.msra.mxu0 0.0
        %4707 = vmatprep.subr.mxu0 0.0
        %4708 = vmatpush1.msra.mxu0 0.0
        %4709 = vmatprep.subr.mxu0 0.0
        %4710 = vmatpush1.msra.mxu0 0.0
        %4711 = vmatprep.subr.mxu0 0.0
        %4712 = vmatpush1.msra.mxu0 0.0
        %4713 = vmatprep.subr.mxu0 0.0
        %4714 = vmatpush1.msra.mxu0 0.0
        %4715 = vmatprep.subr.mxu0 0.0
        %4716 = vmatpush1.msra.mxu0 0.0
        %4717 = vmatprep.subr.mxu0 0.0
        %4718 = vmatpush1.msra.mxu0 %v959
        %4719 = vmatprep.subr.mxu0 0.0
        %4720 = vmatpush1.msra.mxu0 %v958
        %4721 = vmatprep.subr.mxu0 0.0
        %4722 = vmatpush1.msra.mxu0 %v957
        %4723 = vmatprep.subr.mxu0 0.0
        %4724 = vmatpush1.msra.mxu0 %v956
        %4725 = vmatprep.subr.mxu0 0.0
        %4726 = vmatpush2.msra.mxu0 0.0
        %4727 = vmatprep.subr.mxu0 0.0
        %4728 = vmatpush2.msra.mxu0 0.0
        %4729 = vmatprep.subr.mxu0 0.0
        %4730 = vmatpush2.msra.mxu0 0.0
        %4731 = vmatprep.subr.mxu0 0.0
        %4732 = vmatpush2.msra.mxu0 0.0
        %4733 = vmatprep.subr.mxu0 0.0
        %4734 = vmatpush2.msra.mxu0 0.0
        %4735 = vmatprep.subr.mxu0 0.0
        %4736 = vmatpush2.msra.mxu0 0.0
        %4737 = vmatprep.subr.mxu0 0.0
        %4738 = vmatpush2.msra.mxu0 0.0
        %4739 = vmatprep.subr.mxu0 0.0
        %4740 = vmatpush2.msra.mxu0 0.0
        %4741 = vmatprep.subr.mxu0 0.0
        %4742 = vmatpush2.msra.mxu0 0.0
        %4743 = vmatprep.subr.mxu0 0.0
        %4744 = vmatpush2.msra.mxu0 0.0
        %4745 = vmatprep.subr.mxu0 0.0
        %4746 = vmatpush2.msra.mxu0 0.0
        %4747 = vmatprep.subr.mxu0 0.0
        %4748 = vmatpush2.msra.mxu0 0.0
        %4749 = vmatprep.subr.mxu0 0.0
        %4750 = vmatpush2.msra.mxu0 0.0
        %4751 = vmatprep.subr.mxu0 0.0
        %4752 = vmatpush2.msra.mxu0 0.0
        %4753 = vmatprep.subr.mxu0 0.0
        %4754 = vmatpush2.msra.mxu0 0.0
        %4755 = vmatprep.subr.mxu0 0.0
        %4756 = vmatpush2.msra.mxu0 0.0
        %4757 = vmatprep.mubr.f32.mxu0 0.0
        %4758 = vmatmul.mubr.f32.gmra.mxu0 %v4691
        %v4759 = vpop.f32.mrf.mxu0
        %v4760 = vadd.f32 %v4685, %v4759
        %v4761 = vpop.f32.mrf.mxu0
        %4762 = vdwg.mxu0
        %v4763 = vadd.f32 %v4760, %v965
        %v4764 = vxor.u32 %v4763, 2147483648
        %v4765 = vmul.f32 %v4764, 1.442695
        %v4766 = vpow.pop %v4765
        %v4767 = vadd.f32 %v4766, 1.0
        %v4768 = vrcp.pop %v4767
        %v4769 = vmul.f32 1.0, %v4768
        %v4770 = vmul.f32 %v4769, 2.0
        %v4771 = vsub.f32 %v4770, 1.0
        %v4772 = vmul.f32 %v4769, %v4510
        %4774 = vrot.lane.b32.xlu0 %v4771, 64
        %v4775 = vpop.permute.xlu0 %4774
        %v4777 = vmul.f32 %v4769, %v4775
        %4779 = vrot.lane.b32.xlu0 %v4777, 32
        %v4780 = vpop.permute.xlu0 %4779
        %v4782 = vadd.f32 %v4772, %v4780
        %v4783 = vtanh.pop %v4782
        %4785 = vrot.lane.b32.xlu0 %v4783, 64
        %v4786 = vpop.permute.xlu0 %4785
        %v4788 = vmul.f32 %v4769, %v4786
        %4789 = vmatprep.subr.mxu0 0.0
        %4790 = vmatpush1.msra.mxu0 0.0
        %4791 = vmatprep.subr.mxu0 0.0
        %4792 = vmatpush1.msra.mxu0 0.0
        %4793 = vmatprep.subr.mxu0 0.0
        %4794 = vmatpush1.msra.mxu0 0.0
        %4795 = vmatprep.subr.mxu0 0.0
        %4796 = vmatpush1.msra.mxu0 0.0
        %4797 = vmatprep.subr.mxu0 0.0
        %4798 = vmatpush1.msra.mxu0 0.0
        %4799 = vmatprep.subr.mxu0 0.0
        %4800 = vmatpush1.msra.mxu0 0.0
        %4801 = vmatprep.subr.mxu0 0.0
        %4802 = vmatpush1.msra.mxu0 0.0
        %4803 = vmatprep.subr.mxu0 0.0
        %4804 = vmatpush1.msra.mxu0 0.0
        %4805 = vmatprep.subr.mxu0 0.0
        %4806 = vmatpush1.msra.mxu0 0.0
        %4807 = vmatprep.subr.mxu0 0.0
        %4808 = vmatpush1.msra.mxu0 0.0
        %4809 = vmatprep.subr.mxu0 0.0
        %4810 = vmatpush1.msra.mxu0 0.0
        %4811 = vmatprep.subr.mxu0 0.0
        %4812 = vmatpush1.msra.mxu0 0.0
        %4813 = vmatprep.subr.mxu0 0.0
        %4814 = vmatpush1.msra.mxu0 %v951
        %4815 = vmatprep.subr.mxu0 0.0
        %4816 = vmatpush1.msra.mxu0 %v950
        %4817 = vmatprep.subr.mxu0 0.0
        %4818 = vmatpush1.msra.mxu0 %v949
        %4819 = vmatprep.subr.mxu0 0.0
        %4820 = vmatpush1.msra.mxu0 %v948
        %4821 = vmatprep.subr.mxu0 0.0
        %4822 = vmatpush2.msra.mxu0 0.0
        %4823 = vmatprep.subr.mxu0 0.0
        %4824 = vmatpush2.msra.mxu0 0.0
        %4825 = vmatprep.subr.mxu0 0.0
        %4826 = vmatpush2.msra.mxu0 0.0
        %4827 = vmatprep.subr.mxu0 0.0
        %4828 = vmatpush2.msra.mxu0 0.0
        %4829 = vmatprep.subr.mxu0 0.0
        %4830 = vmatpush2.msra.mxu0 0.0
        %4831 = vmatprep.subr.mxu0 0.0
        %4832 = vmatpush2.msra.mxu0 0.0
        %4833 = vmatprep.subr.mxu0 0.0
        %4834 = vmatpush2.msra.mxu0 0.0
        %4835 = vmatprep.subr.mxu0 0.0
        %4836 = vmatpush2.msra.mxu0 0.0
        %4837 = vmatprep.subr.mxu0 0.0
        %4838 = vmatpush2.msra.mxu0 0.0
        %4839 = vmatprep.subr.mxu0 0.0
        %4840 = vmatpush2.msra.mxu0 0.0
        %4841 = vmatprep.subr.mxu0 0.0
        %4842 = vmatpush2.msra.mxu0 0.0
        %4843 = vmatprep.subr.mxu0 0.0
        %4844 = vmatpush2.msra.mxu0 0.0
        %4845 = vmatprep.subr.mxu0 0.0
        %4846 = vmatpush2.msra.mxu0 0.0
        %4847 = vmatprep.subr.mxu0 0.0
        %4848 = vmatpush2.msra.mxu0 0.0
        %4849 = vmatprep.subr.mxu0 0.0
        %4850 = vmatpush2.msra.mxu0 0.0
        %4851 = vmatprep.subr.mxu0 0.0
        %4852 = vmatpush2.msra.mxu0 0.0
        %4853 = vmatprep.mubr.f32.mxu0 0.0
        %4854 = vmatmul.mubr.f32.gmra.mxu0 %v4616
        %v4855 = vpop.f32.mrf.mxu0
        %v4856 = vadd.f32 0.0, %v4855
        %v4857 = vpop.f32.mrf.mxu0
        %4858 = vdwg.mxu0
        %v4859 = vadd.f32 %v940, %v4856
        %v4860 = vxor.u32 %v4859, 2147483648
        %v4861 = vmul.f32 %v4860, 1.442695
        %v4862 = vpow.pop %v4861
        %v4863 = vadd.f32 %v4862, 1.0
        %v4864 = vrcp.pop %v4863
        %v4865 = vmul.f32 1.0, %v4864
        %v4866 = vmul.f32 %v4865, 2.0
        %v4867 = vsub.f32 %v4866, 1.0
        %v4868 = vmul.f32 %v4865, %v4606
        %4870 = vrot.lane.b32.xlu0 %v4867, 64
        %v4871 = vpop.permute.xlu0 %4870
        %v4873 = vmul.f32 %v4865, %v4871
        %4875 = vrot.lane.b32.xlu0 %v4873, 32
        %v4876 = vpop.permute.xlu0 %4875
        %v4878 = vadd.f32 %v4868, %v4876
        %v4879 = vtanh.pop %v4878
        %4881 = vrot.lane.b32.xlu0 %v4879, 64
        %v4882 = vpop.permute.xlu0 %4881
        %v4884 = vmul.f32 %v4865, %v4882
        %4886 = vrot.lane.b32.xlu0 %v4884, 32
        %v4887 = vpop.permute.xlu0 %4886
        %v4888 = vsel %vm971, %v4887, 0
        %4890 = vmatprep.subr.mxu0 0.0
        %4891 = vmatpush1.msra.mxu0 0.0
        %4892 = vmatprep.subr.mxu0 0.0
        %4893 = vmatpush1.msra.mxu0 0.0
        %4894 = vmatprep.subr.mxu0 0.0
        %4895 = vmatpush1.msra.mxu0 0.0
        %4896 = vmatprep.subr.mxu0 0.0
        %4897 = vmatpush1.msra.mxu0 0.0
        %4898 = vmatprep.subr.mxu0 0.0
        %4899 = vmatpush1.msra.mxu0 0.0
        %4900 = vmatprep.subr.mxu0 0.0
        %4901 = vmatpush1.msra.mxu0 0.0
        %4902 = vmatprep.subr.mxu0 0.0
        %4903 = vmatpush1.msra.mxu0 0.0
        %4904 = vmatprep.subr.mxu0 0.0
        %4905 = vmatpush1.msra.mxu0 0.0
        %4906 = vmatprep.subr.mxu0 0.0
        %4907 = vmatpush1.msra.mxu0 0.0
        %4908 = vmatprep.subr.mxu0 0.0
        %4909 = vmatpush1.msra.mxu0 0.0
        %4910 = vmatprep.subr.mxu0 0.0
        %4911 = vmatpush1.msra.mxu0 0.0
        %4912 = vmatprep.subr.mxu0 0.0
        %4913 = vmatpush1.msra.mxu0 0.0
        %4914 = vmatprep.subr.mxu0 0.0
        %4915 = vmatpush1.msra.mxu0 %v955
        %4916 = vmatprep.subr.mxu0 0.0
        %4917 = vmatpush1.msra.mxu0 %v954
        %4918 = vmatprep.subr.mxu0 0.0
        %4919 = vmatpush1.msra.mxu0 %v953
        %4920 = vmatprep.subr.mxu0 0.0
        %4921 = vmatpush1.msra.mxu0 %v952
        %4922 = vmatprep.subr.mxu0 0.0
        %4923 = vmatpush2.msra.mxu0 0.0
        %4924 = vmatprep.subr.mxu0 0.0
        %4925 = vmatpush2.msra.mxu0 0.0
        %4926 = vmatprep.subr.mxu0 0.0
        %4927 = vmatpush2.msra.mxu0 0.0
        %4928 = vmatprep.subr.mxu0 0.0
        %4929 = vmatpush2.msra.mxu0 0.0
        %4930 = vmatprep.subr.mxu0 0.0
        %4931 = vmatpush2.msra.mxu0 0.0
        %4932 = vmatprep.subr.mxu0 0.0
        %4933 = vmatpush2.msra.mxu0 0.0
        %4934 = vmatprep.subr.mxu0 0.0
        %4935 = vmatpush2.msra.mxu0 0.0
        %4936 = vmatprep.subr.mxu0 0.0
        %4937 = vmatpush2.msra.mxu0 0.0
        %4938 = vmatprep.subr.mxu0 0.0
        %4939 = vmatpush2.msra.mxu0 0.0
        %4940 = vmatprep.subr.mxu0 0.0
        %4941 = vmatpush2.msra.mxu0 0.0
        %4942 = vmatprep.subr.mxu0 0.0
        %4943 = vmatpush2.msra.mxu0 0.0
        %4944 = vmatprep.subr.mxu0 0.0
        %4945 = vmatpush2.msra.mxu0 0.0
        %4946 = vmatprep.subr.mxu0 0.0
        %4947 = vmatpush2.msra.mxu0 0.0
        %4948 = vmatprep.subr.mxu0 0.0
        %4949 = vmatpush2.msra.mxu0 0.0
        %4950 = vmatprep.subr.mxu0 0.0
        %4951 = vmatpush2.msra.mxu0 0.0
        %4952 = vmatprep.subr.mxu0 0.0
        %4953 = vmatpush2.msra.mxu0 0.0
        %4954 = vmatprep.mubr.f32.mxu0 0.0
        %4955 = vmatmul.mubr.f32.gmra.mxu0 %v4888
        %v4956 = vpop.f32.mrf.mxu0
        %v4957 = vadd.f32 0.0, %v4956
        %v4958 = vpop.f32.mrf.mxu0
        %4959 = vdwg.mxu0
        %4961 = vrot.lane.b32.xlu0 %v4788, 32
        %v4962 = vpop.permute.xlu0 %4961
        %v4963 = vsel %vm971, %v4962, 0
        %4965 = vmatprep.subr.mxu0 0.0
        %4966 = vmatpush1.msra.mxu0 0.0
        %4967 = vmatprep.subr.mxu0 0.0
        %4968 = vmatpush1.msra.mxu0 0.0
        %4969 = vmatprep.subr.mxu0 0.0
        %4970 = vmatpush1.msra.mxu0 0.0
        %4971 = vmatprep.subr.mxu0 0.0
        %4972 = vmatpush1.msra.mxu0 0.0
        %4973 = vmatprep.subr.mxu0 0.0
        %4974 = vmatpush1.msra.mxu0 0.0
        %4975 = vmatprep.subr.mxu0 0.0
        %4976 = vmatpush1.msra.mxu0 0.0
        %4977 = vmatprep.subr.mxu0 0.0
        %4978 = vmatpush1.msra.mxu0 0.0
        %4979 = vmatprep.subr.mxu0 0.0
        %4980 = vmatpush1.msra.mxu0 0.0
        %4981 = vmatprep.subr.mxu0 0.0
        %4982 = vmatpush1.msra.mxu0 0.0
        %4983 = vmatprep.subr.mxu0 0.0
        %4984 = vmatpush1.msra.mxu0 0.0
        %4985 = vmatprep.subr.mxu0 0.0
        %4986 = vmatpush1.msra.mxu0 0.0
        %4987 = vmatprep.subr.mxu0 0.0
        %4988 = vmatpush1.msra.mxu0 0.0
        %4989 = vmatprep.subr.mxu0 0.0
        %4990 = vmatpush1.msra.mxu0 %v959
        %4991 = vmatprep.subr.mxu0 0.0
        %4992 = vmatpush1.msra.mxu0 %v958
        %4993 = vmatprep.subr.mxu0 0.0
        %4994 = vmatpush1.msra.mxu0 %v957
        %4995 = vmatprep.subr.mxu0 0.0
        %4996 = vmatpush1.msra.mxu0 %v956
        %4997 = vmatprep.subr.mxu0 0.0
        %4998 = vmatpush2.msra.mxu0 0.0
        %4999 = vmatprep.subr.mxu0 0.0
        %5000 = vmatpush2.msra.mxu0 0.0
        %5001 = vmatprep.subr.mxu0 0.0
        %5002 = vmatpush2.msra.mxu0 0.0
        %5003 = vmatprep.subr.mxu0 0.0
        %5004 = vmatpush2.msra.mxu0 0.0
        %5005 = vmatprep.subr.mxu0 0.0
        %5006 = vmatpush2.msra.mxu0 0.0
        %5007 = vmatprep.subr.mxu0 0.0
        %5008 = vmatpush2.msra.mxu0 0.0
        %5009 = vmatprep.subr.mxu0 0.0
        %5010 = vmatpush2.msra.mxu0 0.0
        %5011 = vmatprep.subr.mxu0 0.0
        %5012 = vmatpush2.msra.mxu0 0.0
        %5013 = vmatprep.subr.mxu0 0.0
        %5014 = vmatpush2.msra.mxu0 0.0
        %5015 = vmatprep.subr.mxu0 0.0
        %5016 = vmatpush2.msra.mxu0 0.0
        %5017 = vmatprep.subr.mxu0 0.0
        %5018 = vmatpush2.msra.mxu0 0.0
        %5019 = vmatprep.subr.mxu0 0.0
        %5020 = vmatpush2.msra.mxu0 0.0
        %5021 = vmatprep.subr.mxu0 0.0
        %5022 = vmatpush2.msra.mxu0 0.0
        %5023 = vmatprep.subr.mxu0 0.0
        %5024 = vmatpush2.msra.mxu0 0.0
        %5025 = vmatprep.subr.mxu0 0.0
        %5026 = vmatpush2.msra.mxu0 0.0
        %5027 = vmatprep.subr.mxu0 0.0
        %5028 = vmatpush2.msra.mxu0 0.0
        %5029 = vmatprep.mubr.f32.mxu0 0.0
        %5030 = vmatmul.mubr.f32.gmra.mxu0 %v4963
        %v5031 = vpop.f32.mrf.mxu0
        %v5032 = vadd.f32 %v4957, %v5031
        %v5033 = vpop.f32.mrf.mxu0
        %5034 = vdwg.mxu0
        %v5035 = vadd.f32 %v5032, %v965
        %v5036 = vxor.u32 %v5035, 2147483648
        %v5037 = vmul.f32 %v5036, 1.442695
        %v5038 = vpow.pop %v5037
        %v5039 = vadd.f32 %v5038, 1.0
        %v5040 = vrcp.pop %v5039
        %v5041 = vmul.f32 1.0, %v5040
        %v5042 = vmul.f32 %v5041, 2.0
        %v5043 = vsub.f32 %v5042, 1.0
        %v5044 = vmul.f32 %v5041, %v4782
        %5046 = vrot.lane.b32.xlu0 %v5043, 64
        %v5047 = vpop.permute.xlu0 %5046
        %v5049 = vmul.f32 %v5041, %v5047
        %5051 = vrot.lane.b32.xlu0 %v5049, 32
        %v5052 = vpop.permute.xlu0 %5051
        %v5054 = vadd.f32 %v5044, %v5052
        %v5055 = vtanh.pop %v5054
        %5057 = vrot.lane.b32.xlu0 %v5055, 64
        %v5058 = vpop.permute.xlu0 %5057
        %v5060 = vmul.f32 %v5041, %v5058
        %5061 = vmatprep.subr.mxu0 0.0
        %5062 = vmatpush1.msra.mxu0 0.0
        %5063 = vmatprep.subr.mxu0 0.0
        %5064 = vmatpush1.msra.mxu0 0.0
        %5065 = vmatprep.subr.mxu0 0.0
        %5066 = vmatpush1.msra.mxu0 0.0
        %5067 = vmatprep.subr.mxu0 0.0
        %5068 = vmatpush1.msra.mxu0 0.0
        %5069 = vmatprep.subr.mxu0 0.0
        %5070 = vmatpush1.msra.mxu0 0.0
        %5071 = vmatprep.subr.mxu0 0.0
        %5072 = vmatpush1.msra.mxu0 0.0
        %5073 = vmatprep.subr.mxu0 0.0
        %5074 = vmatpush1.msra.mxu0 0.0
        %5075 = vmatprep.subr.mxu0 0.0
        %5076 = vmatpush1.msra.mxu0 0.0
        %5077 = vmatprep.subr.mxu0 0.0
        %5078 = vmatpush1.msra.mxu0 0.0
        %5079 = vmatprep.subr.mxu0 0.0
        %5080 = vmatpush1.msra.mxu0 0.0
        %5081 = vmatprep.subr.mxu0 0.0
        %5082 = vmatpush1.msra.mxu0 0.0
        %5083 = vmatprep.subr.mxu0 0.0
        %5084 = vmatpush1.msra.mxu0 0.0
        %5085 = vmatprep.subr.mxu0 0.0
        %5086 = vmatpush1.msra.mxu0 %v951
        %5087 = vmatprep.subr.mxu0 0.0
        %5088 = vmatpush1.msra.mxu0 %v950
        %5089 = vmatprep.subr.mxu0 0.0
        %5090 = vmatpush1.msra.mxu0 %v949
        %5091 = vmatprep.subr.mxu0 0.0
        %5092 = vmatpush1.msra.mxu0 %v948
        %5093 = vmatprep.subr.mxu0 0.0
        %5094 = vmatpush2.msra.mxu0 0.0
        %5095 = vmatprep.subr.mxu0 0.0
        %5096 = vmatpush2.msra.mxu0 0.0
        %5097 = vmatprep.subr.mxu0 0.0
        %5098 = vmatpush2.msra.mxu0 0.0
        %5099 = vmatprep.subr.mxu0 0.0
        %5100 = vmatpush2.msra.mxu0 0.0
        %5101 = vmatprep.subr.mxu0 0.0
        %5102 = vmatpush2.msra.mxu0 0.0
        %5103 = vmatprep.subr.mxu0 0.0
        %5104 = vmatpush2.msra.mxu0 0.0
        %5105 = vmatprep.subr.mxu0 0.0
        %5106 = vmatpush2.msra.mxu0 0.0
        %5107 = vmatprep.subr.mxu0 0.0
        %5108 = vmatpush2.msra.mxu0 0.0
        %5109 = vmatprep.subr.mxu0 0.0
        %5110 = vmatpush2.msra.mxu0 0.0
        %5111 = vmatprep.subr.mxu0 0.0
        %5112 = vmatpush2.msra.mxu0 0.0
        %5113 = vmatprep.subr.mxu0 0.0
        %5114 = vmatpush2.msra.mxu0 0.0
        %5115 = vmatprep.subr.mxu0 0.0
        %5116 = vmatpush2.msra.mxu0 0.0
        %5117 = vmatprep.subr.mxu0 0.0
        %5118 = vmatpush2.msra.mxu0 0.0
        %5119 = vmatprep.subr.mxu0 0.0
        %5120 = vmatpush2.msra.mxu0 0.0
        %5121 = vmatprep.subr.mxu0 0.0
        %5122 = vmatpush2.msra.mxu0 0.0
        %5123 = vmatprep.subr.mxu0 0.0
        %5124 = vmatpush2.msra.mxu0 0.0
        %5125 = vmatprep.mubr.f32.mxu0 0.0
        %5126 = vmatmul.mubr.f32.gmra.mxu0 %v4888
        %v5127 = vpop.f32.mrf.mxu0
        %v5128 = vadd.f32 0.0, %v5127
        %v5129 = vpop.f32.mrf.mxu0
        %5130 = vdwg.mxu0
        %v5131 = vadd.f32 %v945, %v5128
        %v5132 = vxor.u32 %v5131, 2147483648
        %v5133 = vmul.f32 %v5132, 1.442695
        %v5134 = vpow.pop %v5133
        %v5135 = vadd.f32 %v5134, 1.0
        %v5136 = vrcp.pop %v5135
        %v5137 = vmul.f32 1.0, %v5136
        %v5138 = vmul.f32 %v5137, 2.0
        %v5139 = vsub.f32 %v5138, 1.0
        %v5140 = vmul.f32 %v5137, %v4878
        %5142 = vrot.lane.b32.xlu0 %v5139, 64
        %v5143 = vpop.permute.xlu0 %5142
        %v5145 = vmul.f32 %v5137, %v5143
        %5147 = vrot.lane.b32.xlu0 %v5145, 32
        %v5148 = vpop.permute.xlu0 %5147
        %v5150 = vadd.f32 %v5140, %v5148
        %v5151 = vtanh.pop %v5150
        %5153 = vrot.lane.b32.xlu0 %v5151, 64
        %v5154 = vpop.permute.xlu0 %5153
        %v5156 = vmul.f32 %v5137, %v5154
        %5158 = vrot.lane.b32.xlu0 %v5156, 32
        %v5159 = vpop.permute.xlu0 %5158
        %v5160 = vsel %vm971, %v5159, 0
        %5162 = vmatprep.subr.mxu0 0.0
        %5163 = vmatpush1.msra.mxu0 0.0
        %5164 = vmatprep.subr.mxu0 0.0
        %5165 = vmatpush1.msra.mxu0 0.0
        %5166 = vmatprep.subr.mxu0 0.0
        %5167 = vmatpush1.msra.mxu0 0.0
        %5168 = vmatprep.subr.mxu0 0.0
        %5169 = vmatpush1.msra.mxu0 0.0
        %5170 = vmatprep.subr.mxu0 0.0
        %5171 = vmatpush1.msra.mxu0 0.0
        %5172 = vmatprep.subr.mxu0 0.0
        %5173 = vmatpush1.msra.mxu0 0.0
        %5174 = vmatprep.subr.mxu0 0.0
        %5175 = vmatpush1.msra.mxu0 0.0
        %5176 = vmatprep.subr.mxu0 0.0
        %5177 = vmatpush1.msra.mxu0 0.0
        %5178 = vmatprep.subr.mxu0 0.0
        %5179 = vmatpush1.msra.mxu0 0.0
        %5180 = vmatprep.subr.mxu0 0.0
        %5181 = vmatpush1.msra.mxu0 0.0
        %5182 = vmatprep.subr.mxu0 0.0
        %5183 = vmatpush1.msra.mxu0 0.0
        %5184 = vmatprep.subr.mxu0 0.0
        %5185 = vmatpush1.msra.mxu0 0.0
        %5186 = vmatprep.subr.mxu0 0.0
        %5187 = vmatpush1.msra.mxu0 %v955
        %5188 = vmatprep.subr.mxu0 0.0
        %5189 = vmatpush1.msra.mxu0 %v954
        %5190 = vmatprep.subr.mxu0 0.0
        %5191 = vmatpush1.msra.mxu0 %v953
        %5192 = vmatprep.subr.mxu0 0.0
        %5193 = vmatpush1.msra.mxu0 %v952
        %5194 = vmatprep.subr.mxu0 0.0
        %5195 = vmatpush2.msra.mxu0 0.0
        %5196 = vmatprep.subr.mxu0 0.0
        %5197 = vmatpush2.msra.mxu0 0.0
        %5198 = vmatprep.subr.mxu0 0.0
        %5199 = vmatpush2.msra.mxu0 0.0
        %5200 = vmatprep.subr.mxu0 0.0
        %5201 = vmatpush2.msra.mxu0 0.0
        %5202 = vmatprep.subr.mxu0 0.0
        %5203 = vmatpush2.msra.mxu0 0.0
        %5204 = vmatprep.subr.mxu0 0.0
        %5205 = vmatpush2.msra.mxu0 0.0
        %5206 = vmatprep.subr.mxu0 0.0
        %5207 = vmatpush2.msra.mxu0 0.0
        %5208 = vmatprep.subr.mxu0 0.0
        %5209 = vmatpush2.msra.mxu0 0.0
        %5210 = vmatprep.subr.mxu0 0.0
        %5211 = vmatpush2.msra.mxu0 0.0
        %5212 = vmatprep.subr.mxu0 0.0
        %5213 = vmatpush2.msra.mxu0 0.0
        %5214 = vmatprep.subr.mxu0 0.0
        %5215 = vmatpush2.msra.mxu0 0.0
        %5216 = vmatprep.subr.mxu0 0.0
        %5217 = vmatpush2.msra.mxu0 0.0
        %5218 = vmatprep.subr.mxu0 0.0
        %5219 = vmatpush2.msra.mxu0 0.0
        %5220 = vmatprep.subr.mxu0 0.0
        %5221 = vmatpush2.msra.mxu0 0.0
        %5222 = vmatprep.subr.mxu0 0.0
        %5223 = vmatpush2.msra.mxu0 0.0
        %5224 = vmatprep.subr.mxu0 0.0
        %5225 = vmatpush2.msra.mxu0 0.0
        %5226 = vmatprep.mubr.f32.mxu0 0.0
        %5227 = vmatmul.mubr.f32.gmra.mxu0 %v5160
        %v5228 = vpop.f32.mrf.mxu0
        %v5229 = vadd.f32 0.0, %v5228
        %v5230 = vpop.f32.mrf.mxu0
        %5231 = vdwg.mxu0
        %5233 = vrot.lane.b32.xlu0 %v5060, 32
        %v5234 = vpop.permute.xlu0 %5233
        %v5235 = vsel %vm971, %v5234, 0
        %5237 = vmatprep.subr.mxu0 0.0
        %5238 = vmatpush1.msra.mxu0 0.0
        %5239 = vmatprep.subr.mxu0 0.0
        %5240 = vmatpush1.msra.mxu0 0.0
        %5241 = vmatprep.subr.mxu0 0.0
        %5242 = vmatpush1.msra.mxu0 0.0
        %5243 = vmatprep.subr.mxu0 0.0
        %5244 = vmatpush1.msra.mxu0 0.0
        %5245 = vmatprep.subr.mxu0 0.0
        %5246 = vmatpush1.msra.mxu0 0.0
        %5247 = vmatprep.subr.mxu0 0.0
        %5248 = vmatpush1.msra.mxu0 0.0
        %5249 = vmatprep.subr.mxu0 0.0
        %5250 = vmatpush1.msra.mxu0 0.0
        %5251 = vmatprep.subr.mxu0 0.0
        %5252 = vmatpush1.msra.mxu0 0.0
        %5253 = vmatprep.subr.mxu0 0.0
        %5254 = vmatpush1.msra.mxu0 0.0
        %5255 = vmatprep.subr.mxu0 0.0
        %5256 = vmatpush1.msra.mxu0 0.0
        %5257 = vmatprep.subr.mxu0 0.0
        %5258 = vmatpush1.msra.mxu0 0.0
        %5259 = vmatprep.subr.mxu0 0.0
        %5260 = vmatpush1.msra.mxu0 0.0
        %5261 = vmatprep.subr.mxu0 0.0
        %5262 = vmatpush1.msra.mxu0 %v959
        %5263 = vmatprep.subr.mxu0 0.0
        %5264 = vmatpush1.msra.mxu0 %v958
        %5265 = vmatprep.subr.mxu0 0.0
        %5266 = vmatpush1.msra.mxu0 %v957
        %5267 = vmatprep.subr.mxu0 0.0
        %5268 = vmatpush1.msra.mxu0 %v956
        %5269 = vmatprep.subr.mxu0 0.0
        %5270 = vmatpush2.msra.mxu0 0.0
        %5271 = vmatprep.subr.mxu0 0.0
        %5272 = vmatpush2.msra.mxu0 0.0
        %5273 = vmatprep.subr.mxu0 0.0
        %5274 = vmatpush2.msra.mxu0 0.0
        %5275 = vmatprep.subr.mxu0 0.0
        %5276 = vmatpush2.msra.mxu0 0.0
        %5277 = vmatprep.subr.mxu0 0.0
        %5278 = vmatpush2.msra.mxu0 0.0
        %5279 = vmatprep.subr.mxu0 0.0
        %5280 = vmatpush2.msra.mxu0 0.0
        %5281 = vmatprep.subr.mxu0 0.0
        %5282 = vmatpush2.msra.mxu0 0.0
        %5283 = vmatprep.subr.mxu0 0.0
        %5284 = vmatpush2.msra.mxu0 0.0
        %5285 = vmatprep.subr.mxu0 0.0
        %5286 = vmatpush2.msra.mxu0 0.0
        %5287 = vmatprep.subr.mxu0 0.0
        %5288 = vmatpush2.msra.mxu0 0.0
        %5289 = vmatprep.subr.mxu0 0.0
        %5290 = vmatpush2.msra.mxu0 0.0
        %5291 = vmatprep.subr.mxu0 0.0
        %5292 = vmatpush2.msra.mxu0 0.0
        %5293 = vmatprep.subr.mxu0 0.0
        %5294 = vmatpush2.msra.mxu0 0.0
        %5295 = vmatprep.subr.mxu0 0.0
        %5296 = vmatpush2.msra.mxu0 0.0
        %5297 = vmatprep.subr.mxu0 0.0
        %5298 = vmatpush2.msra.mxu0 0.0
        %5299 = vmatprep.subr.mxu0 0.0
        %5300 = vmatpush2.msra.mxu0 0.0
        %5301 = vmatprep.mubr.f32.mxu0 0.0
        %5302 = vmatmul.mubr.f32.gmra.mxu0 %v5235
        %v5303 = vpop.f32.mrf.mxu0
        %v5304 = vadd.f32 %v5229, %v5303
        %v5305 = vpop.f32.mrf.mxu0
        %5306 = vdwg.mxu0
        %v5307 = vadd.f32 %v5304, %v965
        %v5308 = vxor.u32 %v5307, 2147483648
        %v5309 = vmul.f32 %v5308, 1.442695
        %v5310 = vpow.pop %v5309
        %v5311 = vadd.f32 %v5310, 1.0
        %v5312 = vrcp.pop %v5311
        %v5313 = vmul.f32 1.0, %v5312
        %v5314 = vmul.f32 %v5313, 2.0
        %v5315 = vsub.f32 %v5314, 1.0
        %v5316 = vmul.f32 %v5313, %v5054
        %5318 = vrot.lane.b32.xlu0 %v5315, 64
        %v5319 = vpop.permute.xlu0 %5318
        %v5321 = vmul.f32 %v5313, %v5319
        %5323 = vrot.lane.b32.xlu0 %v5321, 32
        %v5324 = vpop.permute.xlu0 %5323
        %v5326 = vadd.f32 %v5316, %v5324
        %v5327 = vtanh.pop %v5326
        %5329 = vrot.lane.b32.xlu0 %v5327, 64
        %v5330 = vpop.permute.xlu0 %5329
        %v5332 = vmul.f32 %v5313, %v5330
        %5334 = vst.msk [vmem:[#allocation2] sm:$0xff] %vm971, %v5159
        %5336 = vrot.lane.b32.xlu0 %v5150, 96
        %v5337 = vpop.permute.xlu0 %5336
        %5339 = vst.msk [vmem:[#allocation3] sm:$0xff] %vm971, %v5337
        %5341 = vrot.lane.b32.xlu0 %v5332, 32
        %v5342 = vpop.permute.xlu0 %5341
        %5344 = vst.msk [vmem:[#allocation4] sm:$0xff] %vm971, %v5342
        %5346 = vrot.lane.b32.xlu0 %v5326, 96
        %v5347 = vpop.permute.xlu0 %5346
        %5349 = vst.msk [vmem:[#allocation5] sm:$0xff] %vm971, %v5347
        %p5350 = scmp.eq.s32.totalorder %s27, 1
        // Predicated region
        $region99: #{tpu_custom_call.1} parent=89 // pred_check
          %p5351 = pneg %p5350
        $region100: #{tpu_custom_call.1} parent=89 // pred_check_branch
          %5353 = sbr.rel (%p5351) target = $region102
        $region101: #{tpu_custom_call.1} parent=89 // pred_region
          %v5354 = vld [vmem:[%s7] sm:$0x1]
          %v5356 = vlaneseq
          %v5357 = vshrl.u32 %v5356, 7
          %v5358 = vsub.s32 0, %v5357
          %v5359 = vrot.slane %v5354, %v5358
          %5360 = vrot.lane.b32.xlu0 %v5359, 96
          %v5361 = vpop.permute.xlu0 %5360
          %v5363 = vmul.f32 %v5332, %v5361
          %5365 = vrot.lane.b32.xlu0 %v5363, 32
          %v5366 = vpop.permute.xlu0 %5365
          %v5368 = vsel %vm971, %v5366, 0.0
          %5369 = vadd.xlane.f32.xlu0 %v5368
          %v5370 = vpop.xlane.xlu0 %5369
          %v5371 = vld [vmem:[#allocation6] sm:$0x1]
          %v5373 = vlaneseq
          %v5374 = vshrl.u32 %v5373, 7
          %v5375 = vsub.s32 0, %v5374
          %v5376 = vrot.slane %v5371, %v5375
          %v5378 = vadd.f32 %v5370, %v5376
          %vm5379 = vcmask 7168
          %5380 = vst.msk [vmem:[%s447] sm:$0xff] %vm5379, %v5378
        $region102: #{tpu_custom_call.1} parent=89 // pred_fallthru
          _
        %p5381 = scmp.lt.s32.totalorder %s26, 0
        %s5382 = scalar_select %p5381, %s26, 0
        %s5383 = smul.addr %s5382, 8
        %s5384 = scalar_lea.vmem %s9, %s5383
        // Predicated region
        $region103: #{tpu_custom_call.1} parent=89 // pred_check
          %p5385 = pneg %p248
        $region104: #{tpu_custom_call.1} parent=89 // pred_check_branch
          %5387 = sbr.rel (%p5385) target = $region106
        $region105: #{tpu_custom_call.1} parent=89 // pred_region
          _
        $region106: #{tpu_custom_call.1} parent=89 // pred_fallthru
          _
        // Predicated region
        $region107: #{tpu_custom_call.1} parent=89 // pred_check
          %p5388 = pneg %p248
        $region108: #{tpu_custom_call.1} parent=89 // pred_check_branch
          %5390 = sbr.rel (%p5388) target = $region110
        $region109: #{tpu_custom_call.1} parent=89 // pred_region
          %p5391 = scmp.lt.s32.totalorder %s26, 0
          %s5392 = scalar_select %p5391, %s26, 0
          %s5393 = smul.addr %s5392, 8
          %s5394 = scalar_lea.vmem %s9, %s5393
        $region110: #{tpu_custom_call.1} parent=89 // pred_fallthru
          _
      $region90: #{tpu_custom_call.1} parent=5 // pred_fallthru
        _
      %p5395 = scmp.le.s32.totalorder 2, %s17
      // Predicated region
      $region111: #{tpu_custom_call.1} parent=5 // pred_check
        %p5396 = pneg %p5395
      $region112: #{tpu_custom_call.1} parent=5 // pred_check_branch
        %5398 = sbr.rel (%p5396) target = $region114
      $region113: #{tpu_custom_call.1} parent=5 // pred_region
        %s5399 = ssub.s32 %s17, 2
      $region114: #{tpu_custom_call.1} parent=5 // pred_fallthru
        _
    $region6: #{tpu_custom_call.1} parent=1 // loop_footer
      %s21 = sadd.s32 1, %s17
    $region7: #{tpu_custom_call.1} parent=1 // loop_footer_branch
      %16 = sbr.rel target = $region3
    $region8: #{tpu_custom_call.1} parent=1 // loop_exit
      _

</llo_original>
